<compile_context>
chip_gen: v5e
topology: v5e:2x2
jax: 0.10.0
libtpu: 0.0.40
codegen_flags: <defaults>
</compile_context>

<pallas_src>
import functools

import jax
import jax.numpy as jnp
from jax.experimental import pallas as pl
from jax.experimental.pallas import tpu as pltpu

EPS = 1e-5
OUT_DTYPE = jnp.bfloat16


def _vmem_limit_bytes():
    # ~96 MiB on v5e/v6e (128 MiB physical), ~48 MiB on v7x (64 MiB physical).
    try:
        cap = int(pltpu.get_tpu_info().vmem_capacity_bytes)
    except Exception:
        cap = 64 * 1024 * 1024
    return min(cap * 3 // 4, 100 * 1024 * 1024)


_VMEM_LIMIT = _vmem_limit_bytes()


# ---------------------------------------------------------------------------
# In-kernel helpers (operate on VMEM-resident bf16 values)
# ---------------------------------------------------------------------------
def _pad_hw1(x):
    """Zero-pad the two leading (spatial) dims of an (H, W, C) value by 1."""
    h, w, c = x.shape
    zrow = jnp.zeros((1, w, c), x.dtype)
    x = jnp.concatenate([zrow, x, zrow], axis=0)
    zcol = jnp.zeros((h + 2, 1, c), x.dtype)
    return jnp.concatenate([zcol, x, zcol], axis=1)


def _conv3x3_bn_relu(x_hwc, w_ref, scale, shift):
    """3x3 conv (pad=1) as a 9-tap MXU accumulation + folded-BN affine + ReLU.

    x_hwc : (H, W, Cin)  bf16 value (VMEM resident)
    w_ref : (9, Cin, Cout) bf16 ref, taps ordered (kh, kw)
    scale, shift : (1, Cout) f32
    returns (H*W, Cout) f32
    """
    h, w, cin = x_hwc.shape
    cout = w_ref.shape[-1]
    xp = _pad_hw1(x_hwc)                                  # bf16, built once
    acc = jnp.zeros((h * w, cout), jnp.float32)
    # Statically unrolled 9-tap accumulation: only ONE (HW, Cin) operand is live
    # at a time (vs. a 9x-duplicated im2col slab); MXU work is identical.
    for kh in range(3):
        for kw in range(3):
            tap = xp[kh:kh + h, kw:kw + w, :].reshape(h * w, cin)
            acc = acc + jnp.dot(tap, w_ref[kh * 3 + kw],
                                preferred_element_type=jnp.float32)
    return jnp.maximum(acc * scale + shift, 0.0)


# ---------------------------------------------------------------------------
# Fused kernel: ConvTranspose2d(k=2,s=2) -> concat -> (Conv3x3+BN+ReLU) x2
# ---------------------------------------------------------------------------
def _upsample_fused_kernel(x1_ref, x2_ref, wup_ref, bup_ref,
                           w1_ref, s1_ref, t1_ref,
                           w2_ref, s2_ref, t2_ref, o_ref):
    # Per grid step (one batch element):
    #   x1_ref : (1, H,  W,  Cin)   bf16  low-res input (NHWC)
    #   x2_ref : (1, 2H, 2W, Cmid)  bf16  skip connection (NHWC)
    #   wup_ref: (Cin, 4*Cmid)      bf16  cols ordered (kh, kw, cout)
    #   bup_ref: (1, 4*Cmid)        f32
    #   w1_ref : (9, Cin,  Cout)    bf16  taps ordered (kh, kw); cin = [up|skip]
    #   w2_ref : (9, Cout, Cout)    bf16
    #   s*/t*  : (1, Cout)          f32   folded BN scale / shift
    #   o_ref  : (1, Cout, 4*H*W)   bf16  channel-major (NCHW) output
    _, H, W, Cin = x1_ref.shape
    _, H2, W2, Cmid = x2_ref.shape

    # -- ConvTranspose2d(kernel=2, stride=2): one bf16 MXU matmul (f32 acc).
    x1 = x1_ref[0].reshape(H * W, Cin)
    y = jnp.dot(x1, wup_ref[...], preferred_element_type=jnp.float32) + bup_ref[...]
    y = y.astype(jnp.bfloat16)        # everything below feeds the MXU in bf16

    # Sub-pixel interleave: out[2i+kh, 2j+kw, :] = y_{kh,kw}[i, j, :]
    y00 = y[:, 0 * Cmid:1 * Cmid].reshape(H, W, Cmid)     # (kh, kw) = (0, 0)
    y01 = y[:, 1 * Cmid:2 * Cmid].reshape(H, W, Cmid)     # (0, 1)
    y10 = y[:, 2 * Cmid:3 * Cmid].reshape(H, W, Cmid)     # (1, 0)
    y11 = y[:, 3 * Cmid:4 * Cmid].reshape(H, W, Cmid)     # (1, 1)
    top = jnp.stack([y00, y01], axis=2).reshape(H, W2, Cmid)   # even output rows
    bot = jnp.stack([y10, y11], axis=2).reshape(H, W2, Cmid)   # odd output rows
    up = jnp.stack([top, bot], axis=1).reshape(H2, W2, Cmid)   # (2H, 2W, Cmid)
    # TODO(synk): replace this interleave with stride-2 stores into a padded
    #             VMEM scratch (or fold it into conv1's tap gather).

    # -- torch.cat([up, x2], dim=channel) entirely in VMEM (bf16).
    xin = jnp.concatenate([up, x2_ref[0]], axis=-1)

    # -- DoubleConv; the intermediate stays bf16-resident in VMEM.
    z1 = _conv3x3_bn_relu(xin, w1_ref, s1_ref[...], t1_ref[...])
    mid = z1.astype(jnp.bfloat16).reshape(H2, W2, z1.shape[-1])
    z2 = _conv3x3_bn_relu(mid, w2_ref, s2_ref[...], t2_ref[...])

    # -- Channel-major store: lane-dense (H2*W2 >= 128) and already NCHW.
    o_ref[0] = jnp.transpose(z2, (1, 0)).astype(o_ref.dtype)


# ---------------------------------------------------------------------------
# Parameters (deterministic, synthetic, PyTorch layouts) + one-time prep
# ---------------------------------------------------------------------------
def make_params(key, in_channel, out_channel):
    mid = in_channel // 2
    ks = jax.random.split(key, 16)

    def u(k, shape, fan_in):
        bound = 1.0 / jnp.sqrt(float(fan_in))
        return jax.random.uniform(k, shape, jnp.float32, -bound, bound)

    p = {}
    # nn.ConvTranspose2d(in_channel, in_channel // 2, kernel_size=2, stride=2)
    p["up_w"] = u(ks[0], (in_channel, mid, 2, 2), in_channel * 4)
    p["up_b"] = u(ks[1], (mid,), in_channel * 4)
    # DoubleConv(in_channel, out_channel): (Conv3x3 -> BN -> ReLU) x2
    p["c1_w"] = u(ks[2], (out_channel, in_channel, 3, 3), in_channel * 9)
    p["c1_b"] = u(ks[3], (out_channel,), in_channel * 9)
    p["c1_gamma"] = 1.0 + 0.1 * jax.random.normal(ks[4], (out_channel,), jnp.float32)
    p["c1_beta"] = 0.05 * jax.random.normal(ks[5], (out_channel,), jnp.float32)
    p["c1_mean"] = 0.1 * jax.random.normal(ks[6], (out_channel,), jnp.float32)
    p["c1_var"] = 1.0 + 0.1 * jax.random.uniform(ks[7], (out_channel,), jnp.float32)
    p["c2_w"] = u(ks[8], (out_channel, out_channel, 3, 3), out_channel * 9)
    p["c2_b"] = u(ks[9], (out_channel,), out_channel * 9)
    p["c2_gamma"] = 1.0 + 0.1 * jax.random.normal(ks[10], (out_channel,), jnp.float32)
    p["c2_beta"] = 0.05 * jax.random.normal(ks[11], (out_channel,), jnp.float32)
    p["c2_mean"] = 0.1 * jax.random.normal(ks[12], (out_channel,), jnp.float32)
    p["c2_var"] = 1.0 + 0.1 * jax.random.uniform(ks[13], (out_channel,), jnp.float32)
    return p


def _fold_bn(conv_b, gamma, beta, mean, var):
    scale = gamma / jnp.sqrt(var + EPS)
    shift = (conv_b - mean) * scale + beta
    return scale.astype(jnp.float32), shift.astype(jnp.float32)


def prepare_params(params):
    """One-time conversion of PyTorch-layout params to kernel layout (bf16)."""
    in_ch = params["up_w"].shape[0]
    mid = in_ch // 2
    cout = params["c1_w"].shape[0]

    # ConvTranspose weight (Cin, Cmid, 2, 2) -> (Cin, 4*Cmid), cols (kh, kw, c).
    wup = jnp.transpose(params["up_w"], (0, 2, 3, 1)).reshape(in_ch, 4 * mid)
    bup = jnp.tile(params["up_b"], 4).reshape(1, 4 * mid)

    def taps(w_oihw):  # OIHW -> (9, I, O), taps ordered (kh, kw)
        o, i, kh, kw = w_oihw.shape
        return jnp.transpose(w_oihw, (2, 3, 1, 0)).reshape(kh * kw, i, o)

    s1, t1 = _fold_bn(params["c1_b"], params["c1_gamma"], params["c1_beta"],
                      params["c1_mean"], params["c1_var"])
    s2, t2 = _fold_bn(params["c2_b"], params["c2_gamma"], params["c2_beta"],
                      params["c2_mean"], params["c2_var"])
    return {
        "wup": wup.astype(jnp.bfloat16),
        "bup": bup.astype(jnp.float32),
        "w1": taps(params["c1_w"]).astype(jnp.bfloat16),
        "s1": s1.reshape(1, cout), "t1": t1.reshape(1, cout),
        "w2": taps(params["c2_w"]).astype(jnp.bfloat16),
        "s2": s2.reshape(1, cout), "t2": t2.reshape(1, cout),
    }


# ---------------------------------------------------------------------------
# pallas_call wrapper
# ---------------------------------------------------------------------------
def _fused_call(B, H, W, Cin, H2, W2, Cmid, Cout, single_buffer_weights):
    def wspec(shape):
        # Grid-invariant operands: single-buffer them to free VMEM headroom.
        kw = {"pipeline_mode": pl.Buffered(1)} if single_buffer_weights else {}
        return pl.BlockSpec(shape, lambda *_: (0,) * len(shape), **kw)

    flops = 2 * B * (H * W * Cin * (4 * Cmid)
                     + H2 * W2 * 9 * Cin * Cout
                     + H2 * W2 * 9 * Cout * Cout)
    bytes_accessed = (
        B * H * W * Cin * 2 + B * H2 * W2 * Cmid * 2                 # activations
        + (Cin * 4 * Cmid + 9 * Cin * Cout + 9 * Cout * Cout) * 2    # bf16 weights
        + (4 * Cmid + 4 * Cout) * 4                                  # f32 bias / BN
        + B * Cout * H2 * W2 * jnp.dtype(OUT_DTYPE).itemsize)        # output

    return pl.pallas_call(
        _upsample_fused_kernel,
        out_shape=jax.ShapeDtypeStruct((B, Cout, H2 * W2), OUT_DTYPE),
        grid=(B,),
        in_specs=[
            pl.BlockSpec((1, H, W, Cin), lambda b: (b, 0, 0, 0)),
            pl.BlockSpec((1, H2, W2, Cmid), lambda b: (b, 0, 0, 0)),
            wspec((Cin, 4 * Cmid)),     # wup
            wspec((1, 4 * Cmid)),       # bup
            wspec((9, Cin, Cout)),      # w1
            wspec((1, Cout)),           # s1
            wspec((1, Cout)),           # t1
            wspec((9, Cout, Cout)),     # w2
            wspec((1, Cout)),           # s2
            wspec((1, Cout)),           # t2
        ],
        out_specs=pl.BlockSpec((1, Cout, H2 * W2), lambda b: (b, 0, 0)),
        compiler_params=pltpu.CompilerParams(
            dimension_semantics=("parallel",),
            vmem_limit_bytes=_VMEM_LIMIT,
        ),
        cost_estimate=pl.CostEstimate(flops=flops, transcendentals=0,
                                      bytes_accessed=bytes_accessed),
    )


@functools.partial(jax.jit, static_argnames=("single_buffer_weights",))
def _upsample_impl(prepared, x1_nchw, x2_nchw, single_buffer_weights=True):
    B, Cin, H, W = x1_nchw.shape
    _, Cmid, H2, W2 = x2_nchw.shape
    Cout = prepared["s1"].shape[-1]
    assert Cmid == Cin // 2 and H2 == 2 * H and W2 == 2 * W

    # NCHW/f32 module boundary -> NHWC/bf16 kernel layout (one fused
    # transpose+cast per input; callers that already hold NHWC bf16 activations
    # can call the pallas path directly and skip this).
    x1 = jnp.transpose(x1_nchw, (0, 2, 3, 1)).astype(jnp.bfloat16)
    x2 = jnp.transpose(x2_nchw, (0, 2, 3, 1)).astype(jnp.bfloat16)

    call = _fused_call(B, H, W, Cin, H2, W2, Cmid, Cout, single_buffer_weights)
    out = call(x1, x2, prepared["wup"], prepared["bup"],
               prepared["w1"], prepared["s1"], prepared["t1"],
               prepared["w2"], prepared["s2"], prepared["t2"])
    # Kernel already wrote channel-major data -> metadata-only reshape to NCHW.
    return out.reshape(B, Cout, H2, W2)


def upsample_forward(prepared, x1_nchw, x2_nchw):
    """UpSample forward.  Prefers single-buffered weight operands; falls back to
    default double buffering if this Pallas build rejects pl.Buffered(1)."""
    try:
        return _upsample_impl(prepared, x1_nchw, x2_nchw, single_buffer_weights=True)
    except Exception:
        return _upsample_impl(prepared, x1_nchw, x2_nchw, single_buffer_weights=False)


# ---------------------------------------------------------------------------
# Pure-JAX reference (f32, NCHW)
# ---------------------------------------------------------------------------
def upsample_reference(params, x1_nchw, x2_nchw):
    x1 = jnp.transpose(x1_nchw, (0, 2, 3, 1))
    x2 = jnp.transpose(x2_nchw, (0, 2, 3, 1))
    # ConvTranspose(k=2, s=2) == conv over 2x-dilated input, pad 1, flipped kernel.
    rhs = jnp.transpose(jnp.flip(params["up_w"], axis=(2, 3)), (2, 3, 0, 1))  # HWIO
    x1_up = jax.lax.conv_general_dilated(
        x1, rhs, window_strides=(1, 1), padding=((1, 1), (1, 1)),
        lhs_dilation=(2, 2),
        dimension_numbers=("NHWC", "HWIO", "NHWC")) + params["up_b"]
    x = jnp.concatenate([x1_up, x2], axis=-1)

    def block(x, prefix):
        w = jnp.transpose(params[prefix + "_w"], (2, 3, 1, 0))
        y = jax.lax.conv_general_dilated(
            x, w, (1, 1), ((1, 1), (1, 1)),
            dimension_numbers=("NHWC", "HWIO", "NHWC")) + params[prefix + "_b"]
        y = (y - params[prefix + "_mean"]) / jnp.sqrt(params[prefix + "_var"] + EPS) \
            * params[prefix + "_gamma"] + params[prefix + "_beta"]
        return jnp.maximum(y, 0.0)

    y = block(x, "c1")
    y = block(y, "c2")
    return jnp.transpose(y, (0, 3, 1, 2))


if __name__ == "__main__":
    key = jax.random.PRNGKey(0)
    in_channel, out_channel = 32, 16
    B, H, W = 2, 8, 8

    kp, k1, k2 = jax.random.split(key, 3)
    params = make_params(kp, in_channel, out_channel)
    prepared = prepare_params(params)

    # PyTorch convention: x1 is the low-res feature map, x2 the skip connection.
    x1 = jax.random.normal(k1, (B, in_channel, H, W), jnp.float32)
    x2 = jax.random.normal(k2, (B, in_channel // 2, 2 * H, 2 * W), jnp.float32)

    out = jax.block_until_ready(upsample_forward(prepared, x1, x2))
    assert out.shape == (B, out_channel, 2 * H, 2 * W), out.shape

    ref = upsample_reference(params, x1, x2)
    out_f32 = out.astype(jnp.float32)
    max_err = float(jnp.max(jnp.abs(out_f32 - ref)))
    # bf16 activations/weights on the MXU + bf16 writeback vs. an f32 reference.
    assert jnp.allclose(out_f32, ref, atol=5e-2, rtol=5e-2), max_err

    print("KERNEL_OK")
</pallas_src>

<mosaic_0001>
module attributes {stable_mosaic.version = 11 : i64} {
  func.func @_upsample_fused_kernel(%arg0: i32, %arg1: memref<1x8x8x32xbf16, #tpu.memory_space<vmem>>, %arg2: memref<1x16x16x16xbf16, #tpu.memory_space<vmem>>, %arg3: memref<32x64xbf16, #tpu.memory_space<vmem>>, %arg4: memref<1x64xf32, #tpu.memory_space<vmem>>, %arg5: memref<9x32x16xbf16, #tpu.memory_space<vmem>>, %arg6: memref<1x16xf32, #tpu.memory_space<vmem>>, %arg7: memref<1x16xf32, #tpu.memory_space<vmem>>, %arg8: memref<9x16x16xbf16, #tpu.memory_space<vmem>>, %arg9: memref<1x16xf32, #tpu.memory_space<vmem>>, %arg10: memref<1x16xf32, #tpu.memory_space<vmem>>, %arg11: memref<1x16x256xbf16, #tpu.memory_space<vmem>>) attributes {dimension_semantics = [#tpu.dimension_semantics<parallel>], iteration_bounds = array<i64: 2>, scalar_prefetch = 0 : i64, scratch_operands = 0 : i64, tpu.core_type = #tpu.core_type<tc>, window_params = [{transform_indices = @transform_0, window_bounds = array<i64: 1, 8, 8, 32>}, {transform_indices = @transform_1, window_bounds = array<i64: 1, 16, 16, 16>}, {pipeline_mode = #tpu.pipeline_mode<synchronous>, transform_indices = @transform_2, window_bounds = array<i64: 32, 64>}, {pipeline_mode = #tpu.pipeline_mode<synchronous>, transform_indices = @transform_3, window_bounds = array<i64: 1, 64>}, {pipeline_mode = #tpu.pipeline_mode<synchronous>, transform_indices = @transform_4, window_bounds = array<i64: 9, 32, 16>}, {pipeline_mode = #tpu.pipeline_mode<synchronous>, transform_indices = @transform_5, window_bounds = array<i64: 1, 16>}, {pipeline_mode = #tpu.pipeline_mode<synchronous>, transform_indices = @transform_6, window_bounds = array<i64: 1, 16>}, {pipeline_mode = #tpu.pipeline_mode<synchronous>, transform_indices = @transform_7, window_bounds = array<i64: 9, 16, 16>}, {pipeline_mode = #tpu.pipeline_mode<synchronous>, transform_indices = @transform_8, window_bounds = array<i64: 1, 16>}, {pipeline_mode = #tpu.pipeline_mode<synchronous>, transform_indices = @transform_9, window_bounds = array<i64: 1, 16>}, {transform_indices = @transform_10, window_bounds = array<i64: 1, 16, 256>}]} {
    %c0 = arith.constant 0 : index
    %c0_0 = arith.constant 0 : index
    %c0_1 = arith.constant 0 : index
    %c0_2 = arith.constant 0 : index
    %0 = vector.load %arg1[%c0, %c0_0, %c0_1, %c0_2] : memref<1x8x8x32xbf16, #tpu.memory_space<vmem>>, vector<1x8x8x32xbf16>
    %1 = vector.shape_cast %0 : vector<1x8x8x32xbf16> to vector<8x8x32xbf16>
    %2 = vector.shape_cast %1 : vector<8x8x32xbf16> to vector<64x32xbf16>
    %c0_3 = arith.constant 0 : index
    %c0_4 = arith.constant 0 : index
    %3 = vector.load %arg3[%c0_3, %c0_4] : memref<32x64xbf16, #tpu.memory_space<vmem>>, vector<32x64xbf16>
    %cst = arith.constant dense<0.000000e+00> : vector<64x64xf32>
    %4 = tpu.matmul %2, %3, %cst {dimension_numbers = #tpu.dot_dimension_numbers<[1], [0], [0], [1], [0, 0, 1, 1], [], []>} : vector<64x32xbf16>, vector<32x64xbf16>, vector<64x64xf32> -> vector<64x64xf32>
    %c0_5 = arith.constant 0 : index
    %c0_6 = arith.constant 0 : index
    %5 = vector.load %arg4[%c0_5, %c0_6] : memref<1x64xf32, #tpu.memory_space<vmem>>, vector<1x64xf32>
    %6 = vector.broadcast %5 : vector<1x64xf32> to vector<64x64xf32>
    %7 = arith.addf %4, %6 : vector<64x64xf32>
    %8 = arith.truncf %7 : vector<64x64xf32> to vector<64x64xbf16>
    %9 = vector.extract_strided_slice %8 {offsets = [0, 0], sizes = [64, 16], strides = [1, 1]} : vector<64x64xbf16> to vector<64x16xbf16>
    %10 = vector.shape_cast %9 : vector<64x16xbf16> to vector<8x8x16xbf16>
    %11 = vector.extract_strided_slice %8 {offsets = [0, 16], sizes = [64, 16], strides = [1, 1]} : vector<64x64xbf16> to vector<64x16xbf16>
    %12 = vector.shape_cast %11 : vector<64x16xbf16> to vector<8x8x16xbf16>
    %13 = vector.extract_strided_slice %8 {offsets = [0, 32], sizes = [64, 16], strides = [1, 1]} : vector<64x64xbf16> to vector<64x16xbf16>
    %14 = vector.shape_cast %13 : vector<64x16xbf16> to vector<8x8x16xbf16>
    %15 = vector.extract_strided_slice %8 {offsets = [0, 48], sizes = [64, 16], strides = [1, 1]} : vector<64x64xbf16> to vector<64x16xbf16>
    %16 = vector.shape_cast %15 : vector<64x16xbf16> to vector<8x8x16xbf16>
    %17 = vector.shape_cast %10 : vector<8x8x16xbf16> to vector<8x8x1x16xbf16>
    %18 = vector.shape_cast %12 : vector<8x8x16xbf16> to vector<8x8x1x16xbf16>
    %19 = tpu.concatenate %17, %18 in 2 : vector<8x8x1x16xbf16>, vector<8x8x1x16xbf16> -> vector<8x8x2x16xbf16>
    %20 = vector.shape_cast %19 : vector<8x8x2x16xbf16> to vector<8x16x16xbf16>
    %21 = vector.shape_cast %14 : vector<8x8x16xbf16> to vector<8x8x1x16xbf16>
    %22 = vector.shape_cast %16 : vector<8x8x16xbf16> to vector<8x8x1x16xbf16>
    %23 = tpu.concatenate %21, %22 in 2 : vector<8x8x1x16xbf16>, vector<8x8x1x16xbf16> -> vector<8x8x2x16xbf16>
    %24 = vector.shape_cast %23 : vector<8x8x2x16xbf16> to vector<8x16x16xbf16>
    %25 = vector.shape_cast %20 : vector<8x16x16xbf16> to vector<8x1x16x16xbf16>
    %26 = vector.shape_cast %24 : vector<8x16x16xbf16> to vector<8x1x16x16xbf16>
    %27 = tpu.concatenate %25, %26 in 1 : vector<8x1x16x16xbf16>, vector<8x1x16x16xbf16> -> vector<8x2x16x16xbf16>
    %28 = vector.shape_cast %27 : vector<8x2x16x16xbf16> to vector<16x16x16xbf16>
    %c0_7 = arith.constant 0 : index
    %c0_8 = arith.constant 0 : index
    %c0_9 = arith.constant 0 : index
    %c0_10 = arith.constant 0 : index
    %29 = vector.load %arg2[%c0_7, %c0_8, %c0_9, %c0_10] : memref<1x16x16x16xbf16, #tpu.memory_space<vmem>>, vector<1x16x16x16xbf16>
    %30 = vector.shape_cast %29 : vector<1x16x16x16xbf16> to vector<16x16x16xbf16>
    %31 = tpu.concatenate %28, %30 in 2 : vector<16x16x16xbf16>, vector<16x16x16xbf16> -> vector<16x16x32xbf16>
    %c0_11 = arith.constant 0 : index
    %c0_12 = arith.constant 0 : index
    %32 = vector.load %arg6[%c0_11, %c0_12] : memref<1x16xf32, #tpu.memory_space<vmem>>, vector<1x16xf32>
    %c0_13 = arith.constant 0 : index
    %c0_14 = arith.constant 0 : index
    %33 = vector.load %arg7[%c0_13, %c0_14] : memref<1x16xf32, #tpu.memory_space<vmem>>, vector<1x16xf32>
    %cst_15 = arith.constant 0.000000e+00 : bf16
    %34 = vector.broadcast %cst_15 : bf16 to vector<1x16x32xbf16>
    %35 = tpu.concatenate %34, %31, %34 in 0 : vector<1x16x32xbf16>, vector<16x16x32xbf16>, vector<1x16x32xbf16> -> vector<18x16x32xbf16>
    %cst_16 = arith.constant 0.000000e+00 : bf16
    %36 = vector.broadcast %cst_16 : bf16 to vector<18x1x32xbf16>
    %37 = tpu.concatenate %36, %35, %36 in 1 : vector<18x1x32xbf16>, vector<18x16x32xbf16>, vector<18x1x32xbf16> -> vector<18x18x32xbf16>
    %cst_17 = arith.constant 0.000000e+00 : f32
    %38 = vector.broadcast %cst_17 : f32 to vector<256x16xf32>
    %39 = vector.extract_strided_slice %37 {offsets = [0, 0, 0], sizes = [16, 16, 32], strides = [1, 1, 1]} : vector<18x18x32xbf16> to vector<16x16x32xbf16>
    %40 = vector.shape_cast %39 : vector<16x16x32xbf16> to vector<256x32xbf16>
    %c0_18 = arith.constant 0 : index
    %c0_19 = arith.constant 0 : index
    %c0_20 = arith.constant 0 : index
    %41 = vector.load %arg5[%c0_18, %c0_19, %c0_20] : memref<9x32x16xbf16, #tpu.memory_space<vmem>>, vector<1x32x16xbf16>
    %42 = vector.shape_cast %41 : vector<1x32x16xbf16> to vector<32x16xbf16>
    %cst_21 = arith.constant dense<0.000000e+00> : vector<256x16xf32>
    %43 = tpu.matmul %40, %42, %cst_21 {dimension_numbers = #tpu.dot_dimension_numbers<[1], [0], [0], [1], [0, 0, 1, 1], [], []>} : vector<256x32xbf16>, vector<32x16xbf16>, vector<256x16xf32> -> vector<256x16xf32>
    %44 = arith.addf %38, %43 : vector<256x16xf32>
    %45 = vector.extract_strided_slice %37 {offsets = [0, 1, 0], sizes = [16, 16, 32], strides = [1, 1, 1]} : vector<18x18x32xbf16> to vector<16x16x32xbf16>
    %46 = vector.shape_cast %45 : vector<16x16x32xbf16> to vector<256x32xbf16>
    %c1 = arith.constant 1 : index
    %c0_22 = arith.constant 0 : index
    %c0_23 = arith.constant 0 : index
    %47 = vector.load %arg5[%c1, %c0_22, %c0_23] : memref<9x32x16xbf16, #tpu.memory_space<vmem>>, vector<1x32x16xbf16>
    %48 = vector.shape_cast %47 : vector<1x32x16xbf16> to vector<32x16xbf16>
    %cst_24 = arith.constant dense<0.000000e+00> : vector<256x16xf32>
    %49 = tpu.matmul %46, %48, %cst_24 {dimension_numbers = #tpu.dot_dimension_numbers<[1], [0], [0], [1], [0, 0, 1, 1], [], []>} : vector<256x32xbf16>, vector<32x16xbf16>, vector<256x16xf32> -> vector<256x16xf32>
    %50 = arith.addf %44, %49 : vector<256x16xf32>
    %51 = vector.extract_strided_slice %37 {offsets = [0, 2, 0], sizes = [16, 16, 32], strides = [1, 1, 1]} : vector<18x18x32xbf16> to vector<16x16x32xbf16>
    %52 = vector.shape_cast %51 : vector<16x16x32xbf16> to vector<256x32xbf16>
    %c2 = arith.constant 2 : index
    %c0_25 = arith.constant 0 : index
    %c0_26 = arith.constant 0 : index
    %53 = vector.load %arg5[%c2, %c0_25, %c0_26] : memref<9x32x16xbf16, #tpu.memory_space<vmem>>, vector<1x32x16xbf16>
    %54 = vector.shape_cast %53 : vector<1x32x16xbf16> to vector<32x16xbf16>
    %cst_27 = arith.constant dense<0.000000e+00> : vector<256x16xf32>
    %55 = tpu.matmul %52, %54, %cst_27 {dimension_numbers = #tpu.dot_dimension_numbers<[1], [0], [0], [1], [0, 0, 1, 1], [], []>} : vector<256x32xbf16>, vector<32x16xbf16>, vector<256x16xf32> -> vector<256x16xf32>
    %56 = arith.addf %50, %55 : vector<256x16xf32>
    %57 = vector.extract_strided_slice %37 {offsets = [1, 0, 0], sizes = [16, 16, 32], strides = [1, 1, 1]} : vector<18x18x32xbf16> to vector<16x16x32xbf16>
    %58 = vector.shape_cast %57 : vector<16x16x32xbf16> to vector<256x32xbf16>
    %c3 = arith.constant 3 : index
    %c0_28 = arith.constant 0 : index
    %c0_29 = arith.constant 0 : index
    %59 = vector.load %arg5[%c3, %c0_28, %c0_29] : memref<9x32x16xbf16, #tpu.memory_space<vmem>>, vector<1x32x16xbf16>
    %60 = vector.shape_cast %59 : vector<1x32x16xbf16> to vector<32x16xbf16>
    %cst_30 = arith.constant dense<0.000000e+00> : vector<256x16xf32>
    %61 = tpu.matmul %58, %60, %cst_30 {dimension_numbers = #tpu.dot_dimension_numbers<[1], [0], [0], [1], [0, 0, 1, 1], [], []>} : vector<256x32xbf16>, vector<32x16xbf16>, vector<256x16xf32> -> vector<256x16xf32>
    %62 = arith.addf %56, %61 : vector<256x16xf32>
    %63 = vector.extract_strided_slice %37 {offsets = [1, 1, 0], sizes = [16, 16, 32], strides = [1, 1, 1]} : vector<18x18x32xbf16> to vector<16x16x32xbf16>
    %64 = vector.shape_cast %63 : vector<16x16x32xbf16> to vector<256x32xbf16>
    %c4 = arith.constant 4 : index
    %c0_31 = arith.constant 0 : index
    %c0_32 = arith.constant 0 : index
    %65 = vector.load %arg5[%c4, %c0_31, %c0_32] : memref<9x32x16xbf16, #tpu.memory_space<vmem>>, vector<1x32x16xbf16>
    %66 = vector.shape_cast %65 : vector<1x32x16xbf16> to vector<32x16xbf16>
    %cst_33 = arith.constant dense<0.000000e+00> : vector<256x16xf32>
    %67 = tpu.matmul %64, %66, %cst_33 {dimension_numbers = #tpu.dot_dimension_numbers<[1], [0], [0], [1], [0, 0, 1, 1], [], []>} : vector<256x32xbf16>, vector<32x16xbf16>, vector<256x16xf32> -> vector<256x16xf32>
    %68 = arith.addf %62, %67 : vector<256x16xf32>
    %69 = vector.extract_strided_slice %37 {offsets = [1, 2, 0], sizes = [16, 16, 32], strides = [1, 1, 1]} : vector<18x18x32xbf16> to vector<16x16x32xbf16>
    %70 = vector.shape_cast %69 : vector<16x16x32xbf16> to vector<256x32xbf16>
    %c5 = arith.constant 5 : index
    %c0_34 = arith.constant 0 : index
    %c0_35 = arith.constant 0 : index
    %71 = vector.load %arg5[%c5, %c0_34, %c0_35] : memref<9x32x16xbf16, #tpu.memory_space<vmem>>, vector<1x32x16xbf16>
    %72 = vector.shape_cast %71 : vector<1x32x16xbf16> to vector<32x16xbf16>
    %cst_36 = arith.constant dense<0.000000e+00> : vector<256x16xf32>
    %73 = tpu.matmul %70, %72, %cst_36 {dimension_numbers = #tpu.dot_dimension_numbers<[1], [0], [0], [1], [0, 0, 1, 1], [], []>} : vector<256x32xbf16>, vector<32x16xbf16>, vector<256x16xf32> -> vector<256x16xf32>
    %74 = arith.addf %68, %73 : vector<256x16xf32>
    %75 = vector.extract_strided_slice %37 {offsets = [2, 0, 0], sizes = [16, 16, 32], strides = [1, 1, 1]} : vector<18x18x32xbf16> to vector<16x16x32xbf16>
    %76 = vector.shape_cast %75 : vector<16x16x32xbf16> to vector<256x32xbf16>
    %c6 = arith.constant 6 : index
    %c0_37 = arith.constant 0 : index
    %c0_38 = arith.constant 0 : index
    %77 = vector.load %arg5[%c6, %c0_37, %c0_38] : memref<9x32x16xbf16, #tpu.memory_space<vmem>>, vector<1x32x16xbf16>
    %78 = vector.shape_cast %77 : vector<1x32x16xbf16> to vector<32x16xbf16>
    %cst_39 = arith.constant dense<0.000000e+00> : vector<256x16xf32>
    %79 = tpu.matmul %76, %78, %cst_39 {dimension_numbers = #tpu.dot_dimension_numbers<[1], [0], [0], [1], [0, 0, 1, 1], [], []>} : vector<256x32xbf16>, vector<32x16xbf16>, vector<256x16xf32> -> vector<256x16xf32>
    %80 = arith.addf %74, %79 : vector<256x16xf32>
    %81 = vector.extract_strided_slice %37 {offsets = [2, 1, 0], sizes = [16, 16, 32], strides = [1, 1, 1]} : vector<18x18x32xbf16> to vector<16x16x32xbf16>
    %82 = vector.shape_cast %81 : vector<16x16x32xbf16> to vector<256x32xbf16>
    %c7 = arith.constant 7 : index
    %c0_40 = arith.constant 0 : index
    %c0_41 = arith.constant 0 : index
    %83 = vector.load %arg5[%c7, %c0_40, %c0_41] : memref<9x32x16xbf16, #tpu.memory_space<vmem>>, vector<1x32x16xbf16>
    %84 = vector.shape_cast %83 : vector<1x32x16xbf16> to vector<32x16xbf16>
    %cst_42 = arith.constant dense<0.000000e+00> : vector<256x16xf32>
    %85 = tpu.matmul %82, %84, %cst_42 {dimension_numbers = #tpu.dot_dimension_numbers<[1], [0], [0], [1], [0, 0, 1, 1], [], []>} : vector<256x32xbf16>, vector<32x16xbf16>, vector<256x16xf32> -> vector<256x16xf32>
    %86 = arith.addf %80, %85 : vector<256x16xf32>
    %87 = vector.extract_strided_slice %37 {offsets = [2, 2, 0], sizes = [16, 16, 32], strides = [1, 1, 1]} : vector<18x18x32xbf16> to vector<16x16x32xbf16>
    %88 = vector.shape_cast %87 : vector<16x16x32xbf16> to vector<256x32xbf16>
    %c8 = arith.constant 8 : index
    %c0_43 = arith.constant 0 : index
    %c0_44 = arith.constant 0 : index
    %89 = vector.load %arg5[%c8, %c0_43, %c0_44] : memref<9x32x16xbf16, #tpu.memory_space<vmem>>, vector<1x32x16xbf16>
    %90 = vector.shape_cast %89 : vector<1x32x16xbf16> to vector<32x16xbf16>
    %cst_45 = arith.constant dense<0.000000e+00> : vector<256x16xf32>
    %91 = tpu.matmul %88, %90, %cst_45 {dimension_numbers = #tpu.dot_dimension_numbers<[1], [0], [0], [1], [0, 0, 1, 1], [], []>} : vector<256x32xbf16>, vector<32x16xbf16>, vector<256x16xf32> -> vector<256x16xf32>
    %92 = arith.addf %86, %91 : vector<256x16xf32>
    %93 = vector.broadcast %32 : vector<1x16xf32> to vector<256x16xf32>
    %94 = arith.mulf %92, %93 : vector<256x16xf32>
    %95 = vector.broadcast %33 : vector<1x16xf32> to vector<256x16xf32>
    %96 = arith.addf %94, %95 : vector<256x16xf32>
    %cst_46 = arith.constant 0.000000e+00 : f32
    %97 = vector.broadcast %cst_46 : f32 to vector<256x16xf32>
    %98 = arith.maximumf %96, %97 : vector<256x16xf32>
    %99 = arith.truncf %98 : vector<256x16xf32> to vector<256x16xbf16>
    %100 = vector.shape_cast %99 : vector<256x16xbf16> to vector<16x16x16xbf16>
    %c0_47 = arith.constant 0 : index
    %c0_48 = arith.constant 0 : index
    %101 = vector.load %arg9[%c0_47, %c0_48] : memref<1x16xf32, #tpu.memory_space<vmem>>, vector<1x16xf32>
    %c0_49 = arith.constant 0 : index
    %c0_50 = arith.constant 0 : index
    %102 = vector.load %arg10[%c0_49, %c0_50] : memref<1x16xf32, #tpu.memory_space<vmem>>, vector<1x16xf32>
    %cst_51 = arith.constant 0.000000e+00 : bf16
    %103 = vector.broadcast %cst_51 : bf16 to vector<1x16x16xbf16>
    %104 = tpu.concatenate %103, %100, %103 in 0 : vector<1x16x16xbf16>, vector<16x16x16xbf16>, vector<1x16x16xbf16> -> vector<18x16x16xbf16>
    %cst_52 = arith.constant 0.000000e+00 : bf16
    %105 = vector.broadcast %cst_52 : bf16 to vector<18x1x16xbf16>
    %106 = tpu.concatenate %105, %104, %105 in 1 : vector<18x1x16xbf16>, vector<18x16x16xbf16>, vector<18x1x16xbf16> -> vector<18x18x16xbf16>
    %cst_53 = arith.constant 0.000000e+00 : f32
    %107 = vector.broadcast %cst_53 : f32 to vector<256x16xf32>
    %108 = vector.extract_strided_slice %106 {offsets = [0, 0, 0], sizes = [16, 16, 16], strides = [1, 1, 1]} : vector<18x18x16xbf16> to vector<16x16x16xbf16>
    %109 = vector.shape_cast %108 : vector<16x16x16xbf16> to vector<256x16xbf16>
    %c0_54 = arith.constant 0 : index
    %c0_55 = arith.constant 0 : index
    %c0_56 = arith.constant 0 : index
    %110 = vector.load %arg8[%c0_54, %c0_55, %c0_56] : memref<9x16x16xbf16, #tpu.memory_space<vmem>>, vector<1x16x16xbf16>
    %111 = vector.shape_cast %110 : vector<1x16x16xbf16> to vector<16x16xbf16>
    %cst_57 = arith.constant dense<0.000000e+00> : vector<256x16xf32>
    %112 = tpu.matmul %109, %111, %cst_57 {dimension_numbers = #tpu.dot_dimension_numbers<[1], [0], [0], [1], [0, 0, 1, 1], [], []>} : vector<256x16xbf16>, vector<16x16xbf16>, vector<256x16xf32> -> vector<256x16xf32>
    %113 = arith.addf %107, %112 : vector<256x16xf32>
    %114 = vector.extract_strided_slice %106 {offsets = [0, 1, 0], sizes = [16, 16, 16], strides = [1, 1, 1]} : vector<18x18x16xbf16> to vector<16x16x16xbf16>
    %115 = vector.shape_cast %114 : vector<16x16x16xbf16> to vector<256x16xbf16>
    %c1_58 = arith.constant 1 : index
    %c0_59 = arith.constant 0 : index
    %c0_60 = arith.constant 0 : index
    %116 = vector.load %arg8[%c1_58, %c0_59, %c0_60] : memref<9x16x16xbf16, #tpu.memory_space<vmem>>, vector<1x16x16xbf16>
    %117 = vector.shape_cast %116 : vector<1x16x16xbf16> to vector<16x16xbf16>
    %cst_61 = arith.constant dense<0.000000e+00> : vector<256x16xf32>
    %118 = tpu.matmul %115, %117, %cst_61 {dimension_numbers = #tpu.dot_dimension_numbers<[1], [0], [0], [1], [0, 0, 1, 1], [], []>} : vector<256x16xbf16>, vector<16x16xbf16>, vector<256x16xf32> -> vector<256x16xf32>
    %119 = arith.addf %113, %118 : vector<256x16xf32>
    %120 = vector.extract_strided_slice %106 {offsets = [0, 2, 0], sizes = [16, 16, 16], strides = [1, 1, 1]} : vector<18x18x16xbf16> to vector<16x16x16xbf16>
    %121 = vector.shape_cast %120 : vector<16x16x16xbf16> to vector<256x16xbf16>
    %c2_62 = arith.constant 2 : index
    %c0_63 = arith.constant 0 : index
    %c0_64 = arith.constant 0 : index
    %122 = vector.load %arg8[%c2_62, %c0_63, %c0_64] : memref<9x16x16xbf16, #tpu.memory_space<vmem>>, vector<1x16x16xbf16>
    %123 = vector.shape_cast %122 : vector<1x16x16xbf16> to vector<16x16xbf16>
    %cst_65 = arith.constant dense<0.000000e+00> : vector<256x16xf32>
    %124 = tpu.matmul %121, %123, %cst_65 {dimension_numbers = #tpu.dot_dimension_numbers<[1], [0], [0], [1], [0, 0, 1, 1], [], []>} : vector<256x16xbf16>, vector<16x16xbf16>, vector<256x16xf32> -> vector<256x16xf32>
    %125 = arith.addf %119, %124 : vector<256x16xf32>
    %126 = vector.extract_strided_slice %106 {offsets = [1, 0, 0], sizes = [16, 16, 16], strides = [1, 1, 1]} : vector<18x18x16xbf16> to vector<16x16x16xbf16>
    %127 = vector.shape_cast %126 : vector<16x16x16xbf16> to vector<256x16xbf16>
    %c3_66 = arith.constant 3 : index
    %c0_67 = arith.constant 0 : index
    %c0_68 = arith.constant 0 : index
    %128 = vector.load %arg8[%c3_66, %c0_67, %c0_68] : memref<9x16x16xbf16, #tpu.memory_space<vmem>>, vector<1x16x16xbf16>
    %129 = vector.shape_cast %128 : vector<1x16x16xbf16> to vector<16x16xbf16>
    %cst_69 = arith.constant dense<0.000000e+00> : vector<256x16xf32>
    %130 = tpu.matmul %127, %129, %cst_69 {dimension_numbers = #tpu.dot_dimension_numbers<[1], [0], [0], [1], [0, 0, 1, 1], [], []>} : vector<256x16xbf16>, vector<16x16xbf16>, vector<256x16xf32> -> vector<256x16xf32>
    %131 = arith.addf %125, %130 : vector<256x16xf32>
    %132 = vector.extract_strided_slice %106 {offsets = [1, 1, 0], sizes = [16, 16, 16], strides = [1, 1, 1]} : vector<18x18x16xbf16> to vector<16x16x16xbf16>
    %133 = vector.shape_cast %132 : vector<16x16x16xbf16> to vector<256x16xbf16>
    %c4_70 = arith.constant 4 : index
    %c0_71 = arith.constant 0 : index
    %c0_72 = arith.constant 0 : index
    %134 = vector.load %arg8[%c4_70, %c0_71, %c0_72] : memref<9x16x16xbf16, #tpu.memory_space<vmem>>, vector<1x16x16xbf16>
    %135 = vector.shape_cast %134 : vector<1x16x16xbf16> to vector<16x16xbf16>
    %cst_73 = arith.constant dense<0.000000e+00> : vector<256x16xf32>
    %136 = tpu.matmul %133, %135, %cst_73 {dimension_numbers = #tpu.dot_dimension_numbers<[1], [0], [0], [1], [0, 0, 1, 1], [], []>} : vector<256x16xbf16>, vector<16x16xbf16>, vector<256x16xf32> -> vector<256x16xf32>
    %137 = arith.addf %131, %136 : vector<256x16xf32>
    %138 = vector.extract_strided_slice %106 {offsets = [1, 2, 0], sizes = [16, 16, 16], strides = [1, 1, 1]} : vector<18x18x16xbf16> to vector<16x16x16xbf16>
    %139 = vector.shape_cast %138 : vector<16x16x16xbf16> to vector<256x16xbf16>
    %c5_74 = arith.constant 5 : index
    %c0_75 = arith.constant 0 : index
    %c0_76 = arith.constant 0 : index
    %140 = vector.load %arg8[%c5_74, %c0_75, %c0_76] : memref<9x16x16xbf16, #tpu.memory_space<vmem>>, vector<1x16x16xbf16>
    %141 = vector.shape_cast %140 : vector<1x16x16xbf16> to vector<16x16xbf16>
    %cst_77 = arith.constant dense<0.000000e+00> : vector<256x16xf32>
    %142 = tpu.matmul %139, %141, %cst_77 {dimension_numbers = #tpu.dot_dimension_numbers<[1], [0], [0], [1], [0, 0, 1, 1], [], []>} : vector<256x16xbf16>, vector<16x16xbf16>, vector<256x16xf32> -> vector<256x16xf32>
    %143 = arith.addf %137, %142 : vector<256x16xf32>
    %144 = vector.extract_strided_slice %106 {offsets = [2, 0, 0], sizes = [16, 16, 16], strides = [1, 1, 1]} : vector<18x18x16xbf16> to vector<16x16x16xbf16>
    %145 = vector.shape_cast %144 : vector<16x16x16xbf16> to vector<256x16xbf16>
    %c6_78 = arith.constant 6 : index
    %c0_79 = arith.constant 0 : index
    %c0_80 = arith.constant 0 : index
    %146 = vector.load %arg8[%c6_78, %c0_79, %c0_80] : memref<9x16x16xbf16, #tpu.memory_space<vmem>>, vector<1x16x16xbf16>
    %147 = vector.shape_cast %146 : vector<1x16x16xbf16> to vector<16x16xbf16>
    %cst_81 = arith.constant dense<0.000000e+00> : vector<256x16xf32>
    %148 = tpu.matmul %145, %147, %cst_81 {dimension_numbers = #tpu.dot_dimension_numbers<[1], [0], [0], [1], [0, 0, 1, 1], [], []>} : vector<256x16xbf16>, vector<16x16xbf16>, vector<256x16xf32> -> vector<256x16xf32>
    %149 = arith.addf %143, %148 : vector<256x16xf32>
    %150 = vector.extract_strided_slice %106 {offsets = [2, 1, 0], sizes = [16, 16, 16], strides = [1, 1, 1]} : vector<18x18x16xbf16> to vector<16x16x16xbf16>
    %151 = vector.shape_cast %150 : vector<16x16x16xbf16> to vector<256x16xbf16>
    %c7_82 = arith.constant 7 : index
    %c0_83 = arith.constant 0 : index
    %c0_84 = arith.constant 0 : index
    %152 = vector.load %arg8[%c7_82, %c0_83, %c0_84] : memref<9x16x16xbf16, #tpu.memory_space<vmem>>, vector<1x16x16xbf16>
    %153 = vector.shape_cast %152 : vector<1x16x16xbf16> to vector<16x16xbf16>
    %cst_85 = arith.constant dense<0.000000e+00> : vector<256x16xf32>
    %154 = tpu.matmul %151, %153, %cst_85 {dimension_numbers = #tpu.dot_dimension_numbers<[1], [0], [0], [1], [0, 0, 1, 1], [], []>} : vector<256x16xbf16>, vector<16x16xbf16>, vector<256x16xf32> -> vector<256x16xf32>
    %155 = arith.addf %149, %154 : vector<256x16xf32>
    %156 = vector.extract_strided_slice %106 {offsets = [2, 2, 0], sizes = [16, 16, 16], strides = [1, 1, 1]} : vector<18x18x16xbf16> to vector<16x16x16xbf16>
    %157 = vector.shape_cast %156 : vector<16x16x16xbf16> to vector<256x16xbf16>
    %c8_86 = arith.constant 8 : index
    %c0_87 = arith.constant 0 : index
    %c0_88 = arith.constant 0 : index
    %158 = vector.load %arg8[%c8_86, %c0_87, %c0_88] : memref<9x16x16xbf16, #tpu.memory_space<vmem>>, vector<1x16x16xbf16>
    %159 = vector.shape_cast %158 : vector<1x16x16xbf16> to vector<16x16xbf16>
    %cst_89 = arith.constant dense<0.000000e+00> : vector<256x16xf32>
    %160 = tpu.matmul %157, %159, %cst_89 {dimension_numbers = #tpu.dot_dimension_numbers<[1], [0], [0], [1], [0, 0, 1, 1], [], []>} : vector<256x16xbf16>, vector<16x16xbf16>, vector<256x16xf32> -> vector<256x16xf32>
    %161 = arith.addf %155, %160 : vector<256x16xf32>
    %162 = vector.broadcast %101 : vector<1x16xf32> to vector<256x16xf32>
    %163 = arith.mulf %161, %162 : vector<256x16xf32>
    %164 = vector.broadcast %102 : vector<1x16xf32> to vector<256x16xf32>
    %165 = arith.addf %163, %164 : vector<256x16xf32>
    %cst_90 = arith.constant 0.000000e+00 : f32
    %166 = vector.broadcast %cst_90 : f32 to vector<256x16xf32>
    %167 = arith.maximumf %165, %166 : vector<256x16xf32>
    %168 = tpu.transpose %167, [1, 0] : vector<256x16xf32> -> vector<16x256xf32>
    %169 = arith.truncf %168 : vector<16x256xf32> to vector<16x256xbf16>
    %c0_91 = arith.constant 0 : index
    %c0_92 = arith.constant 0 : index
    %c0_93 = arith.constant 0 : index
    %170 = vector.load %arg11[%c0_91, %c0_92, %c0_93] : memref<1x16x256xbf16, #tpu.memory_space<vmem>>, vector<1x16x256xbf16>
    %171 = vector.shape_cast %170 : vector<1x16x256xbf16> to vector<16x256xbf16>
    %172 = vector.shape_cast %169 : vector<16x256xbf16> to vector<1x16x256xbf16>
    tpu.vector_store %arg11[%c0_91, %c0_92, %c0_93], %172 {strides = array<i32>} : memref<1x16x256xbf16, #tpu.memory_space<vmem>>, vector<1x16x256xbf16>,
    return
  }
  func.func @transform_0(%arg0: i32) -> (i32, i32, i32, i32) {
    %c0_i32 = arith.constant 0 : i32
    %c0_i32_0 = arith.constant 0 : i32
    %c0_i32_1 = arith.constant 0 : i32
    %c0_i32_2 = arith.constant 0 : i32
    return %arg0, %c0_i32, %c0_i32_0, %c0_i32_1 : i32, i32, i32, i32
  }
  func.func @transform_1(%arg0: i32) -> (i32, i32, i32, i32) {
    %c0_i32 = arith.constant 0 : i32
    %c0_i32_0 = arith.constant 0 : i32
    %c0_i32_1 = arith.constant 0 : i32
    %c0_i32_2 = arith.constant 0 : i32
    return %arg0, %c0_i32, %c0_i32_0, %c0_i32_1 : i32, i32, i32, i32
  }
  func.func @transform_2(%arg0: i32) -> (i32, i32) {
    %c0_i32 = arith.constant 0 : i32
    %c0_i32_0 = arith.constant 0 : i32
    %c0_i32_1 = arith.constant 0 : i32
    return %c0_i32, %c0_i32_0 : i32, i32
  }
  func.func @transform_3(%arg0: i32) -> (i32, i32) {
    %c0_i32 = arith.constant 0 : i32
    %c0_i32_0 = arith.constant 0 : i32
    %c0_i32_1 = arith.constant 0 : i32
    return %c0_i32, %c0_i32_0 : i32, i32
  }
  func.func @transform_4(%arg0: i32) -> (i32, i32, i32) {
    %c0_i32 = arith.constant 0 : i32
    %c0_i32_0 = arith.constant 0 : i32
    %c0_i32_1 = arith.constant 0 : i32
    %c0_i32_2 = arith.constant 0 : i32
    return %c0_i32, %c0_i32_0, %c0_i32_1 : i32, i32, i32
  }
  func.func @transform_5(%arg0: i32) -> (i32, i32) {
    %c0_i32 = arith.constant 0 : i32
    %c0_i32_0 = arith.constant 0 : i32
    %c0_i32_1 = arith.constant 0 : i32
    return %c0_i32, %c0_i32_0 : i32, i32
  }
  func.func @transform_6(%arg0: i32) -> (i32, i32) {
    %c0_i32 = arith.constant 0 : i32
    %c0_i32_0 = arith.constant 0 : i32
    %c0_i32_1 = arith.constant 0 : i32
    return %c0_i32, %c0_i32_0 : i32, i32
  }
  func.func @transform_7(%arg0: i32) -> (i32, i32, i32) {
    %c0_i32 = arith.constant 0 : i32
    %c0_i32_0 = arith.constant 0 : i32
    %c0_i32_1 = arith.constant 0 : i32
    %c0_i32_2 = arith.constant 0 : i32
    return %c0_i32, %c0_i32_0, %c0_i32_1 : i32, i32, i32
  }
  func.func @transform_8(%arg0: i32) -> (i32, i32) {
    %c0_i32 = arith.constant 0 : i32
    %c0_i32_0 = arith.constant 0 : i32
    %c0_i32_1 = arith.constant 0 : i32
    return %c0_i32, %c0_i32_0 : i32, i32
  }
  func.func @transform_9(%arg0: i32) -> (i32, i32) {
    %c0_i32 = arith.constant 0 : i32
    %c0_i32_0 = arith.constant 0 : i32
    %c0_i32_1 = arith.constant 0 : i32
    return %c0_i32, %c0_i32_0 : i32, i32
  }
  func.func @transform_10(%arg0: i32) -> (i32, i32, i32) {
    %c0_i32 = arith.constant 0 : i32
    %c0_i32_0 = arith.constant 0 : i32
    %c0_i32_1 = arith.constant 0 : i32
    return %arg0, %c0_i32, %c0_i32_0 : i32, i32, i32
  }
}

module attributes {stable_mosaic.version = 11 : i64} {
  func.func @_upsample_fused_kernel(%arg0: i32, %arg1: memref<1x8x8x32xbf16, #tpu.memory_space<vmem>>, %arg2: memref<1x16x16x16xbf16, #tpu.memory_space<vmem>>, %arg3: memref<32x64xbf16, #tpu.memory_space<vmem>>, %arg4: memref<1x64xf32, #tpu.memory_space<vmem>>, %arg5: memref<9x32x16xbf16, #tpu.memory_space<vmem>>, %arg6: memref<1x16xf32, #tpu.memory_space<vmem>>, %arg7: memref<1x16xf32, #tpu.memory_space<vmem>>, %arg8: memref<9x16x16xbf16, #tpu.memory_space<vmem>>, %arg9: memref<1x16xf32, #tpu.memory_space<vmem>>, %arg10: memref<1x16xf32, #tpu.memory_space<vmem>>, %arg11: memref<1x16x256xbf16, #tpu.memory_space<vmem>>) attributes {dimension_semantics = [#tpu.dimension_semantics<parallel>], iteration_bounds = array<i64: 2>, scalar_prefetch = 0 : i64, scratch_operands = 0 : i64, tpu.core_type = #tpu.core_type<tc>, window_params = [{transform_indices = @transform_0, window_bounds = array<i64: 1, 8, 8, 32>}, {transform_indices = @transform_1, window_bounds = array<i64: 1, 16, 16, 16>}, {pipeline_mode = #tpu.pipeline_mode<synchronous>, transform_indices = @transform_2, window_bounds = array<i64: 32, 64>}, {pipeline_mode = #tpu.pipeline_mode<synchronous>, transform_indices = @transform_3, window_bounds = array<i64: 1, 64>}, {pipeline_mode = #tpu.pipeline_mode<synchronous>, transform_indices = @transform_4, window_bounds = array<i64: 9, 32, 16>}, {pipeline_mode = #tpu.pipeline_mode<synchronous>, transform_indices = @transform_5, window_bounds = array<i64: 1, 16>}, {pipeline_mode = #tpu.pipeline_mode<synchronous>, transform_indices = @transform_6, window_bounds = array<i64: 1, 16>}, {pipeline_mode = #tpu.pipeline_mode<synchronous>, transform_indices = @transform_7, window_bounds = array<i64: 9, 16, 16>}, {pipeline_mode = #tpu.pipeline_mode<synchronous>, transform_indices = @transform_8, window_bounds = array<i64: 1, 16>}, {pipeline_mode = #tpu.pipeline_mode<synchronous>, transform_indices = @transform_9, window_bounds = array<i64: 1, 16>}, {transform_indices = @transform_10, window_bounds = array<i64: 1, 16, 256>}]} {
    %c0 = arith.constant 0 : index
    %c0_0 = arith.constant 0 : index
    %c0_1 = arith.constant 0 : index
    %c0_2 = arith.constant 0 : index
    %0 = vector.load %arg1[%c0, %c0_0, %c0_1, %c0_2] : memref<1x8x8x32xbf16, #tpu.memory_space<vmem>>, vector<1x8x8x32xbf16>
    %1 = vector.shape_cast %0 : vector<1x8x8x32xbf16> to vector<8x8x32xbf16>
    %2 = vector.shape_cast %1 : vector<8x8x32xbf16> to vector<64x32xbf16>
    %c0_3 = arith.constant 0 : index
    %c0_4 = arith.constant 0 : index
    %3 = vector.load %arg3[%c0_3, %c0_4] : memref<32x64xbf16, #tpu.memory_space<vmem>>, vector<32x64xbf16>
    %cst = arith.constant dense<0.000000e+00> : vector<64x64xf32>
    %4 = tpu.matmul %2, %3, %cst {dimension_numbers = #tpu.dot_dimension_numbers<[1], [0], [0], [1], [0, 0, 1, 1], [], []>} : vector<64x32xbf16>, vector<32x64xbf16>, vector<64x64xf32> -> vector<64x64xf32>
    %c0_5 = arith.constant 0 : index
    %c0_6 = arith.constant 0 : index
    %5 = vector.load %arg4[%c0_5, %c0_6] : memref<1x64xf32, #tpu.memory_space<vmem>>, vector<1x64xf32>
    %6 = vector.broadcast %5 : vector<1x64xf32> to vector<64x64xf32>
    %7 = arith.addf %4, %6 : vector<64x64xf32>
    %8 = arith.truncf %7 : vector<64x64xf32> to vector<64x64xbf16>
    %9 = vector.extract_strided_slice %8 {offsets = [0, 0], sizes = [64, 16], strides = [1, 1]} : vector<64x64xbf16> to vector<64x16xbf16>
    %10 = vector.shape_cast %9 : vector<64x16xbf16> to vector<8x8x16xbf16>
    %11 = vector.extract_strided_slice %8 {offsets = [0, 16], sizes = [64, 16], strides = [1, 1]} : vector<64x64xbf16> to vector<64x16xbf16>
    %12 = vector.shape_cast %11 : vector<64x16xbf16> to vector<8x8x16xbf16>
    %13 = vector.extract_strided_slice %8 {offsets = [0, 32], sizes = [64, 16], strides = [1, 1]} : vector<64x64xbf16> to vector<64x16xbf16>
    %14 = vector.shape_cast %13 : vector<64x16xbf16> to vector<8x8x16xbf16>
    %15 = vector.extract_strided_slice %8 {offsets = [0, 48], sizes = [64, 16], strides = [1, 1]} : vector<64x64xbf16> to vector<64x16xbf16>
    %16 = vector.shape_cast %15 : vector<64x16xbf16> to vector<8x8x16xbf16>
    %17 = vector.shape_cast %10 : vector<8x8x16xbf16> to vector<8x8x1x16xbf16>
    %18 = vector.shape_cast %12 : vector<8x8x16xbf16> to vector<8x8x1x16xbf16>
    %19 = tpu.concatenate %17, %18 in 2 : vector<8x8x1x16xbf16>, vector<8x8x1x16xbf16> -> vector<8x8x2x16xbf16>
    %20 = vector.shape_cast %19 : vector<8x8x2x16xbf16> to vector<8x16x16xbf16>
    %21 = vector.shape_cast %14 : vector<8x8x16xbf16> to vector<8x8x1x16xbf16>
    %22 = vector.shape_cast %16 : vector<8x8x16xbf16> to vector<8x8x1x16xbf16>
    %23 = tpu.concatenate %21, %22 in 2 : vector<8x8x1x16xbf16>, vector<8x8x1x16xbf16> -> vector<8x8x2x16xbf16>
    %24 = vector.shape_cast %23 : vector<8x8x2x16xbf16> to vector<8x16x16xbf16>
    %25 = vector.shape_cast %20 : vector<8x16x16xbf16> to vector<8x1x16x16xbf16>
    %26 = vector.shape_cast %24 : vector<8x16x16xbf16> to vector<8x1x16x16xbf16>
    %27 = tpu.concatenate %25, %26 in 1 : vector<8x1x16x16xbf16>, vector<8x1x16x16xbf16> -> vector<8x2x16x16xbf16>
    %28 = vector.shape_cast %27 : vector<8x2x16x16xbf16> to vector<16x16x16xbf16>
    %c0_7 = arith.constant 0 : index
    %c0_8 = arith.constant 0 : index
    %c0_9 = arith.constant 0 : index
    %c0_10 = arith.constant 0 : index
    %29 = vector.load %arg2[%c0_7, %c0_8, %c0_9, %c0_10] : memref<1x16x16x16xbf16, #tpu.memory_space<vmem>>, vector<1x16x16x16xbf16>
    %30 = vector.shape_cast %29 : vector<1x16x16x16xbf16> to vector<16x16x16xbf16>
    %31 = tpu.concatenate %28, %30 in 2 : vector<16x16x16xbf16>, vector<16x16x16xbf16> -> vector<16x16x32xbf16>
    %c0_11 = arith.constant 0 : index
    %c0_12 = arith.constant 0 : index
    %32 = vector.load %arg6[%c0_11, %c0_12] : memref<1x16xf32, #tpu.memory_space<vmem>>, vector<1x16xf32>
    %c0_13 = arith.constant 0 : index
    %c0_14 = arith.constant 0 : index
    %33 = vector.load %arg7[%c0_13, %c0_14] : memref<1x16xf32, #tpu.memory_space<vmem>>, vector<1x16xf32>
    %cst_15 = arith.constant 0.000000e+00 : bf16
    %34 = vector.broadcast %cst_15 : bf16 to vector<1x16x32xbf16>
    %35 = tpu.concatenate %34, %31, %34 in 0 : vector<1x16x32xbf16>, vector<16x16x32xbf16>, vector<1x16x32xbf16> -> vector<18x16x32xbf16>
    %cst_16 = arith.constant 0.000000e+00 : bf16
    %36 = vector.broadcast %cst_16 : bf16 to vector<18x1x32xbf16>
    %37 = tpu.concatenate %36, %35, %36 in 1 : vector<18x1x32xbf16>, vector<18x16x32xbf16>, vector<18x1x32xbf16> -> vector<18x18x32xbf16>
    %cst_17 = arith.constant 0.000000e+00 : f32
    %38 = vector.broadcast %cst_17 : f32 to vector<256x16xf32>
    %39 = vector.extract_strided_slice %37 {offsets = [0, 0, 0], sizes = [16, 16, 32], strides = [1, 1, 1]} : vector<18x18x32xbf16> to vector<16x16x32xbf16>
    %40 = vector.shape_cast %39 : vector<16x16x32xbf16> to vector<256x32xbf16>
    %c0_18 = arith.constant 0 : index
    %c0_19 = arith.constant 0 : index
    %c0_20 = arith.constant 0 : index
    %41 = vector.load %arg5[%c0_18, %c0_19, %c0_20] : memref<9x32x16xbf16, #tpu.memory_space<vmem>>, vector<1x32x16xbf16>
    %42 = vector.shape_cast %41 : vector<1x32x16xbf16> to vector<32x16xbf16>
    %cst_21 = arith.constant dense<0.000000e+00> : vector<256x16xf32>
    %43 = tpu.matmul %40, %42, %cst_21 {dimension_numbers = #tpu.dot_dimension_numbers<[1], [0], [0], [1], [0, 0, 1, 1], [], []>} : vector<256x32xbf16>, vector<32x16xbf16>, vector<256x16xf32> -> vector<256x16xf32>
    %44 = arith.addf %38, %43 : vector<256x16xf32>
    %45 = vector.extract_strided_slice %37 {offsets = [0, 1, 0], sizes = [16, 16, 32], strides = [1, 1, 1]} : vector<18x18x32xbf16> to vector<16x16x32xbf16>
    %46 = vector.shape_cast %45 : vector<16x16x32xbf16> to vector<256x32xbf16>
    %c1 = arith.constant 1 : index
    %c0_22 = arith.constant 0 : index
    %c0_23 = arith.constant 0 : index
    %47 = vector.load %arg5[%c1, %c0_22, %c0_23] : memref<9x32x16xbf16, #tpu.memory_space<vmem>>, vector<1x32x16xbf16>
    %48 = vector.shape_cast %47 : vector<1x32x16xbf16> to vector<32x16xbf16>
    %cst_24 = arith.constant dense<0.000000e+00> : vector<256x16xf32>
    %49 = tpu.matmul %46, %48, %cst_24 {dimension_numbers = #tpu.dot_dimension_numbers<[1], [0], [0], [1], [0, 0, 1, 1], [], []>} : vector<256x32xbf16>, vector<32x16xbf16>, vector<256x16xf32> -> vector<256x16xf32>
    %50 = arith.addf %44, %49 : vector<256x16xf32>
    %51 = vector.extract_strided_slice %37 {offsets = [0, 2, 0], sizes = [16, 16, 32], strides = [1, 1, 1]} : vector<18x18x32xbf16> to vector<16x16x32xbf16>
    %52 = vector.shape_cast %51 : vector<16x16x32xbf16> to vector<256x32xbf16>
    %c2 = arith.constant 2 : index
    %c0_25 = arith.constant 0 : index
    %c0_26 = arith.constant 0 : index
    %53 = vector.load %arg5[%c2, %c0_25, %c0_26] : memref<9x32x16xbf16, #tpu.memory_space<vmem>>, vector<1x32x16xbf16>
    %54 = vector.shape_cast %53 : vector<1x32x16xbf16> to vector<32x16xbf16>
    %cst_27 = arith.constant dense<0.000000e+00> : vector<256x16xf32>
    %55 = tpu.matmul %52, %54, %cst_27 {dimension_numbers = #tpu.dot_dimension_numbers<[1], [0], [0], [1], [0, 0, 1, 1], [], []>} : vector<256x32xbf16>, vector<32x16xbf16>, vector<256x16xf32> -> vector<256x16xf32>
    %56 = arith.addf %50, %55 : vector<256x16xf32>
    %57 = vector.extract_strided_slice %37 {offsets = [1, 0, 0], sizes = [16, 16, 32], strides = [1, 1, 1]} : vector<18x18x32xbf16> to vector<16x16x32xbf16>
    %58 = vector.shape_cast %57 : vector<16x16x32xbf16> to vector<256x32xbf16>
    %c3 = arith.constant 3 : index
    %c0_28 = arith.constant 0 : index
    %c0_29 = arith.constant 0 : index
    %59 = vector.load %arg5[%c3, %c0_28, %c0_29] : memref<9x32x16xbf16, #tpu.memory_space<vmem>>, vector<1x32x16xbf16>
    %60 = vector.shape_cast %59 : vector<1x32x16xbf16> to vector<32x16xbf16>
    %cst_30 = arith.constant dense<0.000000e+00> : vector<256x16xf32>
    %61 = tpu.matmul %58, %60, %cst_30 {dimension_numbers = #tpu.dot_dimension_numbers<[1], [0], [0], [1], [0, 0, 1, 1], [], []>} : vector<256x32xbf16>, vector<32x16xbf16>, vector<256x16xf32> -> vector<256x16xf32>
    %62 = arith.addf %56, %61 : vector<256x16xf32>
    %63 = vector.extract_strided_slice %37 {offsets = [1, 1, 0], sizes = [16, 16, 32], strides = [1, 1, 1]} : vector<18x18x32xbf16> to vector<16x16x32xbf16>
    %64 = vector.shape_cast %63 : vector<16x16x32xbf16> to vector<256x32xbf16>
    %c4 = arith.constant 4 : index
    %c0_31 = arith.constant 0 : index
    %c0_32 = arith.constant 0 : index
    %65 = vector.load %arg5[%c4, %c0_31, %c0_32] : memref<9x32x16xbf16, #tpu.memory_space<vmem>>, vector<1x32x16xbf16>
    %66 = vector.shape_cast %65 : vector<1x32x16xbf16> to vector<32x16xbf16>
    %cst_33 = arith.constant dense<0.000000e+00> : vector<256x16xf32>
    %67 = tpu.matmul %64, %66, %cst_33 {dimension_numbers = #tpu.dot_dimension_numbers<[1], [0], [0], [1], [0, 0, 1, 1], [], []>} : vector<256x32xbf16>, vector<32x16xbf16>, vector<256x16xf32> -> vector<256x16xf32>
    %68 = arith.addf %62, %67 : vector<256x16xf32>
    %69 = vector.extract_strided_slice %37 {offsets = [1, 2, 0], sizes = [16, 16, 32], strides = [1, 1, 1]} : vector<18x18x32xbf16> to vector<16x16x32xbf16>
    %70 = vector.shape_cast %69 : vector<16x16x32xbf16> to vector<256x32xbf16>
    %c5 = arith.constant 5 : index
    %c0_34 = arith.constant 0 : index
    %c0_35 = arith.constant 0 : index
    %71 = vector.load %arg5[%c5, %c0_34, %c0_35] : memref<9x32x16xbf16, #tpu.memory_space<vmem>>, vector<1x32x16xbf16>
    %72 = vector.shape_cast %71 : vector<1x32x16xbf16> to vector<32x16xbf16>
    %cst_36 = arith.constant dense<0.000000e+00> : vector<256x16xf32>
    %73 = tpu.matmul %70, %72, %cst_36 {dimension_numbers = #tpu.dot_dimension_numbers<[1], [0], [0], [1], [0, 0, 1, 1], [], []>} : vector<256x32xbf16>, vector<32x16xbf16>, vector<256x16xf32> -> vector<256x16xf32>
    %74 = arith.addf %68, %73 : vector<256x16xf32>
    %75 = vector.extract_strided_slice %37 {offsets = [2, 0, 0], sizes = [16, 16, 32], strides = [1, 1, 1]} : vector<18x18x32xbf16> to vector<16x16x32xbf16>
    %76 = vector.shape_cast %75 : vector<16x16x32xbf16> to vector<256x32xbf16>
    %c6 = arith.constant 6 : index
    %c0_37 = arith.constant 0 : index
    %c0_38 = arith.constant 0 : index
    %77 = vector.load %arg5[%c6, %c0_37, %c0_38] : memref<9x32x16xbf16, #tpu.memory_space<vmem>>, vector<1x32x16xbf16>
    %78 = vector.shape_cast %77 : vector<1x32x16xbf16> to vector<32x16xbf16>
    %cst_39 = arith.constant dense<0.000000e+00> : vector<256x16xf32>
    %79 = tpu.matmul %76, %78, %cst_39 {dimension_numbers = #tpu.dot_dimension_numbers<[1], [0], [0], [1], [0, 0, 1, 1], [], []>} : vector<256x32xbf16>, vector<32x16xbf16>, vector<256x16xf32> -> vector<256x16xf32>
    %80 = arith.addf %74, %79 : vector<256x16xf32>
    %81 = vector.extract_strided_slice %37 {offsets = [2, 1, 0], sizes = [16, 16, 32], strides = [1, 1, 1]} : vector<18x18x32xbf16> to vector<16x16x32xbf16>
    %82 = vector.shape_cast %81 : vector<16x16x32xbf16> to vector<256x32xbf16>
    %c7 = arith.constant 7 : index
    %c0_40 = arith.constant 0 : index
    %c0_41 = arith.constant 0 : index
    %83 = vector.load %arg5[%c7, %c0_40, %c0_41] : memref<9x32x16xbf16, #tpu.memory_space<vmem>>, vector<1x32x16xbf16>
    %84 = vector.shape_cast %83 : vector<1x32x16xbf16> to vector<32x16xbf16>
    %cst_42 = arith.constant dense<0.000000e+00> : vector<256x16xf32>
    %85 = tpu.matmul %82, %84, %cst_42 {dimension_numbers = #tpu.dot_dimension_numbers<[1], [0], [0], [1], [0, 0, 1, 1], [], []>} : vector<256x32xbf16>, vector<32x16xbf16>, vector<256x16xf32> -> vector<256x16xf32>
    %86 = arith.addf %80, %85 : vector<256x16xf32>
    %87 = vector.extract_strided_slice %37 {offsets = [2, 2, 0], sizes = [16, 16, 32], strides = [1, 1, 1]} : vector<18x18x32xbf16> to vector<16x16x32xbf16>
    %88 = vector.shape_cast %87 : vector<16x16x32xbf16> to vector<256x32xbf16>
    %c8 = arith.constant 8 : index
    %c0_43 = arith.constant 0 : index
    %c0_44 = arith.constant 0 : index
    %89 = vector.load %arg5[%c8, %c0_43, %c0_44] : memref<9x32x16xbf16, #tpu.memory_space<vmem>>, vector<1x32x16xbf16>
    %90 = vector.shape_cast %89 : vector<1x32x16xbf16> to vector<32x16xbf16>
    %cst_45 = arith.constant dense<0.000000e+00> : vector<256x16xf32>
    %91 = tpu.matmul %88, %90, %cst_45 {dimension_numbers = #tpu.dot_dimension_numbers<[1], [0], [0], [1], [0, 0, 1, 1], [], []>} : vector<256x32xbf16>, vector<32x16xbf16>, vector<256x16xf32> -> vector<256x16xf32>
    %92 = arith.addf %86, %91 : vector<256x16xf32>
    %93 = vector.broadcast %32 : vector<1x16xf32> to vector<256x16xf32>
    %94 = arith.mulf %92, %93 : vector<256x16xf32>
    %95 = vector.broadcast %33 : vector<1x16xf32> to vector<256x16xf32>
    %96 = arith.addf %94, %95 : vector<256x16xf32>
    %cst_46 = arith.constant 0.000000e+00 : f32
    %97 = vector.broadcast %cst_46 : f32 to vector<256x16xf32>
    %98 = arith.maximumf %96, %97 : vector<256x16xf32>
    %99 = arith.truncf %98 : vector<256x16xf32> to vector<256x16xbf16>
    %100 = vector.shape_cast %99 : vector<256x16xbf16> to vector<16x16x16xbf16>
    %c0_47 = arith.constant 0 : index
    %c0_48 = arith.constant 0 : index
    %101 = vector.load %arg9[%c0_47, %c0_48] : memref<1x16xf32, #tpu.memory_space<vmem>>, vector<1x16xf32>
    %c0_49 = arith.constant 0 : index
    %c0_50 = arith.constant 0 : index
    %102 = vector.load %arg10[%c0_49, %c0_50] : memref<1x16xf32, #tpu.memory_space<vmem>>, vector<1x16xf32>
    %cst_51 = arith.constant 0.000000e+00 : bf16
    %103 = vector.broadcast %cst_51 : bf16 to vector<1x16x16xbf16>
    %104 = tpu.concatenate %103, %100, %103 in 0 : vector<1x16x16xbf16>, vector<16x16x16xbf16>, vector<1x16x16xbf16> -> vector<18x16x16xbf16>
    %cst_52 = arith.constant 0.000000e+00 : bf16
    %105 = vector.broadcast %cst_52 : bf16 to vector<18x1x16xbf16>
    %106 = tpu.concatenate %105, %104, %105 in 1 : vector<18x1x16xbf16>, vector<18x16x16xbf16>, vector<18x1x16xbf16> -> vector<18x18x16xbf16>
    %cst_53 = arith.constant 0.000000e+00 : f32
    %107 = vector.broadcast %cst_53 : f32 to vector<256x16xf32>
    %108 = vector.extract_strided_slice %106 {offsets = [0, 0, 0], sizes = [16, 16, 16], strides = [1, 1, 1]} : vector<18x18x16xbf16> to vector<16x16x16xbf16>
    %109 = vector.shape_cast %108 : vector<16x16x16xbf16> to vector<256x16xbf16>
    %c0_54 = arith.constant 0 : index
    %c0_55 = arith.constant 0 : index
    %c0_56 = arith.constant 0 : index
    %110 = vector.load %arg8[%c0_54, %c0_55, %c0_56] : memref<9x16x16xbf16, #tpu.memory_space<vmem>>, vector<1x16x16xbf16>
    %111 = vector.shape_cast %110 : vector<1x16x16xbf16> to vector<16x16xbf16>
    %cst_57 = arith.constant dense<0.000000e+00> : vector<256x16xf32>
    %112 = tpu.matmul %109, %111, %cst_57 {dimension_numbers = #tpu.dot_dimension_numbers<[1], [0], [0], [1], [0, 0, 1, 1], [], []>} : vector<256x16xbf16>, vector<16x16xbf16>, vector<256x16xf32> -> vector<256x16xf32>
    %113 = arith.addf %107, %112 : vector<256x16xf32>
    %114 = vector.extract_strided_slice %106 {offsets = [0, 1, 0], sizes = [16, 16, 16], strides = [1, 1, 1]} : vector<18x18x16xbf16> to vector<16x16x16xbf16>
    %115 = vector.shape_cast %114 : vector<16x16x16xbf16> to vector<256x16xbf16>
    %c1_58 = arith.constant 1 : index
    %c0_59 = arith.constant 0 : index
    %c0_60 = arith.constant 0 : index
    %116 = vector.load %arg8[%c1_58, %c0_59, %c0_60] : memref<9x16x16xbf16, #tpu.memory_space<vmem>>, vector<1x16x16xbf16>
    %117 = vector.shape_cast %116 : vector<1x16x16xbf16> to vector<16x16xbf16>
    %cst_61 = arith.constant dense<0.000000e+00> : vector<256x16xf32>
    %118 = tpu.matmul %115, %117, %cst_61 {dimension_numbers = #tpu.dot_dimension_numbers<[1], [0], [0], [1], [0, 0, 1, 1], [], []>} : vector<256x16xbf16>, vector<16x16xbf16>, vector<256x16xf32> -> vector<256x16xf32>
    %119 = arith.addf %113, %118 : vector<256x16xf32>
    %120 = vector.extract_strided_slice %106 {offsets = [0, 2, 0], sizes = [16, 16, 16], strides = [1, 1, 1]} : vector<18x18x16xbf16> to vector<16x16x16xbf16>
    %121 = vector.shape_cast %120 : vector<16x16x16xbf16> to vector<256x16xbf16>
    %c2_62 = arith.constant 2 : index
    %c0_63 = arith.constant 0 : index
    %c0_64 = arith.constant 0 : index
    %122 = vector.load %arg8[%c2_62, %c0_63, %c0_64] : memref<9x16x16xbf16, #tpu.memory_space<vmem>>, vector<1x16x16xbf16>
    %123 = vector.shape_cast %122 : vector<1x16x16xbf16> to vector<16x16xbf16>
    %cst_65 = arith.constant dense<0.000000e+00> : vector<256x16xf32>
    %124 = tpu.matmul %121, %123, %cst_65 {dimension_numbers = #tpu.dot_dimension_numbers<[1], [0], [0], [1], [0, 0, 1, 1], [], []>} : vector<256x16xbf16>, vector<16x16xbf16>, vector<256x16xf32> -> vector<256x16xf32>
    %125 = arith.addf %119, %124 : vector<256x16xf32>
    %126 = vector.extract_strided_slice %106 {offsets = [1, 0, 0], sizes = [16, 16, 16], strides = [1, 1, 1]} : vector<18x18x16xbf16> to vector<16x16x16xbf16>
    %127 = vector.shape_cast %126 : vector<16x16x16xbf16> to vector<256x16xbf16>
    %c3_66 = arith.constant 3 : index
    %c0_67 = arith.constant 0 : index
    %c0_68 = arith.constant 0 : index
    %128 = vector.load %arg8[%c3_66, %c0_67, %c0_68] : memref<9x16x16xbf16, #tpu.memory_space<vmem>>, vector<1x16x16xbf16>
    %129 = vector.shape_cast %128 : vector<1x16x16xbf16> to vector<16x16xbf16>
    %cst_69 = arith.constant dense<0.000000e+00> : vector<256x16xf32>
    %130 = tpu.matmul %127, %129, %cst_69 {dimension_numbers = #tpu.dot_dimension_numbers<[1], [0], [0], [1], [0, 0, 1, 1], [], []>} : vector<256x16xbf16>, vector<16x16xbf16>, vector<256x16xf32> -> vector<256x16xf32>
    %131 = arith.addf %125, %130 : vector<256x16xf32>
    %132 = vector.extract_strided_slice %106 {offsets = [1, 1, 0], sizes = [16, 16, 16], strides = [1, 1, 1]} : vector<18x18x16xbf16> to vector<16x16x16xbf16>
    %133 = vector.shape_cast %132 : vector<16x16x16xbf16> to vector<256x16xbf16>
    %c4_70 = arith.constant 4 : index
    %c0_71 = arith.constant 0 : index
    %c0_72 = arith.constant 0 : index
    %134 = vector.load %arg8[%c4_70, %c0_71, %c0_72] : memref<9x16x16xbf16, #tpu.memory_space<vmem>>, vector<1x16x16xbf16>
    %135 = vector.shape_cast %134 : vector<1x16x16xbf16> to vector<16x16xbf16>
    %cst_73 = arith.constant dense<0.000000e+00> : vector<256x16xf32>
    %136 = tpu.matmul %133, %135, %cst_73 {dimension_numbers = #tpu.dot_dimension_numbers<[1], [0], [0], [1], [0, 0, 1, 1], [], []>} : vector<256x16xbf16>, vector<16x16xbf16>, vector<256x16xf32> -> vector<256x16xf32>
    %137 = arith.addf %131, %136 : vector<256x16xf32>
    %138 = vector.extract_strided_slice %106 {offsets = [1, 2, 0], sizes = [16, 16, 16], strides = [1, 1, 1]} : vector<18x18x16xbf16> to vector<16x16x16xbf16>
    %139 = vector.shape_cast %138 : vector<16x16x16xbf16> to vector<256x16xbf16>
    %c5_74 = arith.constant 5 : index
    %c0_75 = arith.constant 0 : index
    %c0_76 = arith.constant 0 : index
    %140 = vector.load %arg8[%c5_74, %c0_75, %c0_76] : memref<9x16x16xbf16, #tpu.memory_space<vmem>>, vector<1x16x16xbf16>
    %141 = vector.shape_cast %140 : vector<1x16x16xbf16> to vector<16x16xbf16>
    %cst_77 = arith.constant dense<0.000000e+00> : vector<256x16xf32>
    %142 = tpu.matmul %139, %141, %cst_77 {dimension_numbers = #tpu.dot_dimension_numbers<[1], [0], [0], [1], [0, 0, 1, 1], [], []>} : vector<256x16xbf16>, vector<16x16xbf16>, vector<256x16xf32> -> vector<256x16xf32>
    %143 = arith.addf %137, %142 : vector<256x16xf32>
    %144 = vector.extract_strided_slice %106 {offsets = [2, 0, 0], sizes = [16, 16, 16], strides = [1, 1, 1]} : vector<18x18x16xbf16> to vector<16x16x16xbf16>
    %145 = vector.shape_cast %144 : vector<16x16x16xbf16> to vector<256x16xbf16>
    %c6_78 = arith.constant 6 : index
    %c0_79 = arith.constant 0 : index
    %c0_80 = arith.constant 0 : index
    %146 = vector.load %arg8[%c6_78, %c0_79, %c0_80] : memref<9x16x16xbf16, #tpu.memory_space<vmem>>, vector<1x16x16xbf16>
    %147 = vector.shape_cast %146 : vector<1x16x16xbf16> to vector<16x16xbf16>
    %cst_81 = arith.constant dense<0.000000e+00> : vector<256x16xf32>
    %148 = tpu.matmul %145, %147, %cst_81 {dimension_numbers = #tpu.dot_dimension_numbers<[1], [0], [0], [1], [0, 0, 1, 1], [], []>} : vector<256x16xbf16>, vector<16x16xbf16>, vector<256x16xf32> -> vector<256x16xf32>
    %149 = arith.addf %143, %148 : vector<256x16xf32>
    %150 = vector.extract_strided_slice %106 {offsets = [2, 1, 0], sizes = [16, 16, 16], strides = [1, 1, 1]} : vector<18x18x16xbf16> to vector<16x16x16xbf16>
    %151 = vector.shape_cast %150 : vector<16x16x16xbf16> to vector<256x16xbf16>
    %c7_82 = arith.constant 7 : index
    %c0_83 = arith.constant 0 : index
    %c0_84 = arith.constant 0 : index
    %152 = vector.load %arg8[%c7_82, %c0_83, %c0_84] : memref<9x16x16xbf16, #tpu.memory_space<vmem>>, vector<1x16x16xbf16>
    %153 = vector.shape_cast %152 : vector<1x16x16xbf16> to vector<16x16xbf16>
    %cst_85 = arith.constant dense<0.000000e+00> : vector<256x16xf32>
    %154 = tpu.matmul %151, %153, %cst_85 {dimension_numbers = #tpu.dot_dimension_numbers<[1], [0], [0], [1], [0, 0, 1, 1], [], []>} : vector<256x16xbf16>, vector<16x16xbf16>, vector<256x16xf32> -> vector<256x16xf32>
    %155 = arith.addf %149, %154 : vector<256x16xf32>
    %156 = vector.extract_strided_slice %106 {offsets = [2, 2, 0], sizes = [16, 16, 16], strides = [1, 1, 1]} : vector<18x18x16xbf16> to vector<16x16x16xbf16>
    %157 = vector.shape_cast %156 : vector<16x16x16xbf16> to vector<256x16xbf16>
    %c8_86 = arith.constant 8 : index
    %c0_87 = arith.constant 0 : index
    %c0_88 = arith.constant 0 : index
    %158 = vector.load %arg8[%c8_86, %c0_87, %c0_88] : memref<9x16x16xbf16, #tpu.memory_space<vmem>>, vector<1x16x16xbf16>
    %159 = vector.shape_cast %158 : vector<1x16x16xbf16> to vector<16x16xbf16>
    %cst_89 = arith.constant dense<0.000000e+00> : vector<256x16xf32>
    %160 = tpu.matmul %157, %159, %cst_89 {dimension_numbers = #tpu.dot_dimension_numbers<[1], [0], [0], [1], [0, 0, 1, 1], [], []>} : vector<256x16xbf16>, vector<16x16xbf16>, vector<256x16xf32> -> vector<256x16xf32>
    %161 = arith.addf %155, %160 : vector<256x16xf32>
    %162 = vector.broadcast %101 : vector<1x16xf32> to vector<256x16xf32>
    %163 = arith.mulf %161, %162 : vector<256x16xf32>
    %164 = vector.broadcast %102 : vector<1x16xf32> to vector<256x16xf32>
    %165 = arith.addf %163, %164 : vector<256x16xf32>
    %cst_90 = arith.constant 0.000000e+00 : f32
    %166 = vector.broadcast %cst_90 : f32 to vector<256x16xf32>
    %167 = arith.maximumf %165, %166 : vector<256x16xf32>
    %168 = tpu.transpose %167, [1, 0] : vector<256x16xf32> -> vector<16x256xf32>
    %169 = arith.truncf %168 : vector<16x256xf32> to vector<16x256xbf16>
    %c0_91 = arith.constant 0 : index
    %c0_92 = arith.constant 0 : index
    %c0_93 = arith.constant 0 : index
    %170 = vector.load %arg11[%c0_91, %c0_92, %c0_93] : memref<1x16x256xbf16, #tpu.memory_space<vmem>>, vector<1x16x256xbf16>
    %171 = vector.shape_cast %170 : vector<1x16x256xbf16> to vector<16x256xbf16>
    %172 = vector.shape_cast %169 : vector<16x256xbf16> to vector<1x16x256xbf16>
    tpu.vector_store %arg11[%c0_91, %c0_92, %c0_93], %172 {strides = array<i32>} : memref<1x16x256xbf16, #tpu.memory_space<vmem>>, vector<1x16x256xbf16>,
    return
  }
  func.func @transform_0(%arg0: i32) -> (i32, i32, i32, i32) {
    %c0_i32 = arith.constant 0 : i32
    %c0_i32_0 = arith.constant 0 : i32
    %c0_i32_1 = arith.constant 0 : i32
    %c0_i32_2 = arith.constant 0 : i32
    return %arg0, %c0_i32, %c0_i32_0, %c0_i32_1 : i32, i32, i32, i32
  }
  func.func @transform_1(%arg0: i32) -> (i32, i32, i32, i32) {
    %c0_i32 = arith.constant 0 : i32
    %c0_i32_0 = arith.constant 0 : i32
    %c0_i32_1 = arith.constant 0 : i32
    %c0_i32_2 = arith.constant 0 : i32
    return %arg0, %c0_i32, %c0_i32_0, %c0_i32_1 : i32, i32, i32, i32
  }
  func.func @transform_2(%arg0: i32) -> (i32, i32) {
    %c0_i32 = arith.constant 0 : i32
    %c0_i32_0 = arith.constant 0 : i32
    %c0_i32_1 = arith.constant 0 : i32
    return %c0_i32, %c0_i32_0 : i32, i32
  }
  func.func @transform_3(%arg0: i32) -> (i32, i32) {
    %c0_i32 = arith.constant 0 : i32
    %c0_i32_0 = arith.constant 0 : i32
    %c0_i32_1 = arith.constant 0 : i32
    return %c0_i32, %c0_i32_0 : i32, i32
  }
  func.func @transform_4(%arg0: i32) -> (i32, i32, i32) {
    %c0_i32 = arith.constant 0 : i32
    %c0_i32_0 = arith.constant 0 : i32
    %c0_i32_1 = arith.constant 0 : i32
    %c0_i32_2 = arith.constant 0 : i32
    return %c0_i32, %c0_i32_0, %c0_i32_1 : i32, i32, i32
  }
  func.func @transform_5(%arg0: i32) -> (i32, i32) {
    %c0_i32 = arith.constant 0 : i32
    %c0_i32_0 = arith.constant 0 : i32
    %c0_i32_1 = arith.constant 0 : i32
    return %c0_i32, %c0_i32_0 : i32, i32
  }
  func.func @transform_6(%arg0: i32) -> (i32, i32) {
    %c0_i32 = arith.constant 0 : i32
    %c0_i32_0 = arith.constant 0 : i32
    %c0_i32_1 = arith.constant 0 : i32
    return %c0_i32, %c0_i32_0 : i32, i32
  }
  func.func @transform_7(%arg0: i32) -> (i32, i32, i32) {
    %c0_i32 = arith.constant 0 : i32
    %c0_i32_0 = arith.constant 0 : i32
    %c0_i32_1 = arith.constant 0 : i32
    %c0_i32_2 = arith.constant 0 : i32
    return %c0_i32, %c0_i32_0, %c0_i32_1 : i32, i32, i32
  }
  func.func @transform_8(%arg0: i32) -> (i32, i32) {
    %c0_i32 = arith.constant 0 : i32
    %c0_i32_0 = arith.constant 0 : i32
    %c0_i32_1 = arith.constant 0 : i32
    return %c0_i32, %c0_i32_0 : i32, i32
  }
  func.func @transform_9(%arg0: i32) -> (i32, i32) {
    %c0_i32 = arith.constant 0 : i32
    %c0_i32_0 = arith.constant 0 : i32
    %c0_i32_1 = arith.constant 0 : i32
    return %c0_i32, %c0_i32_0 : i32, i32
  }
  func.func @transform_10(%arg0: i32) -> (i32, i32, i32) {
    %c0_i32 = arith.constant 0 : i32
    %c0_i32_0 = arith.constant 0 : i32
    %c0_i32_1 = arith.constant 0 : i32
    return %arg0, %c0_i32, %c0_i32_0 : i32, i32, i32
  }
}

</mosaic_0001>

<llo_original>
// kernel: _upsample_impl.1
$region0: #{_upsample_impl.1}
  #allocation0 [shape = 'u32[]', space=smem, size = 0x4, offset = 0x4, fixed_abs, tag = 'smem constant byte address 0x4 - core index']
  #allocation1 [shape = 'u32[72,128]{1,0:T(1,128)}', space=vmem, size = 0x9000, scoped, tag = 'internal scratch']
  %s0 = inlined_call_operand.vmem [shape: bf16[2,8,8,32], index: 0, kind: input, shape index: {}]
  %s1 = inlined_call_operand.vmem [shape: bf16[2,16,16,16], index: 1, kind: input, shape index: {}]
  %s2 = inlined_call_operand.vmem [shape: bf16[32,64], index: 2, kind: input, shape index: {}]
  %s3 = inlined_call_operand.vmem [shape: f32[1,64], index: 3, kind: input, shape index: {}]
  %s4 = inlined_call_operand.vmem [shape: bf16[9,32,16], index: 4, kind: input, shape index: {}]
  %s5 = inlined_call_operand.vmem [shape: f32[1,16], index: 5, kind: input, shape index: {}]
  %s6 = inlined_call_operand.vmem [shape: f32[1,16], index: 6, kind: input, shape index: {}]
  %s7 = inlined_call_operand.vmem [shape: bf16[9,16,16], index: 7, kind: input, shape index: {}]
  %s8 = inlined_call_operand.vmem [shape: f32[1,16], index: 8, kind: input, shape index: {}]
  %s9 = inlined_call_operand.vmem [shape: f32[1,16], index: 9, kind: input, shape index: {}]
  %s10 = inlined_call_operand.vmem [shape: bf16[2,16,256], index: 10, kind: output, shape index: {}]
  %s11 = sld [smem:[#allocation0]]
  $region73: #{_upsample_impl.1} parent=0
    _
  %s13 = ssub.s32 1, %s11
  %s14 = scalar_select 0, %s13, %s11
  loop: start=0, step=1, limit=4
  $region2: #{_upsample_impl.1} parent=0 // loop_pre_header
    _
  $region3: #{_upsample_impl.1} parent=0 // loop_header
    %s16 = sphi 0, %s20
    %p17 = scmp.ge.s32.totalorder %s16, 4
    %s26 = sphi 0, %s28
    %s29 = sphi 0, %s26
    %s30 = sphi 0, %s29
    %s46 = sphi 0, %s30
    %s52 = sphi 0, %s54
    %s55 = sphi 0, %s52
    %s56 = sphi 0, %s55
    %s72 = sphi 0, %s56
    %s76 = sphi 0, %s76
    %s78 = sphi 0, %s76
    %s79 = sphi 0, %s78
    %s93 = sphi 0, %s79
    %s97 = sphi 0, %s97
    %s99 = sphi 0, %s97
    %s100 = sphi 0, %s99
    %s114 = sphi 0, %s100
    %s118 = sphi 0, %s118
    %s120 = sphi 0, %s118
    %s121 = sphi 0, %s120
    %s135 = sphi 0, %s121
    %s139 = sphi 0, %s139
    %s141 = sphi 0, %s139
    %s142 = sphi 0, %s141
    %s156 = sphi 0, %s142
    %s160 = sphi 0, %s160
    %s162 = sphi 0, %s160
    %s163 = sphi 0, %s162
    %s177 = sphi 0, %s163
    %s181 = sphi 0, %s181
    %s183 = sphi 0, %s181
    %s184 = sphi 0, %s183
    %s198 = sphi 0, %s184
    %s202 = sphi 0, %s202
    %s204 = sphi 0, %s202
    %s205 = sphi 0, %s204
    %s219 = sphi 0, %s205
    %s223 = sphi 0, %s223
    %s225 = sphi 0, %s223
    %s226 = sphi 0, %s225
    %s240 = sphi 0, %s226
    %s246 = sphi 0, %s248
    %s249 = sphi 0, %s246
    %s250 = sphi 0, %s249
    %s266 = sphi 0, %s250
  $region4: #{_upsample_impl.1} parent=0 // loop_header_branch
    %19 = sbr.rel (%p17) target = $region8
  $region5: #{_upsample_impl.1} parent=0 // loop_body
    %s21 = ssub.s32 %s16, 1
    %s22 = ssub.s32 %s16, 2
    %s23 = sadd.s32 %s16, 1
    %s24 = ssub.s32 %s16, %s23
    %p25 = scmp.eq.s32.totalorder %s24, 0
    %s27 = sadd.s32 %s26, 1
    %s28 = scalar_select %p25, %s26, %s27
    %p31 = pneg %p25
    %p32 = scmp.eq.s32.totalorder %s16, 1
    %p33 = por %p31, %p32
    %p34 = scmp.ne.s32.totalorder %s26, %s29
    %p35 = scmp.eq.s32.totalorder %s16, 0
    %p36 = por %p34, %p35
    %p37 = scmp.ne.s32.totalorder %s26, %s29
    %p38 = scmp.eq.s32.totalorder %s21, 1
    %p39 = por %p37, %p38
    %p40 = scmp.ne.s32.totalorder %s29, %s30
    %p41 = scmp.eq.s32.totalorder %s21, 0
    %p42 = por %p40, %p41
    %p43 = scmp.ne.s32.totalorder %s29, %s30
    %p44 = scmp.eq.s32.totalorder %s22, 1
    %p45 = por %p43, %p44
    %p47 = scmp.ne.s32.totalorder %s30, %s46
    %p48 = scmp.eq.s32.totalorder %s22, 0
    %p49 = por %p47, %p48
    %s50 = ssub.s32 %s16, %s23
    %p51 = scmp.eq.s32.totalorder %s50, 0
    %s53 = sadd.s32 %s52, 1
    %s54 = scalar_select %p51, %s52, %s53
    %p57 = pneg %p51
    %p58 = scmp.eq.s32.totalorder %s16, 1
    %p59 = por %p57, %p58
    %p60 = scmp.ne.s32.totalorder %s52, %s55
    %p61 = scmp.eq.s32.totalorder %s16, 0
    %p62 = por %p60, %p61
    %p63 = scmp.ne.s32.totalorder %s52, %s55
    %p64 = scmp.eq.s32.totalorder %s21, 1
    %p65 = por %p63, %p64
    %p66 = scmp.ne.s32.totalorder %s55, %s56
    %p67 = scmp.eq.s32.totalorder %s21, 0
    %p68 = por %p66, %p67
    %p69 = scmp.ne.s32.totalorder %s55, %s56
    %p70 = scmp.eq.s32.totalorder %s22, 1
    %p71 = por %p69, %p70
    %p73 = scmp.ne.s32.totalorder %s56, %s72
    %p74 = scmp.eq.s32.totalorder %s22, 0
    %p75 = por %p73, %p74
    %s77 = sadd.s32 %s76, 1
    %p80 = scmp.eq.s32.totalorder %s16, 1
    %p81 = scmp.ne.s32.totalorder %s76, %s78
    %p82 = scmp.eq.s32.totalorder %s16, 0
    %p83 = por %p81, %p82
    %p84 = scmp.ne.s32.totalorder %s76, %s78
    %p85 = scmp.eq.s32.totalorder %s21, 1
    %p86 = por %p84, %p85
    %p87 = scmp.ne.s32.totalorder %s78, %s79
    %p88 = scmp.eq.s32.totalorder %s21, 0
    %p89 = por %p87, %p88
    %p90 = scmp.ne.s32.totalorder %s78, %s79
    %p91 = scmp.eq.s32.totalorder %s22, 1
    %p92 = por %p90, %p91
    %p94 = scmp.ne.s32.totalorder %s79, %s93
    %p95 = scmp.eq.s32.totalorder %s22, 0
    %p96 = por %p94, %p95
    %s98 = sadd.s32 %s97, 1
    %p101 = scmp.eq.s32.totalorder %s16, 1
    %p102 = scmp.ne.s32.totalorder %s97, %s99
    %p103 = scmp.eq.s32.totalorder %s16, 0
    %p104 = por %p102, %p103
    %p105 = scmp.ne.s32.totalorder %s97, %s99
    %p106 = scmp.eq.s32.totalorder %s21, 1
    %p107 = por %p105, %p106
    %p108 = scmp.ne.s32.totalorder %s99, %s100
    %p109 = scmp.eq.s32.totalorder %s21, 0
    %p110 = por %p108, %p109
    %p111 = scmp.ne.s32.totalorder %s99, %s100
    %p112 = scmp.eq.s32.totalorder %s22, 1
    %p113 = por %p111, %p112
    %p115 = scmp.ne.s32.totalorder %s100, %s114
    %p116 = scmp.eq.s32.totalorder %s22, 0
    %p117 = por %p115, %p116
    %s119 = sadd.s32 %s118, 1
    %p122 = scmp.eq.s32.totalorder %s16, 1
    %p123 = scmp.ne.s32.totalorder %s118, %s120
    %p124 = scmp.eq.s32.totalorder %s16, 0
    %p125 = por %p123, %p124
    %p126 = scmp.ne.s32.totalorder %s118, %s120
    %p127 = scmp.eq.s32.totalorder %s21, 1
    %p128 = por %p126, %p127
    %p129 = scmp.ne.s32.totalorder %s120, %s121
    %p130 = scmp.eq.s32.totalorder %s21, 0
    %p131 = por %p129, %p130
    %p132 = scmp.ne.s32.totalorder %s120, %s121
    %p133 = scmp.eq.s32.totalorder %s22, 1
    %p134 = por %p132, %p133
    %p136 = scmp.ne.s32.totalorder %s121, %s135
    %p137 = scmp.eq.s32.totalorder %s22, 0
    %p138 = por %p136, %p137
    %s140 = sadd.s32 %s139, 1
    %p143 = scmp.eq.s32.totalorder %s16, 1
    %p144 = scmp.ne.s32.totalorder %s139, %s141
    %p145 = scmp.eq.s32.totalorder %s16, 0
    %p146 = por %p144, %p145
    %p147 = scmp.ne.s32.totalorder %s139, %s141
    %p148 = scmp.eq.s32.totalorder %s21, 1
    %p149 = por %p147, %p148
    %p150 = scmp.ne.s32.totalorder %s141, %s142
    %p151 = scmp.eq.s32.totalorder %s21, 0
    %p152 = por %p150, %p151
    %p153 = scmp.ne.s32.totalorder %s141, %s142
    %p154 = scmp.eq.s32.totalorder %s22, 1
    %p155 = por %p153, %p154
    %p157 = scmp.ne.s32.totalorder %s142, %s156
    %p158 = scmp.eq.s32.totalorder %s22, 0
    %p159 = por %p157, %p158
    %s161 = sadd.s32 %s160, 1
    %p164 = scmp.eq.s32.totalorder %s16, 1
    %p165 = scmp.ne.s32.totalorder %s160, %s162
    %p166 = scmp.eq.s32.totalorder %s16, 0
    %p167 = por %p165, %p166
    %p168 = scmp.ne.s32.totalorder %s160, %s162
    %p169 = scmp.eq.s32.totalorder %s21, 1
    %p170 = por %p168, %p169
    %p171 = scmp.ne.s32.totalorder %s162, %s163
    %p172 = scmp.eq.s32.totalorder %s21, 0
    %p173 = por %p171, %p172
    %p174 = scmp.ne.s32.totalorder %s162, %s163
    %p175 = scmp.eq.s32.totalorder %s22, 1
    %p176 = por %p174, %p175
    %p178 = scmp.ne.s32.totalorder %s163, %s177
    %p179 = scmp.eq.s32.totalorder %s22, 0
    %p180 = por %p178, %p179
    %s182 = sadd.s32 %s181, 1
    %p185 = scmp.eq.s32.totalorder %s16, 1
    %p186 = scmp.ne.s32.totalorder %s181, %s183
    %p187 = scmp.eq.s32.totalorder %s16, 0
    %p188 = por %p186, %p187
    %p189 = scmp.ne.s32.totalorder %s181, %s183
    %p190 = scmp.eq.s32.totalorder %s21, 1
    %p191 = por %p189, %p190
    %p192 = scmp.ne.s32.totalorder %s183, %s184
    %p193 = scmp.eq.s32.totalorder %s21, 0
    %p194 = por %p192, %p193
    %p195 = scmp.ne.s32.totalorder %s183, %s184
    %p196 = scmp.eq.s32.totalorder %s22, 1
    %p197 = por %p195, %p196
    %p199 = scmp.ne.s32.totalorder %s184, %s198
    %p200 = scmp.eq.s32.totalorder %s22, 0
    %p201 = por %p199, %p200
    %s203 = sadd.s32 %s202, 1
    %p206 = scmp.eq.s32.totalorder %s16, 1
    %p207 = scmp.ne.s32.totalorder %s202, %s204
    %p208 = scmp.eq.s32.totalorder %s16, 0
    %p209 = por %p207, %p208
    %p210 = scmp.ne.s32.totalorder %s202, %s204
    %p211 = scmp.eq.s32.totalorder %s21, 1
    %p212 = por %p210, %p211
    %p213 = scmp.ne.s32.totalorder %s204, %s205
    %p214 = scmp.eq.s32.totalorder %s21, 0
    %p215 = por %p213, %p214
    %p216 = scmp.ne.s32.totalorder %s204, %s205
    %p217 = scmp.eq.s32.totalorder %s22, 1
    %p218 = por %p216, %p217
    %p220 = scmp.ne.s32.totalorder %s205, %s219
    %p221 = scmp.eq.s32.totalorder %s22, 0
    %p222 = por %p220, %p221
    %s224 = sadd.s32 %s223, 1
    %p227 = scmp.eq.s32.totalorder %s16, 1
    %p228 = scmp.ne.s32.totalorder %s223, %s225
    %p229 = scmp.eq.s32.totalorder %s16, 0
    %p230 = por %p228, %p229
    %p231 = scmp.ne.s32.totalorder %s223, %s225
    %p232 = scmp.eq.s32.totalorder %s21, 1
    %p233 = por %p231, %p232
    %p234 = scmp.ne.s32.totalorder %s225, %s226
    %p235 = scmp.eq.s32.totalorder %s21, 0
    %p236 = por %p234, %p235
    %p237 = scmp.ne.s32.totalorder %s225, %s226
    %p238 = scmp.eq.s32.totalorder %s22, 1
    %p239 = por %p237, %p238
    %p241 = scmp.ne.s32.totalorder %s226, %s240
    %p242 = scmp.eq.s32.totalorder %s22, 0
    %p243 = por %p241, %p242
    %s244 = ssub.s32 %s16, %s23
    %p245 = scmp.eq.s32.totalorder %s244, 0
    %s247 = sadd.s32 %s246, 1
    %s248 = scalar_select %p245, %s246, %s247
    %p251 = pneg %p245
    %p252 = scmp.eq.s32.totalorder %s16, 1
    %p253 = por %p251, %p252
    %p254 = scmp.ne.s32.totalorder %s246, %s249
    %p255 = scmp.eq.s32.totalorder %s16, 0
    %p256 = por %p254, %p255
    %p257 = scmp.ne.s32.totalorder %s246, %s249
    %p258 = scmp.eq.s32.totalorder %s21, 1
    %p259 = por %p257, %p258
    %p260 = scmp.ne.s32.totalorder %s249, %s250
    %p261 = scmp.eq.s32.totalorder %s21, 0
    %p262 = por %p260, %p261
    %p263 = scmp.ne.s32.totalorder %s249, %s250
    %p264 = scmp.eq.s32.totalorder %s22, 1
    %p265 = por %p263, %p264
    %p267 = scmp.ne.s32.totalorder %s250, %s266
    %p268 = scmp.eq.s32.totalorder %s22, 0
    %p269 = por %p267, %p268
    %p270 = scmp.le.s32.totalorder 1, %s16
    %p271 = scmp.lt.s32.totalorder %s16, 3
    %p272 = pnand %p270, %p271
    %p273 = pneg %p272
    // Predicated region
    $region9: #{_upsample_impl.1} parent=5 // pred_check
      _
    $region10: #{_upsample_impl.1} parent=5 // pred_check_branch
      %275 = sbr.rel (%p272) target = $region12
    $region11: #{_upsample_impl.1} parent=5 // pred_region
      %s276 = ssub.s32 %s16, 1
      // Predicated region
      $region13: #{_upsample_impl.1} parent=11 // pred_check
        %p277 = pneg %p89
      $region14: #{_upsample_impl.1} parent=11 // pred_check_branch
        %279 = sbr.rel (%p277) target = $region16
      $region15: #{_upsample_impl.1} parent=11 // pred_region
        _
      $region16: #{_upsample_impl.1} parent=11 // pred_fallthru
        _
      // Predicated region
      $region17: #{_upsample_impl.1} parent=11 // pred_check
        %p280 = pneg %p110
      $region18: #{_upsample_impl.1} parent=11 // pred_check_branch
        %282 = sbr.rel (%p280) target = $region20
      $region19: #{_upsample_impl.1} parent=11 // pred_region
        _
      $region20: #{_upsample_impl.1} parent=11 // pred_fallthru
        _
      // Predicated region
      $region21: #{_upsample_impl.1} parent=11 // pred_check
        %p283 = pneg %p131
      $region22: #{_upsample_impl.1} parent=11 // pred_check_branch
        %285 = sbr.rel (%p283) target = $region24
      $region23: #{_upsample_impl.1} parent=11 // pred_region
        _
      $region24: #{_upsample_impl.1} parent=11 // pred_fallthru
        _
      // Predicated region
      $region25: #{_upsample_impl.1} parent=11 // pred_check
        %p286 = pneg %p152
      $region26: #{_upsample_impl.1} parent=11 // pred_check_branch
        %288 = sbr.rel (%p286) target = $region28
      $region27: #{_upsample_impl.1} parent=11 // pred_region
        _
      $region28: #{_upsample_impl.1} parent=11 // pred_fallthru
        _
      // Predicated region
      $region29: #{_upsample_impl.1} parent=11 // pred_check
        %p289 = pneg %p173
      $region30: #{_upsample_impl.1} parent=11 // pred_check_branch
        %291 = sbr.rel (%p289) target = $region32
      $region31: #{_upsample_impl.1} parent=11 // pred_region
        _
      $region32: #{_upsample_impl.1} parent=11 // pred_fallthru
        _
      // Predicated region
      $region33: #{_upsample_impl.1} parent=11 // pred_check
        %p292 = pneg %p194
      $region34: #{_upsample_impl.1} parent=11 // pred_check_branch
        %294 = sbr.rel (%p292) target = $region36
      $region35: #{_upsample_impl.1} parent=11 // pred_region
        _
      $region36: #{_upsample_impl.1} parent=11 // pred_fallthru
        _
      // Predicated region
      $region37: #{_upsample_impl.1} parent=11 // pred_check
        %p295 = pneg %p215
      $region38: #{_upsample_impl.1} parent=11 // pred_check_branch
        %297 = sbr.rel (%p295) target = $region40
      $region39: #{_upsample_impl.1} parent=11 // pred_region
        _
      $region40: #{_upsample_impl.1} parent=11 // pred_fallthru
        _
      // Predicated region
      $region41: #{_upsample_impl.1} parent=11 // pred_check
        %p298 = pneg %p236
      $region42: #{_upsample_impl.1} parent=11 // pred_check_branch
        %300 = sbr.rel (%p298) target = $region44
      $region43: #{_upsample_impl.1} parent=11 // pred_region
        _
      $region44: #{_upsample_impl.1} parent=11 // pred_fallthru
        _
    $region12: #{_upsample_impl.1} parent=5 // pred_fallthru
      _
    %p301 = scmp.lt.s32.totalorder %s16, 2
    // Predicated region
    $region45: #{_upsample_impl.1} parent=5 // pred_check
      %p302 = pneg %p301
    $region46: #{_upsample_impl.1} parent=5 // pred_check_branch
      %304 = sbr.rel (%p302) target = $region48
    $region47: #{_upsample_impl.1} parent=5 // pred_region
      // Predicated region
      $region49: #{_upsample_impl.1} parent=47 // pred_check
        %p305 = pneg %p36
      $region50: #{_upsample_impl.1} parent=47 // pred_check_branch
        %307 = sbr.rel (%p305) target = $region52
      $region51: #{_upsample_impl.1} parent=47 // pred_region
        %p308 = scmp.lt.s32.totalorder %s16, 1
        %s309 = scalar_select %p308, %s16, 1
        %s310 = smul.addr %s309, 8
        %s311 = smul.addr %s310, 4
        %s312 = scalar_lea.vmem %s0, %s311
      $region52: #{_upsample_impl.1} parent=47 // pred_fallthru
        _
      // Predicated region
      $region53: #{_upsample_impl.1} parent=47 // pred_check
        %p313 = pneg %p62
      $region54: #{_upsample_impl.1} parent=47 // pred_check_branch
        %315 = sbr.rel (%p313) target = $region56
      $region55: #{_upsample_impl.1} parent=47 // pred_region
        %p316 = scmp.lt.s32.totalorder %s16, 1
        %s317 = scalar_select %p316, %s16, 1
        %s318 = smul.addr %s317, 32
        %s319 = smul.addr %s318, 4
        %s320 = scalar_lea.vmem %s1, %s319
      $region56: #{_upsample_impl.1} parent=47 // pred_fallthru
        _
    $region48: #{_upsample_impl.1} parent=5 // pred_fallthru
      _
    %p321 = scmp.le.s32.totalorder 1, %s16
    %p322 = scmp.lt.s32.totalorder %s16, 3
    %p323 = pnand %p321, %p322
    %p324 = pneg %p323
    // Predicated region
    $region57: #{_upsample_impl.1} parent=5 // pred_check
      _
    $region58: #{_upsample_impl.1} parent=5 // pred_check_branch
      %326 = sbr.rel (%p323) target = $region60
    $region59: #{_upsample_impl.1} parent=5 // pred_region
      %s327 = ssub.s32 %s16, 1
      %p328 = scmp.lt.s32.totalorder %s21, 1
      %s329 = scalar_select %p328, %s21, 1
      %s330 = smul.addr %s329, 8
      %s331 = smul.addr %s330, 4
      %s332 = scalar_lea.vmem %s0, %s331
      %p333 = pneg %p42
      %p334 = pneg %p39
      %p335 = scmp.lt.s32.totalorder %s21, 1
      %s336 = scalar_select %p335, %s21, 1
      %s337 = smul.addr %s336, 32
      %s338 = smul.addr %s337, 4
      %s339 = scalar_lea.vmem %s1, %s338
      %p340 = pneg %p68
      %p341 = pneg %p65
      %p342 = pneg %p89
      %p343 = pneg %p86
      %p344 = pneg %p110
      %p345 = pneg %p107
      %p346 = pneg %p131
      %p347 = pneg %p128
      %p348 = pneg %p152
      %p349 = pneg %p149
      %p350 = pneg %p173
      %p351 = pneg %p170
      %p352 = pneg %p194
      %p353 = pneg %p191
      %p354 = pneg %p215
      %p355 = pneg %p212
      %p356 = pneg %p236
      %p357 = pneg %p233
      %p358 = pneg %p262
      %p359 = pneg %p259
      %p360 = scmp.lt.s32.totalorder %s21, 1
      %s361 = scalar_select %p360, %s21, 1
      %s362 = smul.addr %s361, 4
      %s363 = smul.addr %s362, 4
      %s364 = scalar_lea.vmem %s10, %s363
      %p365 = scmp.lt.s32.totalorder %s21, 1
      %s366 = scalar_select %p365, %s21, 1
      %s367 = smul.addr %s366, 8
      %s368 = smul.addr %s367, 4
      %s369 = scalar_lea.vmem %s0, %s368
      %p370 = scmp.lt.s32.totalorder %s21, 1
      %s371 = scalar_select %p370, %s21, 1
      %s372 = smul.addr %s371, 32
      %s373 = smul.addr %s372, 4
      %s374 = scalar_lea.vmem %s1, %s373
      %p375 = scmp.lt.s32.totalorder %s21, 1
      %s376 = scalar_select %p375, %s21, 1
      %s377 = smul.addr %s376, 4
      %s378 = smul.addr %s377, 4
      %s379 = scalar_lea.vmem %s10, %s378
      %v381 = vld [vmem:[%s369] sm:$0xf]
      %v382 = vld [vmem:[%s369 + $0x4] sm:$0xf]
      %v383 = vld [vmem:[%s369 + $0x8] sm:$0xf]
      %v384 = vld [vmem:[%s369 + $0xc] sm:$0xf]
      %v385 = vld [vmem:[%s369 + $0x10] sm:$0xf]
      %v386 = vld [vmem:[%s369 + $0x14] sm:$0xf]
      %v387 = vld [vmem:[%s369 + $0x18] sm:$0xf]
      %v388 = vld [vmem:[%s369 + $0x1c] sm:$0xf]
      %v389 = vld [vmem:[%s2] sm:$0xf]
      %v390 = vld [vmem:[%s2 + $0x4] sm:$0xf]
      %v391 = vld [vmem:[%s2 + $0x8] sm:$0xf]
      %v392 = vld [vmem:[%s2 + $0xc] sm:$0xf]
      %v393 = vld [vmem:[%s3] sm:$0x1]
      %v395 = vperm.slane %v393, 0
      %v405 = vunpack.c.l.b16 %v381
      %v406 = vunpack.c.l.b16 %v382
      %v407 = vunpack.c.l.b16 %v383
      %v408 = vunpack.c.l.b16 %v384
      %v409 = vunpack.c.l.b16 %v385
      %v410 = vunpack.c.l.b16 %v386
      %v411 = vunpack.c.l.b16 %v387
      %v412 = vunpack.c.l.b16 %v388
      %v413 = vpack.c.b16 %v406, %v405
      %v414 = vpack.c.b16 %v408, %v407
      %v415 = vpack.c.b16 %v410, %v409
      %v416 = vpack.c.b16 %v412, %v411
      %v421 = vunpack.c.l.b16 %v389
      %v422 = vunpack.c.l.b16 %v390
      %v423 = vunpack.c.l.b16 %v391
      %v424 = vunpack.c.l.b16 %v392
      %v425 = vpack.c.b16 %v422, %v421
      %v426 = vpack.c.b16 %v424, %v423
      %vm429 = vcmask 261120
      %v431 = vsel %vm429, %v413, 0
      %v434 = vsel %vm429, %v414, 0
      %v437 = vsel %vm429, %v415, 0
      %v440 = vsel %vm429, %v416, 0
      %442 = vmatpush.bf16.msra.mxu0 0
      %443 = vmatpush.bf16.msra.mxu0 0
      %444 = vmatpush.bf16.msra.mxu0 0
      %445 = vmatpush.bf16.msra.mxu0 0
      %446 = vmatpush.bf16.msra.mxu0 0
      %447 = vmatpush.bf16.msra.mxu0 0
      %448 = vmatpush.bf16.msra.mxu0 %v426
      %449 = vmatpush.bf16.msra.mxu0 %v425
      %450 = vmatmul.bf16.gmra.mxu0 %v431
      %v451 = vpop.f32.mrf.mxu0
      %v452 = vadd.f32 %v395, %v451
      %v453 = vpop.f32.mrf.mxu0
      %v454 = vadd.f32 %v395, %v453
      %455 = vmatmul.bf16.gmra.mxu0 %v434
      %v456 = vpop.f32.mrf.mxu0
      %v457 = vadd.f32 %v395, %v456
      %v458 = vpop.f32.mrf.mxu0
      %v459 = vadd.f32 %v395, %v458
      %460 = vmatmul.bf16.gmra.mxu0 %v437
      %v461 = vpop.f32.mrf.mxu0
      %v462 = vadd.f32 %v395, %v461
      %v463 = vpop.f32.mrf.mxu0
      %v464 = vadd.f32 %v395, %v463
      %465 = vmatmul.bf16.gmra.mxu0 %v440
      %v466 = vpop.f32.mrf.mxu0
      %v467 = vadd.f32 %v395, %v466
      %v468 = vpop.f32.mrf.mxu0
      %v469 = vadd.f32 %v395, %v468
      %470 = vdwg.mxu0
      %v471 = vpack.c.bf16 %v452, %v452
      %v472 = vpack.c.bf16 %v454, %v454
      %v473 = vpack.c.bf16 %v457, %v457
      %v474 = vpack.c.bf16 %v459, %v459
      %v475 = vpack.c.bf16 %v462, %v462
      %v476 = vpack.c.bf16 %v464, %v464
      %v477 = vpack.c.bf16 %v467, %v467
      %v478 = vpack.c.bf16 %v469, %v469
      %v487 = vrot.slane %v471, 3
      %v488 = vrot.slane %v472, 3
      %v489 = vrot.slane %v473, 3
      %v490 = vrot.slane %v474, 3
      %v491 = vrot.slane %v475, 3
      %v492 = vrot.slane %v476, 3
      %v493 = vrot.slane %v477, 3
      %v494 = vrot.slane %v478, 3
      %vm495 = vcmask 1040384
      %v498 = vsel %vm495, %v471, %v487
      %vm500 = vcmask 1041409
      %v501 = vsel %vm500, %v471, %v487
      %v503 = vrot.slane %v501, 1
      %vm504 = vcmask 1042434
      %v505 = vsel %vm504, %v471, %v487
      %v507 = vrot.slane %v505, 2
      %vm508 = vcmask 1043459
      %v509 = vsel %vm508, %v471, %v487
      %v511 = vrot.slane %v509, 3
      %v514 = vsel %vm495, %v472, %v488
      %v516 = vsel %vm500, %v472, %v488
      %v518 = vrot.slane %v516, 1
      %v519 = vsel %vm504, %v472, %v488
      %v521 = vrot.slane %v519, 2
      %v522 = vsel %vm508, %v472, %v488
      %v524 = vrot.slane %v522, 3
      %v527 = vsel %vm495, %v473, %v489
      %v529 = vsel %vm500, %v473, %v489
      %v531 = vrot.slane %v529, 1
      %v532 = vsel %vm504, %v473, %v489
      %v534 = vrot.slane %v532, 2
      %v535 = vsel %vm508, %v473, %v489
      %v537 = vrot.slane %v535, 3
      %v540 = vsel %vm495, %v474, %v490
      %v542 = vsel %vm500, %v474, %v490
      %v544 = vrot.slane %v542, 1
      %v545 = vsel %vm504, %v474, %v490
      %v547 = vrot.slane %v545, 2
      %v548 = vsel %vm508, %v474, %v490
      %v550 = vrot.slane %v548, 3
      %v553 = vsel %vm495, %v475, %v491
      %v555 = vsel %vm500, %v475, %v491
      %v557 = vrot.slane %v555, 1
      %v558 = vsel %vm504, %v475, %v491
      %v560 = vrot.slane %v558, 2
      %v561 = vsel %vm508, %v475, %v491
      %v563 = vrot.slane %v561, 3
      %v566 = vsel %vm495, %v476, %v492
      %v568 = vsel %vm500, %v476, %v492
      %v570 = vrot.slane %v568, 1
      %v571 = vsel %vm504, %v476, %v492
      %v573 = vrot.slane %v571, 2
      %v574 = vsel %vm508, %v476, %v492
      %v576 = vrot.slane %v574, 3
      %v579 = vsel %vm495, %v477, %v493
      %v581 = vsel %vm500, %v477, %v493
      %v583 = vrot.slane %v581, 1
      %v584 = vsel %vm504, %v477, %v493
      %v586 = vrot.slane %v584, 2
      %v587 = vsel %vm508, %v477, %v493
      %v589 = vrot.slane %v587, 3
      %v592 = vsel %vm495, %v478, %v494
      %v594 = vsel %vm500, %v478, %v494
      %v596 = vrot.slane %v594, 1
      %v597 = vsel %vm504, %v478, %v494
      %v599 = vrot.slane %v597, 2
      %v600 = vsel %vm508, %v478, %v494
      %v602 = vrot.slane %v600, 3
      %v603 = vunpack.i.l.s16 %v498
      %v604 = vunpack.i.h.s16 %v498
      %v605 = vunpack.i.l.s16 %v503
      %v606 = vunpack.i.h.s16 %v503
      %v607 = vunpack.i.l.s16 %v507
      %v608 = vunpack.i.h.s16 %v507
      %v609 = vunpack.i.l.s16 %v511
      %v610 = vunpack.i.h.s16 %v511
      %v611 = vunpack.i.l.s16 %v514
      %v612 = vunpack.i.h.s16 %v514
      %v613 = vunpack.i.l.s16 %v518
      %v614 = vunpack.i.h.s16 %v518
      %v615 = vunpack.i.l.s16 %v521
      %v616 = vunpack.i.h.s16 %v521
      %v617 = vunpack.i.l.s16 %v524
      %v618 = vunpack.i.h.s16 %v524
      %v619 = vunpack.i.l.s16 %v527
      %v620 = vunpack.i.h.s16 %v527
      %v621 = vunpack.i.l.s16 %v531
      %v622 = vunpack.i.h.s16 %v531
      %v623 = vunpack.i.l.s16 %v534
      %v624 = vunpack.i.h.s16 %v534
      %v625 = vunpack.i.l.s16 %v537
      %v626 = vunpack.i.h.s16 %v537
      %v627 = vunpack.i.l.s16 %v540
      %v628 = vunpack.i.h.s16 %v540
      %v629 = vunpack.i.l.s16 %v544
      %v630 = vunpack.i.h.s16 %v544
      %v631 = vunpack.i.l.s16 %v547
      %v632 = vunpack.i.h.s16 %v547
      %v633 = vunpack.i.l.s16 %v550
      %v634 = vunpack.i.h.s16 %v550
      %v635 = vunpack.i.l.s16 %v553
      %v636 = vunpack.i.h.s16 %v553
      %v637 = vunpack.i.l.s16 %v557
      %v638 = vunpack.i.h.s16 %v557
      %v639 = vunpack.i.l.s16 %v560
      %v640 = vunpack.i.h.s16 %v560
      %v641 = vunpack.i.l.s16 %v563
      %v642 = vunpack.i.h.s16 %v563
      %v643 = vunpack.i.l.s16 %v566
      %v644 = vunpack.i.h.s16 %v566
      %v645 = vunpack.i.l.s16 %v570
      %v646 = vunpack.i.h.s16 %v570
      %v647 = vunpack.i.l.s16 %v573
      %v648 = vunpack.i.h.s16 %v573
      %v649 = vunpack.i.l.s16 %v576
      %v650 = vunpack.i.h.s16 %v576
      %v651 = vunpack.i.l.s16 %v579
      %v652 = vunpack.i.h.s16 %v579
      %v653 = vunpack.i.l.s16 %v583
      %v654 = vunpack.i.h.s16 %v583
      %v655 = vunpack.i.l.s16 %v586
      %v656 = vunpack.i.h.s16 %v586
      %v657 = vunpack.i.l.s16 %v589
      %v658 = vunpack.i.h.s16 %v589
      %v659 = vunpack.i.l.s16 %v592
      %v660 = vunpack.i.h.s16 %v592
      %v661 = vunpack.i.l.s16 %v596
      %v662 = vunpack.i.h.s16 %v596
      %v663 = vunpack.i.l.s16 %v599
      %v664 = vunpack.i.h.s16 %v599
      %v665 = vunpack.i.l.s16 %v602
      %v666 = vunpack.i.h.s16 %v602
      %v667 = vpack.i.b16 %v603, %v603
      %v668 = vpack.i.b16 %v604, %v604
      %v669 = vpack.i.b16 %v605, %v605
      %v670 = vpack.i.b16 %v606, %v606
      %v671 = vpack.i.b16 %v607, %v607
      %v672 = vpack.i.b16 %v608, %v608
      %v673 = vpack.i.b16 %v609, %v609
      %v674 = vpack.i.b16 %v610, %v610
      %v675 = vpack.i.b16 %v611, %v611
      %v676 = vpack.i.b16 %v612, %v612
      %v677 = vpack.i.b16 %v613, %v613
      %v678 = vpack.i.b16 %v614, %v614
      %v679 = vpack.i.b16 %v615, %v615
      %v680 = vpack.i.b16 %v616, %v616
      %v681 = vpack.i.b16 %v617, %v617
      %v682 = vpack.i.b16 %v618, %v618
      %v683 = vpack.i.b16 %v619, %v619
      %v684 = vpack.i.b16 %v620, %v620
      %v685 = vpack.i.b16 %v621, %v621
      %v686 = vpack.i.b16 %v622, %v622
      %v687 = vpack.i.b16 %v623, %v623
      %v688 = vpack.i.b16 %v624, %v624
      %v689 = vpack.i.b16 %v625, %v625
      %v690 = vpack.i.b16 %v626, %v626
      %v691 = vpack.i.b16 %v627, %v627
      %v692 = vpack.i.b16 %v628, %v628
      %v693 = vpack.i.b16 %v629, %v629
      %v694 = vpack.i.b16 %v630, %v630
      %v695 = vpack.i.b16 %v631, %v631
      %v696 = vpack.i.b16 %v632, %v632
      %v697 = vpack.i.b16 %v633, %v633
      %v698 = vpack.i.b16 %v634, %v634
      %v699 = vpack.i.b16 %v635, %v635
      %v700 = vpack.i.b16 %v636, %v636
      %v701 = vpack.i.b16 %v637, %v637
      %v702 = vpack.i.b16 %v638, %v638
      %v703 = vpack.i.b16 %v639, %v639
      %v704 = vpack.i.b16 %v640, %v640
      %v705 = vpack.i.b16 %v641, %v641
      %v706 = vpack.i.b16 %v642, %v642
      %v707 = vpack.i.b16 %v643, %v643
      %v708 = vpack.i.b16 %v644, %v644
      %v709 = vpack.i.b16 %v645, %v645
      %v710 = vpack.i.b16 %v646, %v646
      %v711 = vpack.i.b16 %v647, %v647
      %v712 = vpack.i.b16 %v648, %v648
      %v713 = vpack.i.b16 %v649, %v649
      %v714 = vpack.i.b16 %v650, %v650
      %v715 = vpack.i.b16 %v651, %v651
      %v716 = vpack.i.b16 %v652, %v652
      %v717 = vpack.i.b16 %v653, %v653
      %v718 = vpack.i.b16 %v654, %v654
      %v719 = vpack.i.b16 %v655, %v655
      %v720 = vpack.i.b16 %v656, %v656
      %v721 = vpack.i.b16 %v657, %v657
      %v722 = vpack.i.b16 %v658, %v658
      %v723 = vpack.i.b16 %v659, %v659
      %v724 = vpack.i.b16 %v660, %v660
      %v725 = vpack.i.b16 %v661, %v661
      %v726 = vpack.i.b16 %v662, %v662
      %v727 = vpack.i.b16 %v663, %v663
      %v728 = vpack.i.b16 %v664, %v664
      %v729 = vpack.i.b16 %v665, %v665
      %v730 = vpack.i.b16 %v666, %v666
      %v731 = vperm.slane %v667, 0
      %v732 = vperm.slane %v668, 0
      %v733 = vperm.slane %v669, 0
      %v734 = vperm.slane %v670, 0
      %v735 = vperm.slane %v671, 0
      %v736 = vperm.slane %v672, 0
      %v737 = vperm.slane %v673, 0
      %v738 = vperm.slane %v674, 0
      %v739 = vperm.slane %v675, 0
      %v740 = vperm.slane %v676, 0
      %v741 = vperm.slane %v677, 0
      %v742 = vperm.slane %v678, 0
      %v743 = vperm.slane %v679, 0
      %v744 = vperm.slane %v680, 0
      %v745 = vperm.slane %v681, 0
      %v746 = vperm.slane %v682, 0
      %v747 = vperm.slane %v683, 0
      %v748 = vperm.slane %v684, 0
      %v749 = vperm.slane %v685, 0
      %v750 = vperm.slane %v686, 0
      %v751 = vperm.slane %v687, 0
      %v752 = vperm.slane %v688, 0
      %v753 = vperm.slane %v689, 0
      %v754 = vperm.slane %v690, 0
      %v755 = vperm.slane %v691, 0
      %v756 = vperm.slane %v692, 0
      %v757 = vperm.slane %v693, 0
      %v758 = vperm.slane %v694, 0
      %v759 = vperm.slane %v695, 0
      %v760 = vperm.slane %v696, 0
      %v761 = vperm.slane %v697, 0
      %v762 = vperm.slane %v698, 0
      %v763 = vperm.slane %v699, 0
      %v764 = vperm.slane %v700, 0
      %v765 = vperm.slane %v701, 0
      %v766 = vperm.slane %v702, 0
      %v767 = vperm.slane %v703, 0
      %v768 = vperm.slane %v704, 0
      %v769 = vperm.slane %v705, 0
      %v770 = vperm.slane %v706, 0
      %v771 = vperm.slane %v707, 0
      %v772 = vperm.slane %v708, 0
      %v773 = vperm.slane %v709, 0
      %v774 = vperm.slane %v710, 0
      %v775 = vperm.slane %v711, 0
      %v776 = vperm.slane %v712, 0
      %v777 = vperm.slane %v713, 0
      %v778 = vperm.slane %v714, 0
      %v779 = vperm.slane %v715, 0
      %v780 = vperm.slane %v716, 0
      %v781 = vperm.slane %v717, 0
      %v782 = vperm.slane %v718, 0
      %v783 = vperm.slane %v719, 0
      %v784 = vperm.slane %v720, 0
      %v785 = vperm.slane %v721, 0
      %v786 = vperm.slane %v722, 0
      %v787 = vperm.slane %v723, 0
      %v788 = vperm.slane %v724, 0
      %v789 = vperm.slane %v725, 0
      %v790 = vperm.slane %v726, 0
      %v791 = vperm.slane %v727, 0
      %v792 = vperm.slane %v728, 0
      %v793 = vperm.slane %v729, 0
      %v794 = vperm.slane %v730, 0
      %859 = vrot.lane.b32.xlu0 %v731, 112
      %v860 = vpop.permute.xlu0 %859
      %861 = vrot.lane.b32.xlu0 %v732, 112
      %v862 = vpop.permute.xlu0 %861
      %863 = vrot.lane.b32.xlu0 %v733, 112
      %v864 = vpop.permute.xlu0 %863
      %865 = vrot.lane.b32.xlu0 %v734, 112
      %v866 = vpop.permute.xlu0 %865
      %867 = vrot.lane.b32.xlu0 %v735, 112
      %v868 = vpop.permute.xlu0 %867
      %869 = vrot.lane.b32.xlu0 %v736, 112
      %v870 = vpop.permute.xlu0 %869
      %871 = vrot.lane.b32.xlu0 %v737, 112
      %v872 = vpop.permute.xlu0 %871
      %873 = vrot.lane.b32.xlu0 %v738, 112
      %v874 = vpop.permute.xlu0 %873
      %875 = vrot.lane.b32.xlu0 %v739, 112
      %v876 = vpop.permute.xlu0 %875
      %877 = vrot.lane.b32.xlu0 %v740, 112
      %v878 = vpop.permute.xlu0 %877
      %879 = vrot.lane.b32.xlu0 %v741, 112
      %v880 = vpop.permute.xlu0 %879
      %881 = vrot.lane.b32.xlu0 %v742, 112
      %v882 = vpop.permute.xlu0 %881
      %883 = vrot.lane.b32.xlu0 %v743, 112
      %v884 = vpop.permute.xlu0 %883
      %885 = vrot.lane.b32.xlu0 %v744, 112
      %v886 = vpop.permute.xlu0 %885
      %887 = vrot.lane.b32.xlu0 %v745, 112
      %v888 = vpop.permute.xlu0 %887
      %889 = vrot.lane.b32.xlu0 %v746, 112
      %v890 = vpop.permute.xlu0 %889
      %891 = vrot.lane.b32.xlu0 %v747, 112
      %v892 = vpop.permute.xlu0 %891
      %893 = vrot.lane.b32.xlu0 %v748, 112
      %v894 = vpop.permute.xlu0 %893
      %895 = vrot.lane.b32.xlu0 %v749, 112
      %v896 = vpop.permute.xlu0 %895
      %897 = vrot.lane.b32.xlu0 %v750, 112
      %v898 = vpop.permute.xlu0 %897
      %899 = vrot.lane.b32.xlu0 %v751, 112
      %v900 = vpop.permute.xlu0 %899
      %901 = vrot.lane.b32.xlu0 %v752, 112
      %v902 = vpop.permute.xlu0 %901
      %903 = vrot.lane.b32.xlu0 %v753, 112
      %v904 = vpop.permute.xlu0 %903
      %905 = vrot.lane.b32.xlu0 %v754, 112
      %v906 = vpop.permute.xlu0 %905
      %907 = vrot.lane.b32.xlu0 %v755, 112
      %v908 = vpop.permute.xlu0 %907
      %909 = vrot.lane.b32.xlu0 %v756, 112
      %v910 = vpop.permute.xlu0 %909
      %911 = vrot.lane.b32.xlu0 %v757, 112
      %v912 = vpop.permute.xlu0 %911
      %913 = vrot.lane.b32.xlu0 %v758, 112
      %v914 = vpop.permute.xlu0 %913
      %915 = vrot.lane.b32.xlu0 %v759, 112
      %v916 = vpop.permute.xlu0 %915
      %917 = vrot.lane.b32.xlu0 %v760, 112
      %v918 = vpop.permute.xlu0 %917
      %919 = vrot.lane.b32.xlu0 %v761, 112
      %v920 = vpop.permute.xlu0 %919
      %921 = vrot.lane.b32.xlu0 %v762, 112
      %v922 = vpop.permute.xlu0 %921
      %923 = vrot.lane.b32.xlu0 %v763, 112
      %v924 = vpop.permute.xlu0 %923
      %925 = vrot.lane.b32.xlu0 %v764, 112
      %v926 = vpop.permute.xlu0 %925
      %927 = vrot.lane.b32.xlu0 %v765, 112
      %v928 = vpop.permute.xlu0 %927
      %929 = vrot.lane.b32.xlu0 %v766, 112
      %v930 = vpop.permute.xlu0 %929
      %931 = vrot.lane.b32.xlu0 %v767, 112
      %v932 = vpop.permute.xlu0 %931
      %933 = vrot.lane.b32.xlu0 %v768, 112
      %v934 = vpop.permute.xlu0 %933
      %935 = vrot.lane.b32.xlu0 %v769, 112
      %v936 = vpop.permute.xlu0 %935
      %937 = vrot.lane.b32.xlu0 %v770, 112
      %v938 = vpop.permute.xlu0 %937
      %939 = vrot.lane.b32.xlu0 %v771, 112
      %v940 = vpop.permute.xlu0 %939
      %941 = vrot.lane.b32.xlu0 %v772, 112
      %v942 = vpop.permute.xlu0 %941
      %943 = vrot.lane.b32.xlu0 %v773, 112
      %v944 = vpop.permute.xlu0 %943
      %945 = vrot.lane.b32.xlu0 %v774, 112
      %v946 = vpop.permute.xlu0 %945
      %947 = vrot.lane.b32.xlu0 %v775, 112
      %v948 = vpop.permute.xlu0 %947
      %949 = vrot.lane.b32.xlu0 %v776, 112
      %v950 = vpop.permute.xlu0 %949
      %951 = vrot.lane.b32.xlu0 %v777, 112
      %v952 = vpop.permute.xlu0 %951
      %953 = vrot.lane.b32.xlu0 %v778, 112
      %v954 = vpop.permute.xlu0 %953
      %955 = vrot.lane.b32.xlu0 %v779, 112
      %v956 = vpop.permute.xlu0 %955
      %957 = vrot.lane.b32.xlu0 %v780, 112
      %v958 = vpop.permute.xlu0 %957
      %959 = vrot.lane.b32.xlu0 %v781, 112
      %v960 = vpop.permute.xlu0 %959
      %961 = vrot.lane.b32.xlu0 %v782, 112
      %v962 = vpop.permute.xlu0 %961
      %963 = vrot.lane.b32.xlu0 %v783, 112
      %v964 = vpop.permute.xlu0 %963
      %965 = vrot.lane.b32.xlu0 %v784, 112
      %v966 = vpop.permute.xlu0 %965
      %967 = vrot.lane.b32.xlu0 %v785, 112
      %v968 = vpop.permute.xlu0 %967
      %969 = vrot.lane.b32.xlu0 %v786, 112
      %v970 = vpop.permute.xlu0 %969
      %971 = vrot.lane.b32.xlu0 %v787, 112
      %v972 = vpop.permute.xlu0 %971
      %973 = vrot.lane.b32.xlu0 %v788, 112
      %v974 = vpop.permute.xlu0 %973
      %975 = vrot.lane.b32.xlu0 %v789, 112
      %v976 = vpop.permute.xlu0 %975
      %977 = vrot.lane.b32.xlu0 %v790, 112
      %v978 = vpop.permute.xlu0 %977
      %979 = vrot.lane.b32.xlu0 %v791, 112
      %v980 = vpop.permute.xlu0 %979
      %981 = vrot.lane.b32.xlu0 %v792, 112
      %v982 = vpop.permute.xlu0 %981
      %983 = vrot.lane.b32.xlu0 %v793, 112
      %v984 = vpop.permute.xlu0 %983
      %985 = vrot.lane.b32.xlu0 %v794, 112
      %v986 = vpop.permute.xlu0 %985
      %vm1051 = vcmask 1040384
      %vm1052 = vsmask.f32 256
      %vm1053 = vmand %vm1051, %vm1052
      %v1054 = vsel %vm1053, %v731, %v860
      %v1055 = vsel %vm1053, %v732, %v862
      %v1056 = vsel %vm1053, %v733, %v864
      %v1057 = vsel %vm1053, %v734, %v866
      %v1058 = vsel %vm1053, %v735, %v868
      %v1059 = vsel %vm1053, %v736, %v870
      %v1060 = vsel %vm1053, %v737, %v872
      %v1061 = vsel %vm1053, %v738, %v874
      %v1062 = vsel %vm1053, %v739, %v876
      %v1063 = vsel %vm1053, %v740, %v878
      %v1064 = vsel %vm1053, %v741, %v880
      %v1065 = vsel %vm1053, %v742, %v882
      %v1066 = vsel %vm1053, %v743, %v884
      %v1067 = vsel %vm1053, %v744, %v886
      %v1068 = vsel %vm1053, %v745, %v888
      %v1069 = vsel %vm1053, %v746, %v890
      %v1070 = vsel %vm1053, %v747, %v892
      %v1071 = vsel %vm1053, %v748, %v894
      %v1072 = vsel %vm1053, %v749, %v896
      %v1073 = vsel %vm1053, %v750, %v898
      %v1074 = vsel %vm1053, %v751, %v900
      %v1075 = vsel %vm1053, %v752, %v902
      %v1076 = vsel %vm1053, %v753, %v904
      %v1077 = vsel %vm1053, %v754, %v906
      %v1078 = vsel %vm1053, %v755, %v908
      %v1079 = vsel %vm1053, %v756, %v910
      %v1080 = vsel %vm1053, %v757, %v912
      %v1081 = vsel %vm1053, %v758, %v914
      %v1082 = vsel %vm1053, %v759, %v916
      %v1083 = vsel %vm1053, %v760, %v918
      %v1084 = vsel %vm1053, %v761, %v920
      %v1085 = vsel %vm1053, %v762, %v922
      %v1086 = vsel %vm1053, %v763, %v924
      %v1087 = vsel %vm1053, %v764, %v926
      %v1088 = vsel %vm1053, %v765, %v928
      %v1089 = vsel %vm1053, %v766, %v930
      %v1090 = vsel %vm1053, %v767, %v932
      %v1091 = vsel %vm1053, %v768, %v934
      %v1092 = vsel %vm1053, %v769, %v936
      %v1093 = vsel %vm1053, %v770, %v938
      %v1094 = vsel %vm1053, %v771, %v940
      %v1095 = vsel %vm1053, %v772, %v942
      %v1096 = vsel %vm1053, %v773, %v944
      %v1097 = vsel %vm1053, %v774, %v946
      %v1098 = vsel %vm1053, %v775, %v948
      %v1099 = vsel %vm1053, %v776, %v950
      %v1100 = vsel %vm1053, %v777, %v952
      %v1101 = vsel %vm1053, %v778, %v954
      %v1102 = vsel %vm1053, %v779, %v956
      %v1103 = vsel %vm1053, %v780, %v958
      %v1104 = vsel %vm1053, %v781, %v960
      %v1105 = vsel %vm1053, %v782, %v962
      %v1106 = vsel %vm1053, %v783, %v964
      %v1107 = vsel %vm1053, %v784, %v966
      %v1108 = vsel %vm1053, %v785, %v968
      %v1109 = vsel %vm1053, %v786, %v970
      %v1110 = vsel %vm1053, %v787, %v972
      %v1111 = vsel %vm1053, %v788, %v974
      %v1112 = vsel %vm1053, %v789, %v976
      %v1113 = vsel %vm1053, %v790, %v978
      %v1114 = vsel %vm1053, %v791, %v980
      %v1115 = vsel %vm1053, %v792, %v982
      %v1116 = vsel %vm1053, %v793, %v984
      %v1117 = vsel %vm1053, %v794, %v986
      %1182 = vrot.lane.b32.xlu0 %v1054, 96
      %v1183 = vpop.permute.xlu0 %1182
      %1184 = vrot.lane.b32.xlu0 %v1055, 96
      %v1185 = vpop.permute.xlu0 %1184
      %1186 = vrot.lane.b32.xlu0 %v1056, 96
      %v1187 = vpop.permute.xlu0 %1186
      %1188 = vrot.lane.b32.xlu0 %v1057, 96
      %v1189 = vpop.permute.xlu0 %1188
      %1190 = vrot.lane.b32.xlu0 %v1058, 96
      %v1191 = vpop.permute.xlu0 %1190
      %1192 = vrot.lane.b32.xlu0 %v1059, 96
      %v1193 = vpop.permute.xlu0 %1192
      %1194 = vrot.lane.b32.xlu0 %v1060, 96
      %v1195 = vpop.permute.xlu0 %1194
      %1196 = vrot.lane.b32.xlu0 %v1061, 96
      %v1197 = vpop.permute.xlu0 %1196
      %1198 = vrot.lane.b32.xlu0 %v1062, 96
      %v1199 = vpop.permute.xlu0 %1198
      %1200 = vrot.lane.b32.xlu0 %v1063, 96
      %v1201 = vpop.permute.xlu0 %1200
      %1202 = vrot.lane.b32.xlu0 %v1064, 96
      %v1203 = vpop.permute.xlu0 %1202
      %1204 = vrot.lane.b32.xlu0 %v1065, 96
      %v1205 = vpop.permute.xlu0 %1204
      %1206 = vrot.lane.b32.xlu0 %v1066, 96
      %v1207 = vpop.permute.xlu0 %1206
      %1208 = vrot.lane.b32.xlu0 %v1067, 96
      %v1209 = vpop.permute.xlu0 %1208
      %1210 = vrot.lane.b32.xlu0 %v1068, 96
      %v1211 = vpop.permute.xlu0 %1210
      %1212 = vrot.lane.b32.xlu0 %v1069, 96
      %v1213 = vpop.permute.xlu0 %1212
      %1214 = vrot.lane.b32.xlu0 %v1070, 96
      %v1215 = vpop.permute.xlu0 %1214
      %1216 = vrot.lane.b32.xlu0 %v1071, 96
      %v1217 = vpop.permute.xlu0 %1216
      %1218 = vrot.lane.b32.xlu0 %v1072, 96
      %v1219 = vpop.permute.xlu0 %1218
      %1220 = vrot.lane.b32.xlu0 %v1073, 96
      %v1221 = vpop.permute.xlu0 %1220
      %1222 = vrot.lane.b32.xlu0 %v1074, 96
      %v1223 = vpop.permute.xlu0 %1222
      %1224 = vrot.lane.b32.xlu0 %v1075, 96
      %v1225 = vpop.permute.xlu0 %1224
      %1226 = vrot.lane.b32.xlu0 %v1076, 96
      %v1227 = vpop.permute.xlu0 %1226
      %1228 = vrot.lane.b32.xlu0 %v1077, 96
      %v1229 = vpop.permute.xlu0 %1228
      %1230 = vrot.lane.b32.xlu0 %v1078, 96
      %v1231 = vpop.permute.xlu0 %1230
      %1232 = vrot.lane.b32.xlu0 %v1079, 96
      %v1233 = vpop.permute.xlu0 %1232
      %1234 = vrot.lane.b32.xlu0 %v1080, 96
      %v1235 = vpop.permute.xlu0 %1234
      %1236 = vrot.lane.b32.xlu0 %v1081, 96
      %v1237 = vpop.permute.xlu0 %1236
      %1238 = vrot.lane.b32.xlu0 %v1082, 96
      %v1239 = vpop.permute.xlu0 %1238
      %1240 = vrot.lane.b32.xlu0 %v1083, 96
      %v1241 = vpop.permute.xlu0 %1240
      %1242 = vrot.lane.b32.xlu0 %v1084, 96
      %v1243 = vpop.permute.xlu0 %1242
      %1244 = vrot.lane.b32.xlu0 %v1085, 96
      %v1245 = vpop.permute.xlu0 %1244
      %1246 = vrot.lane.b32.xlu0 %v1086, 96
      %v1247 = vpop.permute.xlu0 %1246
      %1248 = vrot.lane.b32.xlu0 %v1087, 96
      %v1249 = vpop.permute.xlu0 %1248
      %1250 = vrot.lane.b32.xlu0 %v1088, 96
      %v1251 = vpop.permute.xlu0 %1250
      %1252 = vrot.lane.b32.xlu0 %v1089, 96
      %v1253 = vpop.permute.xlu0 %1252
      %1254 = vrot.lane.b32.xlu0 %v1090, 96
      %v1255 = vpop.permute.xlu0 %1254
      %1256 = vrot.lane.b32.xlu0 %v1091, 96
      %v1257 = vpop.permute.xlu0 %1256
      %1258 = vrot.lane.b32.xlu0 %v1092, 96
      %v1259 = vpop.permute.xlu0 %1258
      %1260 = vrot.lane.b32.xlu0 %v1093, 96
      %v1261 = vpop.permute.xlu0 %1260
      %1262 = vrot.lane.b32.xlu0 %v1094, 96
      %v1263 = vpop.permute.xlu0 %1262
      %1264 = vrot.lane.b32.xlu0 %v1095, 96
      %v1265 = vpop.permute.xlu0 %1264
      %1266 = vrot.lane.b32.xlu0 %v1096, 96
      %v1267 = vpop.permute.xlu0 %1266
      %1268 = vrot.lane.b32.xlu0 %v1097, 96
      %v1269 = vpop.permute.xlu0 %1268
      %1270 = vrot.lane.b32.xlu0 %v1098, 96
      %v1271 = vpop.permute.xlu0 %1270
      %1272 = vrot.lane.b32.xlu0 %v1099, 96
      %v1273 = vpop.permute.xlu0 %1272
      %1274 = vrot.lane.b32.xlu0 %v1100, 96
      %v1275 = vpop.permute.xlu0 %1274
      %1276 = vrot.lane.b32.xlu0 %v1101, 96
      %v1277 = vpop.permute.xlu0 %1276
      %1278 = vrot.lane.b32.xlu0 %v1102, 96
      %v1279 = vpop.permute.xlu0 %1278
      %1280 = vrot.lane.b32.xlu0 %v1103, 96
      %v1281 = vpop.permute.xlu0 %1280
      %1282 = vrot.lane.b32.xlu0 %v1104, 96
      %v1283 = vpop.permute.xlu0 %1282
      %1284 = vrot.lane.b32.xlu0 %v1105, 96
      %v1285 = vpop.permute.xlu0 %1284
      %1286 = vrot.lane.b32.xlu0 %v1106, 96
      %v1287 = vpop.permute.xlu0 %1286
      %1288 = vrot.lane.b32.xlu0 %v1107, 96
      %v1289 = vpop.permute.xlu0 %1288
      %1290 = vrot.lane.b32.xlu0 %v1108, 96
      %v1291 = vpop.permute.xlu0 %1290
      %1292 = vrot.lane.b32.xlu0 %v1109, 96
      %v1293 = vpop.permute.xlu0 %1292
      %1294 = vrot.lane.b32.xlu0 %v1110, 96
      %v1295 = vpop.permute.xlu0 %1294
      %1296 = vrot.lane.b32.xlu0 %v1111, 96
      %v1297 = vpop.permute.xlu0 %1296
      %1298 = vrot.lane.b32.xlu0 %v1112, 96
      %v1299 = vpop.permute.xlu0 %1298
      %1300 = vrot.lane.b32.xlu0 %v1113, 96
      %v1301 = vpop.permute.xlu0 %1300
      %1302 = vrot.lane.b32.xlu0 %v1114, 96
      %v1303 = vpop.permute.xlu0 %1302
      %1304 = vrot.lane.b32.xlu0 %v1115, 96
      %v1305 = vpop.permute.xlu0 %1304
      %1306 = vrot.lane.b32.xlu0 %v1116, 96
      %v1307 = vpop.permute.xlu0 %1306
      %1308 = vrot.lane.b32.xlu0 %v1117, 96
      %v1309 = vpop.permute.xlu0 %1308
      %v1310 = vld [vmem:[%s374] sm:$0xf]
      %v1311 = vld [vmem:[%s374 + $0x4] sm:$0xf]
      %v1312 = vld [vmem:[%s374 + $0x8] sm:$0xf]
      %v1313 = vld [vmem:[%s374 + $0xc] sm:$0xf]
      %v1314 = vld [vmem:[%s374 + $0x10] sm:$0xf]
      %v1315 = vld [vmem:[%s374 + $0x14] sm:$0xf]
      %v1316 = vld [vmem:[%s374 + $0x18] sm:$0xf]
      %v1317 = vld [vmem:[%s374 + $0x1c] sm:$0xf]
      %v1318 = vld [vmem:[%s374 + $0x20] sm:$0xf]
      %v1319 = vld [vmem:[%s374 + $0x24] sm:$0xf]
      %v1320 = vld [vmem:[%s374 + $0x28] sm:$0xf]
      %v1321 = vld [vmem:[%s374 + $0x2c] sm:$0xf]
      %v1322 = vld [vmem:[%s374 + $0x30] sm:$0xf]
      %v1323 = vld [vmem:[%s374 + $0x34] sm:$0xf]
      %v1324 = vld [vmem:[%s374 + $0x38] sm:$0xf]
      %v1325 = vld [vmem:[%s374 + $0x3c] sm:$0xf]
      %v1326 = vld [vmem:[%s374 + $0x40] sm:$0xf]
      %v1327 = vld [vmem:[%s374 + $0x44] sm:$0xf]
      %v1328 = vld [vmem:[%s374 + $0x48] sm:$0xf]
      %v1329 = vld [vmem:[%s374 + $0x4c] sm:$0xf]
      %v1330 = vld [vmem:[%s374 + $0x50] sm:$0xf]
      %v1331 = vld [vmem:[%s374 + $0x54] sm:$0xf]
      %v1332 = vld [vmem:[%s374 + $0x58] sm:$0xf]
      %v1333 = vld [vmem:[%s374 + $0x5c] sm:$0xf]
      %v1334 = vld [vmem:[%s374 + $0x60] sm:$0xf]
      %v1335 = vld [vmem:[%s374 + $0x64] sm:$0xf]
      %v1336 = vld [vmem:[%s374 + $0x68] sm:$0xf]
      %v1337 = vld [vmem:[%s374 + $0x6c] sm:$0xf]
      %v1338 = vld [vmem:[%s374 + $0x70] sm:$0xf]
      %v1339 = vld [vmem:[%s374 + $0x74] sm:$0xf]
      %v1340 = vld [vmem:[%s374 + $0x78] sm:$0xf]
      %v1341 = vld [vmem:[%s374 + $0x7c] sm:$0xf]
      %1343 = vst [vmem:[#allocation1] ss:$9 sm:$0xff] %v1054
      %s1345 = scalar_lea.vmem [#allocation1], 1
      %1346 = vst [vmem:[%s1345] ss:$9 sm:$0xff] %v1055
      %s1348 = scalar_lea.vmem [#allocation1], 2
      %1349 = vst [vmem:[%s1348] ss:$9 sm:$0xff] %v1056
      %s1351 = scalar_lea.vmem [#allocation1], 3
      %1352 = vst [vmem:[%s1351] ss:$9 sm:$0xff] %v1057
      %s1354 = scalar_lea.vmem [#allocation1], 4
      %1355 = vst [vmem:[%s1354] ss:$9 sm:$0xff] %v1058
      %s1357 = scalar_lea.vmem [#allocation1], 5
      %1358 = vst [vmem:[%s1357] ss:$9 sm:$0xff] %v1059
      %s1360 = scalar_lea.vmem [#allocation1], 6
      %1361 = vst [vmem:[%s1360] ss:$9 sm:$0xff] %v1060
      %s1363 = scalar_lea.vmem [#allocation1], 7
      %1364 = vst [vmem:[%s1363] ss:$9 sm:$0xff] %v1061
      %v1365 = vld [vmem:[#allocation1] sm:$0xff]
      %1367 = vst [vmem:[#allocation1] ss:$9 sm:$0xff] %v1183
      %1369 = vst [vmem:[%s1345] ss:$9 sm:$0xff] %v1185
      %1371 = vst [vmem:[%s1348] ss:$9 sm:$0xff] %v1187
      %1373 = vst [vmem:[%s1351] ss:$9 sm:$0xff] %v1189
      %1375 = vst [vmem:[%s1354] ss:$9 sm:$0xff] %v1191
      %1377 = vst [vmem:[%s1357] ss:$9 sm:$0xff] %v1193
      %1379 = vst [vmem:[%s1360] ss:$9 sm:$0xff] %v1195
      %1381 = vst [vmem:[%s1363] ss:$9 sm:$0xff] %v1197
      %v1382 = vld [vmem:[#allocation1] sm:$0xff]
      %1384 = vst [vmem:[#allocation1] ss:$9 sm:$0xff] %v1062
      %1386 = vst [vmem:[%s1345] ss:$9 sm:$0xff] %v1063
      %1388 = vst [vmem:[%s1348] ss:$9 sm:$0xff] %v1064
      %1390 = vst [vmem:[%s1351] ss:$9 sm:$0xff] %v1065
      %1392 = vst [vmem:[%s1354] ss:$9 sm:$0xff] %v1066
      %1394 = vst [vmem:[%s1357] ss:$9 sm:$0xff] %v1067
      %1396 = vst [vmem:[%s1360] ss:$9 sm:$0xff] %v1068
      %1398 = vst [vmem:[%s1363] ss:$9 sm:$0xff] %v1069
      %v1399 = vld [vmem:[#allocation1] sm:$0xff]
      %1401 = vst [vmem:[#allocation1] ss:$9 sm:$0xff] %v1199
      %1403 = vst [vmem:[%s1345] ss:$9 sm:$0xff] %v1201
      %1405 = vst [vmem:[%s1348] ss:$9 sm:$0xff] %v1203
      %1407 = vst [vmem:[%s1351] ss:$9 sm:$0xff] %v1205
      %1409 = vst [vmem:[%s1354] ss:$9 sm:$0xff] %v1207
      %1411 = vst [vmem:[%s1357] ss:$9 sm:$0xff] %v1209
      %1413 = vst [vmem:[%s1360] ss:$9 sm:$0xff] %v1211
      %1415 = vst [vmem:[%s1363] ss:$9 sm:$0xff] %v1213
      %v1416 = vld [vmem:[#allocation1] sm:$0xff]
      %1418 = vst [vmem:[#allocation1] ss:$9 sm:$0xff] %v1070
      %1420 = vst [vmem:[%s1345] ss:$9 sm:$0xff] %v1071
      %1422 = vst [vmem:[%s1348] ss:$9 sm:$0xff] %v1072
      %1424 = vst [vmem:[%s1351] ss:$9 sm:$0xff] %v1073
      %1426 = vst [vmem:[%s1354] ss:$9 sm:$0xff] %v1074
      %1428 = vst [vmem:[%s1357] ss:$9 sm:$0xff] %v1075
      %1430 = vst [vmem:[%s1360] ss:$9 sm:$0xff] %v1076
      %1432 = vst [vmem:[%s1363] ss:$9 sm:$0xff] %v1077
      %v1433 = vld [vmem:[#allocation1] sm:$0xff]
      %1435 = vst [vmem:[#allocation1] ss:$9 sm:$0xff] %v1215
      %1437 = vst [vmem:[%s1345] ss:$9 sm:$0xff] %v1217
      %1439 = vst [vmem:[%s1348] ss:$9 sm:$0xff] %v1219
      %1441 = vst [vmem:[%s1351] ss:$9 sm:$0xff] %v1221
      %1443 = vst [vmem:[%s1354] ss:$9 sm:$0xff] %v1223
      %1445 = vst [vmem:[%s1357] ss:$9 sm:$0xff] %v1225
      %1447 = vst [vmem:[%s1360] ss:$9 sm:$0xff] %v1227
      %1449 = vst [vmem:[%s1363] ss:$9 sm:$0xff] %v1229
      %v1450 = vld [vmem:[#allocation1] sm:$0xff]
      %1452 = vst [vmem:[#allocation1] ss:$9 sm:$0xff] %v1078
      %1454 = vst [vmem:[%s1345] ss:$9 sm:$0xff] %v1079
      %1456 = vst [vmem:[%s1348] ss:$9 sm:$0xff] %v1080
      %1458 = vst [vmem:[%s1351] ss:$9 sm:$0xff] %v1081
      %1460 = vst [vmem:[%s1354] ss:$9 sm:$0xff] %v1082
      %1462 = vst [vmem:[%s1357] ss:$9 sm:$0xff] %v1083
      %1464 = vst [vmem:[%s1360] ss:$9 sm:$0xff] %v1084
      %1466 = vst [vmem:[%s1363] ss:$9 sm:$0xff] %v1085
      %v1467 = vld [vmem:[#allocation1] sm:$0xff]
      %1469 = vst [vmem:[#allocation1] ss:$9 sm:$0xff] %v1231
      %1471 = vst [vmem:[%s1345] ss:$9 sm:$0xff] %v1233
      %1473 = vst [vmem:[%s1348] ss:$9 sm:$0xff] %v1235
      %1475 = vst [vmem:[%s1351] ss:$9 sm:$0xff] %v1237
      %1477 = vst [vmem:[%s1354] ss:$9 sm:$0xff] %v1239
      %1479 = vst [vmem:[%s1357] ss:$9 sm:$0xff] %v1241
      %1481 = vst [vmem:[%s1360] ss:$9 sm:$0xff] %v1243
      %1483 = vst [vmem:[%s1363] ss:$9 sm:$0xff] %v1245
      %v1484 = vld [vmem:[#allocation1] sm:$0xff]
      %1486 = vst [vmem:[#allocation1] ss:$9 sm:$0xff] %v1086
      %1488 = vst [vmem:[%s1345] ss:$9 sm:$0xff] %v1087
      %1490 = vst [vmem:[%s1348] ss:$9 sm:$0xff] %v1088
      %1492 = vst [vmem:[%s1351] ss:$9 sm:$0xff] %v1089
      %1494 = vst [vmem:[%s1354] ss:$9 sm:$0xff] %v1090
      %1496 = vst [vmem:[%s1357] ss:$9 sm:$0xff] %v1091
      %1498 = vst [vmem:[%s1360] ss:$9 sm:$0xff] %v1092
      %1500 = vst [vmem:[%s1363] ss:$9 sm:$0xff] %v1093
      %v1501 = vld [vmem:[#allocation1] sm:$0xff]
      %1503 = vst [vmem:[#allocation1] ss:$9 sm:$0xff] %v1247
      %1505 = vst [vmem:[%s1345] ss:$9 sm:$0xff] %v1249
      %1507 = vst [vmem:[%s1348] ss:$9 sm:$0xff] %v1251
      %1509 = vst [vmem:[%s1351] ss:$9 sm:$0xff] %v1253
      %1511 = vst [vmem:[%s1354] ss:$9 sm:$0xff] %v1255
      %1513 = vst [vmem:[%s1357] ss:$9 sm:$0xff] %v1257
      %1515 = vst [vmem:[%s1360] ss:$9 sm:$0xff] %v1259
      %1517 = vst [vmem:[%s1363] ss:$9 sm:$0xff] %v1261
      %v1518 = vld [vmem:[#allocation1] sm:$0xff]
      %1520 = vst [vmem:[#allocation1] ss:$9 sm:$0xff] %v1094
      %1522 = vst [vmem:[%s1345] ss:$9 sm:$0xff] %v1095
      %1524 = vst [vmem:[%s1348] ss:$9 sm:$0xff] %v1096
      %1526 = vst [vmem:[%s1351] ss:$9 sm:$0xff] %v1097
      %1528 = vst [vmem:[%s1354] ss:$9 sm:$0xff] %v1098
      %1530 = vst [vmem:[%s1357] ss:$9 sm:$0xff] %v1099
      %1532 = vst [vmem:[%s1360] ss:$9 sm:$0xff] %v1100
      %1534 = vst [vmem:[%s1363] ss:$9 sm:$0xff] %v1101
      %v1535 = vld [vmem:[#allocation1] sm:$0xff]
      %1537 = vst [vmem:[#allocation1] ss:$9 sm:$0xff] %v1263
      %1539 = vst [vmem:[%s1345] ss:$9 sm:$0xff] %v1265
      %1541 = vst [vmem:[%s1348] ss:$9 sm:$0xff] %v1267
      %1543 = vst [vmem:[%s1351] ss:$9 sm:$0xff] %v1269
      %1545 = vst [vmem:[%s1354] ss:$9 sm:$0xff] %v1271
      %1547 = vst [vmem:[%s1357] ss:$9 sm:$0xff] %v1273
      %1549 = vst [vmem:[%s1360] ss:$9 sm:$0xff] %v1275
      %1551 = vst [vmem:[%s1363] ss:$9 sm:$0xff] %v1277
      %v1552 = vld [vmem:[#allocation1] sm:$0xff]
      %1554 = vst [vmem:[#allocation1] ss:$9 sm:$0xff] %v1102
      %1556 = vst [vmem:[%s1345] ss:$9 sm:$0xff] %v1103
      %1558 = vst [vmem:[%s1348] ss:$9 sm:$0xff] %v1104
      %1560 = vst [vmem:[%s1351] ss:$9 sm:$0xff] %v1105
      %1562 = vst [vmem:[%s1354] ss:$9 sm:$0xff] %v1106
      %1564 = vst [vmem:[%s1357] ss:$9 sm:$0xff] %v1107
      %1566 = vst [vmem:[%s1360] ss:$9 sm:$0xff] %v1108
      %1568 = vst [vmem:[%s1363] ss:$9 sm:$0xff] %v1109
      %v1569 = vld [vmem:[#allocation1] sm:$0xff]
      %1571 = vst [vmem:[#allocation1] ss:$9 sm:$0xff] %v1279
      %1573 = vst [vmem:[%s1345] ss:$9 sm:$0xff] %v1281
      %1575 = vst [vmem:[%s1348] ss:$9 sm:$0xff] %v1283
      %1577 = vst [vmem:[%s1351] ss:$9 sm:$0xff] %v1285
      %1579 = vst [vmem:[%s1354] ss:$9 sm:$0xff] %v1287
      %1581 = vst [vmem:[%s1357] ss:$9 sm:$0xff] %v1289
      %1583 = vst [vmem:[%s1360] ss:$9 sm:$0xff] %v1291
      %1585 = vst [vmem:[%s1363] ss:$9 sm:$0xff] %v1293
      %v1586 = vld [vmem:[#allocation1] sm:$0xff]
      %1588 = vst [vmem:[#allocation1] ss:$9 sm:$0xff] %v1110
      %1590 = vst [vmem:[%s1345] ss:$9 sm:$0xff] %v1111
      %1592 = vst [vmem:[%s1348] ss:$9 sm:$0xff] %v1112
      %1594 = vst [vmem:[%s1351] ss:$9 sm:$0xff] %v1113
      %1596 = vst [vmem:[%s1354] ss:$9 sm:$0xff] %v1114
      %1598 = vst [vmem:[%s1357] ss:$9 sm:$0xff] %v1115
      %1600 = vst [vmem:[%s1360] ss:$9 sm:$0xff] %v1116
      %1602 = vst [vmem:[%s1363] ss:$9 sm:$0xff] %v1117
      %v1603 = vld [vmem:[#allocation1] sm:$0xff]
      %1605 = vst [vmem:[#allocation1] ss:$9 sm:$0xff] %v1295
      %1607 = vst [vmem:[%s1345] ss:$9 sm:$0xff] %v1297
      %1609 = vst [vmem:[%s1348] ss:$9 sm:$0xff] %v1299
      %1611 = vst [vmem:[%s1351] ss:$9 sm:$0xff] %v1301
      %1613 = vst [vmem:[%s1354] ss:$9 sm:$0xff] %v1303
      %1615 = vst [vmem:[%s1357] ss:$9 sm:$0xff] %v1305
      %1617 = vst [vmem:[%s1360] ss:$9 sm:$0xff] %v1307
      %1619 = vst [vmem:[%s1363] ss:$9 sm:$0xff] %v1309
      %v1620 = vld [vmem:[#allocation1] sm:$0xff]
      %v1653 = vunpack.c.l.b16 %v1310
      %v1654 = vunpack.c.l.b16 %v1311
      %v1655 = vunpack.c.l.b16 %v1312
      %v1656 = vunpack.c.l.b16 %v1313
      %v1657 = vunpack.c.l.b16 %v1314
      %v1658 = vunpack.c.l.b16 %v1315
      %v1659 = vunpack.c.l.b16 %v1316
      %v1660 = vunpack.c.l.b16 %v1317
      %v1661 = vunpack.c.l.b16 %v1318
      %v1662 = vunpack.c.l.b16 %v1319
      %v1663 = vunpack.c.l.b16 %v1320
      %v1664 = vunpack.c.l.b16 %v1321
      %v1665 = vunpack.c.l.b16 %v1322
      %v1666 = vunpack.c.l.b16 %v1323
      %v1667 = vunpack.c.l.b16 %v1324
      %v1668 = vunpack.c.l.b16 %v1325
      %v1669 = vunpack.c.l.b16 %v1326
      %v1670 = vunpack.c.l.b16 %v1327
      %v1671 = vunpack.c.l.b16 %v1328
      %v1672 = vunpack.c.l.b16 %v1329
      %v1673 = vunpack.c.l.b16 %v1330
      %v1674 = vunpack.c.l.b16 %v1331
      %v1675 = vunpack.c.l.b16 %v1332
      %v1676 = vunpack.c.l.b16 %v1333
      %v1677 = vunpack.c.l.b16 %v1334
      %v1678 = vunpack.c.l.b16 %v1335
      %v1679 = vunpack.c.l.b16 %v1336
      %v1680 = vunpack.c.l.b16 %v1337
      %v1681 = vunpack.c.l.b16 %v1338
      %v1682 = vunpack.c.l.b16 %v1339
      %v1683 = vunpack.c.l.b16 %v1340
      %v1684 = vunpack.c.l.b16 %v1341
      %v1685 = vpack.c.b16 %v1654, %v1653
      %v1686 = vpack.c.b16 %v1656, %v1655
      %v1687 = vpack.c.b16 %v1658, %v1657
      %v1688 = vpack.c.b16 %v1660, %v1659
      %v1689 = vpack.c.b16 %v1662, %v1661
      %v1690 = vpack.c.b16 %v1664, %v1663
      %v1691 = vpack.c.b16 %v1666, %v1665
      %v1692 = vpack.c.b16 %v1668, %v1667
      %v1693 = vpack.c.b16 %v1670, %v1669
      %v1694 = vpack.c.b16 %v1672, %v1671
      %v1695 = vpack.c.b16 %v1674, %v1673
      %v1696 = vpack.c.b16 %v1676, %v1675
      %v1697 = vpack.c.b16 %v1678, %v1677
      %v1698 = vpack.c.b16 %v1680, %v1679
      %v1699 = vpack.c.b16 %v1682, %v1681
      %v1700 = vpack.c.b16 %v1684, %v1683
      %1701 = vrot.lane.b32.xlu0 %v1685, 16
      %v1702 = vpop.permute.xlu0 %1701
      %1703 = vrot.lane.b32.xlu0 %v1686, 16
      %v1704 = vpop.permute.xlu0 %1703
      %1705 = vrot.lane.b32.xlu0 %v1687, 16
      %v1706 = vpop.permute.xlu0 %1705
      %1707 = vrot.lane.b32.xlu0 %v1688, 16
      %v1708 = vpop.permute.xlu0 %1707
      %1709 = vrot.lane.b32.xlu0 %v1689, 16
      %v1710 = vpop.permute.xlu0 %1709
      %1711 = vrot.lane.b32.xlu0 %v1690, 16
      %v1712 = vpop.permute.xlu0 %1711
      %1713 = vrot.lane.b32.xlu0 %v1691, 16
      %v1714 = vpop.permute.xlu0 %1713
      %1715 = vrot.lane.b32.xlu0 %v1692, 16
      %v1716 = vpop.permute.xlu0 %1715
      %1717 = vrot.lane.b32.xlu0 %v1693, 16
      %v1718 = vpop.permute.xlu0 %1717
      %1719 = vrot.lane.b32.xlu0 %v1694, 16
      %v1720 = vpop.permute.xlu0 %1719
      %1721 = vrot.lane.b32.xlu0 %v1695, 16
      %v1722 = vpop.permute.xlu0 %1721
      %1723 = vrot.lane.b32.xlu0 %v1696, 16
      %v1724 = vpop.permute.xlu0 %1723
      %1725 = vrot.lane.b32.xlu0 %v1697, 16
      %v1726 = vpop.permute.xlu0 %1725
      %1727 = vrot.lane.b32.xlu0 %v1698, 16
      %v1728 = vpop.permute.xlu0 %1727
      %1729 = vrot.lane.b32.xlu0 %v1699, 16
      %v1730 = vpop.permute.xlu0 %1729
      %1731 = vrot.lane.b32.xlu0 %v1700, 16
      %v1732 = vpop.permute.xlu0 %1731
      %vm1733 = vcmask 130048
      %v1735 = vsel %vm1733, %v1365, %v1702
      %v1737 = vsel %vm1733, %v1382, %v1704
      %v1739 = vsel %vm1733, %v1399, %v1706
      %v1741 = vsel %vm1733, %v1416, %v1708
      %v1743 = vsel %vm1733, %v1433, %v1710
      %v1745 = vsel %vm1733, %v1450, %v1712
      %v1747 = vsel %vm1733, %v1467, %v1714
      %v1749 = vsel %vm1733, %v1484, %v1716
      %v1751 = vsel %vm1733, %v1501, %v1718
      %v1753 = vsel %vm1733, %v1518, %v1720
      %v1755 = vsel %vm1733, %v1535, %v1722
      %v1757 = vsel %vm1733, %v1552, %v1724
      %v1759 = vsel %vm1733, %v1569, %v1726
      %v1761 = vsel %vm1733, %v1586, %v1728
      %v1763 = vsel %vm1733, %v1603, %v1730
      %v1765 = vsel %vm1733, %v1620, %v1732
      %v1766 = vld [vmem:[%s5] sm:$0x1]
      %v1767 = vld [vmem:[%s6] sm:$0x1]
      %v1769 = vshrl.u32 0, 16
      %v1771 = vrot.slane %v1769, 7
      %v1772 = vshll.u32 0, 16
      %v1774 = vor.u32 %v1771, %v1772
      %v1775 = vshrl.u32 %v1735, 16
      %v1777 = vrot.slane %v1775, 7
      %v1778 = vshll.u32 %v1735, 16
      %v1780 = vor.u32 %v1777, %v1778
      %v1781 = vshrl.u32 %v1737, 16
      %v1783 = vrot.slane %v1781, 7
      %v1784 = vshll.u32 %v1737, 16
      %v1786 = vor.u32 %v1783, %v1784
      %v1787 = vshrl.u32 %v1739, 16
      %v1789 = vrot.slane %v1787, 7
      %v1790 = vshll.u32 %v1739, 16
      %v1792 = vor.u32 %v1789, %v1790
      %v1793 = vshrl.u32 %v1741, 16
      %v1795 = vrot.slane %v1793, 7
      %v1796 = vshll.u32 %v1741, 16
      %v1798 = vor.u32 %v1795, %v1796
      %v1799 = vshrl.u32 %v1743, 16
      %v1801 = vrot.slane %v1799, 7
      %v1802 = vshll.u32 %v1743, 16
      %v1804 = vor.u32 %v1801, %v1802
      %v1805 = vshrl.u32 %v1745, 16
      %v1807 = vrot.slane %v1805, 7
      %v1808 = vshll.u32 %v1745, 16
      %v1810 = vor.u32 %v1807, %v1808
      %v1811 = vshrl.u32 %v1747, 16
      %v1813 = vrot.slane %v1811, 7
      %v1814 = vshll.u32 %v1747, 16
      %v1816 = vor.u32 %v1813, %v1814
      %v1817 = vshrl.u32 %v1749, 16
      %v1819 = vrot.slane %v1817, 7
      %v1820 = vshll.u32 %v1749, 16
      %v1822 = vor.u32 %v1819, %v1820
      %v1823 = vshrl.u32 %v1751, 16
      %v1825 = vrot.slane %v1823, 7
      %v1826 = vshll.u32 %v1751, 16
      %v1828 = vor.u32 %v1825, %v1826
      %v1829 = vshrl.u32 %v1753, 16
      %v1831 = vrot.slane %v1829, 7
      %v1832 = vshll.u32 %v1753, 16
      %v1834 = vor.u32 %v1831, %v1832
      %v1835 = vshrl.u32 %v1755, 16
      %v1837 = vrot.slane %v1835, 7
      %v1838 = vshll.u32 %v1755, 16
      %v1840 = vor.u32 %v1837, %v1838
      %v1841 = vshrl.u32 %v1757, 16
      %v1843 = vrot.slane %v1841, 7
      %v1844 = vshll.u32 %v1757, 16
      %v1846 = vor.u32 %v1843, %v1844
      %v1847 = vshrl.u32 %v1759, 16
      %v1849 = vrot.slane %v1847, 7
      %v1850 = vshll.u32 %v1759, 16
      %v1852 = vor.u32 %v1849, %v1850
      %v1853 = vshrl.u32 %v1761, 16
      %v1855 = vrot.slane %v1853, 7
      %v1856 = vshll.u32 %v1761, 16
      %v1858 = vor.u32 %v1855, %v1856
      %v1859 = vshrl.u32 %v1763, 16
      %v1861 = vrot.slane %v1859, 7
      %v1862 = vshll.u32 %v1763, 16
      %v1864 = vor.u32 %v1861, %v1862
      %v1865 = vshrl.u32 %v1765, 16
      %v1867 = vrot.slane %v1865, 7
      %v1868 = vshll.u32 %v1765, 16
      %v1870 = vor.u32 %v1867, %v1868
      %v1905 = vsel %vm1053, 0, %v1774
      %v1906 = vsel %vm1053, 0, %v1780
      %v1907 = vsel %vm1053, 0, %v1786
      %v1908 = vsel %vm1053, 0, %v1792
      %v1909 = vsel %vm1053, 0, %v1798
      %v1910 = vsel %vm1053, 0, %v1804
      %v1911 = vsel %vm1053, 0, %v1810
      %v1912 = vsel %vm1053, 0, %v1816
      %v1913 = vsel %vm1053, 0, %v1822
      %v1914 = vsel %vm1053, 0, %v1828
      %v1915 = vsel %vm1053, 0, %v1834
      %v1916 = vsel %vm1053, 0, %v1840
      %v1917 = vsel %vm1053, 0, %v1846
      %v1918 = vsel %vm1053, 0, %v1852
      %v1919 = vsel %vm1053, 0, %v1858
      %v1920 = vsel %vm1053, 0, %v1864
      %v1921 = vsel %vm1053, 0, %v1870
      %v1922 = vsel %vm1053, %v1771, 0
      %v1923 = vsel %vm1053, %v1777, 0
      %v1924 = vsel %vm1053, %v1783, 0
      %v1925 = vsel %vm1053, %v1789, 0
      %v1926 = vsel %vm1053, %v1795, 0
      %v1927 = vsel %vm1053, %v1801, 0
      %v1928 = vsel %vm1053, %v1807, 0
      %v1929 = vsel %vm1053, %v1813, 0
      %v1930 = vsel %vm1053, %v1819, 0
      %v1931 = vsel %vm1053, %v1825, 0
      %v1932 = vsel %vm1053, %v1831, 0
      %v1933 = vsel %vm1053, %v1837, 0
      %v1934 = vsel %vm1053, %v1843, 0
      %v1935 = vsel %vm1053, %v1849, 0
      %v1936 = vsel %vm1053, %v1855, 0
      %v1937 = vsel %vm1053, %v1861, 0
      %v1938 = vsel %vm1053, %v1867, 0
      %v1939 = vld [vmem:[%s4] sm:$0xf]
      %v1940 = vld [vmem:[%s4 + $0x4] sm:$0xf]
      %v1941 = vld [vmem:[%s4 + $0x8] sm:$0xf]
      %v1942 = vld [vmem:[%s4 + $0xc] sm:$0xf]
      %vm1943 = vsmask.f32 7424
      %v1945 = vshrl.u32 %v1905, 16
      %v1947 = vshll.u32 %v1905, 16
      %v1949 = vrot.slane %v1947, 1
      %v1950 = vor.u32 %v1945, %v1949
      %v1952 = vshll.u32 %v1922, 16
      %v1954 = vrot.slane %v1952, 1
      %v1955 = vsel %vm1943, %v1950, %v1954
      %v1957 = vshrl.u32 %v1906, 16
      %v1959 = vshll.u32 %v1906, 16
      %v1961 = vrot.slane %v1959, 1
      %v1962 = vor.u32 %v1957, %v1961
      %v1964 = vshll.u32 %v1923, 16
      %v1966 = vrot.slane %v1964, 1
      %v1967 = vsel %vm1943, %v1962, %v1966
      %v1969 = vshrl.u32 %v1907, 16
      %v1971 = vshll.u32 %v1907, 16
      %v1973 = vrot.slane %v1971, 1
      %v1974 = vor.u32 %v1969, %v1973
      %v1976 = vshll.u32 %v1924, 16
      %v1978 = vrot.slane %v1976, 1
      %v1979 = vsel %vm1943, %v1974, %v1978
      %v1981 = vshrl.u32 %v1908, 16
      %v1983 = vshll.u32 %v1908, 16
      %v1985 = vrot.slane %v1983, 1
      %v1986 = vor.u32 %v1981, %v1985
      %v1988 = vshll.u32 %v1925, 16
      %v1990 = vrot.slane %v1988, 1
      %v1991 = vsel %vm1943, %v1986, %v1990
      %v1993 = vshrl.u32 %v1909, 16
      %v1995 = vshll.u32 %v1909, 16
      %v1997 = vrot.slane %v1995, 1
      %v1998 = vor.u32 %v1993, %v1997
      %v2000 = vshll.u32 %v1926, 16
      %v2002 = vrot.slane %v2000, 1
      %v2003 = vsel %vm1943, %v1998, %v2002
      %v2005 = vshrl.u32 %v1910, 16
      %v2007 = vshll.u32 %v1910, 16
      %v2009 = vrot.slane %v2007, 1
      %v2010 = vor.u32 %v2005, %v2009
      %v2012 = vshll.u32 %v1927, 16
      %v2014 = vrot.slane %v2012, 1
      %v2015 = vsel %vm1943, %v2010, %v2014
      %v2017 = vshrl.u32 %v1911, 16
      %v2019 = vshll.u32 %v1911, 16
      %v2021 = vrot.slane %v2019, 1
      %v2022 = vor.u32 %v2017, %v2021
      %v2024 = vshll.u32 %v1928, 16
      %v2026 = vrot.slane %v2024, 1
      %v2027 = vsel %vm1943, %v2022, %v2026
      %v2029 = vshrl.u32 %v1912, 16
      %v2031 = vshll.u32 %v1912, 16
      %v2033 = vrot.slane %v2031, 1
      %v2034 = vor.u32 %v2029, %v2033
      %v2036 = vshll.u32 %v1929, 16
      %v2038 = vrot.slane %v2036, 1
      %v2039 = vsel %vm1943, %v2034, %v2038
      %v2041 = vshrl.u32 %v1913, 16
      %v2043 = vshll.u32 %v1913, 16
      %v2045 = vrot.slane %v2043, 1
      %v2046 = vor.u32 %v2041, %v2045
      %v2048 = vshll.u32 %v1930, 16
      %v2050 = vrot.slane %v2048, 1
      %v2051 = vsel %vm1943, %v2046, %v2050
      %v2053 = vshrl.u32 %v1914, 16
      %v2055 = vshll.u32 %v1914, 16
      %v2057 = vrot.slane %v2055, 1
      %v2058 = vor.u32 %v2053, %v2057
      %v2060 = vshll.u32 %v1931, 16
      %v2062 = vrot.slane %v2060, 1
      %v2063 = vsel %vm1943, %v2058, %v2062
      %v2065 = vshrl.u32 %v1915, 16
      %v2067 = vshll.u32 %v1915, 16
      %v2069 = vrot.slane %v2067, 1
      %v2070 = vor.u32 %v2065, %v2069
      %v2072 = vshll.u32 %v1932, 16
      %v2074 = vrot.slane %v2072, 1
      %v2075 = vsel %vm1943, %v2070, %v2074
      %v2077 = vshrl.u32 %v1916, 16
      %v2079 = vshll.u32 %v1916, 16
      %v2081 = vrot.slane %v2079, 1
      %v2082 = vor.u32 %v2077, %v2081
      %v2084 = vshll.u32 %v1933, 16
      %v2086 = vrot.slane %v2084, 1
      %v2087 = vsel %vm1943, %v2082, %v2086
      %v2089 = vshrl.u32 %v1917, 16
      %v2091 = vshll.u32 %v1917, 16
      %v2093 = vrot.slane %v2091, 1
      %v2094 = vor.u32 %v2089, %v2093
      %v2096 = vshll.u32 %v1934, 16
      %v2098 = vrot.slane %v2096, 1
      %v2099 = vsel %vm1943, %v2094, %v2098
      %v2101 = vshrl.u32 %v1918, 16
      %v2103 = vshll.u32 %v1918, 16
      %v2105 = vrot.slane %v2103, 1
      %v2106 = vor.u32 %v2101, %v2105
      %v2108 = vshll.u32 %v1935, 16
      %v2110 = vrot.slane %v2108, 1
      %v2111 = vsel %vm1943, %v2106, %v2110
      %v2113 = vshrl.u32 %v1919, 16
      %v2115 = vshll.u32 %v1919, 16
      %v2117 = vrot.slane %v2115, 1
      %v2118 = vor.u32 %v2113, %v2117
      %v2120 = vshll.u32 %v1936, 16
      %v2122 = vrot.slane %v2120, 1
      %v2123 = vsel %vm1943, %v2118, %v2122
      %v2125 = vshrl.u32 %v1920, 16
      %v2127 = vshll.u32 %v1920, 16
      %v2129 = vrot.slane %v2127, 1
      %v2130 = vor.u32 %v2125, %v2129
      %v2132 = vshll.u32 %v1937, 16
      %v2134 = vrot.slane %v2132, 1
      %v2135 = vsel %vm1943, %v2130, %v2134
      %s2136 = scalar_lea.vmem %s4, 16
      %v2137 = vld [vmem:[%s2136] sm:$0xf]
      %v2138 = vld [vmem:[%s2136 + $0x4] sm:$0xf]
      %v2139 = vld [vmem:[%s2136 + $0x8] sm:$0xf]
      %v2140 = vld [vmem:[%s2136 + $0xc] sm:$0xf]
      %v2145 = vunpack.c.l.b16 %v2137
      %v2146 = vunpack.c.l.b16 %v2138
      %v2147 = vunpack.c.l.b16 %v2139
      %v2148 = vunpack.c.l.b16 %v2140
      %v2149 = vpack.c.b16 %v2146, %v2145
      %v2150 = vpack.c.b16 %v2148, %v2147
      %v2154 = vsel %vm429, %v1955, 0
      %v2157 = vsel %vm429, %v1967, 0
      %v2160 = vsel %vm429, %v1979, 0
      %v2163 = vsel %vm429, %v1991, 0
      %v2166 = vsel %vm429, %v2003, 0
      %v2169 = vsel %vm429, %v2015, 0
      %v2172 = vsel %vm429, %v2027, 0
      %v2175 = vsel %vm429, %v2039, 0
      %v2178 = vsel %vm429, %v2051, 0
      %v2181 = vsel %vm429, %v2063, 0
      %v2184 = vsel %vm429, %v2075, 0
      %v2187 = vsel %vm429, %v2087, 0
      %v2190 = vsel %vm429, %v2099, 0
      %v2193 = vsel %vm429, %v2111, 0
      %v2196 = vsel %vm429, %v2123, 0
      %v2199 = vsel %vm429, %v2135, 0
      %2201 = vmatpush.bf16.msra.mxu0 0
      %2202 = vmatpush.bf16.msra.mxu0 0
      %2203 = vmatpush.bf16.msra.mxu0 0
      %2204 = vmatpush.bf16.msra.mxu0 0
      %2205 = vmatpush.bf16.msra.mxu0 0
      %2206 = vmatpush.bf16.msra.mxu0 0
      %2207 = vmatpush.bf16.msra.mxu0 %v2150
      %2208 = vmatpush.bf16.msra.mxu0 %v2149
      %2209 = vmatmul.bf16.gmra.mxu0 %v2154
      %v2210 = vpop.f32.mrf.mxu0
      %v2211 = vadd.f32 0.0, %v2210
      %v2212 = vpop.f32.mrf.mxu0
      %v2213 = vadd.f32 0.0, %v2212
      %2214 = vmatmul.bf16.gmra.mxu0 %v2157
      %v2215 = vpop.f32.mrf.mxu0
      %v2216 = vadd.f32 0.0, %v2215
      %v2217 = vpop.f32.mrf.mxu0
      %v2218 = vadd.f32 0.0, %v2217
      %2219 = vmatmul.bf16.gmra.mxu0 %v2160
      %v2220 = vpop.f32.mrf.mxu0
      %v2221 = vadd.f32 0.0, %v2220
      %v2222 = vpop.f32.mrf.mxu0
      %v2223 = vadd.f32 0.0, %v2222
      %2224 = vmatmul.bf16.gmra.mxu0 %v2163
      %v2225 = vpop.f32.mrf.mxu0
      %v2226 = vadd.f32 0.0, %v2225
      %v2227 = vpop.f32.mrf.mxu0
      %v2228 = vadd.f32 0.0, %v2227
      %2229 = vmatmul.bf16.gmra.mxu0 %v2166
      %v2230 = vpop.f32.mrf.mxu0
      %v2231 = vadd.f32 0.0, %v2230
      %v2232 = vpop.f32.mrf.mxu0
      %v2233 = vadd.f32 0.0, %v2232
      %2234 = vmatmul.bf16.gmra.mxu0 %v2169
      %v2235 = vpop.f32.mrf.mxu0
      %v2236 = vadd.f32 0.0, %v2235
      %v2237 = vpop.f32.mrf.mxu0
      %v2238 = vadd.f32 0.0, %v2237
      %2239 = vmatmul.bf16.gmra.mxu0 %v2172
      %v2240 = vpop.f32.mrf.mxu0
      %v2241 = vadd.f32 0.0, %v2240
      %v2242 = vpop.f32.mrf.mxu0
      %v2243 = vadd.f32 0.0, %v2242
      %2244 = vmatmul.bf16.gmra.mxu0 %v2175
      %v2245 = vpop.f32.mrf.mxu0
      %v2246 = vadd.f32 0.0, %v2245
      %v2247 = vpop.f32.mrf.mxu0
      %v2248 = vadd.f32 0.0, %v2247
      %2249 = vmatmul.bf16.gmra.mxu0 %v2178
      %v2250 = vpop.f32.mrf.mxu0
      %v2251 = vadd.f32 0.0, %v2250
      %v2252 = vpop.f32.mrf.mxu0
      %v2253 = vadd.f32 0.0, %v2252
      %2254 = vmatmul.bf16.gmra.mxu0 %v2181
      %v2255 = vpop.f32.mrf.mxu0
      %v2256 = vadd.f32 0.0, %v2255
      %v2257 = vpop.f32.mrf.mxu0
      %v2258 = vadd.f32 0.0, %v2257
      %2259 = vmatmul.bf16.gmra.mxu0 %v2184
      %v2260 = vpop.f32.mrf.mxu0
      %v2261 = vadd.f32 0.0, %v2260
      %v2262 = vpop.f32.mrf.mxu0
      %v2263 = vadd.f32 0.0, %v2262
      %2264 = vmatmul.bf16.gmra.mxu0 %v2187
      %v2265 = vpop.f32.mrf.mxu0
      %v2266 = vadd.f32 0.0, %v2265
      %v2267 = vpop.f32.mrf.mxu0
      %v2268 = vadd.f32 0.0, %v2267
      %2269 = vmatmul.bf16.gmra.mxu0 %v2190
      %v2270 = vpop.f32.mrf.mxu0
      %v2271 = vadd.f32 0.0, %v2270
      %v2272 = vpop.f32.mrf.mxu0
      %v2273 = vadd.f32 0.0, %v2272
      %2274 = vmatmul.bf16.gmra.mxu0 %v2193
      %v2275 = vpop.f32.mrf.mxu0
      %v2276 = vadd.f32 0.0, %v2275
      %v2277 = vpop.f32.mrf.mxu0
      %v2278 = vadd.f32 0.0, %v2277
      %2279 = vmatmul.bf16.gmra.mxu0 %v2196
      %v2280 = vpop.f32.mrf.mxu0
      %v2281 = vadd.f32 0.0, %v2280
      %v2282 = vpop.f32.mrf.mxu0
      %v2283 = vadd.f32 0.0, %v2282
      %2284 = vmatmul.bf16.gmra.mxu0 %v2199
      %v2285 = vpop.f32.mrf.mxu0
      %v2286 = vadd.f32 0.0, %v2285
      %v2287 = vpop.f32.mrf.mxu0
      %v2288 = vadd.f32 0.0, %v2287
      %2289 = vdwg.mxu0
      %v2294 = vunpack.c.l.b16 %v1939
      %v2295 = vunpack.c.l.b16 %v1940
      %v2296 = vunpack.c.l.b16 %v1941
      %v2297 = vunpack.c.l.b16 %v1942
      %v2298 = vpack.c.b16 %v2295, %v2294
      %v2299 = vpack.c.b16 %v2297, %v2296
      %v2302 = vsel %vm429, %v1905, 0
      %v2304 = vsel %vm429, %v1906, 0
      %v2306 = vsel %vm429, %v1907, 0
      %v2308 = vsel %vm429, %v1908, 0
      %v2310 = vsel %vm429, %v1909, 0
      %v2312 = vsel %vm429, %v1910, 0
      %v2314 = vsel %vm429, %v1911, 0
      %v2316 = vsel %vm429, %v1912, 0
      %v2318 = vsel %vm429, %v1913, 0
      %v2320 = vsel %vm429, %v1914, 0
      %v2322 = vsel %vm429, %v1915, 0
      %v2324 = vsel %vm429, %v1916, 0
      %v2326 = vsel %vm429, %v1917, 0
      %v2328 = vsel %vm429, %v1918, 0
      %v2330 = vsel %vm429, %v1919, 0
      %v2332 = vsel %vm429, %v1920, 0
      %2334 = vmatpush.bf16.msra.mxu0 0
      %2335 = vmatpush.bf16.msra.mxu0 0
      %2336 = vmatpush.bf16.msra.mxu0 0
      %2337 = vmatpush.bf16.msra.mxu0 0
      %2338 = vmatpush.bf16.msra.mxu0 0
      %2339 = vmatpush.bf16.msra.mxu0 0
      %2340 = vmatpush.bf16.msra.mxu0 %v2299
      %2341 = vmatpush.bf16.msra.mxu0 %v2298
      %2342 = vmatmul.bf16.gmra.mxu0 %v2302
      %v2343 = vpop.f32.mrf.mxu0
      %v2344 = vadd.f32 %v2211, %v2343
      %v2345 = vpop.f32.mrf.mxu0
      %v2346 = vadd.f32 %v2213, %v2345
      %2347 = vmatmul.bf16.gmra.mxu0 %v2304
      %v2348 = vpop.f32.mrf.mxu0
      %v2349 = vadd.f32 %v2216, %v2348
      %v2350 = vpop.f32.mrf.mxu0
      %v2351 = vadd.f32 %v2218, %v2350
      %2352 = vmatmul.bf16.gmra.mxu0 %v2306
      %v2353 = vpop.f32.mrf.mxu0
      %v2354 = vadd.f32 %v2221, %v2353
      %v2355 = vpop.f32.mrf.mxu0
      %v2356 = vadd.f32 %v2223, %v2355
      %2357 = vmatmul.bf16.gmra.mxu0 %v2308
      %v2358 = vpop.f32.mrf.mxu0
      %v2359 = vadd.f32 %v2226, %v2358
      %v2360 = vpop.f32.mrf.mxu0
      %v2361 = vadd.f32 %v2228, %v2360
      %2362 = vmatmul.bf16.gmra.mxu0 %v2310
      %v2363 = vpop.f32.mrf.mxu0
      %v2364 = vadd.f32 %v2231, %v2363
      %v2365 = vpop.f32.mrf.mxu0
      %v2366 = vadd.f32 %v2233, %v2365
      %2367 = vmatmul.bf16.gmra.mxu0 %v2312
      %v2368 = vpop.f32.mrf.mxu0
      %v2369 = vadd.f32 %v2236, %v2368
      %v2370 = vpop.f32.mrf.mxu0
      %v2371 = vadd.f32 %v2238, %v2370
      %2372 = vmatmul.bf16.gmra.mxu0 %v2314
      %v2373 = vpop.f32.mrf.mxu0
      %v2374 = vadd.f32 %v2241, %v2373
      %v2375 = vpop.f32.mrf.mxu0
      %v2376 = vadd.f32 %v2243, %v2375
      %2377 = vmatmul.bf16.gmra.mxu0 %v2316
      %v2378 = vpop.f32.mrf.mxu0
      %v2379 = vadd.f32 %v2246, %v2378
      %v2380 = vpop.f32.mrf.mxu0
      %v2381 = vadd.f32 %v2248, %v2380
      %2382 = vmatmul.bf16.gmra.mxu0 %v2318
      %v2383 = vpop.f32.mrf.mxu0
      %v2384 = vadd.f32 %v2251, %v2383
      %v2385 = vpop.f32.mrf.mxu0
      %v2386 = vadd.f32 %v2253, %v2385
      %2387 = vmatmul.bf16.gmra.mxu0 %v2320
      %v2388 = vpop.f32.mrf.mxu0
      %v2389 = vadd.f32 %v2256, %v2388
      %v2390 = vpop.f32.mrf.mxu0
      %v2391 = vadd.f32 %v2258, %v2390
      %2392 = vmatmul.bf16.gmra.mxu0 %v2322
      %v2393 = vpop.f32.mrf.mxu0
      %v2394 = vadd.f32 %v2261, %v2393
      %v2395 = vpop.f32.mrf.mxu0
      %v2396 = vadd.f32 %v2263, %v2395
      %2397 = vmatmul.bf16.gmra.mxu0 %v2324
      %v2398 = vpop.f32.mrf.mxu0
      %v2399 = vadd.f32 %v2266, %v2398
      %v2400 = vpop.f32.mrf.mxu0
      %v2401 = vadd.f32 %v2268, %v2400
      %2402 = vmatmul.bf16.gmra.mxu0 %v2326
      %v2403 = vpop.f32.mrf.mxu0
      %v2404 = vadd.f32 %v2271, %v2403
      %v2405 = vpop.f32.mrf.mxu0
      %v2406 = vadd.f32 %v2273, %v2405
      %2407 = vmatmul.bf16.gmra.mxu0 %v2328
      %v2408 = vpop.f32.mrf.mxu0
      %v2409 = vadd.f32 %v2276, %v2408
      %v2410 = vpop.f32.mrf.mxu0
      %v2411 = vadd.f32 %v2278, %v2410
      %2412 = vmatmul.bf16.gmra.mxu0 %v2330
      %v2413 = vpop.f32.mrf.mxu0
      %v2414 = vadd.f32 %v2281, %v2413
      %v2415 = vpop.f32.mrf.mxu0
      %v2416 = vadd.f32 %v2283, %v2415
      %2417 = vmatmul.bf16.gmra.mxu0 %v2332
      %v2418 = vpop.f32.mrf.mxu0
      %v2419 = vadd.f32 %v2286, %v2418
      %v2420 = vpop.f32.mrf.mxu0
      %v2421 = vadd.f32 %v2288, %v2420
      %2422 = vdwg.mxu0
      %vm2455 = vcmask 1046528
      %v2456 = vrot.slane %v1905, 1
      %v2457 = vrot.slane %v1922, 1
      %v2458 = vsel %vm2455, %v2456, %v2457
      %v2459 = vrot.slane %v1906, 1
      %v2460 = vrot.slane %v1923, 1
      %v2461 = vsel %vm2455, %v2459, %v2460
      %v2462 = vrot.slane %v1907, 1
      %v2463 = vrot.slane %v1924, 1
      %v2464 = vsel %vm2455, %v2462, %v2463
      %v2465 = vrot.slane %v1908, 1
      %v2466 = vrot.slane %v1925, 1
      %v2467 = vsel %vm2455, %v2465, %v2466
      %v2468 = vrot.slane %v1909, 1
      %v2469 = vrot.slane %v1926, 1
      %v2470 = vsel %vm2455, %v2468, %v2469
      %v2471 = vrot.slane %v1910, 1
      %v2472 = vrot.slane %v1927, 1
      %v2473 = vsel %vm2455, %v2471, %v2472
      %v2474 = vrot.slane %v1911, 1
      %v2475 = vrot.slane %v1928, 1
      %v2476 = vsel %vm2455, %v2474, %v2475
      %v2477 = vrot.slane %v1912, 1
      %v2478 = vrot.slane %v1929, 1
      %v2479 = vsel %vm2455, %v2477, %v2478
      %v2480 = vrot.slane %v1913, 1
      %v2481 = vrot.slane %v1930, 1
      %v2482 = vsel %vm2455, %v2480, %v2481
      %v2483 = vrot.slane %v1914, 1
      %v2484 = vrot.slane %v1931, 1
      %v2485 = vsel %vm2455, %v2483, %v2484
      %v2486 = vrot.slane %v1915, 1
      %v2487 = vrot.slane %v1932, 1
      %v2488 = vsel %vm2455, %v2486, %v2487
      %v2489 = vrot.slane %v1916, 1
      %v2490 = vrot.slane %v1933, 1
      %v2491 = vsel %vm2455, %v2489, %v2490
      %v2492 = vrot.slane %v1917, 1
      %v2493 = vrot.slane %v1934, 1
      %v2494 = vsel %vm2455, %v2492, %v2493
      %v2495 = vrot.slane %v1918, 1
      %v2496 = vrot.slane %v1935, 1
      %v2497 = vsel %vm2455, %v2495, %v2496
      %v2498 = vrot.slane %v1919, 1
      %v2499 = vrot.slane %v1936, 1
      %v2500 = vsel %vm2455, %v2498, %v2499
      %v2501 = vrot.slane %v1920, 1
      %v2502 = vrot.slane %v1937, 1
      %v2503 = vsel %vm2455, %v2501, %v2502
      %s2504 = scalar_lea.vmem %s4, 32
      %v2505 = vld [vmem:[%s2504] sm:$0xf]
      %v2506 = vld [vmem:[%s2504 + $0x4] sm:$0xf]
      %v2507 = vld [vmem:[%s2504 + $0x8] sm:$0xf]
      %v2508 = vld [vmem:[%s2504 + $0xc] sm:$0xf]
      %v2513 = vunpack.c.l.b16 %v2505
      %v2514 = vunpack.c.l.b16 %v2506
      %v2515 = vunpack.c.l.b16 %v2507
      %v2516 = vunpack.c.l.b16 %v2508
      %v2517 = vpack.c.b16 %v2514, %v2513
      %v2518 = vpack.c.b16 %v2516, %v2515
      %v2522 = vsel %vm429, %v2458, 0
      %v2525 = vsel %vm429, %v2461, 0
      %v2528 = vsel %vm429, %v2464, 0
      %v2531 = vsel %vm429, %v2467, 0
      %v2534 = vsel %vm429, %v2470, 0
      %v2537 = vsel %vm429, %v2473, 0
      %v2540 = vsel %vm429, %v2476, 0
      %v2543 = vsel %vm429, %v2479, 0
      %v2546 = vsel %vm429, %v2482, 0
      %v2549 = vsel %vm429, %v2485, 0
      %v2552 = vsel %vm429, %v2488, 0
      %v2555 = vsel %vm429, %v2491, 0
      %v2558 = vsel %vm429, %v2494, 0
      %v2561 = vsel %vm429, %v2497, 0
      %v2564 = vsel %vm429, %v2500, 0
      %v2567 = vsel %vm429, %v2503, 0
      %2569 = vmatpush.bf16.msra.mxu0 0
      %2570 = vmatpush.bf16.msra.mxu0 0
      %2571 = vmatpush.bf16.msra.mxu0 0
      %2572 = vmatpush.bf16.msra.mxu0 0
      %2573 = vmatpush.bf16.msra.mxu0 0
      %2574 = vmatpush.bf16.msra.mxu0 0
      %2575 = vmatpush.bf16.msra.mxu0 %v2518
      %2576 = vmatpush.bf16.msra.mxu0 %v2517
      %2577 = vmatmul.bf16.gmra.mxu0 %v2522
      %v2578 = vpop.f32.mrf.mxu0
      %v2579 = vadd.f32 0.0, %v2578
      %v2580 = vpop.f32.mrf.mxu0
      %v2581 = vadd.f32 0.0, %v2580
      %2582 = vmatmul.bf16.gmra.mxu0 %v2525
      %v2583 = vpop.f32.mrf.mxu0
      %v2584 = vadd.f32 0.0, %v2583
      %v2585 = vpop.f32.mrf.mxu0
      %v2586 = vadd.f32 0.0, %v2585
      %2587 = vmatmul.bf16.gmra.mxu0 %v2528
      %v2588 = vpop.f32.mrf.mxu0
      %v2589 = vadd.f32 0.0, %v2588
      %v2590 = vpop.f32.mrf.mxu0
      %v2591 = vadd.f32 0.0, %v2590
      %2592 = vmatmul.bf16.gmra.mxu0 %v2531
      %v2593 = vpop.f32.mrf.mxu0
      %v2594 = vadd.f32 0.0, %v2593
      %v2595 = vpop.f32.mrf.mxu0
      %v2596 = vadd.f32 0.0, %v2595
      %2597 = vmatmul.bf16.gmra.mxu0 %v2534
      %v2598 = vpop.f32.mrf.mxu0
      %v2599 = vadd.f32 0.0, %v2598
      %v2600 = vpop.f32.mrf.mxu0
      %v2601 = vadd.f32 0.0, %v2600
      %2602 = vmatmul.bf16.gmra.mxu0 %v2537
      %v2603 = vpop.f32.mrf.mxu0
      %v2604 = vadd.f32 0.0, %v2603
      %v2605 = vpop.f32.mrf.mxu0
      %v2606 = vadd.f32 0.0, %v2605
      %2607 = vmatmul.bf16.gmra.mxu0 %v2540
      %v2608 = vpop.f32.mrf.mxu0
      %v2609 = vadd.f32 0.0, %v2608
      %v2610 = vpop.f32.mrf.mxu0
      %v2611 = vadd.f32 0.0, %v2610
      %2612 = vmatmul.bf16.gmra.mxu0 %v2543
      %v2613 = vpop.f32.mrf.mxu0
      %v2614 = vadd.f32 0.0, %v2613
      %v2615 = vpop.f32.mrf.mxu0
      %v2616 = vadd.f32 0.0, %v2615
      %2617 = vmatmul.bf16.gmra.mxu0 %v2546
      %v2618 = vpop.f32.mrf.mxu0
      %v2619 = vadd.f32 0.0, %v2618
      %v2620 = vpop.f32.mrf.mxu0
      %v2621 = vadd.f32 0.0, %v2620
      %2622 = vmatmul.bf16.gmra.mxu0 %v2549
      %v2623 = vpop.f32.mrf.mxu0
      %v2624 = vadd.f32 0.0, %v2623
      %v2625 = vpop.f32.mrf.mxu0
      %v2626 = vadd.f32 0.0, %v2625
      %2627 = vmatmul.bf16.gmra.mxu0 %v2552
      %v2628 = vpop.f32.mrf.mxu0
      %v2629 = vadd.f32 0.0, %v2628
      %v2630 = vpop.f32.mrf.mxu0
      %v2631 = vadd.f32 0.0, %v2630
      %2632 = vmatmul.bf16.gmra.mxu0 %v2555
      %v2633 = vpop.f32.mrf.mxu0
      %v2634 = vadd.f32 0.0, %v2633
      %v2635 = vpop.f32.mrf.mxu0
      %v2636 = vadd.f32 0.0, %v2635
      %2637 = vmatmul.bf16.gmra.mxu0 %v2558
      %v2638 = vpop.f32.mrf.mxu0
      %v2639 = vadd.f32 0.0, %v2638
      %v2640 = vpop.f32.mrf.mxu0
      %v2641 = vadd.f32 0.0, %v2640
      %2642 = vmatmul.bf16.gmra.mxu0 %v2561
      %v2643 = vpop.f32.mrf.mxu0
      %v2644 = vadd.f32 0.0, %v2643
      %v2645 = vpop.f32.mrf.mxu0
      %v2646 = vadd.f32 0.0, %v2645
      %2647 = vmatmul.bf16.gmra.mxu0 %v2564
      %v2648 = vpop.f32.mrf.mxu0
      %v2649 = vadd.f32 0.0, %v2648
      %v2650 = vpop.f32.mrf.mxu0
      %v2651 = vadd.f32 0.0, %v2650
      %2652 = vmatmul.bf16.gmra.mxu0 %v2567
      %v2653 = vpop.f32.mrf.mxu0
      %v2654 = vadd.f32 0.0, %v2653
      %v2655 = vpop.f32.mrf.mxu0
      %v2656 = vadd.f32 0.0, %v2655
      %2657 = vdwg.mxu0
      %v2658 = vadd.f32 %v2344, %v2579
      %v2659 = vadd.f32 %v2346, %v2581
      %v2660 = vadd.f32 %v2349, %v2584
      %v2661 = vadd.f32 %v2351, %v2586
      %v2662 = vadd.f32 %v2354, %v2589
      %v2663 = vadd.f32 %v2356, %v2591
      %v2664 = vadd.f32 %v2359, %v2594
      %v2665 = vadd.f32 %v2361, %v2596
      %v2666 = vadd.f32 %v2364, %v2599
      %v2667 = vadd.f32 %v2366, %v2601
      %v2668 = vadd.f32 %v2369, %v2604
      %v2669 = vadd.f32 %v2371, %v2606
      %v2670 = vadd.f32 %v2374, %v2609
      %v2671 = vadd.f32 %v2376, %v2611
      %v2672 = vadd.f32 %v2379, %v2614
      %v2673 = vadd.f32 %v2381, %v2616
      %v2674 = vadd.f32 %v2384, %v2619
      %v2675 = vadd.f32 %v2386, %v2621
      %v2676 = vadd.f32 %v2389, %v2624
      %v2677 = vadd.f32 %v2391, %v2626
      %v2678 = vadd.f32 %v2394, %v2629
      %v2679 = vadd.f32 %v2396, %v2631
      %v2680 = vadd.f32 %v2399, %v2634
      %v2681 = vadd.f32 %v2401, %v2636
      %v2682 = vadd.f32 %v2404, %v2639
      %v2683 = vadd.f32 %v2406, %v2641
      %v2684 = vadd.f32 %v2409, %v2644
      %v2685 = vadd.f32 %v2411, %v2646
      %v2686 = vadd.f32 %v2414, %v2649
      %v2687 = vadd.f32 %v2416, %v2651
      %v2688 = vadd.f32 %v2419, %v2654
      %v2689 = vadd.f32 %v2421, %v2656
      %s2690 = scalar_lea.vmem %s4, 48
      %v2691 = vld [vmem:[%s2690] sm:$0xf]
      %v2692 = vld [vmem:[%s2690 + $0x4] sm:$0xf]
      %v2693 = vld [vmem:[%s2690 + $0x8] sm:$0xf]
      %v2694 = vld [vmem:[%s2690 + $0xc] sm:$0xf]
      %v2699 = vunpack.c.l.b16 %v2691
      %v2700 = vunpack.c.l.b16 %v2692
      %v2701 = vunpack.c.l.b16 %v2693
      %v2702 = vunpack.c.l.b16 %v2694
      %v2703 = vpack.c.b16 %v2700, %v2699
      %v2704 = vpack.c.b16 %v2702, %v2701
      %v2708 = vsel %vm429, %v1921, 0
      %2710 = vmatpush.bf16.msra.mxu0 0
      %2711 = vmatpush.bf16.msra.mxu0 0
      %2712 = vmatpush.bf16.msra.mxu0 0
      %2713 = vmatpush.bf16.msra.mxu0 0
      %2714 = vmatpush.bf16.msra.mxu0 0
      %2715 = vmatpush.bf16.msra.mxu0 0
      %2716 = vmatpush.bf16.msra.mxu0 %v2704
      %2717 = vmatpush.bf16.msra.mxu0 %v2703
      %2718 = vmatmul.bf16.gmra.mxu0 %v2304
      %v2719 = vpop.f32.mrf.mxu0
      %v2720 = vadd.f32 0.0, %v2719
      %v2721 = vpop.f32.mrf.mxu0
      %v2722 = vadd.f32 0.0, %v2721
      %2723 = vmatmul.bf16.gmra.mxu0 %v2306
      %v2724 = vpop.f32.mrf.mxu0
      %v2725 = vadd.f32 0.0, %v2724
      %v2726 = vpop.f32.mrf.mxu0
      %v2727 = vadd.f32 0.0, %v2726
      %2728 = vmatmul.bf16.gmra.mxu0 %v2308
      %v2729 = vpop.f32.mrf.mxu0
      %v2730 = vadd.f32 0.0, %v2729
      %v2731 = vpop.f32.mrf.mxu0
      %v2732 = vadd.f32 0.0, %v2731
      %2733 = vmatmul.bf16.gmra.mxu0 %v2310
      %v2734 = vpop.f32.mrf.mxu0
      %v2735 = vadd.f32 0.0, %v2734
      %v2736 = vpop.f32.mrf.mxu0
      %v2737 = vadd.f32 0.0, %v2736
      %2738 = vmatmul.bf16.gmra.mxu0 %v2312
      %v2739 = vpop.f32.mrf.mxu0
      %v2740 = vadd.f32 0.0, %v2739
      %v2741 = vpop.f32.mrf.mxu0
      %v2742 = vadd.f32 0.0, %v2741
      %2743 = vmatmul.bf16.gmra.mxu0 %v2314
      %v2744 = vpop.f32.mrf.mxu0
      %v2745 = vadd.f32 0.0, %v2744
      %v2746 = vpop.f32.mrf.mxu0
      %v2747 = vadd.f32 0.0, %v2746
      %2748 = vmatmul.bf16.gmra.mxu0 %v2316
      %v2749 = vpop.f32.mrf.mxu0
      %v2750 = vadd.f32 0.0, %v2749
      %v2751 = vpop.f32.mrf.mxu0
      %v2752 = vadd.f32 0.0, %v2751
      %2753 = vmatmul.bf16.gmra.mxu0 %v2318
      %v2754 = vpop.f32.mrf.mxu0
      %v2755 = vadd.f32 0.0, %v2754
      %v2756 = vpop.f32.mrf.mxu0
      %v2757 = vadd.f32 0.0, %v2756
      %2758 = vmatmul.bf16.gmra.mxu0 %v2320
      %v2759 = vpop.f32.mrf.mxu0
      %v2760 = vadd.f32 0.0, %v2759
      %v2761 = vpop.f32.mrf.mxu0
      %v2762 = vadd.f32 0.0, %v2761
      %2763 = vmatmul.bf16.gmra.mxu0 %v2322
      %v2764 = vpop.f32.mrf.mxu0
      %v2765 = vadd.f32 0.0, %v2764
      %v2766 = vpop.f32.mrf.mxu0
      %v2767 = vadd.f32 0.0, %v2766
      %2768 = vmatmul.bf16.gmra.mxu0 %v2324
      %v2769 = vpop.f32.mrf.mxu0
      %v2770 = vadd.f32 0.0, %v2769
      %v2771 = vpop.f32.mrf.mxu0
      %v2772 = vadd.f32 0.0, %v2771
      %2773 = vmatmul.bf16.gmra.mxu0 %v2326
      %v2774 = vpop.f32.mrf.mxu0
      %v2775 = vadd.f32 0.0, %v2774
      %v2776 = vpop.f32.mrf.mxu0
      %v2777 = vadd.f32 0.0, %v2776
      %2778 = vmatmul.bf16.gmra.mxu0 %v2328
      %v2779 = vpop.f32.mrf.mxu0
      %v2780 = vadd.f32 0.0, %v2779
      %v2781 = vpop.f32.mrf.mxu0
      %v2782 = vadd.f32 0.0, %v2781
      %2783 = vmatmul.bf16.gmra.mxu0 %v2330
      %v2784 = vpop.f32.mrf.mxu0
      %v2785 = vadd.f32 0.0, %v2784
      %v2786 = vpop.f32.mrf.mxu0
      %v2787 = vadd.f32 0.0, %v2786
      %2788 = vmatmul.bf16.gmra.mxu0 %v2332
      %v2789 = vpop.f32.mrf.mxu0
      %v2790 = vadd.f32 0.0, %v2789
      %v2791 = vpop.f32.mrf.mxu0
      %v2792 = vadd.f32 0.0, %v2791
      %2793 = vmatmul.bf16.gmra.mxu0 %v2708
      %v2794 = vpop.f32.mrf.mxu0
      %v2795 = vadd.f32 0.0, %v2794
      %v2796 = vpop.f32.mrf.mxu0
      %v2797 = vadd.f32 0.0, %v2796
      %2798 = vdwg.mxu0
      %v2799 = vadd.f32 %v2658, %v2720
      %v2800 = vadd.f32 %v2659, %v2722
      %v2801 = vadd.f32 %v2660, %v2725
      %v2802 = vadd.f32 %v2661, %v2727
      %v2803 = vadd.f32 %v2662, %v2730
      %v2804 = vadd.f32 %v2663, %v2732
      %v2805 = vadd.f32 %v2664, %v2735
      %v2806 = vadd.f32 %v2665, %v2737
      %v2807 = vadd.f32 %v2666, %v2740
      %v2808 = vadd.f32 %v2667, %v2742
      %v2809 = vadd.f32 %v2668, %v2745
      %v2810 = vadd.f32 %v2669, %v2747
      %v2811 = vadd.f32 %v2670, %v2750
      %v2812 = vadd.f32 %v2671, %v2752
      %v2813 = vadd.f32 %v2672, %v2755
      %v2814 = vadd.f32 %v2673, %v2757
      %v2815 = vadd.f32 %v2674, %v2760
      %v2816 = vadd.f32 %v2675, %v2762
      %v2817 = vadd.f32 %v2676, %v2765
      %v2818 = vadd.f32 %v2677, %v2767
      %v2819 = vadd.f32 %v2678, %v2770
      %v2820 = vadd.f32 %v2679, %v2772
      %v2821 = vadd.f32 %v2680, %v2775
      %v2822 = vadd.f32 %v2681, %v2777
      %v2823 = vadd.f32 %v2682, %v2780
      %v2824 = vadd.f32 %v2683, %v2782
      %v2825 = vadd.f32 %v2684, %v2785
      %v2826 = vadd.f32 %v2685, %v2787
      %v2827 = vadd.f32 %v2686, %v2790
      %v2828 = vadd.f32 %v2687, %v2792
      %v2829 = vadd.f32 %v2688, %v2795
      %v2830 = vadd.f32 %v2689, %v2797
      %v2831 = vshrl.u32 %v1921, 16
      %v2833 = vshll.u32 %v1921, 16
      %v2835 = vrot.slane %v2833, 1
      %v2836 = vor.u32 %v2831, %v2835
      %v2838 = vshll.u32 %v1938, 16
      %v2840 = vrot.slane %v2838, 1
      %v2841 = vsel %vm1943, %v2836, %v2840
      %s2842 = scalar_lea.vmem %s4, 64
      %v2843 = vld [vmem:[%s2842] sm:$0xf]
      %v2844 = vld [vmem:[%s2842 + $0x4] sm:$0xf]
      %v2845 = vld [vmem:[%s2842 + $0x8] sm:$0xf]
      %v2846 = vld [vmem:[%s2842 + $0xc] sm:$0xf]
      %v2851 = vunpack.c.l.b16 %v2843
      %v2852 = vunpack.c.l.b16 %v2844
      %v2853 = vunpack.c.l.b16 %v2845
      %v2854 = vunpack.c.l.b16 %v2846
      %v2855 = vpack.c.b16 %v2852, %v2851
      %v2856 = vpack.c.b16 %v2854, %v2853
      %v2860 = vsel %vm429, %v2841, 0
      %2862 = vmatpush.bf16.msra.mxu0 0
      %2863 = vmatpush.bf16.msra.mxu0 0
      %2864 = vmatpush.bf16.msra.mxu0 0
      %2865 = vmatpush.bf16.msra.mxu0 0
      %2866 = vmatpush.bf16.msra.mxu0 0
      %2867 = vmatpush.bf16.msra.mxu0 0
      %2868 = vmatpush.bf16.msra.mxu0 %v2856
      %2869 = vmatpush.bf16.msra.mxu0 %v2855
      %2870 = vmatmul.bf16.gmra.mxu0 %v2157
      %v2871 = vpop.f32.mrf.mxu0
      %v2872 = vadd.f32 0.0, %v2871
      %v2873 = vpop.f32.mrf.mxu0
      %v2874 = vadd.f32 0.0, %v2873
      %2875 = vmatmul.bf16.gmra.mxu0 %v2160
      %v2876 = vpop.f32.mrf.mxu0
      %v2877 = vadd.f32 0.0, %v2876
      %v2878 = vpop.f32.mrf.mxu0
      %v2879 = vadd.f32 0.0, %v2878
      %2880 = vmatmul.bf16.gmra.mxu0 %v2163
      %v2881 = vpop.f32.mrf.mxu0
      %v2882 = vadd.f32 0.0, %v2881
      %v2883 = vpop.f32.mrf.mxu0
      %v2884 = vadd.f32 0.0, %v2883
      %2885 = vmatmul.bf16.gmra.mxu0 %v2166
      %v2886 = vpop.f32.mrf.mxu0
      %v2887 = vadd.f32 0.0, %v2886
      %v2888 = vpop.f32.mrf.mxu0
      %v2889 = vadd.f32 0.0, %v2888
      %2890 = vmatmul.bf16.gmra.mxu0 %v2169
      %v2891 = vpop.f32.mrf.mxu0
      %v2892 = vadd.f32 0.0, %v2891
      %v2893 = vpop.f32.mrf.mxu0
      %v2894 = vadd.f32 0.0, %v2893
      %2895 = vmatmul.bf16.gmra.mxu0 %v2172
      %v2896 = vpop.f32.mrf.mxu0
      %v2897 = vadd.f32 0.0, %v2896
      %v2898 = vpop.f32.mrf.mxu0
      %v2899 = vadd.f32 0.0, %v2898
      %2900 = vmatmul.bf16.gmra.mxu0 %v2175
      %v2901 = vpop.f32.mrf.mxu0
      %v2902 = vadd.f32 0.0, %v2901
      %v2903 = vpop.f32.mrf.mxu0
      %v2904 = vadd.f32 0.0, %v2903
      %2905 = vmatmul.bf16.gmra.mxu0 %v2178
      %v2906 = vpop.f32.mrf.mxu0
      %v2907 = vadd.f32 0.0, %v2906
      %v2908 = vpop.f32.mrf.mxu0
      %v2909 = vadd.f32 0.0, %v2908
      %2910 = vmatmul.bf16.gmra.mxu0 %v2181
      %v2911 = vpop.f32.mrf.mxu0
      %v2912 = vadd.f32 0.0, %v2911
      %v2913 = vpop.f32.mrf.mxu0
      %v2914 = vadd.f32 0.0, %v2913
      %2915 = vmatmul.bf16.gmra.mxu0 %v2184
      %v2916 = vpop.f32.mrf.mxu0
      %v2917 = vadd.f32 0.0, %v2916
      %v2918 = vpop.f32.mrf.mxu0
      %v2919 = vadd.f32 0.0, %v2918
      %2920 = vmatmul.bf16.gmra.mxu0 %v2187
      %v2921 = vpop.f32.mrf.mxu0
      %v2922 = vadd.f32 0.0, %v2921
      %v2923 = vpop.f32.mrf.mxu0
      %v2924 = vadd.f32 0.0, %v2923
      %2925 = vmatmul.bf16.gmra.mxu0 %v2190
      %v2926 = vpop.f32.mrf.mxu0
      %v2927 = vadd.f32 0.0, %v2926
      %v2928 = vpop.f32.mrf.mxu0
      %v2929 = vadd.f32 0.0, %v2928
      %2930 = vmatmul.bf16.gmra.mxu0 %v2193
      %v2931 = vpop.f32.mrf.mxu0
      %v2932 = vadd.f32 0.0, %v2931
      %v2933 = vpop.f32.mrf.mxu0
      %v2934 = vadd.f32 0.0, %v2933
      %2935 = vmatmul.bf16.gmra.mxu0 %v2196
      %v2936 = vpop.f32.mrf.mxu0
      %v2937 = vadd.f32 0.0, %v2936
      %v2938 = vpop.f32.mrf.mxu0
      %v2939 = vadd.f32 0.0, %v2938
      %2940 = vmatmul.bf16.gmra.mxu0 %v2199
      %v2941 = vpop.f32.mrf.mxu0
      %v2942 = vadd.f32 0.0, %v2941
      %v2943 = vpop.f32.mrf.mxu0
      %v2944 = vadd.f32 0.0, %v2943
      %2945 = vmatmul.bf16.gmra.mxu0 %v2860
      %v2946 = vpop.f32.mrf.mxu0
      %v2947 = vadd.f32 0.0, %v2946
      %v2948 = vpop.f32.mrf.mxu0
      %v2949 = vadd.f32 0.0, %v2948
      %2950 = vdwg.mxu0
      %v2951 = vadd.f32 %v2799, %v2872
      %v2952 = vadd.f32 %v2800, %v2874
      %v2953 = vadd.f32 %v2801, %v2877
      %v2954 = vadd.f32 %v2802, %v2879
      %v2955 = vadd.f32 %v2803, %v2882
      %v2956 = vadd.f32 %v2804, %v2884
      %v2957 = vadd.f32 %v2805, %v2887
      %v2958 = vadd.f32 %v2806, %v2889
      %v2959 = vadd.f32 %v2807, %v2892
      %v2960 = vadd.f32 %v2808, %v2894
      %v2961 = vadd.f32 %v2809, %v2897
      %v2962 = vadd.f32 %v2810, %v2899
      %v2963 = vadd.f32 %v2811, %v2902
      %v2964 = vadd.f32 %v2812, %v2904
      %v2965 = vadd.f32 %v2813, %v2907
      %v2966 = vadd.f32 %v2814, %v2909
      %v2967 = vadd.f32 %v2815, %v2912
      %v2968 = vadd.f32 %v2816, %v2914
      %v2969 = vadd.f32 %v2817, %v2917
      %v2970 = vadd.f32 %v2818, %v2919
      %v2971 = vadd.f32 %v2819, %v2922
      %v2972 = vadd.f32 %v2820, %v2924
      %v2973 = vadd.f32 %v2821, %v2927
      %v2974 = vadd.f32 %v2822, %v2929
      %v2975 = vadd.f32 %v2823, %v2932
      %v2976 = vadd.f32 %v2824, %v2934
      %v2977 = vadd.f32 %v2825, %v2937
      %v2978 = vadd.f32 %v2826, %v2939
      %v2979 = vadd.f32 %v2827, %v2942
      %v2980 = vadd.f32 %v2828, %v2944
      %v2981 = vadd.f32 %v2829, %v2947
      %v2982 = vadd.f32 %v2830, %v2949
      %v2985 = vrot.slane %v1921, 1
      %v2986 = vrot.slane %v1938, 1
      %v2987 = vsel %vm2455, %v2985, %v2986
      %s2988 = scalar_lea.vmem %s4, 80
      %v2989 = vld [vmem:[%s2988] sm:$0xf]
      %v2990 = vld [vmem:[%s2988 + $0x4] sm:$0xf]
      %v2991 = vld [vmem:[%s2988 + $0x8] sm:$0xf]
      %v2992 = vld [vmem:[%s2988 + $0xc] sm:$0xf]
      %v2997 = vunpack.c.l.b16 %v2989
      %v2998 = vunpack.c.l.b16 %v2990
      %v2999 = vunpack.c.l.b16 %v2991
      %v3000 = vunpack.c.l.b16 %v2992
      %v3001 = vpack.c.b16 %v2998, %v2997
      %v3002 = vpack.c.b16 %v3000, %v2999
      %v3006 = vsel %vm429, %v2987, 0
      %3008 = vmatpush.bf16.msra.mxu0 0
      %3009 = vmatpush.bf16.msra.mxu0 0
      %3010 = vmatpush.bf16.msra.mxu0 0
      %3011 = vmatpush.bf16.msra.mxu0 0
      %3012 = vmatpush.bf16.msra.mxu0 0
      %3013 = vmatpush.bf16.msra.mxu0 0
      %3014 = vmatpush.bf16.msra.mxu0 %v3002
      %3015 = vmatpush.bf16.msra.mxu0 %v3001
      %3016 = vmatmul.bf16.gmra.mxu0 %v2525
      %v3017 = vpop.f32.mrf.mxu0
      %v3018 = vadd.f32 0.0, %v3017
      %v3019 = vpop.f32.mrf.mxu0
      %v3020 = vadd.f32 0.0, %v3019
      %3021 = vmatmul.bf16.gmra.mxu0 %v2528
      %v3022 = vpop.f32.mrf.mxu0
      %v3023 = vadd.f32 0.0, %v3022
      %v3024 = vpop.f32.mrf.mxu0
      %v3025 = vadd.f32 0.0, %v3024
      %3026 = vmatmul.bf16.gmra.mxu0 %v2531
      %v3027 = vpop.f32.mrf.mxu0
      %v3028 = vadd.f32 0.0, %v3027
      %v3029 = vpop.f32.mrf.mxu0
      %v3030 = vadd.f32 0.0, %v3029
      %3031 = vmatmul.bf16.gmra.mxu0 %v2534
      %v3032 = vpop.f32.mrf.mxu0
      %v3033 = vadd.f32 0.0, %v3032
      %v3034 = vpop.f32.mrf.mxu0
      %v3035 = vadd.f32 0.0, %v3034
      %3036 = vmatmul.bf16.gmra.mxu0 %v2537
      %v3037 = vpop.f32.mrf.mxu0
      %v3038 = vadd.f32 0.0, %v3037
      %v3039 = vpop.f32.mrf.mxu0
      %v3040 = vadd.f32 0.0, %v3039
      %3041 = vmatmul.bf16.gmra.mxu0 %v2540
      %v3042 = vpop.f32.mrf.mxu0
      %v3043 = vadd.f32 0.0, %v3042
      %v3044 = vpop.f32.mrf.mxu0
      %v3045 = vadd.f32 0.0, %v3044
      %3046 = vmatmul.bf16.gmra.mxu0 %v2543
      %v3047 = vpop.f32.mrf.mxu0
      %v3048 = vadd.f32 0.0, %v3047
      %v3049 = vpop.f32.mrf.mxu0
      %v3050 = vadd.f32 0.0, %v3049
      %3051 = vmatmul.bf16.gmra.mxu0 %v2546
      %v3052 = vpop.f32.mrf.mxu0
      %v3053 = vadd.f32 0.0, %v3052
      %v3054 = vpop.f32.mrf.mxu0
      %v3055 = vadd.f32 0.0, %v3054
      %3056 = vmatmul.bf16.gmra.mxu0 %v2549
      %v3057 = vpop.f32.mrf.mxu0
      %v3058 = vadd.f32 0.0, %v3057
      %v3059 = vpop.f32.mrf.mxu0
      %v3060 = vadd.f32 0.0, %v3059
      %3061 = vmatmul.bf16.gmra.mxu0 %v2552
      %v3062 = vpop.f32.mrf.mxu0
      %v3063 = vadd.f32 0.0, %v3062
      %v3064 = vpop.f32.mrf.mxu0
      %v3065 = vadd.f32 0.0, %v3064
      %3066 = vmatmul.bf16.gmra.mxu0 %v2555
      %v3067 = vpop.f32.mrf.mxu0
      %v3068 = vadd.f32 0.0, %v3067
      %v3069 = vpop.f32.mrf.mxu0
      %v3070 = vadd.f32 0.0, %v3069
      %3071 = vmatmul.bf16.gmra.mxu0 %v2558
      %v3072 = vpop.f32.mrf.mxu0
      %v3073 = vadd.f32 0.0, %v3072
      %v3074 = vpop.f32.mrf.mxu0
      %v3075 = vadd.f32 0.0, %v3074
      %3076 = vmatmul.bf16.gmra.mxu0 %v2561
      %v3077 = vpop.f32.mrf.mxu0
      %v3078 = vadd.f32 0.0, %v3077
      %v3079 = vpop.f32.mrf.mxu0
      %v3080 = vadd.f32 0.0, %v3079
      %3081 = vmatmul.bf16.gmra.mxu0 %v2564
      %v3082 = vpop.f32.mrf.mxu0
      %v3083 = vadd.f32 0.0, %v3082
      %v3084 = vpop.f32.mrf.mxu0
      %v3085 = vadd.f32 0.0, %v3084
      %3086 = vmatmul.bf16.gmra.mxu0 %v2567
      %v3087 = vpop.f32.mrf.mxu0
      %v3088 = vadd.f32 0.0, %v3087
      %v3089 = vpop.f32.mrf.mxu0
      %v3090 = vadd.f32 0.0, %v3089
      %3091 = vmatmul.bf16.gmra.mxu0 %v3006
      %v3092 = vpop.f32.mrf.mxu0
      %v3093 = vadd.f32 0.0, %v3092
      %v3094 = vpop.f32.mrf.mxu0
      %v3095 = vadd.f32 0.0, %v3094
      %3096 = vdwg.mxu0
      %v3097 = vadd.f32 %v2951, %v3018
      %v3098 = vadd.f32 %v2952, %v3020
      %v3099 = vadd.f32 %v2953, %v3023
      %v3100 = vadd.f32 %v2954, %v3025
      %v3101 = vadd.f32 %v2955, %v3028
      %v3102 = vadd.f32 %v2956, %v3030
      %v3103 = vadd.f32 %v2957, %v3033
      %v3104 = vadd.f32 %v2958, %v3035
      %v3105 = vadd.f32 %v2959, %v3038
      %v3106 = vadd.f32 %v2960, %v3040
      %v3107 = vadd.f32 %v2961, %v3043
      %v3108 = vadd.f32 %v2962, %v3045
      %v3109 = vadd.f32 %v2963, %v3048
      %v3110 = vadd.f32 %v2964, %v3050
      %v3111 = vadd.f32 %v2965, %v3053
      %v3112 = vadd.f32 %v2966, %v3055
      %v3113 = vadd.f32 %v2967, %v3058
      %v3114 = vadd.f32 %v2968, %v3060
      %v3115 = vadd.f32 %v2969, %v3063
      %v3116 = vadd.f32 %v2970, %v3065
      %v3117 = vadd.f32 %v2971, %v3068
      %v3118 = vadd.f32 %v2972, %v3070
      %v3119 = vadd.f32 %v2973, %v3073
      %v3120 = vadd.f32 %v2974, %v3075
      %v3121 = vadd.f32 %v2975, %v3078
      %v3122 = vadd.f32 %v2976, %v3080
      %v3123 = vadd.f32 %v2977, %v3083
      %v3124 = vadd.f32 %v2978, %v3085
      %v3125 = vadd.f32 %v2979, %v3088
      %v3126 = vadd.f32 %v2980, %v3090
      %v3127 = vadd.f32 %v2981, %v3093
      %v3128 = vadd.f32 %v2982, %v3095
      %s3129 = scalar_lea.vmem %s4, 96
      %v3130 = vld [vmem:[%s3129] sm:$0xf]
      %v3131 = vld [vmem:[%s3129 + $0x4] sm:$0xf]
      %v3132 = vld [vmem:[%s3129 + $0x8] sm:$0xf]
      %v3133 = vld [vmem:[%s3129 + $0xc] sm:$0xf]
      %v3138 = vunpack.c.l.b16 %v3130
      %v3139 = vunpack.c.l.b16 %v3131
      %v3140 = vunpack.c.l.b16 %v3132
      %v3141 = vunpack.c.l.b16 %v3133
      %v3142 = vpack.c.b16 %v3139, %v3138
      %v3143 = vpack.c.b16 %v3141, %v3140
      %3146 = vmatpush.bf16.msra.mxu0 0
      %3147 = vmatpush.bf16.msra.mxu0 0
      %3148 = vmatpush.bf16.msra.mxu0 0
      %3149 = vmatpush.bf16.msra.mxu0 0
      %3150 = vmatpush.bf16.msra.mxu0 0
      %3151 = vmatpush.bf16.msra.mxu0 0
      %3152 = vmatpush.bf16.msra.mxu0 %v3143
      %3153 = vmatpush.bf16.msra.mxu0 %v3142
      %3154 = vmatmul.bf16.gmra.mxu0 %v2306
      %v3155 = vpop.f32.mrf.mxu0
      %v3156 = vadd.f32 0.0, %v3155
      %v3157 = vpop.f32.mrf.mxu0
      %v3158 = vadd.f32 0.0, %v3157
      %3159 = vmatmul.bf16.gmra.mxu0 %v2308
      %v3160 = vpop.f32.mrf.mxu0
      %v3161 = vadd.f32 0.0, %v3160
      %v3162 = vpop.f32.mrf.mxu0
      %v3163 = vadd.f32 0.0, %v3162
      %3164 = vmatmul.bf16.gmra.mxu0 %v2310
      %v3165 = vpop.f32.mrf.mxu0
      %v3166 = vadd.f32 0.0, %v3165
      %v3167 = vpop.f32.mrf.mxu0
      %v3168 = vadd.f32 0.0, %v3167
      %3169 = vmatmul.bf16.gmra.mxu0 %v2312
      %v3170 = vpop.f32.mrf.mxu0
      %v3171 = vadd.f32 0.0, %v3170
      %v3172 = vpop.f32.mrf.mxu0
      %v3173 = vadd.f32 0.0, %v3172
      %3174 = vmatmul.bf16.gmra.mxu0 %v2314
      %v3175 = vpop.f32.mrf.mxu0
      %v3176 = vadd.f32 0.0, %v3175
      %v3177 = vpop.f32.mrf.mxu0
      %v3178 = vadd.f32 0.0, %v3177
      %3179 = vmatmul.bf16.gmra.mxu0 %v2316
      %v3180 = vpop.f32.mrf.mxu0
      %v3181 = vadd.f32 0.0, %v3180
      %v3182 = vpop.f32.mrf.mxu0
      %v3183 = vadd.f32 0.0, %v3182
      %3184 = vmatmul.bf16.gmra.mxu0 %v2318
      %v3185 = vpop.f32.mrf.mxu0
      %v3186 = vadd.f32 0.0, %v3185
      %v3187 = vpop.f32.mrf.mxu0
      %v3188 = vadd.f32 0.0, %v3187
      %3189 = vmatmul.bf16.gmra.mxu0 %v2320
      %v3190 = vpop.f32.mrf.mxu0
      %v3191 = vadd.f32 0.0, %v3190
      %v3192 = vpop.f32.mrf.mxu0
      %v3193 = vadd.f32 0.0, %v3192
      %3194 = vmatmul.bf16.gmra.mxu0 %v2322
      %v3195 = vpop.f32.mrf.mxu0
      %v3196 = vadd.f32 0.0, %v3195
      %v3197 = vpop.f32.mrf.mxu0
      %v3198 = vadd.f32 0.0, %v3197
      %3199 = vmatmul.bf16.gmra.mxu0 %v2324
      %v3200 = vpop.f32.mrf.mxu0
      %v3201 = vadd.f32 0.0, %v3200
      %v3202 = vpop.f32.mrf.mxu0
      %v3203 = vadd.f32 0.0, %v3202
      %3204 = vmatmul.bf16.gmra.mxu0 %v2326
      %v3205 = vpop.f32.mrf.mxu0
      %v3206 = vadd.f32 0.0, %v3205
      %v3207 = vpop.f32.mrf.mxu0
      %v3208 = vadd.f32 0.0, %v3207
      %3209 = vmatmul.bf16.gmra.mxu0 %v2328
      %v3210 = vpop.f32.mrf.mxu0
      %v3211 = vadd.f32 0.0, %v3210
      %v3212 = vpop.f32.mrf.mxu0
      %v3213 = vadd.f32 0.0, %v3212
      %3214 = vmatmul.bf16.gmra.mxu0 %v2330
      %v3215 = vpop.f32.mrf.mxu0
      %v3216 = vadd.f32 0.0, %v3215
      %v3217 = vpop.f32.mrf.mxu0
      %v3218 = vadd.f32 0.0, %v3217
      %3219 = vmatmul.bf16.gmra.mxu0 %v2332
      %v3220 = vpop.f32.mrf.mxu0
      %v3221 = vadd.f32 0.0, %v3220
      %v3222 = vpop.f32.mrf.mxu0
      %v3223 = vadd.f32 0.0, %v3222
      %3224 = vmatmul.bf16.gmra.mxu0 %v2708
      %v3225 = vpop.f32.mrf.mxu0
      %v3226 = vadd.f32 0.0, %v3225
      %v3227 = vpop.f32.mrf.mxu0
      %v3228 = vadd.f32 0.0, %v3227
      %3229 = vmatmul.bf16.gmra.mxu0 %v2302
      %v3230 = vpop.f32.mrf.mxu0
      %v3231 = vadd.f32 0.0, %v3230
      %v3232 = vpop.f32.mrf.mxu0
      %v3233 = vadd.f32 0.0, %v3232
      %3234 = vdwg.mxu0
      %v3235 = vadd.f32 %v3097, %v3156
      %v3236 = vadd.f32 %v3098, %v3158
      %v3237 = vadd.f32 %v3099, %v3161
      %v3238 = vadd.f32 %v3100, %v3163
      %v3239 = vadd.f32 %v3101, %v3166
      %v3240 = vadd.f32 %v3102, %v3168
      %v3241 = vadd.f32 %v3103, %v3171
      %v3242 = vadd.f32 %v3104, %v3173
      %v3243 = vadd.f32 %v3105, %v3176
      %v3244 = vadd.f32 %v3106, %v3178
      %v3245 = vadd.f32 %v3107, %v3181
      %v3246 = vadd.f32 %v3108, %v3183
      %v3247 = vadd.f32 %v3109, %v3186
      %v3248 = vadd.f32 %v3110, %v3188
      %v3249 = vadd.f32 %v3111, %v3191
      %v3250 = vadd.f32 %v3112, %v3193
      %v3251 = vadd.f32 %v3113, %v3196
      %v3252 = vadd.f32 %v3114, %v3198
      %v3253 = vadd.f32 %v3115, %v3201
      %v3254 = vadd.f32 %v3116, %v3203
      %v3255 = vadd.f32 %v3117, %v3206
      %v3256 = vadd.f32 %v3118, %v3208
      %v3257 = vadd.f32 %v3119, %v3211
      %v3258 = vadd.f32 %v3120, %v3213
      %v3259 = vadd.f32 %v3121, %v3216
      %v3260 = vadd.f32 %v3122, %v3218
      %v3261 = vadd.f32 %v3123, %v3221
      %v3262 = vadd.f32 %v3124, %v3223
      %v3263 = vadd.f32 %v3125, %v3226
      %v3264 = vadd.f32 %v3126, %v3228
      %v3265 = vadd.f32 %v3127, %v3231
      %v3266 = vadd.f32 %v3128, %v3233
      %s3267 = scalar_lea.vmem %s4, 112
      %v3268 = vld [vmem:[%s3267] sm:$0xf]
      %v3269 = vld [vmem:[%s3267 + $0x4] sm:$0xf]
      %v3270 = vld [vmem:[%s3267 + $0x8] sm:$0xf]
      %v3271 = vld [vmem:[%s3267 + $0xc] sm:$0xf]
      %v3276 = vunpack.c.l.b16 %v3268
      %v3277 = vunpack.c.l.b16 %v3269
      %v3278 = vunpack.c.l.b16 %v3270
      %v3279 = vunpack.c.l.b16 %v3271
      %v3280 = vpack.c.b16 %v3277, %v3276
      %v3281 = vpack.c.b16 %v3279, %v3278
      %3284 = vmatpush.bf16.msra.mxu0 0
      %3285 = vmatpush.bf16.msra.mxu0 0
      %3286 = vmatpush.bf16.msra.mxu0 0
      %3287 = vmatpush.bf16.msra.mxu0 0
      %3288 = vmatpush.bf16.msra.mxu0 0
      %3289 = vmatpush.bf16.msra.mxu0 0
      %3290 = vmatpush.bf16.msra.mxu0 %v3281
      %3291 = vmatpush.bf16.msra.mxu0 %v3280
      %3292 = vmatmul.bf16.gmra.mxu0 %v2160
      %v3293 = vpop.f32.mrf.mxu0
      %v3294 = vadd.f32 0.0, %v3293
      %v3295 = vpop.f32.mrf.mxu0
      %v3296 = vadd.f32 0.0, %v3295
      %3297 = vmatmul.bf16.gmra.mxu0 %v2163
      %v3298 = vpop.f32.mrf.mxu0
      %v3299 = vadd.f32 0.0, %v3298
      %v3300 = vpop.f32.mrf.mxu0
      %v3301 = vadd.f32 0.0, %v3300
      %3302 = vmatmul.bf16.gmra.mxu0 %v2166
      %v3303 = vpop.f32.mrf.mxu0
      %v3304 = vadd.f32 0.0, %v3303
      %v3305 = vpop.f32.mrf.mxu0
      %v3306 = vadd.f32 0.0, %v3305
      %3307 = vmatmul.bf16.gmra.mxu0 %v2169
      %v3308 = vpop.f32.mrf.mxu0
      %v3309 = vadd.f32 0.0, %v3308
      %v3310 = vpop.f32.mrf.mxu0
      %v3311 = vadd.f32 0.0, %v3310
      %3312 = vmatmul.bf16.gmra.mxu0 %v2172
      %v3313 = vpop.f32.mrf.mxu0
      %v3314 = vadd.f32 0.0, %v3313
      %v3315 = vpop.f32.mrf.mxu0
      %v3316 = vadd.f32 0.0, %v3315
      %3317 = vmatmul.bf16.gmra.mxu0 %v2175
      %v3318 = vpop.f32.mrf.mxu0
      %v3319 = vadd.f32 0.0, %v3318
      %v3320 = vpop.f32.mrf.mxu0
      %v3321 = vadd.f32 0.0, %v3320
      %3322 = vmatmul.bf16.gmra.mxu0 %v2178
      %v3323 = vpop.f32.mrf.mxu0
      %v3324 = vadd.f32 0.0, %v3323
      %v3325 = vpop.f32.mrf.mxu0
      %v3326 = vadd.f32 0.0, %v3325
      %3327 = vmatmul.bf16.gmra.mxu0 %v2181
      %v3328 = vpop.f32.mrf.mxu0
      %v3329 = vadd.f32 0.0, %v3328
      %v3330 = vpop.f32.mrf.mxu0
      %v3331 = vadd.f32 0.0, %v3330
      %3332 = vmatmul.bf16.gmra.mxu0 %v2184
      %v3333 = vpop.f32.mrf.mxu0
      %v3334 = vadd.f32 0.0, %v3333
      %v3335 = vpop.f32.mrf.mxu0
      %v3336 = vadd.f32 0.0, %v3335
      %3337 = vmatmul.bf16.gmra.mxu0 %v2187
      %v3338 = vpop.f32.mrf.mxu0
      %v3339 = vadd.f32 0.0, %v3338
      %v3340 = vpop.f32.mrf.mxu0
      %v3341 = vadd.f32 0.0, %v3340
      %3342 = vmatmul.bf16.gmra.mxu0 %v2190
      %v3343 = vpop.f32.mrf.mxu0
      %v3344 = vadd.f32 0.0, %v3343
      %v3345 = vpop.f32.mrf.mxu0
      %v3346 = vadd.f32 0.0, %v3345
      %3347 = vmatmul.bf16.gmra.mxu0 %v2193
      %v3348 = vpop.f32.mrf.mxu0
      %v3349 = vadd.f32 0.0, %v3348
      %v3350 = vpop.f32.mrf.mxu0
      %v3351 = vadd.f32 0.0, %v3350
      %3352 = vmatmul.bf16.gmra.mxu0 %v2196
      %v3353 = vpop.f32.mrf.mxu0
      %v3354 = vadd.f32 0.0, %v3353
      %v3355 = vpop.f32.mrf.mxu0
      %v3356 = vadd.f32 0.0, %v3355
      %3357 = vmatmul.bf16.gmra.mxu0 %v2199
      %v3358 = vpop.f32.mrf.mxu0
      %v3359 = vadd.f32 0.0, %v3358
      %v3360 = vpop.f32.mrf.mxu0
      %v3361 = vadd.f32 0.0, %v3360
      %3362 = vmatmul.bf16.gmra.mxu0 %v2860
      %v3363 = vpop.f32.mrf.mxu0
      %v3364 = vadd.f32 0.0, %v3363
      %v3365 = vpop.f32.mrf.mxu0
      %v3366 = vadd.f32 0.0, %v3365
      %3367 = vmatmul.bf16.gmra.mxu0 %v2154
      %v3368 = vpop.f32.mrf.mxu0
      %v3369 = vadd.f32 0.0, %v3368
      %v3370 = vpop.f32.mrf.mxu0
      %v3371 = vadd.f32 0.0, %v3370
      %3372 = vdwg.mxu0
      %v3373 = vadd.f32 %v3235, %v3294
      %v3374 = vadd.f32 %v3236, %v3296
      %v3375 = vadd.f32 %v3237, %v3299
      %v3376 = vadd.f32 %v3238, %v3301
      %v3377 = vadd.f32 %v3239, %v3304
      %v3378 = vadd.f32 %v3240, %v3306
      %v3379 = vadd.f32 %v3241, %v3309
      %v3380 = vadd.f32 %v3242, %v3311
      %v3381 = vadd.f32 %v3243, %v3314
      %v3382 = vadd.f32 %v3244, %v3316
      %v3383 = vadd.f32 %v3245, %v3319
      %v3384 = vadd.f32 %v3246, %v3321
      %v3385 = vadd.f32 %v3247, %v3324
      %v3386 = vadd.f32 %v3248, %v3326
      %v3387 = vadd.f32 %v3249, %v3329
      %v3388 = vadd.f32 %v3250, %v3331
      %v3389 = vadd.f32 %v3251, %v3334
      %v3390 = vadd.f32 %v3252, %v3336
      %v3391 = vadd.f32 %v3253, %v3339
      %v3392 = vadd.f32 %v3254, %v3341
      %v3393 = vadd.f32 %v3255, %v3344
      %v3394 = vadd.f32 %v3256, %v3346
      %v3395 = vadd.f32 %v3257, %v3349
      %v3396 = vadd.f32 %v3258, %v3351
      %v3397 = vadd.f32 %v3259, %v3354
      %v3398 = vadd.f32 %v3260, %v3356
      %v3399 = vadd.f32 %v3261, %v3359
      %v3400 = vadd.f32 %v3262, %v3361
      %v3401 = vadd.f32 %v3263, %v3364
      %v3402 = vadd.f32 %v3264, %v3366
      %v3403 = vadd.f32 %v3265, %v3369
      %v3404 = vadd.f32 %v3266, %v3371
      %s3405 = scalar_lea.vmem %s4, 128
      %v3406 = vld [vmem:[%s3405] sm:$0xf]
      %v3407 = vld [vmem:[%s3405 + $0x4] sm:$0xf]
      %v3408 = vld [vmem:[%s3405 + $0x8] sm:$0xf]
      %v3409 = vld [vmem:[%s3405 + $0xc] sm:$0xf]
      %v3414 = vunpack.c.l.b16 %v3406
      %v3415 = vunpack.c.l.b16 %v3407
      %v3416 = vunpack.c.l.b16 %v3408
      %v3417 = vunpack.c.l.b16 %v3409
      %v3418 = vpack.c.b16 %v3415, %v3414
      %v3419 = vpack.c.b16 %v3417, %v3416
      %3422 = vmatpush.bf16.msra.mxu0 0
      %3423 = vmatpush.bf16.msra.mxu0 0
      %3424 = vmatpush.bf16.msra.mxu0 0
      %3425 = vmatpush.bf16.msra.mxu0 0
      %3426 = vmatpush.bf16.msra.mxu0 0
      %3427 = vmatpush.bf16.msra.mxu0 0
      %3428 = vmatpush.bf16.msra.mxu0 %v3419
      %3429 = vmatpush.bf16.msra.mxu0 %v3418
      %3430 = vmatmul.bf16.gmra.mxu0 %v2528
      %v3431 = vpop.f32.mrf.mxu0
      %v3432 = vadd.f32 0.0, %v3431
      %v3433 = vpop.f32.mrf.mxu0
      %v3434 = vadd.f32 0.0, %v3433
      %3435 = vmatmul.bf16.gmra.mxu0 %v2531
      %v3436 = vpop.f32.mrf.mxu0
      %v3437 = vadd.f32 0.0, %v3436
      %v3438 = vpop.f32.mrf.mxu0
      %v3439 = vadd.f32 0.0, %v3438
      %3440 = vmatmul.bf16.gmra.mxu0 %v2534
      %v3441 = vpop.f32.mrf.mxu0
      %v3442 = vadd.f32 0.0, %v3441
      %v3443 = vpop.f32.mrf.mxu0
      %v3444 = vadd.f32 0.0, %v3443
      %3445 = vmatmul.bf16.gmra.mxu0 %v2537
      %v3446 = vpop.f32.mrf.mxu0
      %v3447 = vadd.f32 0.0, %v3446
      %v3448 = vpop.f32.mrf.mxu0
      %v3449 = vadd.f32 0.0, %v3448
      %3450 = vmatmul.bf16.gmra.mxu0 %v2540
      %v3451 = vpop.f32.mrf.mxu0
      %v3452 = vadd.f32 0.0, %v3451
      %v3453 = vpop.f32.mrf.mxu0
      %v3454 = vadd.f32 0.0, %v3453
      %3455 = vmatmul.bf16.gmra.mxu0 %v2543
      %v3456 = vpop.f32.mrf.mxu0
      %v3457 = vadd.f32 0.0, %v3456
      %v3458 = vpop.f32.mrf.mxu0
      %v3459 = vadd.f32 0.0, %v3458
      %3460 = vmatmul.bf16.gmra.mxu0 %v2546
      %v3461 = vpop.f32.mrf.mxu0
      %v3462 = vadd.f32 0.0, %v3461
      %v3463 = vpop.f32.mrf.mxu0
      %v3464 = vadd.f32 0.0, %v3463
      %3465 = vmatmul.bf16.gmra.mxu0 %v2549
      %v3466 = vpop.f32.mrf.mxu0
      %v3467 = vadd.f32 0.0, %v3466
      %v3468 = vpop.f32.mrf.mxu0
      %v3469 = vadd.f32 0.0, %v3468
      %3470 = vmatmul.bf16.gmra.mxu0 %v2552
      %v3471 = vpop.f32.mrf.mxu0
      %v3472 = vadd.f32 0.0, %v3471
      %v3473 = vpop.f32.mrf.mxu0
      %v3474 = vadd.f32 0.0, %v3473
      %3475 = vmatmul.bf16.gmra.mxu0 %v2555
      %v3476 = vpop.f32.mrf.mxu0
      %v3477 = vadd.f32 0.0, %v3476
      %v3478 = vpop.f32.mrf.mxu0
      %v3479 = vadd.f32 0.0, %v3478
      %3480 = vmatmul.bf16.gmra.mxu0 %v2558
      %v3481 = vpop.f32.mrf.mxu0
      %v3482 = vadd.f32 0.0, %v3481
      %v3483 = vpop.f32.mrf.mxu0
      %v3484 = vadd.f32 0.0, %v3483
      %3485 = vmatmul.bf16.gmra.mxu0 %v2561
      %v3486 = vpop.f32.mrf.mxu0
      %v3487 = vadd.f32 0.0, %v3486
      %v3488 = vpop.f32.mrf.mxu0
      %v3489 = vadd.f32 0.0, %v3488
      %3490 = vmatmul.bf16.gmra.mxu0 %v2564
      %v3491 = vpop.f32.mrf.mxu0
      %v3492 = vadd.f32 0.0, %v3491
      %v3493 = vpop.f32.mrf.mxu0
      %v3494 = vadd.f32 0.0, %v3493
      %3495 = vmatmul.bf16.gmra.mxu0 %v2567
      %v3496 = vpop.f32.mrf.mxu0
      %v3497 = vadd.f32 0.0, %v3496
      %v3498 = vpop.f32.mrf.mxu0
      %v3499 = vadd.f32 0.0, %v3498
      %3500 = vmatmul.bf16.gmra.mxu0 %v3006
      %v3501 = vpop.f32.mrf.mxu0
      %v3502 = vadd.f32 0.0, %v3501
      %v3503 = vpop.f32.mrf.mxu0
      %v3504 = vadd.f32 0.0, %v3503
      %3505 = vmatmul.bf16.gmra.mxu0 %v2522
      %v3506 = vpop.f32.mrf.mxu0
      %v3507 = vadd.f32 0.0, %v3506
      %v3508 = vpop.f32.mrf.mxu0
      %v3509 = vadd.f32 0.0, %v3508
      %3510 = vdwg.mxu0
      %v3511 = vadd.f32 %v3373, %v3432
      %v3512 = vadd.f32 %v3374, %v3434
      %v3513 = vadd.f32 %v3375, %v3437
      %v3514 = vadd.f32 %v3376, %v3439
      %v3515 = vadd.f32 %v3377, %v3442
      %v3516 = vadd.f32 %v3378, %v3444
      %v3517 = vadd.f32 %v3379, %v3447
      %v3518 = vadd.f32 %v3380, %v3449
      %v3519 = vadd.f32 %v3381, %v3452
      %v3520 = vadd.f32 %v3382, %v3454
      %v3521 = vadd.f32 %v3383, %v3457
      %v3522 = vadd.f32 %v3384, %v3459
      %v3523 = vadd.f32 %v3385, %v3462
      %v3524 = vadd.f32 %v3386, %v3464
      %v3525 = vadd.f32 %v3387, %v3467
      %v3526 = vadd.f32 %v3388, %v3469
      %v3527 = vadd.f32 %v3389, %v3472
      %v3528 = vadd.f32 %v3390, %v3474
      %v3529 = vadd.f32 %v3391, %v3477
      %v3530 = vadd.f32 %v3392, %v3479
      %v3531 = vadd.f32 %v3393, %v3482
      %v3532 = vadd.f32 %v3394, %v3484
      %v3533 = vadd.f32 %v3395, %v3487
      %v3534 = vadd.f32 %v3396, %v3489
      %v3535 = vadd.f32 %v3397, %v3492
      %v3536 = vadd.f32 %v3398, %v3494
      %v3537 = vadd.f32 %v3399, %v3497
      %v3538 = vadd.f32 %v3400, %v3499
      %v3539 = vadd.f32 %v3401, %v3502
      %v3540 = vadd.f32 %v3402, %v3504
      %v3541 = vadd.f32 %v3403, %v3507
      %v3542 = vadd.f32 %v3404, %v3509
      %v3544 = vperm.slane %v1766, 0
      %v3546 = vmul.f32 %v3511, %v3544
      %v3547 = vmul.f32 %v3512, %v3544
      %v3548 = vmul.f32 %v3513, %v3544
      %v3549 = vmul.f32 %v3514, %v3544
      %v3550 = vmul.f32 %v3515, %v3544
      %v3551 = vmul.f32 %v3516, %v3544
      %v3552 = vmul.f32 %v3517, %v3544
      %v3553 = vmul.f32 %v3518, %v3544
      %v3554 = vmul.f32 %v3519, %v3544
      %v3555 = vmul.f32 %v3520, %v3544
      %v3556 = vmul.f32 %v3521, %v3544
      %v3557 = vmul.f32 %v3522, %v3544
      %v3558 = vmul.f32 %v3523, %v3544
      %v3559 = vmul.f32 %v3524, %v3544
      %v3560 = vmul.f32 %v3525, %v3544
      %v3561 = vmul.f32 %v3526, %v3544
      %v3562 = vmul.f32 %v3527, %v3544
      %v3563 = vmul.f32 %v3528, %v3544
      %v3564 = vmul.f32 %v3529, %v3544
      %v3565 = vmul.f32 %v3530, %v3544
      %v3566 = vmul.f32 %v3531, %v3544
      %v3567 = vmul.f32 %v3532, %v3544
      %v3568 = vmul.f32 %v3533, %v3544
      %v3569 = vmul.f32 %v3534, %v3544
      %v3570 = vmul.f32 %v3535, %v3544
      %v3571 = vmul.f32 %v3536, %v3544
      %v3572 = vmul.f32 %v3537, %v3544
      %v3573 = vmul.f32 %v3538, %v3544
      %v3574 = vmul.f32 %v3539, %v3544
      %v3575 = vmul.f32 %v3540, %v3544
      %v3576 = vmul.f32 %v3541, %v3544
      %v3577 = vmul.f32 %v3542, %v3544
      %v3579 = vperm.slane %v1767, 0
      %v3581 = vadd.f32 %v3546, %v3579
      %v3582 = vadd.f32 %v3547, %v3579
      %v3583 = vadd.f32 %v3548, %v3579
      %v3584 = vadd.f32 %v3549, %v3579
      %v3585 = vadd.f32 %v3550, %v3579
      %v3586 = vadd.f32 %v3551, %v3579
      %v3587 = vadd.f32 %v3552, %v3579
      %v3588 = vadd.f32 %v3553, %v3579
      %v3589 = vadd.f32 %v3554, %v3579
      %v3590 = vadd.f32 %v3555, %v3579
      %v3591 = vadd.f32 %v3556, %v3579
      %v3592 = vadd.f32 %v3557, %v3579
      %v3593 = vadd.f32 %v3558, %v3579
      %v3594 = vadd.f32 %v3559, %v3579
      %v3595 = vadd.f32 %v3560, %v3579
      %v3596 = vadd.f32 %v3561, %v3579
      %v3597 = vadd.f32 %v3562, %v3579
      %v3598 = vadd.f32 %v3563, %v3579
      %v3599 = vadd.f32 %v3564, %v3579
      %v3600 = vadd.f32 %v3565, %v3579
      %v3601 = vadd.f32 %v3566, %v3579
      %v3602 = vadd.f32 %v3567, %v3579
      %v3603 = vadd.f32 %v3568, %v3579
      %v3604 = vadd.f32 %v3569, %v3579
      %v3605 = vadd.f32 %v3570, %v3579
      %v3606 = vadd.f32 %v3571, %v3579
      %v3607 = vadd.f32 %v3572, %v3579
      %v3608 = vadd.f32 %v3573, %v3579
      %v3609 = vadd.f32 %v3574, %v3579
      %v3610 = vadd.f32 %v3575, %v3579
      %v3611 = vadd.f32 %v3576, %v3579
      %v3612 = vadd.f32 %v3577, %v3579
      %v3613 = vmax.f32 %v3581, 0.0
      %v3614 = vmax.f32 %v3582, 0.0
      %v3615 = vmax.f32 %v3583, 0.0
      %v3616 = vmax.f32 %v3584, 0.0
      %v3617 = vmax.f32 %v3585, 0.0
      %v3618 = vmax.f32 %v3586, 0.0
      %v3619 = vmax.f32 %v3587, 0.0
      %v3620 = vmax.f32 %v3588, 0.0
      %v3621 = vmax.f32 %v3589, 0.0
      %v3622 = vmax.f32 %v3590, 0.0
      %v3623 = vmax.f32 %v3591, 0.0
      %v3624 = vmax.f32 %v3592, 0.0
      %v3625 = vmax.f32 %v3593, 0.0
      %v3626 = vmax.f32 %v3594, 0.0
      %v3627 = vmax.f32 %v3595, 0.0
      %v3628 = vmax.f32 %v3596, 0.0
      %v3629 = vmax.f32 %v3597, 0.0
      %v3630 = vmax.f32 %v3598, 0.0
      %v3631 = vmax.f32 %v3599, 0.0
      %v3632 = vmax.f32 %v3600, 0.0
      %v3633 = vmax.f32 %v3601, 0.0
      %v3634 = vmax.f32 %v3602, 0.0
      %v3635 = vmax.f32 %v3603, 0.0
      %v3636 = vmax.f32 %v3604, 0.0
      %v3637 = vmax.f32 %v3605, 0.0
      %v3638 = vmax.f32 %v3606, 0.0
      %v3639 = vmax.f32 %v3607, 0.0
      %v3640 = vmax.f32 %v3608, 0.0
      %v3641 = vmax.f32 %v3609, 0.0
      %v3642 = vmax.f32 %v3610, 0.0
      %v3643 = vmax.f32 %v3611, 0.0
      %v3644 = vmax.f32 %v3612, 0.0
      %v3645 = vpack.c.bf16 %v3613, %v3613
      %v3646 = vpack.c.bf16 %v3614, %v3614
      %v3647 = vpack.c.bf16 %v3615, %v3615
      %v3648 = vpack.c.bf16 %v3616, %v3616
      %v3649 = vpack.c.bf16 %v3617, %v3617
      %v3650 = vpack.c.bf16 %v3618, %v3618
      %v3651 = vpack.c.bf16 %v3619, %v3619
      %v3652 = vpack.c.bf16 %v3620, %v3620
      %v3653 = vpack.c.bf16 %v3621, %v3621
      %v3654 = vpack.c.bf16 %v3622, %v3622
      %v3655 = vpack.c.bf16 %v3623, %v3623
      %v3656 = vpack.c.bf16 %v3624, %v3624
      %v3657 = vpack.c.bf16 %v3625, %v3625
      %v3658 = vpack.c.bf16 %v3626, %v3626
      %v3659 = vpack.c.bf16 %v3627, %v3627
      %v3660 = vpack.c.bf16 %v3628, %v3628
      %v3661 = vpack.c.bf16 %v3629, %v3629
      %v3662 = vpack.c.bf16 %v3630, %v3630
      %v3663 = vpack.c.bf16 %v3631, %v3631
      %v3664 = vpack.c.bf16 %v3632, %v3632
      %v3665 = vpack.c.bf16 %v3633, %v3633
      %v3666 = vpack.c.bf16 %v3634, %v3634
      %v3667 = vpack.c.bf16 %v3635, %v3635
      %v3668 = vpack.c.bf16 %v3636, %v3636
      %v3669 = vpack.c.bf16 %v3637, %v3637
      %v3670 = vpack.c.bf16 %v3638, %v3638
      %v3671 = vpack.c.bf16 %v3639, %v3639
      %v3672 = vpack.c.bf16 %v3640, %v3640
      %v3673 = vpack.c.bf16 %v3641, %v3641
      %v3674 = vpack.c.bf16 %v3642, %v3642
      %v3675 = vpack.c.bf16 %v3643, %v3643
      %v3676 = vpack.c.bf16 %v3644, %v3644
      %v3677 = vld [vmem:[%s8] sm:$0x1]
      %v3678 = vld [vmem:[%s9] sm:$0x1]
      %v3711 = vunpack.c.l.b16 %v3645
      %v3712 = vunpack.c.l.b16 %v3646
      %v3713 = vunpack.c.l.b16 %v3647
      %v3714 = vunpack.c.l.b16 %v3648
      %v3715 = vunpack.c.l.b16 %v3649
      %v3716 = vunpack.c.l.b16 %v3650
      %v3717 = vunpack.c.l.b16 %v3651
      %v3718 = vunpack.c.l.b16 %v3652
      %v3719 = vunpack.c.l.b16 %v3653
      %v3720 = vunpack.c.l.b16 %v3654
      %v3721 = vunpack.c.l.b16 %v3655
      %v3722 = vunpack.c.l.b16 %v3656
      %v3723 = vunpack.c.l.b16 %v3657
      %v3724 = vunpack.c.l.b16 %v3658
      %v3725 = vunpack.c.l.b16 %v3659
      %v3726 = vunpack.c.l.b16 %v3660
      %v3727 = vunpack.c.l.b16 %v3661
      %v3728 = vunpack.c.l.b16 %v3662
      %v3729 = vunpack.c.l.b16 %v3663
      %v3730 = vunpack.c.l.b16 %v3664
      %v3731 = vunpack.c.l.b16 %v3665
      %v3732 = vunpack.c.l.b16 %v3666
      %v3733 = vunpack.c.l.b16 %v3667
      %v3734 = vunpack.c.l.b16 %v3668
      %v3735 = vunpack.c.l.b16 %v3669
      %v3736 = vunpack.c.l.b16 %v3670
      %v3737 = vunpack.c.l.b16 %v3671
      %v3738 = vunpack.c.l.b16 %v3672
      %v3739 = vunpack.c.l.b16 %v3673
      %v3740 = vunpack.c.l.b16 %v3674
      %v3741 = vunpack.c.l.b16 %v3675
      %v3742 = vunpack.c.l.b16 %v3676
      %v3743 = vpack.c.b16 %v3712, %v3711
      %v3744 = vpack.c.b16 %v3714, %v3713
      %v3745 = vpack.c.b16 %v3716, %v3715
      %v3746 = vpack.c.b16 %v3718, %v3717
      %v3747 = vpack.c.b16 %v3720, %v3719
      %v3748 = vpack.c.b16 %v3722, %v3721
      %v3749 = vpack.c.b16 %v3724, %v3723
      %v3750 = vpack.c.b16 %v3726, %v3725
      %v3751 = vpack.c.b16 %v3728, %v3727
      %v3752 = vpack.c.b16 %v3730, %v3729
      %v3753 = vpack.c.b16 %v3732, %v3731
      %v3754 = vpack.c.b16 %v3734, %v3733
      %v3755 = vpack.c.b16 %v3736, %v3735
      %v3756 = vpack.c.b16 %v3738, %v3737
      %v3757 = vpack.c.b16 %v3740, %v3739
      %v3758 = vpack.c.b16 %v3742, %v3741
      %v3760 = vshrl.u32 %v3743, 16
      %v3762 = vrot.slane %v3760, 7
      %v3763 = vshll.u32 %v3743, 16
      %v3765 = vor.u32 %v3762, %v3763
      %v3767 = vshrl.u32 %v3744, 16
      %v3769 = vrot.slane %v3767, 7
      %v3770 = vshll.u32 %v3744, 16
      %v3772 = vor.u32 %v3769, %v3770
      %v3774 = vshrl.u32 %v3745, 16
      %v3776 = vrot.slane %v3774, 7
      %v3777 = vshll.u32 %v3745, 16
      %v3779 = vor.u32 %v3776, %v3777
      %v3781 = vshrl.u32 %v3746, 16
      %v3783 = vrot.slane %v3781, 7
      %v3784 = vshll.u32 %v3746, 16
      %v3786 = vor.u32 %v3783, %v3784
      %v3788 = vshrl.u32 %v3747, 16
      %v3790 = vrot.slane %v3788, 7
      %v3791 = vshll.u32 %v3747, 16
      %v3793 = vor.u32 %v3790, %v3791
      %v3795 = vshrl.u32 %v3748, 16
      %v3797 = vrot.slane %v3795, 7
      %v3798 = vshll.u32 %v3748, 16
      %v3800 = vor.u32 %v3797, %v3798
      %v3802 = vshrl.u32 %v3749, 16
      %v3804 = vrot.slane %v3802, 7
      %v3805 = vshll.u32 %v3749, 16
      %v3807 = vor.u32 %v3804, %v3805
      %v3809 = vshrl.u32 %v3750, 16
      %v3811 = vrot.slane %v3809, 7
      %v3812 = vshll.u32 %v3750, 16
      %v3814 = vor.u32 %v3811, %v3812
      %v3816 = vshrl.u32 %v3751, 16
      %v3818 = vrot.slane %v3816, 7
      %v3819 = vshll.u32 %v3751, 16
      %v3821 = vor.u32 %v3818, %v3819
      %v3823 = vshrl.u32 %v3752, 16
      %v3825 = vrot.slane %v3823, 7
      %v3826 = vshll.u32 %v3752, 16
      %v3828 = vor.u32 %v3825, %v3826
      %v3830 = vshrl.u32 %v3753, 16
      %v3832 = vrot.slane %v3830, 7
      %v3833 = vshll.u32 %v3753, 16
      %v3835 = vor.u32 %v3832, %v3833
      %v3837 = vshrl.u32 %v3754, 16
      %v3839 = vrot.slane %v3837, 7
      %v3840 = vshll.u32 %v3754, 16
      %v3842 = vor.u32 %v3839, %v3840
      %v3844 = vshrl.u32 %v3755, 16
      %v3846 = vrot.slane %v3844, 7
      %v3847 = vshll.u32 %v3755, 16
      %v3849 = vor.u32 %v3846, %v3847
      %v3851 = vshrl.u32 %v3756, 16
      %v3853 = vrot.slane %v3851, 7
      %v3854 = vshll.u32 %v3756, 16
      %v3856 = vor.u32 %v3853, %v3854
      %v3858 = vshrl.u32 %v3757, 16
      %v3860 = vrot.slane %v3858, 7
      %v3861 = vshll.u32 %v3757, 16
      %v3863 = vor.u32 %v3860, %v3861
      %v3865 = vshrl.u32 %v3758, 16
      %v3867 = vrot.slane %v3865, 7
      %v3868 = vshll.u32 %v3758, 16
      %v3870 = vor.u32 %v3867, %v3868
      %v3903 = vsel %vm1053, 0, %v3765
      %v3904 = vsel %vm1053, 0, %v3772
      %v3905 = vsel %vm1053, 0, %v3779
      %v3906 = vsel %vm1053, 0, %v3786
      %v3907 = vsel %vm1053, 0, %v3793
      %v3908 = vsel %vm1053, 0, %v3800
      %v3909 = vsel %vm1053, 0, %v3807
      %v3910 = vsel %vm1053, 0, %v3814
      %v3911 = vsel %vm1053, 0, %v3821
      %v3912 = vsel %vm1053, 0, %v3828
      %v3913 = vsel %vm1053, 0, %v3835
      %v3914 = vsel %vm1053, 0, %v3842
      %v3915 = vsel %vm1053, 0, %v3849
      %v3916 = vsel %vm1053, 0, %v3856
      %v3917 = vsel %vm1053, 0, %v3863
      %v3918 = vsel %vm1053, 0, %v3870
      %v3919 = vsel %vm1053, %v3762, 0
      %v3920 = vsel %vm1053, %v3769, 0
      %v3921 = vsel %vm1053, %v3776, 0
      %v3922 = vsel %vm1053, %v3783, 0
      %v3923 = vsel %vm1053, %v3790, 0
      %v3924 = vsel %vm1053, %v3797, 0
      %v3925 = vsel %vm1053, %v3804, 0
      %v3926 = vsel %vm1053, %v3811, 0
      %v3927 = vsel %vm1053, %v3818, 0
      %v3928 = vsel %vm1053, %v3825, 0
      %v3929 = vsel %vm1053, %v3832, 0
      %v3930 = vsel %vm1053, %v3839, 0
      %v3931 = vsel %vm1053, %v3846, 0
      %v3932 = vsel %vm1053, %v3853, 0
      %v3933 = vsel %vm1053, %v3860, 0
      %v3934 = vsel %vm1053, %v3867, 0
      %v3935 = vld [vmem:[%s7] sm:$0xf]
      %v3936 = vld [vmem:[%s7 + $0x4] sm:$0xf]
      %v3938 = vshrl.u32 %v3903, 16
      %v3940 = vshll.u32 %v3903, 16
      %v3942 = vrot.slane %v3940, 1
      %v3943 = vor.u32 %v3938, %v3942
      %v3945 = vshll.u32 %v3919, 16
      %v3947 = vrot.slane %v3945, 1
      %v3948 = vsel %vm1943, %v3943, %v3947
      %v3950 = vshrl.u32 %v3904, 16
      %v3952 = vshll.u32 %v3904, 16
      %v3954 = vrot.slane %v3952, 1
      %v3955 = vor.u32 %v3950, %v3954
      %v3957 = vshll.u32 %v3920, 16
      %v3959 = vrot.slane %v3957, 1
      %v3960 = vsel %vm1943, %v3955, %v3959
      %v3962 = vshrl.u32 %v3905, 16
      %v3964 = vshll.u32 %v3905, 16
      %v3966 = vrot.slane %v3964, 1
      %v3967 = vor.u32 %v3962, %v3966
      %v3969 = vshll.u32 %v3921, 16
      %v3971 = vrot.slane %v3969, 1
      %v3972 = vsel %vm1943, %v3967, %v3971
      %v3974 = vshrl.u32 %v3906, 16
      %v3976 = vshll.u32 %v3906, 16
      %v3978 = vrot.slane %v3976, 1
      %v3979 = vor.u32 %v3974, %v3978
      %v3981 = vshll.u32 %v3922, 16
      %v3983 = vrot.slane %v3981, 1
      %v3984 = vsel %vm1943, %v3979, %v3983
      %v3986 = vshrl.u32 %v3907, 16
      %v3988 = vshll.u32 %v3907, 16
      %v3990 = vrot.slane %v3988, 1
      %v3991 = vor.u32 %v3986, %v3990
      %v3993 = vshll.u32 %v3923, 16
      %v3995 = vrot.slane %v3993, 1
      %v3996 = vsel %vm1943, %v3991, %v3995
      %v3998 = vshrl.u32 %v3908, 16
      %v4000 = vshll.u32 %v3908, 16
      %v4002 = vrot.slane %v4000, 1
      %v4003 = vor.u32 %v3998, %v4002
      %v4005 = vshll.u32 %v3924, 16
      %v4007 = vrot.slane %v4005, 1
      %v4008 = vsel %vm1943, %v4003, %v4007
      %v4010 = vshrl.u32 %v3909, 16
      %v4012 = vshll.u32 %v3909, 16
      %v4014 = vrot.slane %v4012, 1
      %v4015 = vor.u32 %v4010, %v4014
      %v4017 = vshll.u32 %v3925, 16
      %v4019 = vrot.slane %v4017, 1
      %v4020 = vsel %vm1943, %v4015, %v4019
      %v4022 = vshrl.u32 %v3910, 16
      %v4024 = vshll.u32 %v3910, 16
      %v4026 = vrot.slane %v4024, 1
      %v4027 = vor.u32 %v4022, %v4026
      %v4029 = vshll.u32 %v3926, 16
      %v4031 = vrot.slane %v4029, 1
      %v4032 = vsel %vm1943, %v4027, %v4031
      %v4034 = vshrl.u32 %v3911, 16
      %v4036 = vshll.u32 %v3911, 16
      %v4038 = vrot.slane %v4036, 1
      %v4039 = vor.u32 %v4034, %v4038
      %v4041 = vshll.u32 %v3927, 16
      %v4043 = vrot.slane %v4041, 1
      %v4044 = vsel %vm1943, %v4039, %v4043
      %v4046 = vshrl.u32 %v3912, 16
      %v4048 = vshll.u32 %v3912, 16
      %v4050 = vrot.slane %v4048, 1
      %v4051 = vor.u32 %v4046, %v4050
      %v4053 = vshll.u32 %v3928, 16
      %v4055 = vrot.slane %v4053, 1
      %v4056 = vsel %vm1943, %v4051, %v4055
      %v4058 = vshrl.u32 %v3913, 16
      %v4060 = vshll.u32 %v3913, 16
      %v4062 = vrot.slane %v4060, 1
      %v4063 = vor.u32 %v4058, %v4062
      %v4065 = vshll.u32 %v3929, 16
      %v4067 = vrot.slane %v4065, 1
      %v4068 = vsel %vm1943, %v4063, %v4067
      %v4070 = vshrl.u32 %v3914, 16
      %v4072 = vshll.u32 %v3914, 16
      %v4074 = vrot.slane %v4072, 1
      %v4075 = vor.u32 %v4070, %v4074
      %v4077 = vshll.u32 %v3930, 16
      %v4079 = vrot.slane %v4077, 1
      %v4080 = vsel %vm1943, %v4075, %v4079
      %v4082 = vshrl.u32 %v3915, 16
      %v4084 = vshll.u32 %v3915, 16
      %v4086 = vrot.slane %v4084, 1
      %v4087 = vor.u32 %v4082, %v4086
      %v4089 = vshll.u32 %v3931, 16
      %v4091 = vrot.slane %v4089, 1
      %v4092 = vsel %vm1943, %v4087, %v4091
      %v4094 = vshrl.u32 %v3916, 16
      %v4096 = vshll.u32 %v3916, 16
      %v4098 = vrot.slane %v4096, 1
      %v4099 = vor.u32 %v4094, %v4098
      %v4101 = vshll.u32 %v3932, 16
      %v4103 = vrot.slane %v4101, 1
      %v4104 = vsel %vm1943, %v4099, %v4103
      %v4106 = vshrl.u32 %v3917, 16
      %v4108 = vshll.u32 %v3917, 16
      %v4110 = vrot.slane %v4108, 1
      %v4111 = vor.u32 %v4106, %v4110
      %v4113 = vshll.u32 %v3933, 16
      %v4115 = vrot.slane %v4113, 1
      %v4116 = vsel %vm1943, %v4111, %v4115
      %s4117 = scalar_lea.vmem %s7, 8
      %v4118 = vld [vmem:[%s4117] sm:$0xf]
      %v4119 = vld [vmem:[%s4117 + $0x4] sm:$0xf]
      %v4122 = vunpack.c.l.b16 %v4118
      %v4123 = vunpack.c.l.b16 %v4119
      %v4124 = vpack.c.b16 %v4123, %v4122
      %v4126 = vsel %vm1733, %v1955, 0
      %v4129 = vsel %vm1733, %v3948, 0
      %v4132 = vsel %vm1733, %v3960, 0
      %v4135 = vsel %vm1733, %v3972, 0
      %v4138 = vsel %vm1733, %v3984, 0
      %v4141 = vsel %vm1733, %v3996, 0
      %v4144 = vsel %vm1733, %v4008, 0
      %v4147 = vsel %vm1733, %v4020, 0
      %v4150 = vsel %vm1733, %v4032, 0
      %v4153 = vsel %vm1733, %v4044, 0
      %v4156 = vsel %vm1733, %v4056, 0
      %v4159 = vsel %vm1733, %v4068, 0
      %v4162 = vsel %vm1733, %v4080, 0
      %v4165 = vsel %vm1733, %v4092, 0
      %v4168 = vsel %vm1733, %v4104, 0
      %v4171 = vsel %vm1733, %v4116, 0
      %4173 = vmatpush.bf16.msra.mxu0 0
      %4174 = vmatpush.bf16.msra.mxu0 0
      %4175 = vmatpush.bf16.msra.mxu0 0
      %4176 = vmatpush.bf16.msra.mxu0 0
      %4177 = vmatpush.bf16.msra.mxu0 0
      %4178 = vmatpush.bf16.msra.mxu0 0
      %4179 = vmatpush.bf16.msra.mxu0 0
      %4180 = vmatpush.bf16.msra.mxu0 %v4124
      %4181 = vmatmul.bf16.gmra.mxu0 %v4126
      %v4182 = vpop.f32.mrf.mxu0
      %v4183 = vadd.f32 0.0, %v4182
      %v4184 = vpop.f32.mrf.mxu0
      %v4185 = vadd.f32 0.0, %v4184
      %4186 = vmatmul.bf16.gmra.mxu0 %v4129
      %v4187 = vpop.f32.mrf.mxu0
      %v4188 = vadd.f32 0.0, %v4187
      %v4189 = vpop.f32.mrf.mxu0
      %v4190 = vadd.f32 0.0, %v4189
      %4191 = vmatmul.bf16.gmra.mxu0 %v4132
      %v4192 = vpop.f32.mrf.mxu0
      %v4193 = vadd.f32 0.0, %v4192
      %v4194 = vpop.f32.mrf.mxu0
      %v4195 = vadd.f32 0.0, %v4194
      %4196 = vmatmul.bf16.gmra.mxu0 %v4135
      %v4197 = vpop.f32.mrf.mxu0
      %v4198 = vadd.f32 0.0, %v4197
      %v4199 = vpop.f32.mrf.mxu0
      %v4200 = vadd.f32 0.0, %v4199
      %4201 = vmatmul.bf16.gmra.mxu0 %v4138
      %v4202 = vpop.f32.mrf.mxu0
      %v4203 = vadd.f32 0.0, %v4202
      %v4204 = vpop.f32.mrf.mxu0
      %v4205 = vadd.f32 0.0, %v4204
      %4206 = vmatmul.bf16.gmra.mxu0 %v4141
      %v4207 = vpop.f32.mrf.mxu0
      %v4208 = vadd.f32 0.0, %v4207
      %v4209 = vpop.f32.mrf.mxu0
      %v4210 = vadd.f32 0.0, %v4209
      %4211 = vmatmul.bf16.gmra.mxu0 %v4144
      %v4212 = vpop.f32.mrf.mxu0
      %v4213 = vadd.f32 0.0, %v4212
      %v4214 = vpop.f32.mrf.mxu0
      %v4215 = vadd.f32 0.0, %v4214
      %4216 = vmatmul.bf16.gmra.mxu0 %v4147
      %v4217 = vpop.f32.mrf.mxu0
      %v4218 = vadd.f32 0.0, %v4217
      %v4219 = vpop.f32.mrf.mxu0
      %v4220 = vadd.f32 0.0, %v4219
      %4221 = vmatmul.bf16.gmra.mxu0 %v4150
      %v4222 = vpop.f32.mrf.mxu0
      %v4223 = vadd.f32 0.0, %v4222
      %v4224 = vpop.f32.mrf.mxu0
      %v4225 = vadd.f32 0.0, %v4224
      %4226 = vmatmul.bf16.gmra.mxu0 %v4153
      %v4227 = vpop.f32.mrf.mxu0
      %v4228 = vadd.f32 0.0, %v4227
      %v4229 = vpop.f32.mrf.mxu0
      %v4230 = vadd.f32 0.0, %v4229
      %4231 = vmatmul.bf16.gmra.mxu0 %v4156
      %v4232 = vpop.f32.mrf.mxu0
      %v4233 = vadd.f32 0.0, %v4232
      %v4234 = vpop.f32.mrf.mxu0
      %v4235 = vadd.f32 0.0, %v4234
      %4236 = vmatmul.bf16.gmra.mxu0 %v4159
      %v4237 = vpop.f32.mrf.mxu0
      %v4238 = vadd.f32 0.0, %v4237
      %v4239 = vpop.f32.mrf.mxu0
      %v4240 = vadd.f32 0.0, %v4239
      %4241 = vmatmul.bf16.gmra.mxu0 %v4162
      %v4242 = vpop.f32.mrf.mxu0
      %v4243 = vadd.f32 0.0, %v4242
      %v4244 = vpop.f32.mrf.mxu0
      %v4245 = vadd.f32 0.0, %v4244
      %4246 = vmatmul.bf16.gmra.mxu0 %v4165
      %v4247 = vpop.f32.mrf.mxu0
      %v4248 = vadd.f32 0.0, %v4247
      %v4249 = vpop.f32.mrf.mxu0
      %v4250 = vadd.f32 0.0, %v4249
      %4251 = vmatmul.bf16.gmra.mxu0 %v4168
      %v4252 = vpop.f32.mrf.mxu0
      %v4253 = vadd.f32 0.0, %v4252
      %v4254 = vpop.f32.mrf.mxu0
      %v4255 = vadd.f32 0.0, %v4254
      %4256 = vmatmul.bf16.gmra.mxu0 %v4171
      %v4257 = vpop.f32.mrf.mxu0
      %v4258 = vadd.f32 0.0, %v4257
      %v4259 = vpop.f32.mrf.mxu0
      %v4260 = vadd.f32 0.0, %v4259
      %4261 = vdwg.mxu0
      %v4264 = vunpack.c.l.b16 %v3935
      %v4265 = vunpack.c.l.b16 %v3936
      %v4266 = vpack.c.b16 %v4265, %v4264
      %v4268 = vsel %vm1733, %v1905, 0
      %v4270 = vsel %vm1733, %v3903, 0
      %v4272 = vsel %vm1733, %v3904, 0
      %v4274 = vsel %vm1733, %v3905, 0
      %v4276 = vsel %vm1733, %v3906, 0
      %v4278 = vsel %vm1733, %v3907, 0
      %v4280 = vsel %vm1733, %v3908, 0
      %v4282 = vsel %vm1733, %v3909, 0
      %v4284 = vsel %vm1733, %v3910, 0
      %v4286 = vsel %vm1733, %v3911, 0
      %v4288 = vsel %vm1733, %v3912, 0
      %v4290 = vsel %vm1733, %v3913, 0
      %v4292 = vsel %vm1733, %v3914, 0
      %v4294 = vsel %vm1733, %v3915, 0
      %v4296 = vsel %vm1733, %v3916, 0
      %v4298 = vsel %vm1733, %v3917, 0
      %4300 = vmatpush.bf16.msra.mxu0 0
      %4301 = vmatpush.bf16.msra.mxu0 0
      %4302 = vmatpush.bf16.msra.mxu0 0
      %4303 = vmatpush.bf16.msra.mxu0 0
      %4304 = vmatpush.bf16.msra.mxu0 0
      %4305 = vmatpush.bf16.msra.mxu0 0
      %4306 = vmatpush.bf16.msra.mxu0 0
      %4307 = vmatpush.bf16.msra.mxu0 %v4266
      %4308 = vmatmul.bf16.gmra.mxu0 %v4268
      %v4309 = vpop.f32.mrf.mxu0
      %v4310 = vadd.f32 %v4183, %v4309
      %v4311 = vpop.f32.mrf.mxu0
      %v4312 = vadd.f32 %v4185, %v4311
      %4313 = vmatmul.bf16.gmra.mxu0 %v4270
      %v4314 = vpop.f32.mrf.mxu0
      %v4315 = vadd.f32 %v4188, %v4314
      %v4316 = vpop.f32.mrf.mxu0
      %v4317 = vadd.f32 %v4190, %v4316
      %4318 = vmatmul.bf16.gmra.mxu0 %v4272
      %v4319 = vpop.f32.mrf.mxu0
      %v4320 = vadd.f32 %v4193, %v4319
      %v4321 = vpop.f32.mrf.mxu0
      %v4322 = vadd.f32 %v4195, %v4321
      %4323 = vmatmul.bf16.gmra.mxu0 %v4274
      %v4324 = vpop.f32.mrf.mxu0
      %v4325 = vadd.f32 %v4198, %v4324
      %v4326 = vpop.f32.mrf.mxu0
      %v4327 = vadd.f32 %v4200, %v4326
      %4328 = vmatmul.bf16.gmra.mxu0 %v4276
      %v4329 = vpop.f32.mrf.mxu0
      %v4330 = vadd.f32 %v4203, %v4329
      %v4331 = vpop.f32.mrf.mxu0
      %v4332 = vadd.f32 %v4205, %v4331
      %4333 = vmatmul.bf16.gmra.mxu0 %v4278
      %v4334 = vpop.f32.mrf.mxu0
      %v4335 = vadd.f32 %v4208, %v4334
      %v4336 = vpop.f32.mrf.mxu0
      %v4337 = vadd.f32 %v4210, %v4336
      %4338 = vmatmul.bf16.gmra.mxu0 %v4280
      %v4339 = vpop.f32.mrf.mxu0
      %v4340 = vadd.f32 %v4213, %v4339
      %v4341 = vpop.f32.mrf.mxu0
      %v4342 = vadd.f32 %v4215, %v4341
      %4343 = vmatmul.bf16.gmra.mxu0 %v4282
      %v4344 = vpop.f32.mrf.mxu0
      %v4345 = vadd.f32 %v4218, %v4344
      %v4346 = vpop.f32.mrf.mxu0
      %v4347 = vadd.f32 %v4220, %v4346
      %4348 = vmatmul.bf16.gmra.mxu0 %v4284
      %v4349 = vpop.f32.mrf.mxu0
      %v4350 = vadd.f32 %v4223, %v4349
      %v4351 = vpop.f32.mrf.mxu0
      %v4352 = vadd.f32 %v4225, %v4351
      %4353 = vmatmul.bf16.gmra.mxu0 %v4286
      %v4354 = vpop.f32.mrf.mxu0
      %v4355 = vadd.f32 %v4228, %v4354
      %v4356 = vpop.f32.mrf.mxu0
      %v4357 = vadd.f32 %v4230, %v4356
      %4358 = vmatmul.bf16.gmra.mxu0 %v4288
      %v4359 = vpop.f32.mrf.mxu0
      %v4360 = vadd.f32 %v4233, %v4359
      %v4361 = vpop.f32.mrf.mxu0
      %v4362 = vadd.f32 %v4235, %v4361
      %4363 = vmatmul.bf16.gmra.mxu0 %v4290
      %v4364 = vpop.f32.mrf.mxu0
      %v4365 = vadd.f32 %v4238, %v4364
      %v4366 = vpop.f32.mrf.mxu0
      %v4367 = vadd.f32 %v4240, %v4366
      %4368 = vmatmul.bf16.gmra.mxu0 %v4292
      %v4369 = vpop.f32.mrf.mxu0
      %v4370 = vadd.f32 %v4243, %v4369
      %v4371 = vpop.f32.mrf.mxu0
      %v4372 = vadd.f32 %v4245, %v4371
      %4373 = vmatmul.bf16.gmra.mxu0 %v4294
      %v4374 = vpop.f32.mrf.mxu0
      %v4375 = vadd.f32 %v4248, %v4374
      %v4376 = vpop.f32.mrf.mxu0
      %v4377 = vadd.f32 %v4250, %v4376
      %4378 = vmatmul.bf16.gmra.mxu0 %v4296
      %v4379 = vpop.f32.mrf.mxu0
      %v4380 = vadd.f32 %v4253, %v4379
      %v4381 = vpop.f32.mrf.mxu0
      %v4382 = vadd.f32 %v4255, %v4381
      %4383 = vmatmul.bf16.gmra.mxu0 %v4298
      %v4384 = vpop.f32.mrf.mxu0
      %v4385 = vadd.f32 %v4258, %v4384
      %v4386 = vpop.f32.mrf.mxu0
      %v4387 = vadd.f32 %v4260, %v4386
      %4388 = vdwg.mxu0
      %v4419 = vrot.slane %v3903, 1
      %v4420 = vrot.slane %v3919, 1
      %v4421 = vsel %vm2455, %v4419, %v4420
      %v4422 = vrot.slane %v3904, 1
      %v4423 = vrot.slane %v3920, 1
      %v4424 = vsel %vm2455, %v4422, %v4423
      %v4425 = vrot.slane %v3905, 1
      %v4426 = vrot.slane %v3921, 1
      %v4427 = vsel %vm2455, %v4425, %v4426
      %v4428 = vrot.slane %v3906, 1
      %v4429 = vrot.slane %v3922, 1
      %v4430 = vsel %vm2455, %v4428, %v4429
      %v4431 = vrot.slane %v3907, 1
      %v4432 = vrot.slane %v3923, 1
      %v4433 = vsel %vm2455, %v4431, %v4432
      %v4434 = vrot.slane %v3908, 1
      %v4435 = vrot.slane %v3924, 1
      %v4436 = vsel %vm2455, %v4434, %v4435
      %v4437 = vrot.slane %v3909, 1
      %v4438 = vrot.slane %v3925, 1
      %v4439 = vsel %vm2455, %v4437, %v4438
      %v4440 = vrot.slane %v3910, 1
      %v4441 = vrot.slane %v3926, 1
      %v4442 = vsel %vm2455, %v4440, %v4441
      %v4443 = vrot.slane %v3911, 1
      %v4444 = vrot.slane %v3927, 1
      %v4445 = vsel %vm2455, %v4443, %v4444
      %v4446 = vrot.slane %v3912, 1
      %v4447 = vrot.slane %v3928, 1
      %v4448 = vsel %vm2455, %v4446, %v4447
      %v4449 = vrot.slane %v3913, 1
      %v4450 = vrot.slane %v3929, 1
      %v4451 = vsel %vm2455, %v4449, %v4450
      %v4452 = vrot.slane %v3914, 1
      %v4453 = vrot.slane %v3930, 1
      %v4454 = vsel %vm2455, %v4452, %v4453
      %v4455 = vrot.slane %v3915, 1
      %v4456 = vrot.slane %v3931, 1
      %v4457 = vsel %vm2455, %v4455, %v4456
      %v4458 = vrot.slane %v3916, 1
      %v4459 = vrot.slane %v3932, 1
      %v4460 = vsel %vm2455, %v4458, %v4459
      %v4461 = vrot.slane %v3917, 1
      %v4462 = vrot.slane %v3933, 1
      %v4463 = vsel %vm2455, %v4461, %v4462
      %s4464 = scalar_lea.vmem %s7, 16
      %v4465 = vld [vmem:[%s4464] sm:$0xf]
      %v4466 = vld [vmem:[%s4464 + $0x4] sm:$0xf]
      %v4469 = vunpack.c.l.b16 %v4465
      %v4470 = vunpack.c.l.b16 %v4466
      %v4471 = vpack.c.b16 %v4470, %v4469
      %v4473 = vsel %vm1733, %v2458, 0
      %v4476 = vsel %vm1733, %v4421, 0
      %v4479 = vsel %vm1733, %v4424, 0
      %v4482 = vsel %vm1733, %v4427, 0
      %v4485 = vsel %vm1733, %v4430, 0
      %v4488 = vsel %vm1733, %v4433, 0
      %v4491 = vsel %vm1733, %v4436, 0
      %v4494 = vsel %vm1733, %v4439, 0
      %v4497 = vsel %vm1733, %v4442, 0
      %v4500 = vsel %vm1733, %v4445, 0
      %v4503 = vsel %vm1733, %v4448, 0
      %v4506 = vsel %vm1733, %v4451, 0
      %v4509 = vsel %vm1733, %v4454, 0
      %v4512 = vsel %vm1733, %v4457, 0
      %v4515 = vsel %vm1733, %v4460, 0
      %v4518 = vsel %vm1733, %v4463, 0
      %4520 = vmatpush.bf16.msra.mxu0 0
      %4521 = vmatpush.bf16.msra.mxu0 0
      %4522 = vmatpush.bf16.msra.mxu0 0
      %4523 = vmatpush.bf16.msra.mxu0 0
      %4524 = vmatpush.bf16.msra.mxu0 0
      %4525 = vmatpush.bf16.msra.mxu0 0
      %4526 = vmatpush.bf16.msra.mxu0 0
      %4527 = vmatpush.bf16.msra.mxu0 %v4471
      %4528 = vmatmul.bf16.gmra.mxu0 %v4473
      %v4529 = vpop.f32.mrf.mxu0
      %v4530 = vadd.f32 0.0, %v4529
      %v4531 = vpop.f32.mrf.mxu0
      %v4532 = vadd.f32 0.0, %v4531
      %4533 = vmatmul.bf16.gmra.mxu0 %v4476
      %v4534 = vpop.f32.mrf.mxu0
      %v4535 = vadd.f32 0.0, %v4534
      %v4536 = vpop.f32.mrf.mxu0
      %v4537 = vadd.f32 0.0, %v4536
      %4538 = vmatmul.bf16.gmra.mxu0 %v4479
      %v4539 = vpop.f32.mrf.mxu0
      %v4540 = vadd.f32 0.0, %v4539
      %v4541 = vpop.f32.mrf.mxu0
      %v4542 = vadd.f32 0.0, %v4541
      %4543 = vmatmul.bf16.gmra.mxu0 %v4482
      %v4544 = vpop.f32.mrf.mxu0
      %v4545 = vadd.f32 0.0, %v4544
      %v4546 = vpop.f32.mrf.mxu0
      %v4547 = vadd.f32 0.0, %v4546
      %4548 = vmatmul.bf16.gmra.mxu0 %v4485
      %v4549 = vpop.f32.mrf.mxu0
      %v4550 = vadd.f32 0.0, %v4549
      %v4551 = vpop.f32.mrf.mxu0
      %v4552 = vadd.f32 0.0, %v4551
      %4553 = vmatmul.bf16.gmra.mxu0 %v4488
      %v4554 = vpop.f32.mrf.mxu0
      %v4555 = vadd.f32 0.0, %v4554
      %v4556 = vpop.f32.mrf.mxu0
      %v4557 = vadd.f32 0.0, %v4556
      %4558 = vmatmul.bf16.gmra.mxu0 %v4491
      %v4559 = vpop.f32.mrf.mxu0
      %v4560 = vadd.f32 0.0, %v4559
      %v4561 = vpop.f32.mrf.mxu0
      %v4562 = vadd.f32 0.0, %v4561
      %4563 = vmatmul.bf16.gmra.mxu0 %v4494
      %v4564 = vpop.f32.mrf.mxu0
      %v4565 = vadd.f32 0.0, %v4564
      %v4566 = vpop.f32.mrf.mxu0
      %v4567 = vadd.f32 0.0, %v4566
      %4568 = vmatmul.bf16.gmra.mxu0 %v4497
      %v4569 = vpop.f32.mrf.mxu0
      %v4570 = vadd.f32 0.0, %v4569
      %v4571 = vpop.f32.mrf.mxu0
      %v4572 = vadd.f32 0.0, %v4571
      %4573 = vmatmul.bf16.gmra.mxu0 %v4500
      %v4574 = vpop.f32.mrf.mxu0
      %v4575 = vadd.f32 0.0, %v4574
      %v4576 = vpop.f32.mrf.mxu0
      %v4577 = vadd.f32 0.0, %v4576
      %4578 = vmatmul.bf16.gmra.mxu0 %v4503
      %v4579 = vpop.f32.mrf.mxu0
      %v4580 = vadd.f32 0.0, %v4579
      %v4581 = vpop.f32.mrf.mxu0
      %v4582 = vadd.f32 0.0, %v4581
      %4583 = vmatmul.bf16.gmra.mxu0 %v4506
      %v4584 = vpop.f32.mrf.mxu0
      %v4585 = vadd.f32 0.0, %v4584
      %v4586 = vpop.f32.mrf.mxu0
      %v4587 = vadd.f32 0.0, %v4586
      %4588 = vmatmul.bf16.gmra.mxu0 %v4509
      %v4589 = vpop.f32.mrf.mxu0
      %v4590 = vadd.f32 0.0, %v4589
      %v4591 = vpop.f32.mrf.mxu0
      %v4592 = vadd.f32 0.0, %v4591
      %4593 = vmatmul.bf16.gmra.mxu0 %v4512
      %v4594 = vpop.f32.mrf.mxu0
      %v4595 = vadd.f32 0.0, %v4594
      %v4596 = vpop.f32.mrf.mxu0
      %v4597 = vadd.f32 0.0, %v4596
      %4598 = vmatmul.bf16.gmra.mxu0 %v4515
      %v4599 = vpop.f32.mrf.mxu0
      %v4600 = vadd.f32 0.0, %v4599
      %v4601 = vpop.f32.mrf.mxu0
      %v4602 = vadd.f32 0.0, %v4601
      %4603 = vmatmul.bf16.gmra.mxu0 %v4518
      %v4604 = vpop.f32.mrf.mxu0
      %v4605 = vadd.f32 0.0, %v4604
      %v4606 = vpop.f32.mrf.mxu0
      %v4607 = vadd.f32 0.0, %v4606
      %4608 = vdwg.mxu0
      %v4609 = vadd.f32 %v4310, %v4530
      %v4610 = vadd.f32 %v4312, %v4532
      %v4611 = vadd.f32 %v4315, %v4535
      %v4612 = vadd.f32 %v4317, %v4537
      %v4613 = vadd.f32 %v4320, %v4540
      %v4614 = vadd.f32 %v4322, %v4542
      %v4615 = vadd.f32 %v4325, %v4545
      %v4616 = vadd.f32 %v4327, %v4547
      %v4617 = vadd.f32 %v4330, %v4550
      %v4618 = vadd.f32 %v4332, %v4552
      %v4619 = vadd.f32 %v4335, %v4555
      %v4620 = vadd.f32 %v4337, %v4557
      %v4621 = vadd.f32 %v4340, %v4560
      %v4622 = vadd.f32 %v4342, %v4562
      %v4623 = vadd.f32 %v4345, %v4565
      %v4624 = vadd.f32 %v4347, %v4567
      %v4625 = vadd.f32 %v4350, %v4570
      %v4626 = vadd.f32 %v4352, %v4572
      %v4627 = vadd.f32 %v4355, %v4575
      %v4628 = vadd.f32 %v4357, %v4577
      %v4629 = vadd.f32 %v4360, %v4580
      %v4630 = vadd.f32 %v4362, %v4582
      %v4631 = vadd.f32 %v4365, %v4585
      %v4632 = vadd.f32 %v4367, %v4587
      %v4633 = vadd.f32 %v4370, %v4590
      %v4634 = vadd.f32 %v4372, %v4592
      %v4635 = vadd.f32 %v4375, %v4595
      %v4636 = vadd.f32 %v4377, %v4597
      %v4637 = vadd.f32 %v4380, %v4600
      %v4638 = vadd.f32 %v4382, %v4602
      %v4639 = vadd.f32 %v4385, %v4605
      %v4640 = vadd.f32 %v4387, %v4607
      %s4641 = scalar_lea.vmem %s7, 24
      %v4642 = vld [vmem:[%s4641] sm:$0xf]
      %v4643 = vld [vmem:[%s4641 + $0x4] sm:$0xf]
      %v4646 = vunpack.c.l.b16 %v4642
      %v4647 = vunpack.c.l.b16 %v4643
      %v4648 = vpack.c.b16 %v4647, %v4646
      %v4651 = vsel %vm1733, %v3918, 0
      %4653 = vmatpush.bf16.msra.mxu0 0
      %4654 = vmatpush.bf16.msra.mxu0 0
      %4655 = vmatpush.bf16.msra.mxu0 0
      %4656 = vmatpush.bf16.msra.mxu0 0
      %4657 = vmatpush.bf16.msra.mxu0 0
      %4658 = vmatpush.bf16.msra.mxu0 0
      %4659 = vmatpush.bf16.msra.mxu0 0
      %4660 = vmatpush.bf16.msra.mxu0 %v4648
      %4661 = vmatmul.bf16.gmra.mxu0 %v4270
      %v4662 = vpop.f32.mrf.mxu0
      %v4663 = vadd.f32 0.0, %v4662
      %v4664 = vpop.f32.mrf.mxu0
      %v4665 = vadd.f32 0.0, %v4664
      %4666 = vmatmul.bf16.gmra.mxu0 %v4272
      %v4667 = vpop.f32.mrf.mxu0
      %v4668 = vadd.f32 0.0, %v4667
      %v4669 = vpop.f32.mrf.mxu0
      %v4670 = vadd.f32 0.0, %v4669
      %4671 = vmatmul.bf16.gmra.mxu0 %v4274
      %v4672 = vpop.f32.mrf.mxu0
      %v4673 = vadd.f32 0.0, %v4672
      %v4674 = vpop.f32.mrf.mxu0
      %v4675 = vadd.f32 0.0, %v4674
      %4676 = vmatmul.bf16.gmra.mxu0 %v4276
      %v4677 = vpop.f32.mrf.mxu0
      %v4678 = vadd.f32 0.0, %v4677
      %v4679 = vpop.f32.mrf.mxu0
      %v4680 = vadd.f32 0.0, %v4679
      %4681 = vmatmul.bf16.gmra.mxu0 %v4278
      %v4682 = vpop.f32.mrf.mxu0
      %v4683 = vadd.f32 0.0, %v4682
      %v4684 = vpop.f32.mrf.mxu0
      %v4685 = vadd.f32 0.0, %v4684
      %4686 = vmatmul.bf16.gmra.mxu0 %v4280
      %v4687 = vpop.f32.mrf.mxu0
      %v4688 = vadd.f32 0.0, %v4687
      %v4689 = vpop.f32.mrf.mxu0
      %v4690 = vadd.f32 0.0, %v4689
      %4691 = vmatmul.bf16.gmra.mxu0 %v4282
      %v4692 = vpop.f32.mrf.mxu0
      %v4693 = vadd.f32 0.0, %v4692
      %v4694 = vpop.f32.mrf.mxu0
      %v4695 = vadd.f32 0.0, %v4694
      %4696 = vmatmul.bf16.gmra.mxu0 %v4284
      %v4697 = vpop.f32.mrf.mxu0
      %v4698 = vadd.f32 0.0, %v4697
      %v4699 = vpop.f32.mrf.mxu0
      %v4700 = vadd.f32 0.0, %v4699
      %4701 = vmatmul.bf16.gmra.mxu0 %v4286
      %v4702 = vpop.f32.mrf.mxu0
      %v4703 = vadd.f32 0.0, %v4702
      %v4704 = vpop.f32.mrf.mxu0
      %v4705 = vadd.f32 0.0, %v4704
      %4706 = vmatmul.bf16.gmra.mxu0 %v4288
      %v4707 = vpop.f32.mrf.mxu0
      %v4708 = vadd.f32 0.0, %v4707
      %v4709 = vpop.f32.mrf.mxu0
      %v4710 = vadd.f32 0.0, %v4709
      %4711 = vmatmul.bf16.gmra.mxu0 %v4290
      %v4712 = vpop.f32.mrf.mxu0
      %v4713 = vadd.f32 0.0, %v4712
      %v4714 = vpop.f32.mrf.mxu0
      %v4715 = vadd.f32 0.0, %v4714
      %4716 = vmatmul.bf16.gmra.mxu0 %v4292
      %v4717 = vpop.f32.mrf.mxu0
      %v4718 = vadd.f32 0.0, %v4717
      %v4719 = vpop.f32.mrf.mxu0
      %v4720 = vadd.f32 0.0, %v4719
      %4721 = vmatmul.bf16.gmra.mxu0 %v4294
      %v4722 = vpop.f32.mrf.mxu0
      %v4723 = vadd.f32 0.0, %v4722
      %v4724 = vpop.f32.mrf.mxu0
      %v4725 = vadd.f32 0.0, %v4724
      %4726 = vmatmul.bf16.gmra.mxu0 %v4296
      %v4727 = vpop.f32.mrf.mxu0
      %v4728 = vadd.f32 0.0, %v4727
      %v4729 = vpop.f32.mrf.mxu0
      %v4730 = vadd.f32 0.0, %v4729
      %4731 = vmatmul.bf16.gmra.mxu0 %v4298
      %v4732 = vpop.f32.mrf.mxu0
      %v4733 = vadd.f32 0.0, %v4732
      %v4734 = vpop.f32.mrf.mxu0
      %v4735 = vadd.f32 0.0, %v4734
      %4736 = vmatmul.bf16.gmra.mxu0 %v4651
      %v4737 = vpop.f32.mrf.mxu0
      %v4738 = vadd.f32 0.0, %v4737
      %v4739 = vpop.f32.mrf.mxu0
      %v4740 = vadd.f32 0.0, %v4739
      %4741 = vdwg.mxu0
      %v4742 = vadd.f32 %v4609, %v4663
      %v4743 = vadd.f32 %v4610, %v4665
      %v4744 = vadd.f32 %v4611, %v4668
      %v4745 = vadd.f32 %v4612, %v4670
      %v4746 = vadd.f32 %v4613, %v4673
      %v4747 = vadd.f32 %v4614, %v4675
      %v4748 = vadd.f32 %v4615, %v4678
      %v4749 = vadd.f32 %v4616, %v4680
      %v4750 = vadd.f32 %v4617, %v4683
      %v4751 = vadd.f32 %v4618, %v4685
      %v4752 = vadd.f32 %v4619, %v4688
      %v4753 = vadd.f32 %v4620, %v4690
      %v4754 = vadd.f32 %v4621, %v4693
      %v4755 = vadd.f32 %v4622, %v4695
      %v4756 = vadd.f32 %v4623, %v4698
      %v4757 = vadd.f32 %v4624, %v4700
      %v4758 = vadd.f32 %v4625, %v4703
      %v4759 = vadd.f32 %v4626, %v4705
      %v4760 = vadd.f32 %v4627, %v4708
      %v4761 = vadd.f32 %v4628, %v4710
      %v4762 = vadd.f32 %v4629, %v4713
      %v4763 = vadd.f32 %v4630, %v4715
      %v4764 = vadd.f32 %v4631, %v4718
      %v4765 = vadd.f32 %v4632, %v4720
      %v4766 = vadd.f32 %v4633, %v4723
      %v4767 = vadd.f32 %v4634, %v4725
      %v4768 = vadd.f32 %v4635, %v4728
      %v4769 = vadd.f32 %v4636, %v4730
      %v4770 = vadd.f32 %v4637, %v4733
      %v4771 = vadd.f32 %v4638, %v4735
      %v4772 = vadd.f32 %v4639, %v4738
      %v4773 = vadd.f32 %v4640, %v4740
      %v4774 = vshrl.u32 %v3918, 16
      %v4776 = vshll.u32 %v3918, 16
      %v4778 = vrot.slane %v4776, 1
      %v4779 = vor.u32 %v4774, %v4778
      %v4781 = vshll.u32 %v3934, 16
      %v4783 = vrot.slane %v4781, 1
      %v4784 = vsel %vm1943, %v4779, %v4783
      %s4785 = scalar_lea.vmem %s7, 32
      %v4786 = vld [vmem:[%s4785] sm:$0xf]
      %v4787 = vld [vmem:[%s4785 + $0x4] sm:$0xf]
      %v4790 = vunpack.c.l.b16 %v4786
      %v4791 = vunpack.c.l.b16 %v4787
      %v4792 = vpack.c.b16 %v4791, %v4790
      %v4795 = vsel %vm1733, %v4784, 0
      %4797 = vmatpush.bf16.msra.mxu0 0
      %4798 = vmatpush.bf16.msra.mxu0 0
      %4799 = vmatpush.bf16.msra.mxu0 0
      %4800 = vmatpush.bf16.msra.mxu0 0
      %4801 = vmatpush.bf16.msra.mxu0 0
      %4802 = vmatpush.bf16.msra.mxu0 0
      %4803 = vmatpush.bf16.msra.mxu0 0
      %4804 = vmatpush.bf16.msra.mxu0 %v4792
      %4805 = vmatmul.bf16.gmra.mxu0 %v4129
      %v4806 = vpop.f32.mrf.mxu0
      %v4807 = vadd.f32 0.0, %v4806
      %v4808 = vpop.f32.mrf.mxu0
      %v4809 = vadd.f32 0.0, %v4808
      %4810 = vmatmul.bf16.gmra.mxu0 %v4132
      %v4811 = vpop.f32.mrf.mxu0
      %v4812 = vadd.f32 0.0, %v4811
      %v4813 = vpop.f32.mrf.mxu0
      %v4814 = vadd.f32 0.0, %v4813
      %4815 = vmatmul.bf16.gmra.mxu0 %v4135
      %v4816 = vpop.f32.mrf.mxu0
      %v4817 = vadd.f32 0.0, %v4816
      %v4818 = vpop.f32.mrf.mxu0
      %v4819 = vadd.f32 0.0, %v4818
      %4820 = vmatmul.bf16.gmra.mxu0 %v4138
      %v4821 = vpop.f32.mrf.mxu0
      %v4822 = vadd.f32 0.0, %v4821
      %v4823 = vpop.f32.mrf.mxu0
      %v4824 = vadd.f32 0.0, %v4823
      %4825 = vmatmul.bf16.gmra.mxu0 %v4141
      %v4826 = vpop.f32.mrf.mxu0
      %v4827 = vadd.f32 0.0, %v4826
      %v4828 = vpop.f32.mrf.mxu0
      %v4829 = vadd.f32 0.0, %v4828
      %4830 = vmatmul.bf16.gmra.mxu0 %v4144
      %v4831 = vpop.f32.mrf.mxu0
      %v4832 = vadd.f32 0.0, %v4831
      %v4833 = vpop.f32.mrf.mxu0
      %v4834 = vadd.f32 0.0, %v4833
      %4835 = vmatmul.bf16.gmra.mxu0 %v4147
      %v4836 = vpop.f32.mrf.mxu0
      %v4837 = vadd.f32 0.0, %v4836
      %v4838 = vpop.f32.mrf.mxu0
      %v4839 = vadd.f32 0.0, %v4838
      %4840 = vmatmul.bf16.gmra.mxu0 %v4150
      %v4841 = vpop.f32.mrf.mxu0
      %v4842 = vadd.f32 0.0, %v4841
      %v4843 = vpop.f32.mrf.mxu0
      %v4844 = vadd.f32 0.0, %v4843
      %4845 = vmatmul.bf16.gmra.mxu0 %v4153
      %v4846 = vpop.f32.mrf.mxu0
      %v4847 = vadd.f32 0.0, %v4846
      %v4848 = vpop.f32.mrf.mxu0
      %v4849 = vadd.f32 0.0, %v4848
      %4850 = vmatmul.bf16.gmra.mxu0 %v4156
      %v4851 = vpop.f32.mrf.mxu0
      %v4852 = vadd.f32 0.0, %v4851
      %v4853 = vpop.f32.mrf.mxu0
      %v4854 = vadd.f32 0.0, %v4853
      %4855 = vmatmul.bf16.gmra.mxu0 %v4159
      %v4856 = vpop.f32.mrf.mxu0
      %v4857 = vadd.f32 0.0, %v4856
      %v4858 = vpop.f32.mrf.mxu0
      %v4859 = vadd.f32 0.0, %v4858
      %4860 = vmatmul.bf16.gmra.mxu0 %v4162
      %v4861 = vpop.f32.mrf.mxu0
      %v4862 = vadd.f32 0.0, %v4861
      %v4863 = vpop.f32.mrf.mxu0
      %v4864 = vadd.f32 0.0, %v4863
      %4865 = vmatmul.bf16.gmra.mxu0 %v4165
      %v4866 = vpop.f32.mrf.mxu0
      %v4867 = vadd.f32 0.0, %v4866
      %v4868 = vpop.f32.mrf.mxu0
      %v4869 = vadd.f32 0.0, %v4868
      %4870 = vmatmul.bf16.gmra.mxu0 %v4168
      %v4871 = vpop.f32.mrf.mxu0
      %v4872 = vadd.f32 0.0, %v4871
      %v4873 = vpop.f32.mrf.mxu0
      %v4874 = vadd.f32 0.0, %v4873
      %4875 = vmatmul.bf16.gmra.mxu0 %v4171
      %v4876 = vpop.f32.mrf.mxu0
      %v4877 = vadd.f32 0.0, %v4876
      %v4878 = vpop.f32.mrf.mxu0
      %v4879 = vadd.f32 0.0, %v4878
      %4880 = vmatmul.bf16.gmra.mxu0 %v4795
      %v4881 = vpop.f32.mrf.mxu0
      %v4882 = vadd.f32 0.0, %v4881
      %v4883 = vpop.f32.mrf.mxu0
      %v4884 = vadd.f32 0.0, %v4883
      %4885 = vdwg.mxu0
      %v4886 = vadd.f32 %v4742, %v4807
      %v4887 = vadd.f32 %v4743, %v4809
      %v4888 = vadd.f32 %v4744, %v4812
      %v4889 = vadd.f32 %v4745, %v4814
      %v4890 = vadd.f32 %v4746, %v4817
      %v4891 = vadd.f32 %v4747, %v4819
      %v4892 = vadd.f32 %v4748, %v4822
      %v4893 = vadd.f32 %v4749, %v4824
      %v4894 = vadd.f32 %v4750, %v4827
      %v4895 = vadd.f32 %v4751, %v4829
      %v4896 = vadd.f32 %v4752, %v4832
      %v4897 = vadd.f32 %v4753, %v4834
      %v4898 = vadd.f32 %v4754, %v4837
      %v4899 = vadd.f32 %v4755, %v4839
      %v4900 = vadd.f32 %v4756, %v4842
      %v4901 = vadd.f32 %v4757, %v4844
      %v4902 = vadd.f32 %v4758, %v4847
      %v4903 = vadd.f32 %v4759, %v4849
      %v4904 = vadd.f32 %v4760, %v4852
      %v4905 = vadd.f32 %v4761, %v4854
      %v4906 = vadd.f32 %v4762, %v4857
      %v4907 = vadd.f32 %v4763, %v4859
      %v4908 = vadd.f32 %v4764, %v4862
      %v4909 = vadd.f32 %v4765, %v4864
      %v4910 = vadd.f32 %v4766, %v4867
      %v4911 = vadd.f32 %v4767, %v4869
      %v4912 = vadd.f32 %v4768, %v4872
      %v4913 = vadd.f32 %v4769, %v4874
      %v4914 = vadd.f32 %v4770, %v4877
      %v4915 = vadd.f32 %v4771, %v4879
      %v4916 = vadd.f32 %v4772, %v4882
      %v4917 = vadd.f32 %v4773, %v4884
      %v4920 = vrot.slane %v3918, 1
      %v4921 = vrot.slane %v3934, 1
      %v4922 = vsel %vm2455, %v4920, %v4921
      %s4923 = scalar_lea.vmem %s7, 40
      %v4924 = vld [vmem:[%s4923] sm:$0xf]
      %v4925 = vld [vmem:[%s4923 + $0x4] sm:$0xf]
      %v4928 = vunpack.c.l.b16 %v4924
      %v4929 = vunpack.c.l.b16 %v4925
      %v4930 = vpack.c.b16 %v4929, %v4928
      %v4933 = vsel %vm1733, %v4922, 0
      %4935 = vmatpush.bf16.msra.mxu0 0
      %4936 = vmatpush.bf16.msra.mxu0 0
      %4937 = vmatpush.bf16.msra.mxu0 0
      %4938 = vmatpush.bf16.msra.mxu0 0
      %4939 = vmatpush.bf16.msra.mxu0 0
      %4940 = vmatpush.bf16.msra.mxu0 0
      %4941 = vmatpush.bf16.msra.mxu0 0
      %4942 = vmatpush.bf16.msra.mxu0 %v4930
      %4943 = vmatmul.bf16.gmra.mxu0 %v4476
      %v4944 = vpop.f32.mrf.mxu0
      %v4945 = vadd.f32 0.0, %v4944
      %v4946 = vpop.f32.mrf.mxu0
      %v4947 = vadd.f32 0.0, %v4946
      %4948 = vmatmul.bf16.gmra.mxu0 %v4479
      %v4949 = vpop.f32.mrf.mxu0
      %v4950 = vadd.f32 0.0, %v4949
      %v4951 = vpop.f32.mrf.mxu0
      %v4952 = vadd.f32 0.0, %v4951
      %4953 = vmatmul.bf16.gmra.mxu0 %v4482
      %v4954 = vpop.f32.mrf.mxu0
      %v4955 = vadd.f32 0.0, %v4954
      %v4956 = vpop.f32.mrf.mxu0
      %v4957 = vadd.f32 0.0, %v4956
      %4958 = vmatmul.bf16.gmra.mxu0 %v4485
      %v4959 = vpop.f32.mrf.mxu0
      %v4960 = vadd.f32 0.0, %v4959
      %v4961 = vpop.f32.mrf.mxu0
      %v4962 = vadd.f32 0.0, %v4961
      %4963 = vmatmul.bf16.gmra.mxu0 %v4488
      %v4964 = vpop.f32.mrf.mxu0
      %v4965 = vadd.f32 0.0, %v4964
      %v4966 = vpop.f32.mrf.mxu0
      %v4967 = vadd.f32 0.0, %v4966
      %4968 = vmatmul.bf16.gmra.mxu0 %v4491
      %v4969 = vpop.f32.mrf.mxu0
      %v4970 = vadd.f32 0.0, %v4969
      %v4971 = vpop.f32.mrf.mxu0
      %v4972 = vadd.f32 0.0, %v4971
      %4973 = vmatmul.bf16.gmra.mxu0 %v4494
      %v4974 = vpop.f32.mrf.mxu0
      %v4975 = vadd.f32 0.0, %v4974
      %v4976 = vpop.f32.mrf.mxu0
      %v4977 = vadd.f32 0.0, %v4976
      %4978 = vmatmul.bf16.gmra.mxu0 %v4497
      %v4979 = vpop.f32.mrf.mxu0
      %v4980 = vadd.f32 0.0, %v4979
      %v4981 = vpop.f32.mrf.mxu0
      %v4982 = vadd.f32 0.0, %v4981
      %4983 = vmatmul.bf16.gmra.mxu0 %v4500
      %v4984 = vpop.f32.mrf.mxu0
      %v4985 = vadd.f32 0.0, %v4984
      %v4986 = vpop.f32.mrf.mxu0
      %v4987 = vadd.f32 0.0, %v4986
      %4988 = vmatmul.bf16.gmra.mxu0 %v4503
      %v4989 = vpop.f32.mrf.mxu0
      %v4990 = vadd.f32 0.0, %v4989
      %v4991 = vpop.f32.mrf.mxu0
      %v4992 = vadd.f32 0.0, %v4991
      %4993 = vmatmul.bf16.gmra.mxu0 %v4506
      %v4994 = vpop.f32.mrf.mxu0
      %v4995 = vadd.f32 0.0, %v4994
      %v4996 = vpop.f32.mrf.mxu0
      %v4997 = vadd.f32 0.0, %v4996
      %4998 = vmatmul.bf16.gmra.mxu0 %v4509
      %v4999 = vpop.f32.mrf.mxu0
      %v5000 = vadd.f32 0.0, %v4999
      %v5001 = vpop.f32.mrf.mxu0
      %v5002 = vadd.f32 0.0, %v5001
      %5003 = vmatmul.bf16.gmra.mxu0 %v4512
      %v5004 = vpop.f32.mrf.mxu0
      %v5005 = vadd.f32 0.0, %v5004
      %v5006 = vpop.f32.mrf.mxu0
      %v5007 = vadd.f32 0.0, %v5006
      %5008 = vmatmul.bf16.gmra.mxu0 %v4515
      %v5009 = vpop.f32.mrf.mxu0
      %v5010 = vadd.f32 0.0, %v5009
      %v5011 = vpop.f32.mrf.mxu0
      %v5012 = vadd.f32 0.0, %v5011
      %5013 = vmatmul.bf16.gmra.mxu0 %v4518
      %v5014 = vpop.f32.mrf.mxu0
      %v5015 = vadd.f32 0.0, %v5014
      %v5016 = vpop.f32.mrf.mxu0
      %v5017 = vadd.f32 0.0, %v5016
      %5018 = vmatmul.bf16.gmra.mxu0 %v4933
      %v5019 = vpop.f32.mrf.mxu0
      %v5020 = vadd.f32 0.0, %v5019
      %v5021 = vpop.f32.mrf.mxu0
      %v5022 = vadd.f32 0.0, %v5021
      %5023 = vdwg.mxu0
      %v5024 = vadd.f32 %v4886, %v4945
      %v5025 = vadd.f32 %v4887, %v4947
      %v5026 = vadd.f32 %v4888, %v4950
      %v5027 = vadd.f32 %v4889, %v4952
      %v5028 = vadd.f32 %v4890, %v4955
      %v5029 = vadd.f32 %v4891, %v4957
      %v5030 = vadd.f32 %v4892, %v4960
      %v5031 = vadd.f32 %v4893, %v4962
      %v5032 = vadd.f32 %v4894, %v4965
      %v5033 = vadd.f32 %v4895, %v4967
      %v5034 = vadd.f32 %v4896, %v4970
      %v5035 = vadd.f32 %v4897, %v4972
      %v5036 = vadd.f32 %v4898, %v4975
      %v5037 = vadd.f32 %v4899, %v4977
      %v5038 = vadd.f32 %v4900, %v4980
      %v5039 = vadd.f32 %v4901, %v4982
      %v5040 = vadd.f32 %v4902, %v4985
      %v5041 = vadd.f32 %v4903, %v4987
      %v5042 = vadd.f32 %v4904, %v4990
      %v5043 = vadd.f32 %v4905, %v4992
      %v5044 = vadd.f32 %v4906, %v4995
      %v5045 = vadd.f32 %v4907, %v4997
      %v5046 = vadd.f32 %v4908, %v5000
      %v5047 = vadd.f32 %v4909, %v5002
      %v5048 = vadd.f32 %v4910, %v5005
      %v5049 = vadd.f32 %v4911, %v5007
      %v5050 = vadd.f32 %v4912, %v5010
      %v5051 = vadd.f32 %v4913, %v5012
      %v5052 = vadd.f32 %v4914, %v5015
      %v5053 = vadd.f32 %v4915, %v5017
      %v5054 = vadd.f32 %v4916, %v5020
      %v5055 = vadd.f32 %v4917, %v5022
      %s5056 = scalar_lea.vmem %s7, 48
      %v5057 = vld [vmem:[%s5056] sm:$0xf]
      %v5058 = vld [vmem:[%s5056 + $0x4] sm:$0xf]
      %v5061 = vunpack.c.l.b16 %v5057
      %v5062 = vunpack.c.l.b16 %v5058
      %v5063 = vpack.c.b16 %v5062, %v5061
      %5065 = vmatpush.bf16.msra.mxu0 0
      %5066 = vmatpush.bf16.msra.mxu0 0
      %5067 = vmatpush.bf16.msra.mxu0 0
      %5068 = vmatpush.bf16.msra.mxu0 0
      %5069 = vmatpush.bf16.msra.mxu0 0
      %5070 = vmatpush.bf16.msra.mxu0 0
      %5071 = vmatpush.bf16.msra.mxu0 0
      %5072 = vmatpush.bf16.msra.mxu0 %v5063
      %5073 = vmatmul.bf16.gmra.mxu0 %v4272
      %v5074 = vpop.f32.mrf.mxu0
      %v5075 = vadd.f32 0.0, %v5074
      %v5076 = vpop.f32.mrf.mxu0
      %v5077 = vadd.f32 0.0, %v5076
      %5078 = vmatmul.bf16.gmra.mxu0 %v4274
      %v5079 = vpop.f32.mrf.mxu0
      %v5080 = vadd.f32 0.0, %v5079
      %v5081 = vpop.f32.mrf.mxu0
      %v5082 = vadd.f32 0.0, %v5081
      %5083 = vmatmul.bf16.gmra.mxu0 %v4276
      %v5084 = vpop.f32.mrf.mxu0
      %v5085 = vadd.f32 0.0, %v5084
      %v5086 = vpop.f32.mrf.mxu0
      %v5087 = vadd.f32 0.0, %v5086
      %5088 = vmatmul.bf16.gmra.mxu0 %v4278
      %v5089 = vpop.f32.mrf.mxu0
      %v5090 = vadd.f32 0.0, %v5089
      %v5091 = vpop.f32.mrf.mxu0
      %v5092 = vadd.f32 0.0, %v5091
      %5093 = vmatmul.bf16.gmra.mxu0 %v4280
      %v5094 = vpop.f32.mrf.mxu0
      %v5095 = vadd.f32 0.0, %v5094
      %v5096 = vpop.f32.mrf.mxu0
      %v5097 = vadd.f32 0.0, %v5096
      %5098 = vmatmul.bf16.gmra.mxu0 %v4282
      %v5099 = vpop.f32.mrf.mxu0
      %v5100 = vadd.f32 0.0, %v5099
      %v5101 = vpop.f32.mrf.mxu0
      %v5102 = vadd.f32 0.0, %v5101
      %5103 = vmatmul.bf16.gmra.mxu0 %v4284
      %v5104 = vpop.f32.mrf.mxu0
      %v5105 = vadd.f32 0.0, %v5104
      %v5106 = vpop.f32.mrf.mxu0
      %v5107 = vadd.f32 0.0, %v5106
      %5108 = vmatmul.bf16.gmra.mxu0 %v4286
      %v5109 = vpop.f32.mrf.mxu0
      %v5110 = vadd.f32 0.0, %v5109
      %v5111 = vpop.f32.mrf.mxu0
      %v5112 = vadd.f32 0.0, %v5111
      %5113 = vmatmul.bf16.gmra.mxu0 %v4288
      %v5114 = vpop.f32.mrf.mxu0
      %v5115 = vadd.f32 0.0, %v5114
      %v5116 = vpop.f32.mrf.mxu0
      %v5117 = vadd.f32 0.0, %v5116
      %5118 = vmatmul.bf16.gmra.mxu0 %v4290
      %v5119 = vpop.f32.mrf.mxu0
      %v5120 = vadd.f32 0.0, %v5119
      %v5121 = vpop.f32.mrf.mxu0
      %v5122 = vadd.f32 0.0, %v5121
      %5123 = vmatmul.bf16.gmra.mxu0 %v4292
      %v5124 = vpop.f32.mrf.mxu0
      %v5125 = vadd.f32 0.0, %v5124
      %v5126 = vpop.f32.mrf.mxu0
      %v5127 = vadd.f32 0.0, %v5126
      %5128 = vmatmul.bf16.gmra.mxu0 %v4294
      %v5129 = vpop.f32.mrf.mxu0
      %v5130 = vadd.f32 0.0, %v5129
      %v5131 = vpop.f32.mrf.mxu0
      %v5132 = vadd.f32 0.0, %v5131
      %5133 = vmatmul.bf16.gmra.mxu0 %v4296
      %v5134 = vpop.f32.mrf.mxu0
      %v5135 = vadd.f32 0.0, %v5134
      %v5136 = vpop.f32.mrf.mxu0
      %v5137 = vadd.f32 0.0, %v5136
      %5138 = vmatmul.bf16.gmra.mxu0 %v4298
      %v5139 = vpop.f32.mrf.mxu0
      %v5140 = vadd.f32 0.0, %v5139
      %v5141 = vpop.f32.mrf.mxu0
      %v5142 = vadd.f32 0.0, %v5141
      %5143 = vmatmul.bf16.gmra.mxu0 %v4651
      %v5144 = vpop.f32.mrf.mxu0
      %v5145 = vadd.f32 0.0, %v5144
      %v5146 = vpop.f32.mrf.mxu0
      %v5147 = vadd.f32 0.0, %v5146
      %5148 = vmatmul.bf16.gmra.mxu0 %v4268
      %v5149 = vpop.f32.mrf.mxu0
      %v5150 = vadd.f32 0.0, %v5149
      %v5151 = vpop.f32.mrf.mxu0
      %v5152 = vadd.f32 0.0, %v5151
      %5153 = vdwg.mxu0
      %v5154 = vadd.f32 %v5024, %v5075
      %v5155 = vadd.f32 %v5025, %v5077
      %v5156 = vadd.f32 %v5026, %v5080
      %v5157 = vadd.f32 %v5027, %v5082
      %v5158 = vadd.f32 %v5028, %v5085
      %v5159 = vadd.f32 %v5029, %v5087
      %v5160 = vadd.f32 %v5030, %v5090
      %v5161 = vadd.f32 %v5031, %v5092
      %v5162 = vadd.f32 %v5032, %v5095
      %v5163 = vadd.f32 %v5033, %v5097
      %v5164 = vadd.f32 %v5034, %v5100
      %v5165 = vadd.f32 %v5035, %v5102
      %v5166 = vadd.f32 %v5036, %v5105
      %v5167 = vadd.f32 %v5037, %v5107
      %v5168 = vadd.f32 %v5038, %v5110
      %v5169 = vadd.f32 %v5039, %v5112
      %v5170 = vadd.f32 %v5040, %v5115
      %v5171 = vadd.f32 %v5041, %v5117
      %v5172 = vadd.f32 %v5042, %v5120
      %v5173 = vadd.f32 %v5043, %v5122
      %v5174 = vadd.f32 %v5044, %v5125
      %v5175 = vadd.f32 %v5045, %v5127
      %v5176 = vadd.f32 %v5046, %v5130
      %v5177 = vadd.f32 %v5047, %v5132
      %v5178 = vadd.f32 %v5048, %v5135
      %v5179 = vadd.f32 %v5049, %v5137
      %v5180 = vadd.f32 %v5050, %v5140
      %v5181 = vadd.f32 %v5051, %v5142
      %v5182 = vadd.f32 %v5052, %v5145
      %v5183 = vadd.f32 %v5053, %v5147
      %v5184 = vadd.f32 %v5054, %v5150
      %v5185 = vadd.f32 %v5055, %v5152
      %s5186 = scalar_lea.vmem %s7, 56
      %v5187 = vld [vmem:[%s5186] sm:$0xf]
      %v5188 = vld [vmem:[%s5186 + $0x4] sm:$0xf]
      %v5191 = vunpack.c.l.b16 %v5187
      %v5192 = vunpack.c.l.b16 %v5188
      %v5193 = vpack.c.b16 %v5192, %v5191
      %5195 = vmatpush.bf16.msra.mxu0 0
      %5196 = vmatpush.bf16.msra.mxu0 0
      %5197 = vmatpush.bf16.msra.mxu0 0
      %5198 = vmatpush.bf16.msra.mxu0 0
      %5199 = vmatpush.bf16.msra.mxu0 0
      %5200 = vmatpush.bf16.msra.mxu0 0
      %5201 = vmatpush.bf16.msra.mxu0 0
      %5202 = vmatpush.bf16.msra.mxu0 %v5193
      %5203 = vmatmul.bf16.gmra.mxu0 %v4132
      %v5204 = vpop.f32.mrf.mxu0
      %v5205 = vadd.f32 0.0, %v5204
      %v5206 = vpop.f32.mrf.mxu0
      %v5207 = vadd.f32 0.0, %v5206
      %5208 = vmatmul.bf16.gmra.mxu0 %v4135
      %v5209 = vpop.f32.mrf.mxu0
      %v5210 = vadd.f32 0.0, %v5209
      %v5211 = vpop.f32.mrf.mxu0
      %v5212 = vadd.f32 0.0, %v5211
      %5213 = vmatmul.bf16.gmra.mxu0 %v4138
      %v5214 = vpop.f32.mrf.mxu0
      %v5215 = vadd.f32 0.0, %v5214
      %v5216 = vpop.f32.mrf.mxu0
      %v5217 = vadd.f32 0.0, %v5216
      %5218 = vmatmul.bf16.gmra.mxu0 %v4141
      %v5219 = vpop.f32.mrf.mxu0
      %v5220 = vadd.f32 0.0, %v5219
      %v5221 = vpop.f32.mrf.mxu0
      %v5222 = vadd.f32 0.0, %v5221
      %5223 = vmatmul.bf16.gmra.mxu0 %v4144
      %v5224 = vpop.f32.mrf.mxu0
      %v5225 = vadd.f32 0.0, %v5224
      %v5226 = vpop.f32.mrf.mxu0
      %v5227 = vadd.f32 0.0, %v5226
      %5228 = vmatmul.bf16.gmra.mxu0 %v4147
      %v5229 = vpop.f32.mrf.mxu0
      %v5230 = vadd.f32 0.0, %v5229
      %v5231 = vpop.f32.mrf.mxu0
      %v5232 = vadd.f32 0.0, %v5231
      %5233 = vmatmul.bf16.gmra.mxu0 %v4150
      %v5234 = vpop.f32.mrf.mxu0
      %v5235 = vadd.f32 0.0, %v5234
      %v5236 = vpop.f32.mrf.mxu0
      %v5237 = vadd.f32 0.0, %v5236
      %5238 = vmatmul.bf16.gmra.mxu0 %v4153
      %v5239 = vpop.f32.mrf.mxu0
      %v5240 = vadd.f32 0.0, %v5239
      %v5241 = vpop.f32.mrf.mxu0
      %v5242 = vadd.f32 0.0, %v5241
      %5243 = vmatmul.bf16.gmra.mxu0 %v4156
      %v5244 = vpop.f32.mrf.mxu0
      %v5245 = vadd.f32 0.0, %v5244
      %v5246 = vpop.f32.mrf.mxu0
      %v5247 = vadd.f32 0.0, %v5246
      %5248 = vmatmul.bf16.gmra.mxu0 %v4159
      %v5249 = vpop.f32.mrf.mxu0
      %v5250 = vadd.f32 0.0, %v5249
      %v5251 = vpop.f32.mrf.mxu0
      %v5252 = vadd.f32 0.0, %v5251
      %5253 = vmatmul.bf16.gmra.mxu0 %v4162
      %v5254 = vpop.f32.mrf.mxu0
      %v5255 = vadd.f32 0.0, %v5254
      %v5256 = vpop.f32.mrf.mxu0
      %v5257 = vadd.f32 0.0, %v5256
      %5258 = vmatmul.bf16.gmra.mxu0 %v4165
      %v5259 = vpop.f32.mrf.mxu0
      %v5260 = vadd.f32 0.0, %v5259
      %v5261 = vpop.f32.mrf.mxu0
      %v5262 = vadd.f32 0.0, %v5261
      %5263 = vmatmul.bf16.gmra.mxu0 %v4168
      %v5264 = vpop.f32.mrf.mxu0
      %v5265 = vadd.f32 0.0, %v5264
      %v5266 = vpop.f32.mrf.mxu0
      %v5267 = vadd.f32 0.0, %v5266
      %5268 = vmatmul.bf16.gmra.mxu0 %v4171
      %v5269 = vpop.f32.mrf.mxu0
      %v5270 = vadd.f32 0.0, %v5269
      %v5271 = vpop.f32.mrf.mxu0
      %v5272 = vadd.f32 0.0, %v5271
      %5273 = vmatmul.bf16.gmra.mxu0 %v4795
      %v5274 = vpop.f32.mrf.mxu0
      %v5275 = vadd.f32 0.0, %v5274
      %v5276 = vpop.f32.mrf.mxu0
      %v5277 = vadd.f32 0.0, %v5276
      %5278 = vmatmul.bf16.gmra.mxu0 %v4126
      %v5279 = vpop.f32.mrf.mxu0
      %v5280 = vadd.f32 0.0, %v5279
      %v5281 = vpop.f32.mrf.mxu0
      %v5282 = vadd.f32 0.0, %v5281
      %5283 = vdwg.mxu0
      %v5284 = vadd.f32 %v5154, %v5205
      %v5285 = vadd.f32 %v5155, %v5207
      %v5286 = vadd.f32 %v5156, %v5210
      %v5287 = vadd.f32 %v5157, %v5212
      %v5288 = vadd.f32 %v5158, %v5215
      %v5289 = vadd.f32 %v5159, %v5217
      %v5290 = vadd.f32 %v5160, %v5220
      %v5291 = vadd.f32 %v5161, %v5222
      %v5292 = vadd.f32 %v5162, %v5225
      %v5293 = vadd.f32 %v5163, %v5227
      %v5294 = vadd.f32 %v5164, %v5230
      %v5295 = vadd.f32 %v5165, %v5232
      %v5296 = vadd.f32 %v5166, %v5235
      %v5297 = vadd.f32 %v5167, %v5237
      %v5298 = vadd.f32 %v5168, %v5240
      %v5299 = vadd.f32 %v5169, %v5242
      %v5300 = vadd.f32 %v5170, %v5245
      %v5301 = vadd.f32 %v5171, %v5247
      %v5302 = vadd.f32 %v5172, %v5250
      %v5303 = vadd.f32 %v5173, %v5252
      %v5304 = vadd.f32 %v5174, %v5255
      %v5305 = vadd.f32 %v5175, %v5257
      %v5306 = vadd.f32 %v5176, %v5260
      %v5307 = vadd.f32 %v5177, %v5262
      %v5308 = vadd.f32 %v5178, %v5265
      %v5309 = vadd.f32 %v5179, %v5267
      %v5310 = vadd.f32 %v5180, %v5270
      %v5311 = vadd.f32 %v5181, %v5272
      %v5312 = vadd.f32 %v5182, %v5275
      %v5313 = vadd.f32 %v5183, %v5277
      %v5314 = vadd.f32 %v5184, %v5280
      %v5315 = vadd.f32 %v5185, %v5282
      %s5316 = scalar_lea.vmem %s7, 64
      %v5317 = vld [vmem:[%s5316] sm:$0xf]
      %v5318 = vld [vmem:[%s5316 + $0x4] sm:$0xf]
      %v5321 = vunpack.c.l.b16 %v5317
      %v5322 = vunpack.c.l.b16 %v5318
      %v5323 = vpack.c.b16 %v5322, %v5321
      %5325 = vmatpush.bf16.msra.mxu0 0
      %5326 = vmatpush.bf16.msra.mxu0 0
      %5327 = vmatpush.bf16.msra.mxu0 0
      %5328 = vmatpush.bf16.msra.mxu0 0
      %5329 = vmatpush.bf16.msra.mxu0 0
      %5330 = vmatpush.bf16.msra.mxu0 0
      %5331 = vmatpush.bf16.msra.mxu0 0
      %5332 = vmatpush.bf16.msra.mxu0 %v5323
      %5333 = vmatmul.bf16.gmra.mxu0 %v4479
      %v5334 = vpop.f32.mrf.mxu0
      %v5335 = vadd.f32 0.0, %v5334
      %v5336 = vpop.f32.mrf.mxu0
      %v5337 = vadd.f32 0.0, %v5336
      %5338 = vmatmul.bf16.gmra.mxu0 %v4482
      %v5339 = vpop.f32.mrf.mxu0
      %v5340 = vadd.f32 0.0, %v5339
      %v5341 = vpop.f32.mrf.mxu0
      %v5342 = vadd.f32 0.0, %v5341
      %5343 = vmatmul.bf16.gmra.mxu0 %v4485
      %v5344 = vpop.f32.mrf.mxu0
      %v5345 = vadd.f32 0.0, %v5344
      %v5346 = vpop.f32.mrf.mxu0
      %v5347 = vadd.f32 0.0, %v5346
      %5348 = vmatmul.bf16.gmra.mxu0 %v4488
      %v5349 = vpop.f32.mrf.mxu0
      %v5350 = vadd.f32 0.0, %v5349
      %v5351 = vpop.f32.mrf.mxu0
      %v5352 = vadd.f32 0.0, %v5351
      %5353 = vmatmul.bf16.gmra.mxu0 %v4491
      %v5354 = vpop.f32.mrf.mxu0
      %v5355 = vadd.f32 0.0, %v5354
      %v5356 = vpop.f32.mrf.mxu0
      %v5357 = vadd.f32 0.0, %v5356
      %5358 = vmatmul.bf16.gmra.mxu0 %v4494
      %v5359 = vpop.f32.mrf.mxu0
      %v5360 = vadd.f32 0.0, %v5359
      %v5361 = vpop.f32.mrf.mxu0
      %v5362 = vadd.f32 0.0, %v5361
      %5363 = vmatmul.bf16.gmra.mxu0 %v4497
      %v5364 = vpop.f32.mrf.mxu0
      %v5365 = vadd.f32 0.0, %v5364
      %v5366 = vpop.f32.mrf.mxu0
      %v5367 = vadd.f32 0.0, %v5366
      %5368 = vmatmul.bf16.gmra.mxu0 %v4500
      %v5369 = vpop.f32.mrf.mxu0
      %v5370 = vadd.f32 0.0, %v5369
      %v5371 = vpop.f32.mrf.mxu0
      %v5372 = vadd.f32 0.0, %v5371
      %5373 = vmatmul.bf16.gmra.mxu0 %v4503
      %v5374 = vpop.f32.mrf.mxu0
      %v5375 = vadd.f32 0.0, %v5374
      %v5376 = vpop.f32.mrf.mxu0
      %v5377 = vadd.f32 0.0, %v5376
      %5378 = vmatmul.bf16.gmra.mxu0 %v4506
      %v5379 = vpop.f32.mrf.mxu0
      %v5380 = vadd.f32 0.0, %v5379
      %v5381 = vpop.f32.mrf.mxu0
      %v5382 = vadd.f32 0.0, %v5381
      %5383 = vmatmul.bf16.gmra.mxu0 %v4509
      %v5384 = vpop.f32.mrf.mxu0
      %v5385 = vadd.f32 0.0, %v5384
      %v5386 = vpop.f32.mrf.mxu0
      %v5387 = vadd.f32 0.0, %v5386
      %5388 = vmatmul.bf16.gmra.mxu0 %v4512
      %v5389 = vpop.f32.mrf.mxu0
      %v5390 = vadd.f32 0.0, %v5389
      %v5391 = vpop.f32.mrf.mxu0
      %v5392 = vadd.f32 0.0, %v5391
      %5393 = vmatmul.bf16.gmra.mxu0 %v4515
      %v5394 = vpop.f32.mrf.mxu0
      %v5395 = vadd.f32 0.0, %v5394
      %v5396 = vpop.f32.mrf.mxu0
      %v5397 = vadd.f32 0.0, %v5396
      %5398 = vmatmul.bf16.gmra.mxu0 %v4518
      %v5399 = vpop.f32.mrf.mxu0
      %v5400 = vadd.f32 0.0, %v5399
      %v5401 = vpop.f32.mrf.mxu0
      %v5402 = vadd.f32 0.0, %v5401
      %5403 = vmatmul.bf16.gmra.mxu0 %v4933
      %v5404 = vpop.f32.mrf.mxu0
      %v5405 = vadd.f32 0.0, %v5404
      %v5406 = vpop.f32.mrf.mxu0
      %v5407 = vadd.f32 0.0, %v5406
      %5408 = vmatmul.bf16.gmra.mxu0 %v4473
      %v5409 = vpop.f32.mrf.mxu0
      %v5410 = vadd.f32 0.0, %v5409
      %v5411 = vpop.f32.mrf.mxu0
      %v5412 = vadd.f32 0.0, %v5411
      %5413 = vdwg.mxu0
      %v5414 = vadd.f32 %v5284, %v5335
      %v5415 = vadd.f32 %v5285, %v5337
      %v5416 = vadd.f32 %v5286, %v5340
      %v5417 = vadd.f32 %v5287, %v5342
      %v5418 = vadd.f32 %v5288, %v5345
      %v5419 = vadd.f32 %v5289, %v5347
      %v5420 = vadd.f32 %v5290, %v5350
      %v5421 = vadd.f32 %v5291, %v5352
      %v5422 = vadd.f32 %v5292, %v5355
      %v5423 = vadd.f32 %v5293, %v5357
      %v5424 = vadd.f32 %v5294, %v5360
      %v5425 = vadd.f32 %v5295, %v5362
      %v5426 = vadd.f32 %v5296, %v5365
      %v5427 = vadd.f32 %v5297, %v5367
      %v5428 = vadd.f32 %v5298, %v5370
      %v5429 = vadd.f32 %v5299, %v5372
      %v5430 = vadd.f32 %v5300, %v5375
      %v5431 = vadd.f32 %v5301, %v5377
      %v5432 = vadd.f32 %v5302, %v5380
      %v5433 = vadd.f32 %v5303, %v5382
      %v5434 = vadd.f32 %v5304, %v5385
      %v5435 = vadd.f32 %v5305, %v5387
      %v5436 = vadd.f32 %v5306, %v5390
      %v5437 = vadd.f32 %v5307, %v5392
      %v5438 = vadd.f32 %v5308, %v5395
      %v5439 = vadd.f32 %v5309, %v5397
      %v5440 = vadd.f32 %v5310, %v5400
      %v5441 = vadd.f32 %v5311, %v5402
      %v5442 = vadd.f32 %v5312, %v5405
      %v5443 = vadd.f32 %v5313, %v5407
      %v5444 = vadd.f32 %v5314, %v5410
      %v5445 = vadd.f32 %v5315, %v5412
      %v5447 = vperm.slane %v3677, 0
      %v5449 = vmul.f32 %v5414, %v5447
      %v5450 = vmul.f32 %v5415, %v5447
      %v5451 = vmul.f32 %v5416, %v5447
      %v5452 = vmul.f32 %v5417, %v5447
      %v5453 = vmul.f32 %v5418, %v5447
      %v5454 = vmul.f32 %v5419, %v5447
      %v5455 = vmul.f32 %v5420, %v5447
      %v5456 = vmul.f32 %v5421, %v5447
      %v5457 = vmul.f32 %v5422, %v5447
      %v5458 = vmul.f32 %v5423, %v5447
      %v5459 = vmul.f32 %v5424, %v5447
      %v5460 = vmul.f32 %v5425, %v5447
      %v5461 = vmul.f32 %v5426, %v5447
      %v5462 = vmul.f32 %v5427, %v5447
      %v5463 = vmul.f32 %v5428, %v5447
      %v5464 = vmul.f32 %v5429, %v5447
      %v5465 = vmul.f32 %v5430, %v5447
      %v5466 = vmul.f32 %v5431, %v5447
      %v5467 = vmul.f32 %v5432, %v5447
      %v5468 = vmul.f32 %v5433, %v5447
      %v5469 = vmul.f32 %v5434, %v5447
      %v5470 = vmul.f32 %v5435, %v5447
      %v5471 = vmul.f32 %v5436, %v5447
      %v5472 = vmul.f32 %v5437, %v5447
      %v5473 = vmul.f32 %v5438, %v5447
      %v5474 = vmul.f32 %v5439, %v5447
      %v5475 = vmul.f32 %v5440, %v5447
      %v5476 = vmul.f32 %v5441, %v5447
      %v5477 = vmul.f32 %v5442, %v5447
      %v5478 = vmul.f32 %v5443, %v5447
      %v5479 = vmul.f32 %v5444, %v5447
      %v5480 = vmul.f32 %v5445, %v5447
      %v5482 = vperm.slane %v3678, 0
      %v5484 = vadd.f32 %v5449, %v5482
      %v5485 = vadd.f32 %v5450, %v5482
      %v5486 = vadd.f32 %v5451, %v5482
      %v5487 = vadd.f32 %v5452, %v5482
      %v5488 = vadd.f32 %v5453, %v5482
      %v5489 = vadd.f32 %v5454, %v5482
      %v5490 = vadd.f32 %v5455, %v5482
      %v5491 = vadd.f32 %v5456, %v5482
      %v5492 = vadd.f32 %v5457, %v5482
      %v5493 = vadd.f32 %v5458, %v5482
      %v5494 = vadd.f32 %v5459, %v5482
      %v5495 = vadd.f32 %v5460, %v5482
      %v5496 = vadd.f32 %v5461, %v5482
      %v5497 = vadd.f32 %v5462, %v5482
      %v5498 = vadd.f32 %v5463, %v5482
      %v5499 = vadd.f32 %v5464, %v5482
      %v5500 = vadd.f32 %v5465, %v5482
      %v5501 = vadd.f32 %v5466, %v5482
      %v5502 = vadd.f32 %v5467, %v5482
      %v5503 = vadd.f32 %v5468, %v5482
      %v5504 = vadd.f32 %v5469, %v5482
      %v5505 = vadd.f32 %v5470, %v5482
      %v5506 = vadd.f32 %v5471, %v5482
      %v5507 = vadd.f32 %v5472, %v5482
      %v5508 = vadd.f32 %v5473, %v5482
      %v5509 = vadd.f32 %v5474, %v5482
      %v5510 = vadd.f32 %v5475, %v5482
      %v5511 = vadd.f32 %v5476, %v5482
      %v5512 = vadd.f32 %v5477, %v5482
      %v5513 = vadd.f32 %v5478, %v5482
      %v5514 = vadd.f32 %v5479, %v5482
      %v5515 = vadd.f32 %v5480, %v5482
      %v5516 = vmax.f32 %v5484, 0.0
      %v5517 = vmax.f32 %v5485, 0.0
      %v5518 = vmax.f32 %v5486, 0.0
      %v5519 = vmax.f32 %v5487, 0.0
      %v5520 = vmax.f32 %v5488, 0.0
      %v5521 = vmax.f32 %v5489, 0.0
      %v5522 = vmax.f32 %v5490, 0.0
      %v5523 = vmax.f32 %v5491, 0.0
      %v5524 = vmax.f32 %v5492, 0.0
      %v5525 = vmax.f32 %v5493, 0.0
      %v5526 = vmax.f32 %v5494, 0.0
      %v5527 = vmax.f32 %v5495, 0.0
      %v5528 = vmax.f32 %v5496, 0.0
      %v5529 = vmax.f32 %v5497, 0.0
      %v5530 = vmax.f32 %v5498, 0.0
      %v5531 = vmax.f32 %v5499, 0.0
      %v5532 = vmax.f32 %v5500, 0.0
      %v5533 = vmax.f32 %v5501, 0.0
      %v5534 = vmax.f32 %v5502, 0.0
      %v5535 = vmax.f32 %v5503, 0.0
      %v5536 = vmax.f32 %v5504, 0.0
      %v5537 = vmax.f32 %v5505, 0.0
      %v5538 = vmax.f32 %v5506, 0.0
      %v5539 = vmax.f32 %v5507, 0.0
      %v5540 = vmax.f32 %v5508, 0.0
      %v5541 = vmax.f32 %v5509, 0.0
      %v5542 = vmax.f32 %v5510, 0.0
      %v5543 = vmax.f32 %v5511, 0.0
      %v5544 = vmax.f32 %v5512, 0.0
      %v5545 = vmax.f32 %v5513, 0.0
      %v5546 = vmax.f32 %v5514, 0.0
      %v5547 = vmax.f32 %v5515, 0.0
      %5548 = vxpose.xlu0.b32.start [1/16] %v5516, 128
      %5549 = vxpose.xlu0.b32.cont [2/16] %v5517, 128
      %5550 = vxpose.xlu0.b32.cont [3/16] %v5518, 128
      %5551 = vxpose.xlu0.b32.cont [4/16] %v5519, 128
      %5552 = vxpose.xlu0.b32.cont [5/16] %v5520, 128
      %5553 = vxpose.xlu0.b32.cont [6/16] %v5521, 128
      %5554 = vxpose.xlu0.b32.cont [7/16] %v5522, 128
      %5555 = vxpose.xlu0.b32.cont [8/16] %v5523, 128
      %5556 = vxpose.xlu0.b32.cont [9/16] %v5524, 128
      %5557 = vxpose.xlu0.b32.cont [10/16] %v5525, 128
      %5558 = vxpose.xlu0.b32.cont [11/16] %v5526, 128
      %5559 = vxpose.xlu0.b32.cont [12/16] %v5527, 128
      %5560 = vxpose.xlu0.b32.cont [13/16] %v5528, 128
      %5561 = vxpose.xlu0.b32.cont [14/16] %v5529, 128
      %5562 = vxpose.xlu0.b32.cont [15/16] %v5530, 128
      %5563 = vxpose.xlu0.b32.end [16/16] %v5531, 128
      %v5564 = vpop.trf.xlu0
      %v5565 = vpop.trf.xlu0
      %v5566 = vpop.trf.xlu0
      %v5567 = vpop.trf.xlu0
      %v5568 = vpop.trf.xlu0
      %v5569 = vpop.trf.xlu0
      %v5570 = vpop.trf.xlu0
      %v5571 = vpop.trf.xlu0
      %v5572 = vpop.trf.xlu0
      %v5573 = vpop.trf.xlu0
      %v5574 = vpop.trf.xlu0
      %v5575 = vpop.trf.xlu0
      %v5576 = vpop.trf.xlu0
      %v5577 = vpop.trf.xlu0
      %v5578 = vpop.trf.xlu0
      %v5579 = vpop.trf.xlu0
      %5580 = vxpose.xlu0.b32.start [1/16] %v5532, 128
      %5581 = vxpose.xlu0.b32.cont [2/16] %v5533, 128
      %5582 = vxpose.xlu0.b32.cont [3/16] %v5534, 128
      %5583 = vxpose.xlu0.b32.cont [4/16] %v5535, 128
      %5584 = vxpose.xlu0.b32.cont [5/16] %v5536, 128
      %5585 = vxpose.xlu0.b32.cont [6/16] %v5537, 128
      %5586 = vxpose.xlu0.b32.cont [7/16] %v5538, 128
      %5587 = vxpose.xlu0.b32.cont [8/16] %v5539, 128
      %5588 = vxpose.xlu0.b32.cont [9/16] %v5540, 128
      %5589 = vxpose.xlu0.b32.cont [10/16] %v5541, 128
      %5590 = vxpose.xlu0.b32.cont [11/16] %v5542, 128
      %5591 = vxpose.xlu0.b32.cont [12/16] %v5543, 128
      %5592 = vxpose.xlu0.b32.cont [13/16] %v5544, 128
      %5593 = vxpose.xlu0.b32.cont [14/16] %v5545, 128
      %5594 = vxpose.xlu0.b32.cont [15/16] %v5546, 128
      %5595 = vxpose.xlu0.b32.end [16/16] %v5547, 128
      %v5596 = vpop.trf.xlu0
      %v5597 = vpop.trf.xlu0
      %v5598 = vpop.trf.xlu0
      %v5599 = vpop.trf.xlu0
      %v5600 = vpop.trf.xlu0
      %v5601 = vpop.trf.xlu0
      %v5602 = vpop.trf.xlu0
      %v5603 = vpop.trf.xlu0
      %v5604 = vpop.trf.xlu0
      %v5605 = vpop.trf.xlu0
      %v5606 = vpop.trf.xlu0
      %v5607 = vpop.trf.xlu0
      %v5608 = vpop.trf.xlu0
      %v5609 = vpop.trf.xlu0
      %v5610 = vpop.trf.xlu0
      %v5611 = vpop.trf.xlu0
      %v5612 = vpack.c.bf16 %v5596, %v5564
      %v5613 = vpack.c.bf16 %v5597, %v5565
      %5614 = vst [vmem:[%s379] sm:$0xff] %v5612
      %5615 = vst [vmem:[%s379 + $0x8] sm:$0xff] %v5613
      %p5616 = scmp.lt.s32.totalorder %s21, 1
      %s5617 = scalar_select %p5616, %s21, 1
      %s5618 = smul.addr %s5617, 4
      %s5619 = smul.addr %s5618, 4
      %s5620 = scalar_lea.vmem %s10, %s5619
      // Predicated region
      $region61: #{_upsample_impl.1} parent=59 // pred_check
        %p5621 = pneg %p259
      $region62: #{_upsample_impl.1} parent=59 // pred_check_branch
        %5623 = sbr.rel (%p5621) target = $region64
      $region63: #{_upsample_impl.1} parent=59 // pred_region
        _
      $region64: #{_upsample_impl.1} parent=59 // pred_fallthru
        _
    $region60: #{_upsample_impl.1} parent=5 // pred_fallthru
      _
    %p5624 = scmp.le.s32.totalorder 2, %s16
    // Predicated region
    $region65: #{_upsample_impl.1} parent=5 // pred_check
      %p5625 = pneg %p5624
    $region66: #{_upsample_impl.1} parent=5 // pred_check_branch
      %5627 = sbr.rel (%p5625) target = $region68
    $region67: #{_upsample_impl.1} parent=5 // pred_region
      %s5628 = ssub.s32 %s16, 2
      // Predicated region
      $region69: #{_upsample_impl.1} parent=67 // pred_check
        %p5629 = pneg %p265
      $region70: #{_upsample_impl.1} parent=67 // pred_check_branch
        %5631 = sbr.rel (%p5629) target = $region72
      $region71: #{_upsample_impl.1} parent=67 // pred_region
        %p5632 = scmp.lt.s32.totalorder %s22, 1
        %s5633 = scalar_select %p5632, %s22, 1
        %s5634 = smul.addr %s5633, 4
        %s5635 = smul.addr %s5634, 4
        %s5636 = scalar_lea.vmem %s10, %s5635
      $region72: #{_upsample_impl.1} parent=67 // pred_fallthru
        _
    $region68: #{_upsample_impl.1} parent=5 // pred_fallthru
      _
  $region6: #{_upsample_impl.1} parent=0 // loop_footer
    %s20 = sadd.s32 1, %s16
  $region7: #{_upsample_impl.1} parent=0 // loop_footer_branch
    %15 = sbr.rel target = $region3
  $region8: #{_upsample_impl.1} parent=0 // loop_exit
    _

// kernel: _upsample_impl.1
$region0: #{_upsample_impl.1}
  #allocation0 [shape = 'u32[]', space=smem, size = 0x4, offset = 0x4, fixed_abs, tag = 'smem constant byte address 0x4 - core index']
  #allocation1 [shape = 'u32[72,128]{1,0:T(1,128)}', space=vmem, size = 0x9000, scoped, tag = 'internal scratch']
  %s0 = inlined_call_operand.vmem [shape: bf16[2,8,8,32], index: 0, kind: input, shape index: {}]
  %s1 = inlined_call_operand.vmem [shape: bf16[2,16,16,16], index: 1, kind: input, shape index: {}]
  %s2 = inlined_call_operand.vmem [shape: bf16[32,64], index: 2, kind: input, shape index: {}]
  %s3 = inlined_call_operand.vmem [shape: f32[1,64], index: 3, kind: input, shape index: {}]
  %s4 = inlined_call_operand.vmem [shape: bf16[9,32,16], index: 4, kind: input, shape index: {}]
  %s5 = inlined_call_operand.vmem [shape: f32[1,16], index: 5, kind: input, shape index: {}]
  %s6 = inlined_call_operand.vmem [shape: f32[1,16], index: 6, kind: input, shape index: {}]
  %s7 = inlined_call_operand.vmem [shape: bf16[9,16,16], index: 7, kind: input, shape index: {}]
  %s8 = inlined_call_operand.vmem [shape: f32[1,16], index: 8, kind: input, shape index: {}]
  %s9 = inlined_call_operand.vmem [shape: f32[1,16], index: 9, kind: input, shape index: {}]
  %s10 = inlined_call_operand.vmem [shape: bf16[2,16,256], index: 10, kind: output, shape index: {}]
  %s11 = sld [smem:[#allocation0]]
  $region73: #{_upsample_impl.1} parent=0
    _
  %s13 = ssub.s32 1, %s11
  %s14 = scalar_select 0, %s13, %s11
  loop: start=0, step=1, limit=4
  $region2: #{_upsample_impl.1} parent=0 // loop_pre_header
    _
  $region3: #{_upsample_impl.1} parent=0 // loop_header
    %s16 = sphi 0, %s20
    %p17 = scmp.ge.s32.totalorder %s16, 4
    %s26 = sphi 0, %s28
    %s29 = sphi 0, %s26
    %s30 = sphi 0, %s29
    %s46 = sphi 0, %s30
    %s52 = sphi 0, %s54
    %s55 = sphi 0, %s52
    %s56 = sphi 0, %s55
    %s72 = sphi 0, %s56
    %s76 = sphi 0, %s76
    %s78 = sphi 0, %s76
    %s79 = sphi 0, %s78
    %s93 = sphi 0, %s79
    %s97 = sphi 0, %s97
    %s99 = sphi 0, %s97
    %s100 = sphi 0, %s99
    %s114 = sphi 0, %s100
    %s118 = sphi 0, %s118
    %s120 = sphi 0, %s118
    %s121 = sphi 0, %s120
    %s135 = sphi 0, %s121
    %s139 = sphi 0, %s139
    %s141 = sphi 0, %s139
    %s142 = sphi 0, %s141
    %s156 = sphi 0, %s142
    %s160 = sphi 0, %s160
    %s162 = sphi 0, %s160
    %s163 = sphi 0, %s162
    %s177 = sphi 0, %s163
    %s181 = sphi 0, %s181
    %s183 = sphi 0, %s181
    %s184 = sphi 0, %s183
    %s198 = sphi 0, %s184
    %s202 = sphi 0, %s202
    %s204 = sphi 0, %s202
    %s205 = sphi 0, %s204
    %s219 = sphi 0, %s205
    %s223 = sphi 0, %s223
    %s225 = sphi 0, %s223
    %s226 = sphi 0, %s225
    %s240 = sphi 0, %s226
    %s246 = sphi 0, %s248
    %s249 = sphi 0, %s246
    %s250 = sphi 0, %s249
    %s266 = sphi 0, %s250
  $region4: #{_upsample_impl.1} parent=0 // loop_header_branch
    %19 = sbr.rel (%p17) target = $region8
  $region5: #{_upsample_impl.1} parent=0 // loop_body
    %s21 = ssub.s32 %s16, 1
    %s22 = ssub.s32 %s16, 2
    %s23 = sadd.s32 %s16, 1
    %s24 = ssub.s32 %s16, %s23
    %p25 = scmp.eq.s32.totalorder %s24, 0
    %s27 = sadd.s32 %s26, 1
    %s28 = scalar_select %p25, %s26, %s27
    %p31 = pneg %p25
    %p32 = scmp.eq.s32.totalorder %s16, 1
    %p33 = por %p31, %p32
    %p34 = scmp.ne.s32.totalorder %s26, %s29
    %p35 = scmp.eq.s32.totalorder %s16, 0
    %p36 = por %p34, %p35
    %p37 = scmp.ne.s32.totalorder %s26, %s29
    %p38 = scmp.eq.s32.totalorder %s21, 1
    %p39 = por %p37, %p38
    %p40 = scmp.ne.s32.totalorder %s29, %s30
    %p41 = scmp.eq.s32.totalorder %s21, 0
    %p42 = por %p40, %p41
    %p43 = scmp.ne.s32.totalorder %s29, %s30
    %p44 = scmp.eq.s32.totalorder %s22, 1
    %p45 = por %p43, %p44
    %p47 = scmp.ne.s32.totalorder %s30, %s46
    %p48 = scmp.eq.s32.totalorder %s22, 0
    %p49 = por %p47, %p48
    %s50 = ssub.s32 %s16, %s23
    %p51 = scmp.eq.s32.totalorder %s50, 0
    %s53 = sadd.s32 %s52, 1
    %s54 = scalar_select %p51, %s52, %s53
    %p57 = pneg %p51
    %p58 = scmp.eq.s32.totalorder %s16, 1
    %p59 = por %p57, %p58
    %p60 = scmp.ne.s32.totalorder %s52, %s55
    %p61 = scmp.eq.s32.totalorder %s16, 0
    %p62 = por %p60, %p61
    %p63 = scmp.ne.s32.totalorder %s52, %s55
    %p64 = scmp.eq.s32.totalorder %s21, 1
    %p65 = por %p63, %p64
    %p66 = scmp.ne.s32.totalorder %s55, %s56
    %p67 = scmp.eq.s32.totalorder %s21, 0
    %p68 = por %p66, %p67
    %p69 = scmp.ne.s32.totalorder %s55, %s56
    %p70 = scmp.eq.s32.totalorder %s22, 1
    %p71 = por %p69, %p70
    %p73 = scmp.ne.s32.totalorder %s56, %s72
    %p74 = scmp.eq.s32.totalorder %s22, 0
    %p75 = por %p73, %p74
    %s77 = sadd.s32 %s76, 1
    %p80 = scmp.eq.s32.totalorder %s16, 1
    %p81 = scmp.ne.s32.totalorder %s76, %s78
    %p82 = scmp.eq.s32.totalorder %s16, 0
    %p83 = por %p81, %p82
    %p84 = scmp.ne.s32.totalorder %s76, %s78
    %p85 = scmp.eq.s32.totalorder %s21, 1
    %p86 = por %p84, %p85
    %p87 = scmp.ne.s32.totalorder %s78, %s79
    %p88 = scmp.eq.s32.totalorder %s21, 0
    %p89 = por %p87, %p88
    %p90 = scmp.ne.s32.totalorder %s78, %s79
    %p91 = scmp.eq.s32.totalorder %s22, 1
    %p92 = por %p90, %p91
    %p94 = scmp.ne.s32.totalorder %s79, %s93
    %p95 = scmp.eq.s32.totalorder %s22, 0
    %p96 = por %p94, %p95
    %s98 = sadd.s32 %s97, 1
    %p101 = scmp.eq.s32.totalorder %s16, 1
    %p102 = scmp.ne.s32.totalorder %s97, %s99
    %p103 = scmp.eq.s32.totalorder %s16, 0
    %p104 = por %p102, %p103
    %p105 = scmp.ne.s32.totalorder %s97, %s99
    %p106 = scmp.eq.s32.totalorder %s21, 1
    %p107 = por %p105, %p106
    %p108 = scmp.ne.s32.totalorder %s99, %s100
    %p109 = scmp.eq.s32.totalorder %s21, 0
    %p110 = por %p108, %p109
    %p111 = scmp.ne.s32.totalorder %s99, %s100
    %p112 = scmp.eq.s32.totalorder %s22, 1
    %p113 = por %p111, %p112
    %p115 = scmp.ne.s32.totalorder %s100, %s114
    %p116 = scmp.eq.s32.totalorder %s22, 0
    %p117 = por %p115, %p116
    %s119 = sadd.s32 %s118, 1
    %p122 = scmp.eq.s32.totalorder %s16, 1
    %p123 = scmp.ne.s32.totalorder %s118, %s120
    %p124 = scmp.eq.s32.totalorder %s16, 0
    %p125 = por %p123, %p124
    %p126 = scmp.ne.s32.totalorder %s118, %s120
    %p127 = scmp.eq.s32.totalorder %s21, 1
    %p128 = por %p126, %p127
    %p129 = scmp.ne.s32.totalorder %s120, %s121
    %p130 = scmp.eq.s32.totalorder %s21, 0
    %p131 = por %p129, %p130
    %p132 = scmp.ne.s32.totalorder %s120, %s121
    %p133 = scmp.eq.s32.totalorder %s22, 1
    %p134 = por %p132, %p133
    %p136 = scmp.ne.s32.totalorder %s121, %s135
    %p137 = scmp.eq.s32.totalorder %s22, 0
    %p138 = por %p136, %p137
    %s140 = sadd.s32 %s139, 1
    %p143 = scmp.eq.s32.totalorder %s16, 1
    %p144 = scmp.ne.s32.totalorder %s139, %s141
    %p145 = scmp.eq.s32.totalorder %s16, 0
    %p146 = por %p144, %p145
    %p147 = scmp.ne.s32.totalorder %s139, %s141
    %p148 = scmp.eq.s32.totalorder %s21, 1
    %p149 = por %p147, %p148
    %p150 = scmp.ne.s32.totalorder %s141, %s142
    %p151 = scmp.eq.s32.totalorder %s21, 0
    %p152 = por %p150, %p151
    %p153 = scmp.ne.s32.totalorder %s141, %s142
    %p154 = scmp.eq.s32.totalorder %s22, 1
    %p155 = por %p153, %p154
    %p157 = scmp.ne.s32.totalorder %s142, %s156
    %p158 = scmp.eq.s32.totalorder %s22, 0
    %p159 = por %p157, %p158
    %s161 = sadd.s32 %s160, 1
    %p164 = scmp.eq.s32.totalorder %s16, 1
    %p165 = scmp.ne.s32.totalorder %s160, %s162
    %p166 = scmp.eq.s32.totalorder %s16, 0
    %p167 = por %p165, %p166
    %p168 = scmp.ne.s32.totalorder %s160, %s162
    %p169 = scmp.eq.s32.totalorder %s21, 1
    %p170 = por %p168, %p169
    %p171 = scmp.ne.s32.totalorder %s162, %s163
    %p172 = scmp.eq.s32.totalorder %s21, 0
    %p173 = por %p171, %p172
    %p174 = scmp.ne.s32.totalorder %s162, %s163
    %p175 = scmp.eq.s32.totalorder %s22, 1
    %p176 = por %p174, %p175
    %p178 = scmp.ne.s32.totalorder %s163, %s177
    %p179 = scmp.eq.s32.totalorder %s22, 0
    %p180 = por %p178, %p179
    %s182 = sadd.s32 %s181, 1
    %p185 = scmp.eq.s32.totalorder %s16, 1
    %p186 = scmp.ne.s32.totalorder %s181, %s183
    %p187 = scmp.eq.s32.totalorder %s16, 0
    %p188 = por %p186, %p187
    %p189 = scmp.ne.s32.totalorder %s181, %s183
    %p190 = scmp.eq.s32.totalorder %s21, 1
    %p191 = por %p189, %p190
    %p192 = scmp.ne.s32.totalorder %s183, %s184
    %p193 = scmp.eq.s32.totalorder %s21, 0
    %p194 = por %p192, %p193
    %p195 = scmp.ne.s32.totalorder %s183, %s184
    %p196 = scmp.eq.s32.totalorder %s22, 1
    %p197 = por %p195, %p196
    %p199 = scmp.ne.s32.totalorder %s184, %s198
    %p200 = scmp.eq.s32.totalorder %s22, 0
    %p201 = por %p199, %p200
    %s203 = sadd.s32 %s202, 1
    %p206 = scmp.eq.s32.totalorder %s16, 1
    %p207 = scmp.ne.s32.totalorder %s202, %s204
    %p208 = scmp.eq.s32.totalorder %s16, 0
    %p209 = por %p207, %p208
    %p210 = scmp.ne.s32.totalorder %s202, %s204
    %p211 = scmp.eq.s32.totalorder %s21, 1
    %p212 = por %p210, %p211
    %p213 = scmp.ne.s32.totalorder %s204, %s205
    %p214 = scmp.eq.s32.totalorder %s21, 0
    %p215 = por %p213, %p214
    %p216 = scmp.ne.s32.totalorder %s204, %s205
    %p217 = scmp.eq.s32.totalorder %s22, 1
    %p218 = por %p216, %p217
    %p220 = scmp.ne.s32.totalorder %s205, %s219
    %p221 = scmp.eq.s32.totalorder %s22, 0
    %p222 = por %p220, %p221
    %s224 = sadd.s32 %s223, 1
    %p227 = scmp.eq.s32.totalorder %s16, 1
    %p228 = scmp.ne.s32.totalorder %s223, %s225
    %p229 = scmp.eq.s32.totalorder %s16, 0
    %p230 = por %p228, %p229
    %p231 = scmp.ne.s32.totalorder %s223, %s225
    %p232 = scmp.eq.s32.totalorder %s21, 1
    %p233 = por %p231, %p232
    %p234 = scmp.ne.s32.totalorder %s225, %s226
    %p235 = scmp.eq.s32.totalorder %s21, 0
    %p236 = por %p234, %p235
    %p237 = scmp.ne.s32.totalorder %s225, %s226
    %p238 = scmp.eq.s32.totalorder %s22, 1
    %p239 = por %p237, %p238
    %p241 = scmp.ne.s32.totalorder %s226, %s240
    %p242 = scmp.eq.s32.totalorder %s22, 0
    %p243 = por %p241, %p242
    %s244 = ssub.s32 %s16, %s23
    %p245 = scmp.eq.s32.totalorder %s244, 0
    %s247 = sadd.s32 %s246, 1
    %s248 = scalar_select %p245, %s246, %s247
    %p251 = pneg %p245
    %p252 = scmp.eq.s32.totalorder %s16, 1
    %p253 = por %p251, %p252
    %p254 = scmp.ne.s32.totalorder %s246, %s249
    %p255 = scmp.eq.s32.totalorder %s16, 0
    %p256 = por %p254, %p255
    %p257 = scmp.ne.s32.totalorder %s246, %s249
    %p258 = scmp.eq.s32.totalorder %s21, 1
    %p259 = por %p257, %p258
    %p260 = scmp.ne.s32.totalorder %s249, %s250
    %p261 = scmp.eq.s32.totalorder %s21, 0
    %p262 = por %p260, %p261
    %p263 = scmp.ne.s32.totalorder %s249, %s250
    %p264 = scmp.eq.s32.totalorder %s22, 1
    %p265 = por %p263, %p264
    %p267 = scmp.ne.s32.totalorder %s250, %s266
    %p268 = scmp.eq.s32.totalorder %s22, 0
    %p269 = por %p267, %p268
    %p270 = scmp.le.s32.totalorder 1, %s16
    %p271 = scmp.lt.s32.totalorder %s16, 3
    %p272 = pnand %p270, %p271
    %p273 = pneg %p272
    // Predicated region
    $region9: #{_upsample_impl.1} parent=5 // pred_check
      _
    $region10: #{_upsample_impl.1} parent=5 // pred_check_branch
      %275 = sbr.rel (%p272) target = $region12
    $region11: #{_upsample_impl.1} parent=5 // pred_region
      %s276 = ssub.s32 %s16, 1
      // Predicated region
      $region13: #{_upsample_impl.1} parent=11 // pred_check
        %p277 = pneg %p89
      $region14: #{_upsample_impl.1} parent=11 // pred_check_branch
        %279 = sbr.rel (%p277) target = $region16
      $region15: #{_upsample_impl.1} parent=11 // pred_region
        _
      $region16: #{_upsample_impl.1} parent=11 // pred_fallthru
        _
      // Predicated region
      $region17: #{_upsample_impl.1} parent=11 // pred_check
        %p280 = pneg %p110
      $region18: #{_upsample_impl.1} parent=11 // pred_check_branch
        %282 = sbr.rel (%p280) target = $region20
      $region19: #{_upsample_impl.1} parent=11 // pred_region
        _
      $region20: #{_upsample_impl.1} parent=11 // pred_fallthru
        _
      // Predicated region
      $region21: #{_upsample_impl.1} parent=11 // pred_check
        %p283 = pneg %p131
      $region22: #{_upsample_impl.1} parent=11 // pred_check_branch
        %285 = sbr.rel (%p283) target = $region24
      $region23: #{_upsample_impl.1} parent=11 // pred_region
        _
      $region24: #{_upsample_impl.1} parent=11 // pred_fallthru
        _
      // Predicated region
      $region25: #{_upsample_impl.1} parent=11 // pred_check
        %p286 = pneg %p152
      $region26: #{_upsample_impl.1} parent=11 // pred_check_branch
        %288 = sbr.rel (%p286) target = $region28
      $region27: #{_upsample_impl.1} parent=11 // pred_region
        _
      $region28: #{_upsample_impl.1} parent=11 // pred_fallthru
        _
      // Predicated region
      $region29: #{_upsample_impl.1} parent=11 // pred_check
        %p289 = pneg %p173
      $region30: #{_upsample_impl.1} parent=11 // pred_check_branch
        %291 = sbr.rel (%p289) target = $region32
      $region31: #{_upsample_impl.1} parent=11 // pred_region
        _
      $region32: #{_upsample_impl.1} parent=11 // pred_fallthru
        _
      // Predicated region
      $region33: #{_upsample_impl.1} parent=11 // pred_check
        %p292 = pneg %p194
      $region34: #{_upsample_impl.1} parent=11 // pred_check_branch
        %294 = sbr.rel (%p292) target = $region36
      $region35: #{_upsample_impl.1} parent=11 // pred_region
        _
      $region36: #{_upsample_impl.1} parent=11 // pred_fallthru
        _
      // Predicated region
      $region37: #{_upsample_impl.1} parent=11 // pred_check
        %p295 = pneg %p215
      $region38: #{_upsample_impl.1} parent=11 // pred_check_branch
        %297 = sbr.rel (%p295) target = $region40
      $region39: #{_upsample_impl.1} parent=11 // pred_region
        _
      $region40: #{_upsample_impl.1} parent=11 // pred_fallthru
        _
      // Predicated region
      $region41: #{_upsample_impl.1} parent=11 // pred_check
        %p298 = pneg %p236
      $region42: #{_upsample_impl.1} parent=11 // pred_check_branch
        %300 = sbr.rel (%p298) target = $region44
      $region43: #{_upsample_impl.1} parent=11 // pred_region
        _
      $region44: #{_upsample_impl.1} parent=11 // pred_fallthru
        _
    $region12: #{_upsample_impl.1} parent=5 // pred_fallthru
      _
    %p301 = scmp.lt.s32.totalorder %s16, 2
    // Predicated region
    $region45: #{_upsample_impl.1} parent=5 // pred_check
      %p302 = pneg %p301
    $region46: #{_upsample_impl.1} parent=5 // pred_check_branch
      %304 = sbr.rel (%p302) target = $region48
    $region47: #{_upsample_impl.1} parent=5 // pred_region
      // Predicated region
      $region49: #{_upsample_impl.1} parent=47 // pred_check
        %p305 = pneg %p36
      $region50: #{_upsample_impl.1} parent=47 // pred_check_branch
        %307 = sbr.rel (%p305) target = $region52
      $region51: #{_upsample_impl.1} parent=47 // pred_region
        %p308 = scmp.lt.s32.totalorder %s16, 1
        %s309 = scalar_select %p308, %s16, 1
        %s310 = smul.addr %s309, 8
        %s311 = smul.addr %s310, 4
        %s312 = scalar_lea.vmem %s0, %s311
      $region52: #{_upsample_impl.1} parent=47 // pred_fallthru
        _
      // Predicated region
      $region53: #{_upsample_impl.1} parent=47 // pred_check
        %p313 = pneg %p62
      $region54: #{_upsample_impl.1} parent=47 // pred_check_branch
        %315 = sbr.rel (%p313) target = $region56
      $region55: #{_upsample_impl.1} parent=47 // pred_region
        %p316 = scmp.lt.s32.totalorder %s16, 1
        %s317 = scalar_select %p316, %s16, 1
        %s318 = smul.addr %s317, 32
        %s319 = smul.addr %s318, 4
        %s320 = scalar_lea.vmem %s1, %s319
      $region56: #{_upsample_impl.1} parent=47 // pred_fallthru
        _
    $region48: #{_upsample_impl.1} parent=5 // pred_fallthru
      _
    %p321 = scmp.le.s32.totalorder 1, %s16
    %p322 = scmp.lt.s32.totalorder %s16, 3
    %p323 = pnand %p321, %p322
    %p324 = pneg %p323
    // Predicated region
    $region57: #{_upsample_impl.1} parent=5 // pred_check
      _
    $region58: #{_upsample_impl.1} parent=5 // pred_check_branch
      %326 = sbr.rel (%p323) target = $region60
    $region59: #{_upsample_impl.1} parent=5 // pred_region
      %s327 = ssub.s32 %s16, 1
      %p328 = scmp.lt.s32.totalorder %s21, 1
      %s329 = scalar_select %p328, %s21, 1
      %s330 = smul.addr %s329, 8
      %s331 = smul.addr %s330, 4
      %s332 = scalar_lea.vmem %s0, %s331
      %p333 = pneg %p42
      %p334 = pneg %p39
      %p335 = scmp.lt.s32.totalorder %s21, 1
      %s336 = scalar_select %p335, %s21, 1
      %s337 = smul.addr %s336, 32
      %s338 = smul.addr %s337, 4
      %s339 = scalar_lea.vmem %s1, %s338
      %p340 = pneg %p68
      %p341 = pneg %p65
      %p342 = pneg %p89
      %p343 = pneg %p86
      %p344 = pneg %p110
      %p345 = pneg %p107
      %p346 = pneg %p131
      %p347 = pneg %p128
      %p348 = pneg %p152
      %p349 = pneg %p149
      %p350 = pneg %p173
      %p351 = pneg %p170
      %p352 = pneg %p194
      %p353 = pneg %p191
      %p354 = pneg %p215
      %p355 = pneg %p212
      %p356 = pneg %p236
      %p357 = pneg %p233
      %p358 = pneg %p262
      %p359 = pneg %p259
      %p360 = scmp.lt.s32.totalorder %s21, 1
      %s361 = scalar_select %p360, %s21, 1
      %s362 = smul.addr %s361, 4
      %s363 = smul.addr %s362, 4
      %s364 = scalar_lea.vmem %s10, %s363
      %p365 = scmp.lt.s32.totalorder %s21, 1
      %s366 = scalar_select %p365, %s21, 1
      %s367 = smul.addr %s366, 8
      %s368 = smul.addr %s367, 4
      %s369 = scalar_lea.vmem %s0, %s368
      %p370 = scmp.lt.s32.totalorder %s21, 1
      %s371 = scalar_select %p370, %s21, 1
      %s372 = smul.addr %s371, 32
      %s373 = smul.addr %s372, 4
      %s374 = scalar_lea.vmem %s1, %s373
      %p375 = scmp.lt.s32.totalorder %s21, 1
      %s376 = scalar_select %p375, %s21, 1
      %s377 = smul.addr %s376, 4
      %s378 = smul.addr %s377, 4
      %s379 = scalar_lea.vmem %s10, %s378
      %v381 = vld [vmem:[%s369] sm:$0xf]
      %v382 = vld [vmem:[%s369 + $0x4] sm:$0xf]
      %v383 = vld [vmem:[%s369 + $0x8] sm:$0xf]
      %v384 = vld [vmem:[%s369 + $0xc] sm:$0xf]
      %v385 = vld [vmem:[%s369 + $0x10] sm:$0xf]
      %v386 = vld [vmem:[%s369 + $0x14] sm:$0xf]
      %v387 = vld [vmem:[%s369 + $0x18] sm:$0xf]
      %v388 = vld [vmem:[%s369 + $0x1c] sm:$0xf]
      %v389 = vld [vmem:[%s2] sm:$0xf]
      %v390 = vld [vmem:[%s2 + $0x4] sm:$0xf]
      %v391 = vld [vmem:[%s2 + $0x8] sm:$0xf]
      %v392 = vld [vmem:[%s2 + $0xc] sm:$0xf]
      %v393 = vld [vmem:[%s3] sm:$0x1]
      %v395 = vperm.slane %v393, 0
      %v405 = vunpack.c.l.b16 %v381
      %v406 = vunpack.c.l.b16 %v382
      %v407 = vunpack.c.l.b16 %v383
      %v408 = vunpack.c.l.b16 %v384
      %v409 = vunpack.c.l.b16 %v385
      %v410 = vunpack.c.l.b16 %v386
      %v411 = vunpack.c.l.b16 %v387
      %v412 = vunpack.c.l.b16 %v388
      %v413 = vpack.c.b16 %v406, %v405
      %v414 = vpack.c.b16 %v408, %v407
      %v415 = vpack.c.b16 %v410, %v409
      %v416 = vpack.c.b16 %v412, %v411
      %v421 = vunpack.c.l.b16 %v389
      %v422 = vunpack.c.l.b16 %v390
      %v423 = vunpack.c.l.b16 %v391
      %v424 = vunpack.c.l.b16 %v392
      %v425 = vpack.c.b16 %v422, %v421
      %v426 = vpack.c.b16 %v424, %v423
      %vm429 = vcmask 261120
      %v431 = vsel %vm429, %v413, 0
      %v434 = vsel %vm429, %v414, 0
      %v437 = vsel %vm429, %v415, 0
      %v440 = vsel %vm429, %v416, 0
      %442 = vmatpush.bf16.msra.mxu0 0
      %443 = vmatpush.bf16.msra.mxu0 0
      %444 = vmatpush.bf16.msra.mxu0 0
      %445 = vmatpush.bf16.msra.mxu0 0
      %446 = vmatpush.bf16.msra.mxu0 0
      %447 = vmatpush.bf16.msra.mxu0 0
      %448 = vmatpush.bf16.msra.mxu0 %v426
      %449 = vmatpush.bf16.msra.mxu0 %v425
      %450 = vmatmul.bf16.gmra.mxu0 %v431
      %v451 = vpop.f32.mrf.mxu0
      %v452 = vadd.f32 %v395, %v451
      %v453 = vpop.f32.mrf.mxu0
      %v454 = vadd.f32 %v395, %v453
      %455 = vmatmul.bf16.gmra.mxu0 %v434
      %v456 = vpop.f32.mrf.mxu0
      %v457 = vadd.f32 %v395, %v456
      %v458 = vpop.f32.mrf.mxu0
      %v459 = vadd.f32 %v395, %v458
      %460 = vmatmul.bf16.gmra.mxu0 %v437
      %v461 = vpop.f32.mrf.mxu0
      %v462 = vadd.f32 %v395, %v461
      %v463 = vpop.f32.mrf.mxu0
      %v464 = vadd.f32 %v395, %v463
      %465 = vmatmul.bf16.gmra.mxu0 %v440
      %v466 = vpop.f32.mrf.mxu0
      %v467 = vadd.f32 %v395, %v466
      %v468 = vpop.f32.mrf.mxu0
      %v469 = vadd.f32 %v395, %v468
      %470 = vdwg.mxu0
      %v471 = vpack.c.bf16 %v452, %v452
      %v472 = vpack.c.bf16 %v454, %v454
      %v473 = vpack.c.bf16 %v457, %v457
      %v474 = vpack.c.bf16 %v459, %v459
      %v475 = vpack.c.bf16 %v462, %v462
      %v476 = vpack.c.bf16 %v464, %v464
      %v477 = vpack.c.bf16 %v467, %v467
      %v478 = vpack.c.bf16 %v469, %v469
      %v487 = vrot.slane %v471, 3
      %v488 = vrot.slane %v472, 3
      %v489 = vrot.slane %v473, 3
      %v490 = vrot.slane %v474, 3
      %v491 = vrot.slane %v475, 3
      %v492 = vrot.slane %v476, 3
      %v493 = vrot.slane %v477, 3
      %v494 = vrot.slane %v478, 3
      %vm495 = vcmask 1040384
      %v498 = vsel %vm495, %v471, %v487
      %vm500 = vcmask 1041409
      %v501 = vsel %vm500, %v471, %v487
      %v503 = vrot.slane %v501, 1
      %vm504 = vcmask 1042434
      %v505 = vsel %vm504, %v471, %v487
      %v507 = vrot.slane %v505, 2
      %vm508 = vcmask 1043459
      %v509 = vsel %vm508, %v471, %v487
      %v511 = vrot.slane %v509, 3
      %v514 = vsel %vm495, %v472, %v488
      %v516 = vsel %vm500, %v472, %v488
      %v518 = vrot.slane %v516, 1
      %v519 = vsel %vm504, %v472, %v488
      %v521 = vrot.slane %v519, 2
      %v522 = vsel %vm508, %v472, %v488
      %v524 = vrot.slane %v522, 3
      %v527 = vsel %vm495, %v473, %v489
      %v529 = vsel %vm500, %v473, %v489
      %v531 = vrot.slane %v529, 1
      %v532 = vsel %vm504, %v473, %v489
      %v534 = vrot.slane %v532, 2
      %v535 = vsel %vm508, %v473, %v489
      %v537 = vrot.slane %v535, 3
      %v540 = vsel %vm495, %v474, %v490
      %v542 = vsel %vm500, %v474, %v490
      %v544 = vrot.slane %v542, 1
      %v545 = vsel %vm504, %v474, %v490
      %v547 = vrot.slane %v545, 2
      %v548 = vsel %vm508, %v474, %v490
      %v550 = vrot.slane %v548, 3
      %v553 = vsel %vm495, %v475, %v491
      %v555 = vsel %vm500, %v475, %v491
      %v557 = vrot.slane %v555, 1
      %v558 = vsel %vm504, %v475, %v491
      %v560 = vrot.slane %v558, 2
      %v561 = vsel %vm508, %v475, %v491
      %v563 = vrot.slane %v561, 3
      %v566 = vsel %vm495, %v476, %v492
      %v568 = vsel %vm500, %v476, %v492
      %v570 = vrot.slane %v568, 1
      %v571 = vsel %vm504, %v476, %v492
      %v573 = vrot.slane %v571, 2
      %v574 = vsel %vm508, %v476, %v492
      %v576 = vrot.slane %v574, 3
      %v579 = vsel %vm495, %v477, %v493
      %v581 = vsel %vm500, %v477, %v493
      %v583 = vrot.slane %v581, 1
      %v584 = vsel %vm504, %v477, %v493
      %v586 = vrot.slane %v584, 2
      %v587 = vsel %vm508, %v477, %v493
      %v589 = vrot.slane %v587, 3
      %v592 = vsel %vm495, %v478, %v494
      %v594 = vsel %vm500, %v478, %v494
      %v596 = vrot.slane %v594, 1
      %v597 = vsel %vm504, %v478, %v494
      %v599 = vrot.slane %v597, 2
      %v600 = vsel %vm508, %v478, %v494
      %v602 = vrot.slane %v600, 3
      %v603 = vunpack.i.l.s16 %v498
      %v604 = vunpack.i.h.s16 %v498
      %v605 = vunpack.i.l.s16 %v503
      %v606 = vunpack.i.h.s16 %v503
      %v607 = vunpack.i.l.s16 %v507
      %v608 = vunpack.i.h.s16 %v507
      %v609 = vunpack.i.l.s16 %v511
      %v610 = vunpack.i.h.s16 %v511
      %v611 = vunpack.i.l.s16 %v514
      %v612 = vunpack.i.h.s16 %v514
      %v613 = vunpack.i.l.s16 %v518
      %v614 = vunpack.i.h.s16 %v518
      %v615 = vunpack.i.l.s16 %v521
      %v616 = vunpack.i.h.s16 %v521
      %v617 = vunpack.i.l.s16 %v524
      %v618 = vunpack.i.h.s16 %v524
      %v619 = vunpack.i.l.s16 %v527
      %v620 = vunpack.i.h.s16 %v527
      %v621 = vunpack.i.l.s16 %v531
      %v622 = vunpack.i.h.s16 %v531
      %v623 = vunpack.i.l.s16 %v534
      %v624 = vunpack.i.h.s16 %v534
      %v625 = vunpack.i.l.s16 %v537
      %v626 = vunpack.i.h.s16 %v537
      %v627 = vunpack.i.l.s16 %v540
      %v628 = vunpack.i.h.s16 %v540
      %v629 = vunpack.i.l.s16 %v544
      %v630 = vunpack.i.h.s16 %v544
      %v631 = vunpack.i.l.s16 %v547
      %v632 = vunpack.i.h.s16 %v547
      %v633 = vunpack.i.l.s16 %v550
      %v634 = vunpack.i.h.s16 %v550
      %v635 = vunpack.i.l.s16 %v553
      %v636 = vunpack.i.h.s16 %v553
      %v637 = vunpack.i.l.s16 %v557
      %v638 = vunpack.i.h.s16 %v557
      %v639 = vunpack.i.l.s16 %v560
      %v640 = vunpack.i.h.s16 %v560
      %v641 = vunpack.i.l.s16 %v563
      %v642 = vunpack.i.h.s16 %v563
      %v643 = vunpack.i.l.s16 %v566
      %v644 = vunpack.i.h.s16 %v566
      %v645 = vunpack.i.l.s16 %v570
      %v646 = vunpack.i.h.s16 %v570
      %v647 = vunpack.i.l.s16 %v573
      %v648 = vunpack.i.h.s16 %v573
      %v649 = vunpack.i.l.s16 %v576
      %v650 = vunpack.i.h.s16 %v576
      %v651 = vunpack.i.l.s16 %v579
      %v652 = vunpack.i.h.s16 %v579
      %v653 = vunpack.i.l.s16 %v583
      %v654 = vunpack.i.h.s16 %v583
      %v655 = vunpack.i.l.s16 %v586
      %v656 = vunpack.i.h.s16 %v586
      %v657 = vunpack.i.l.s16 %v589
      %v658 = vunpack.i.h.s16 %v589
      %v659 = vunpack.i.l.s16 %v592
      %v660 = vunpack.i.h.s16 %v592
      %v661 = vunpack.i.l.s16 %v596
      %v662 = vunpack.i.h.s16 %v596
      %v663 = vunpack.i.l.s16 %v599
      %v664 = vunpack.i.h.s16 %v599
      %v665 = vunpack.i.l.s16 %v602
      %v666 = vunpack.i.h.s16 %v602
      %v667 = vpack.i.b16 %v603, %v603
      %v668 = vpack.i.b16 %v604, %v604
      %v669 = vpack.i.b16 %v605, %v605
      %v670 = vpack.i.b16 %v606, %v606
      %v671 = vpack.i.b16 %v607, %v607
      %v672 = vpack.i.b16 %v608, %v608
      %v673 = vpack.i.b16 %v609, %v609
      %v674 = vpack.i.b16 %v610, %v610
      %v675 = vpack.i.b16 %v611, %v611
      %v676 = vpack.i.b16 %v612, %v612
      %v677 = vpack.i.b16 %v613, %v613
      %v678 = vpack.i.b16 %v614, %v614
      %v679 = vpack.i.b16 %v615, %v615
      %v680 = vpack.i.b16 %v616, %v616
      %v681 = vpack.i.b16 %v617, %v617
      %v682 = vpack.i.b16 %v618, %v618
      %v683 = vpack.i.b16 %v619, %v619
      %v684 = vpack.i.b16 %v620, %v620
      %v685 = vpack.i.b16 %v621, %v621
      %v686 = vpack.i.b16 %v622, %v622
      %v687 = vpack.i.b16 %v623, %v623
      %v688 = vpack.i.b16 %v624, %v624
      %v689 = vpack.i.b16 %v625, %v625
      %v690 = vpack.i.b16 %v626, %v626
      %v691 = vpack.i.b16 %v627, %v627
      %v692 = vpack.i.b16 %v628, %v628
      %v693 = vpack.i.b16 %v629, %v629
      %v694 = vpack.i.b16 %v630, %v630
      %v695 = vpack.i.b16 %v631, %v631
      %v696 = vpack.i.b16 %v632, %v632
      %v697 = vpack.i.b16 %v633, %v633
      %v698 = vpack.i.b16 %v634, %v634
      %v699 = vpack.i.b16 %v635, %v635
      %v700 = vpack.i.b16 %v636, %v636
      %v701 = vpack.i.b16 %v637, %v637
      %v702 = vpack.i.b16 %v638, %v638
      %v703 = vpack.i.b16 %v639, %v639
      %v704 = vpack.i.b16 %v640, %v640
      %v705 = vpack.i.b16 %v641, %v641
      %v706 = vpack.i.b16 %v642, %v642
      %v707 = vpack.i.b16 %v643, %v643
      %v708 = vpack.i.b16 %v644, %v644
      %v709 = vpack.i.b16 %v645, %v645
      %v710 = vpack.i.b16 %v646, %v646
      %v711 = vpack.i.b16 %v647, %v647
      %v712 = vpack.i.b16 %v648, %v648
      %v713 = vpack.i.b16 %v649, %v649
      %v714 = vpack.i.b16 %v650, %v650
      %v715 = vpack.i.b16 %v651, %v651
      %v716 = vpack.i.b16 %v652, %v652
      %v717 = vpack.i.b16 %v653, %v653
      %v718 = vpack.i.b16 %v654, %v654
      %v719 = vpack.i.b16 %v655, %v655
      %v720 = vpack.i.b16 %v656, %v656
      %v721 = vpack.i.b16 %v657, %v657
      %v722 = vpack.i.b16 %v658, %v658
      %v723 = vpack.i.b16 %v659, %v659
      %v724 = vpack.i.b16 %v660, %v660
      %v725 = vpack.i.b16 %v661, %v661
      %v726 = vpack.i.b16 %v662, %v662
      %v727 = vpack.i.b16 %v663, %v663
      %v728 = vpack.i.b16 %v664, %v664
      %v729 = vpack.i.b16 %v665, %v665
      %v730 = vpack.i.b16 %v666, %v666
      %v731 = vperm.slane %v667, 0
      %v732 = vperm.slane %v668, 0
      %v733 = vperm.slane %v669, 0
      %v734 = vperm.slane %v670, 0
      %v735 = vperm.slane %v671, 0
      %v736 = vperm.slane %v672, 0
      %v737 = vperm.slane %v673, 0
      %v738 = vperm.slane %v674, 0
      %v739 = vperm.slane %v675, 0
      %v740 = vperm.slane %v676, 0
      %v741 = vperm.slane %v677, 0
      %v742 = vperm.slane %v678, 0
      %v743 = vperm.slane %v679, 0
      %v744 = vperm.slane %v680, 0
      %v745 = vperm.slane %v681, 0
      %v746 = vperm.slane %v682, 0
      %v747 = vperm.slane %v683, 0
      %v748 = vperm.slane %v684, 0
      %v749 = vperm.slane %v685, 0
      %v750 = vperm.slane %v686, 0
      %v751 = vperm.slane %v687, 0
      %v752 = vperm.slane %v688, 0
      %v753 = vperm.slane %v689, 0
      %v754 = vperm.slane %v690, 0
      %v755 = vperm.slane %v691, 0
      %v756 = vperm.slane %v692, 0
      %v757 = vperm.slane %v693, 0
      %v758 = vperm.slane %v694, 0
      %v759 = vperm.slane %v695, 0
      %v760 = vperm.slane %v696, 0
      %v761 = vperm.slane %v697, 0
      %v762 = vperm.slane %v698, 0
      %v763 = vperm.slane %v699, 0
      %v764 = vperm.slane %v700, 0
      %v765 = vperm.slane %v701, 0
      %v766 = vperm.slane %v702, 0
      %v767 = vperm.slane %v703, 0
      %v768 = vperm.slane %v704, 0
      %v769 = vperm.slane %v705, 0
      %v770 = vperm.slane %v706, 0
      %v771 = vperm.slane %v707, 0
      %v772 = vperm.slane %v708, 0
      %v773 = vperm.slane %v709, 0
      %v774 = vperm.slane %v710, 0
      %v775 = vperm.slane %v711, 0
      %v776 = vperm.slane %v712, 0
      %v777 = vperm.slane %v713, 0
      %v778 = vperm.slane %v714, 0
      %v779 = vperm.slane %v715, 0
      %v780 = vperm.slane %v716, 0
      %v781 = vperm.slane %v717, 0
      %v782 = vperm.slane %v718, 0
      %v783 = vperm.slane %v719, 0
      %v784 = vperm.slane %v720, 0
      %v785 = vperm.slane %v721, 0
      %v786 = vperm.slane %v722, 0
      %v787 = vperm.slane %v723, 0
      %v788 = vperm.slane %v724, 0
      %v789 = vperm.slane %v725, 0
      %v790 = vperm.slane %v726, 0
      %v791 = vperm.slane %v727, 0
      %v792 = vperm.slane %v728, 0
      %v793 = vperm.slane %v729, 0
      %v794 = vperm.slane %v730, 0
      %859 = vrot.lane.b32.xlu0 %v731, 112
      %v860 = vpop.permute.xlu0 %859
      %861 = vrot.lane.b32.xlu0 %v732, 112
      %v862 = vpop.permute.xlu0 %861
      %863 = vrot.lane.b32.xlu0 %v733, 112
      %v864 = vpop.permute.xlu0 %863
      %865 = vrot.lane.b32.xlu0 %v734, 112
      %v866 = vpop.permute.xlu0 %865
      %867 = vrot.lane.b32.xlu0 %v735, 112
      %v868 = vpop.permute.xlu0 %867
      %869 = vrot.lane.b32.xlu0 %v736, 112
      %v870 = vpop.permute.xlu0 %869
      %871 = vrot.lane.b32.xlu0 %v737, 112
      %v872 = vpop.permute.xlu0 %871
      %873 = vrot.lane.b32.xlu0 %v738, 112
      %v874 = vpop.permute.xlu0 %873
      %875 = vrot.lane.b32.xlu0 %v739, 112
      %v876 = vpop.permute.xlu0 %875
      %877 = vrot.lane.b32.xlu0 %v740, 112
      %v878 = vpop.permute.xlu0 %877
      %879 = vrot.lane.b32.xlu0 %v741, 112
      %v880 = vpop.permute.xlu0 %879
      %881 = vrot.lane.b32.xlu0 %v742, 112
      %v882 = vpop.permute.xlu0 %881
      %883 = vrot.lane.b32.xlu0 %v743, 112
      %v884 = vpop.permute.xlu0 %883
      %885 = vrot.lane.b32.xlu0 %v744, 112
      %v886 = vpop.permute.xlu0 %885
      %887 = vrot.lane.b32.xlu0 %v745, 112
      %v888 = vpop.permute.xlu0 %887
      %889 = vrot.lane.b32.xlu0 %v746, 112
      %v890 = vpop.permute.xlu0 %889
      %891 = vrot.lane.b32.xlu0 %v747, 112
      %v892 = vpop.permute.xlu0 %891
      %893 = vrot.lane.b32.xlu0 %v748, 112
      %v894 = vpop.permute.xlu0 %893
      %895 = vrot.lane.b32.xlu0 %v749, 112
      %v896 = vpop.permute.xlu0 %895
      %897 = vrot.lane.b32.xlu0 %v750, 112
      %v898 = vpop.permute.xlu0 %897
      %899 = vrot.lane.b32.xlu0 %v751, 112
      %v900 = vpop.permute.xlu0 %899
      %901 = vrot.lane.b32.xlu0 %v752, 112
      %v902 = vpop.permute.xlu0 %901
      %903 = vrot.lane.b32.xlu0 %v753, 112
      %v904 = vpop.permute.xlu0 %903
      %905 = vrot.lane.b32.xlu0 %v754, 112
      %v906 = vpop.permute.xlu0 %905
      %907 = vrot.lane.b32.xlu0 %v755, 112
      %v908 = vpop.permute.xlu0 %907
      %909 = vrot.lane.b32.xlu0 %v756, 112
      %v910 = vpop.permute.xlu0 %909
      %911 = vrot.lane.b32.xlu0 %v757, 112
      %v912 = vpop.permute.xlu0 %911
      %913 = vrot.lane.b32.xlu0 %v758, 112
      %v914 = vpop.permute.xlu0 %913
      %915 = vrot.lane.b32.xlu0 %v759, 112
      %v916 = vpop.permute.xlu0 %915
      %917 = vrot.lane.b32.xlu0 %v760, 112
      %v918 = vpop.permute.xlu0 %917
      %919 = vrot.lane.b32.xlu0 %v761, 112
      %v920 = vpop.permute.xlu0 %919
      %921 = vrot.lane.b32.xlu0 %v762, 112
      %v922 = vpop.permute.xlu0 %921
      %923 = vrot.lane.b32.xlu0 %v763, 112
      %v924 = vpop.permute.xlu0 %923
      %925 = vrot.lane.b32.xlu0 %v764, 112
      %v926 = vpop.permute.xlu0 %925
      %927 = vrot.lane.b32.xlu0 %v765, 112
      %v928 = vpop.permute.xlu0 %927
      %929 = vrot.lane.b32.xlu0 %v766, 112
      %v930 = vpop.permute.xlu0 %929
      %931 = vrot.lane.b32.xlu0 %v767, 112
      %v932 = vpop.permute.xlu0 %931
      %933 = vrot.lane.b32.xlu0 %v768, 112
      %v934 = vpop.permute.xlu0 %933
      %935 = vrot.lane.b32.xlu0 %v769, 112
      %v936 = vpop.permute.xlu0 %935
      %937 = vrot.lane.b32.xlu0 %v770, 112
      %v938 = vpop.permute.xlu0 %937
      %939 = vrot.lane.b32.xlu0 %v771, 112
      %v940 = vpop.permute.xlu0 %939
      %941 = vrot.lane.b32.xlu0 %v772, 112
      %v942 = vpop.permute.xlu0 %941
      %943 = vrot.lane.b32.xlu0 %v773, 112
      %v944 = vpop.permute.xlu0 %943
      %945 = vrot.lane.b32.xlu0 %v774, 112
      %v946 = vpop.permute.xlu0 %945
      %947 = vrot.lane.b32.xlu0 %v775, 112
      %v948 = vpop.permute.xlu0 %947
      %949 = vrot.lane.b32.xlu0 %v776, 112
      %v950 = vpop.permute.xlu0 %949
      %951 = vrot.lane.b32.xlu0 %v777, 112
      %v952 = vpop.permute.xlu0 %951
      %953 = vrot.lane.b32.xlu0 %v778, 112
      %v954 = vpop.permute.xlu0 %953
      %955 = vrot.lane.b32.xlu0 %v779, 112
      %v956 = vpop.permute.xlu0 %955
      %957 = vrot.lane.b32.xlu0 %v780, 112
      %v958 = vpop.permute.xlu0 %957
      %959 = vrot.lane.b32.xlu0 %v781, 112
      %v960 = vpop.permute.xlu0 %959
      %961 = vrot.lane.b32.xlu0 %v782, 112
      %v962 = vpop.permute.xlu0 %961
      %963 = vrot.lane.b32.xlu0 %v783, 112
      %v964 = vpop.permute.xlu0 %963
      %965 = vrot.lane.b32.xlu0 %v784, 112
      %v966 = vpop.permute.xlu0 %965
      %967 = vrot.lane.b32.xlu0 %v785, 112
      %v968 = vpop.permute.xlu0 %967
      %969 = vrot.lane.b32.xlu0 %v786, 112
      %v970 = vpop.permute.xlu0 %969
      %971 = vrot.lane.b32.xlu0 %v787, 112
      %v972 = vpop.permute.xlu0 %971
      %973 = vrot.lane.b32.xlu0 %v788, 112
      %v974 = vpop.permute.xlu0 %973
      %975 = vrot.lane.b32.xlu0 %v789, 112
      %v976 = vpop.permute.xlu0 %975
      %977 = vrot.lane.b32.xlu0 %v790, 112
      %v978 = vpop.permute.xlu0 %977
      %979 = vrot.lane.b32.xlu0 %v791, 112
      %v980 = vpop.permute.xlu0 %979
      %981 = vrot.lane.b32.xlu0 %v792, 112
      %v982 = vpop.permute.xlu0 %981
      %983 = vrot.lane.b32.xlu0 %v793, 112
      %v984 = vpop.permute.xlu0 %983
      %985 = vrot.lane.b32.xlu0 %v794, 112
      %v986 = vpop.permute.xlu0 %985
      %vm1051 = vcmask 1040384
      %vm1052 = vsmask.f32 256
      %vm1053 = vmand %vm1051, %vm1052
      %v1054 = vsel %vm1053, %v731, %v860
      %v1055 = vsel %vm1053, %v732, %v862
      %v1056 = vsel %vm1053, %v733, %v864
      %v1057 = vsel %vm1053, %v734, %v866
      %v1058 = vsel %vm1053, %v735, %v868
      %v1059 = vsel %vm1053, %v736, %v870
      %v1060 = vsel %vm1053, %v737, %v872
      %v1061 = vsel %vm1053, %v738, %v874
      %v1062 = vsel %vm1053, %v739, %v876
      %v1063 = vsel %vm1053, %v740, %v878
      %v1064 = vsel %vm1053, %v741, %v880
      %v1065 = vsel %vm1053, %v742, %v882
      %v1066 = vsel %vm1053, %v743, %v884
      %v1067 = vsel %vm1053, %v744, %v886
      %v1068 = vsel %vm1053, %v745, %v888
      %v1069 = vsel %vm1053, %v746, %v890
      %v1070 = vsel %vm1053, %v747, %v892
      %v1071 = vsel %vm1053, %v748, %v894
      %v1072 = vsel %vm1053, %v749, %v896
      %v1073 = vsel %vm1053, %v750, %v898
      %v1074 = vsel %vm1053, %v751, %v900
      %v1075 = vsel %vm1053, %v752, %v902
      %v1076 = vsel %vm1053, %v753, %v904
      %v1077 = vsel %vm1053, %v754, %v906
      %v1078 = vsel %vm1053, %v755, %v908
      %v1079 = vsel %vm1053, %v756, %v910
      %v1080 = vsel %vm1053, %v757, %v912
      %v1081 = vsel %vm1053, %v758, %v914
      %v1082 = vsel %vm1053, %v759, %v916
      %v1083 = vsel %vm1053, %v760, %v918
      %v1084 = vsel %vm1053, %v761, %v920
      %v1085 = vsel %vm1053, %v762, %v922
      %v1086 = vsel %vm1053, %v763, %v924
      %v1087 = vsel %vm1053, %v764, %v926
      %v1088 = vsel %vm1053, %v765, %v928
      %v1089 = vsel %vm1053, %v766, %v930
      %v1090 = vsel %vm1053, %v767, %v932
      %v1091 = vsel %vm1053, %v768, %v934
      %v1092 = vsel %vm1053, %v769, %v936
      %v1093 = vsel %vm1053, %v770, %v938
      %v1094 = vsel %vm1053, %v771, %v940
      %v1095 = vsel %vm1053, %v772, %v942
      %v1096 = vsel %vm1053, %v773, %v944
      %v1097 = vsel %vm1053, %v774, %v946
      %v1098 = vsel %vm1053, %v775, %v948
      %v1099 = vsel %vm1053, %v776, %v950
      %v1100 = vsel %vm1053, %v777, %v952
      %v1101 = vsel %vm1053, %v778, %v954
      %v1102 = vsel %vm1053, %v779, %v956
      %v1103 = vsel %vm1053, %v780, %v958
      %v1104 = vsel %vm1053, %v781, %v960
      %v1105 = vsel %vm1053, %v782, %v962
      %v1106 = vsel %vm1053, %v783, %v964
      %v1107 = vsel %vm1053, %v784, %v966
      %v1108 = vsel %vm1053, %v785, %v968
      %v1109 = vsel %vm1053, %v786, %v970
      %v1110 = vsel %vm1053, %v787, %v972
      %v1111 = vsel %vm1053, %v788, %v974
      %v1112 = vsel %vm1053, %v789, %v976
      %v1113 = vsel %vm1053, %v790, %v978
      %v1114 = vsel %vm1053, %v791, %v980
      %v1115 = vsel %vm1053, %v792, %v982
      %v1116 = vsel %vm1053, %v793, %v984
      %v1117 = vsel %vm1053, %v794, %v986
      %1182 = vrot.lane.b32.xlu0 %v1054, 96
      %v1183 = vpop.permute.xlu0 %1182
      %1184 = vrot.lane.b32.xlu0 %v1055, 96
      %v1185 = vpop.permute.xlu0 %1184
      %1186 = vrot.lane.b32.xlu0 %v1056, 96
      %v1187 = vpop.permute.xlu0 %1186
      %1188 = vrot.lane.b32.xlu0 %v1057, 96
      %v1189 = vpop.permute.xlu0 %1188
      %1190 = vrot.lane.b32.xlu0 %v1058, 96
      %v1191 = vpop.permute.xlu0 %1190
      %1192 = vrot.lane.b32.xlu0 %v1059, 96
      %v1193 = vpop.permute.xlu0 %1192
      %1194 = vrot.lane.b32.xlu0 %v1060, 96
      %v1195 = vpop.permute.xlu0 %1194
      %1196 = vrot.lane.b32.xlu0 %v1061, 96
      %v1197 = vpop.permute.xlu0 %1196
      %1198 = vrot.lane.b32.xlu0 %v1062, 96
      %v1199 = vpop.permute.xlu0 %1198
      %1200 = vrot.lane.b32.xlu0 %v1063, 96
      %v1201 = vpop.permute.xlu0 %1200
      %1202 = vrot.lane.b32.xlu0 %v1064, 96
      %v1203 = vpop.permute.xlu0 %1202
      %1204 = vrot.lane.b32.xlu0 %v1065, 96
      %v1205 = vpop.permute.xlu0 %1204
      %1206 = vrot.lane.b32.xlu0 %v1066, 96
      %v1207 = vpop.permute.xlu0 %1206
      %1208 = vrot.lane.b32.xlu0 %v1067, 96
      %v1209 = vpop.permute.xlu0 %1208
      %1210 = vrot.lane.b32.xlu0 %v1068, 96
      %v1211 = vpop.permute.xlu0 %1210
      %1212 = vrot.lane.b32.xlu0 %v1069, 96
      %v1213 = vpop.permute.xlu0 %1212
      %1214 = vrot.lane.b32.xlu0 %v1070, 96
      %v1215 = vpop.permute.xlu0 %1214
      %1216 = vrot.lane.b32.xlu0 %v1071, 96
      %v1217 = vpop.permute.xlu0 %1216
      %1218 = vrot.lane.b32.xlu0 %v1072, 96
      %v1219 = vpop.permute.xlu0 %1218
      %1220 = vrot.lane.b32.xlu0 %v1073, 96
      %v1221 = vpop.permute.xlu0 %1220
      %1222 = vrot.lane.b32.xlu0 %v1074, 96
      %v1223 = vpop.permute.xlu0 %1222
      %1224 = vrot.lane.b32.xlu0 %v1075, 96
      %v1225 = vpop.permute.xlu0 %1224
      %1226 = vrot.lane.b32.xlu0 %v1076, 96
      %v1227 = vpop.permute.xlu0 %1226
      %1228 = vrot.lane.b32.xlu0 %v1077, 96
      %v1229 = vpop.permute.xlu0 %1228
      %1230 = vrot.lane.b32.xlu0 %v1078, 96
      %v1231 = vpop.permute.xlu0 %1230
      %1232 = vrot.lane.b32.xlu0 %v1079, 96
      %v1233 = vpop.permute.xlu0 %1232
      %1234 = vrot.lane.b32.xlu0 %v1080, 96
      %v1235 = vpop.permute.xlu0 %1234
      %1236 = vrot.lane.b32.xlu0 %v1081, 96
      %v1237 = vpop.permute.xlu0 %1236
      %1238 = vrot.lane.b32.xlu0 %v1082, 96
      %v1239 = vpop.permute.xlu0 %1238
      %1240 = vrot.lane.b32.xlu0 %v1083, 96
      %v1241 = vpop.permute.xlu0 %1240
      %1242 = vrot.lane.b32.xlu0 %v1084, 96
      %v1243 = vpop.permute.xlu0 %1242
      %1244 = vrot.lane.b32.xlu0 %v1085, 96
      %v1245 = vpop.permute.xlu0 %1244
      %1246 = vrot.lane.b32.xlu0 %v1086, 96
      %v1247 = vpop.permute.xlu0 %1246
      %1248 = vrot.lane.b32.xlu0 %v1087, 96
      %v1249 = vpop.permute.xlu0 %1248
      %1250 = vrot.lane.b32.xlu0 %v1088, 96
      %v1251 = vpop.permute.xlu0 %1250
      %1252 = vrot.lane.b32.xlu0 %v1089, 96
      %v1253 = vpop.permute.xlu0 %1252
      %1254 = vrot.lane.b32.xlu0 %v1090, 96
      %v1255 = vpop.permute.xlu0 %1254
      %1256 = vrot.lane.b32.xlu0 %v1091, 96
      %v1257 = vpop.permute.xlu0 %1256
      %1258 = vrot.lane.b32.xlu0 %v1092, 96
      %v1259 = vpop.permute.xlu0 %1258
      %1260 = vrot.lane.b32.xlu0 %v1093, 96
      %v1261 = vpop.permute.xlu0 %1260
      %1262 = vrot.lane.b32.xlu0 %v1094, 96
      %v1263 = vpop.permute.xlu0 %1262
      %1264 = vrot.lane.b32.xlu0 %v1095, 96
      %v1265 = vpop.permute.xlu0 %1264
      %1266 = vrot.lane.b32.xlu0 %v1096, 96
      %v1267 = vpop.permute.xlu0 %1266
      %1268 = vrot.lane.b32.xlu0 %v1097, 96
      %v1269 = vpop.permute.xlu0 %1268
      %1270 = vrot.lane.b32.xlu0 %v1098, 96
      %v1271 = vpop.permute.xlu0 %1270
      %1272 = vrot.lane.b32.xlu0 %v1099, 96
      %v1273 = vpop.permute.xlu0 %1272
      %1274 = vrot.lane.b32.xlu0 %v1100, 96
      %v1275 = vpop.permute.xlu0 %1274
      %1276 = vrot.lane.b32.xlu0 %v1101, 96
      %v1277 = vpop.permute.xlu0 %1276
      %1278 = vrot.lane.b32.xlu0 %v1102, 96
      %v1279 = vpop.permute.xlu0 %1278
      %1280 = vrot.lane.b32.xlu0 %v1103, 96
      %v1281 = vpop.permute.xlu0 %1280
      %1282 = vrot.lane.b32.xlu0 %v1104, 96
      %v1283 = vpop.permute.xlu0 %1282
      %1284 = vrot.lane.b32.xlu0 %v1105, 96
      %v1285 = vpop.permute.xlu0 %1284
      %1286 = vrot.lane.b32.xlu0 %v1106, 96
      %v1287 = vpop.permute.xlu0 %1286
      %1288 = vrot.lane.b32.xlu0 %v1107, 96
      %v1289 = vpop.permute.xlu0 %1288
      %1290 = vrot.lane.b32.xlu0 %v1108, 96
      %v1291 = vpop.permute.xlu0 %1290
      %1292 = vrot.lane.b32.xlu0 %v1109, 96
      %v1293 = vpop.permute.xlu0 %1292
      %1294 = vrot.lane.b32.xlu0 %v1110, 96
      %v1295 = vpop.permute.xlu0 %1294
      %1296 = vrot.lane.b32.xlu0 %v1111, 96
      %v1297 = vpop.permute.xlu0 %1296
      %1298 = vrot.lane.b32.xlu0 %v1112, 96
      %v1299 = vpop.permute.xlu0 %1298
      %1300 = vrot.lane.b32.xlu0 %v1113, 96
      %v1301 = vpop.permute.xlu0 %1300
      %1302 = vrot.lane.b32.xlu0 %v1114, 96
      %v1303 = vpop.permute.xlu0 %1302
      %1304 = vrot.lane.b32.xlu0 %v1115, 96
      %v1305 = vpop.permute.xlu0 %1304
      %1306 = vrot.lane.b32.xlu0 %v1116, 96
      %v1307 = vpop.permute.xlu0 %1306
      %1308 = vrot.lane.b32.xlu0 %v1117, 96
      %v1309 = vpop.permute.xlu0 %1308
      %v1310 = vld [vmem:[%s374] sm:$0xf]
      %v1311 = vld [vmem:[%s374 + $0x4] sm:$0xf]
      %v1312 = vld [vmem:[%s374 + $0x8] sm:$0xf]
      %v1313 = vld [vmem:[%s374 + $0xc] sm:$0xf]
      %v1314 = vld [vmem:[%s374 + $0x10] sm:$0xf]
      %v1315 = vld [vmem:[%s374 + $0x14] sm:$0xf]
      %v1316 = vld [vmem:[%s374 + $0x18] sm:$0xf]
      %v1317 = vld [vmem:[%s374 + $0x1c] sm:$0xf]
      %v1318 = vld [vmem:[%s374 + $0x20] sm:$0xf]
      %v1319 = vld [vmem:[%s374 + $0x24] sm:$0xf]
      %v1320 = vld [vmem:[%s374 + $0x28] sm:$0xf]
      %v1321 = vld [vmem:[%s374 + $0x2c] sm:$0xf]
      %v1322 = vld [vmem:[%s374 + $0x30] sm:$0xf]
      %v1323 = vld [vmem:[%s374 + $0x34] sm:$0xf]
      %v1324 = vld [vmem:[%s374 + $0x38] sm:$0xf]
      %v1325 = vld [vmem:[%s374 + $0x3c] sm:$0xf]
      %v1326 = vld [vmem:[%s374 + $0x40] sm:$0xf]
      %v1327 = vld [vmem:[%s374 + $0x44] sm:$0xf]
      %v1328 = vld [vmem:[%s374 + $0x48] sm:$0xf]
      %v1329 = vld [vmem:[%s374 + $0x4c] sm:$0xf]
      %v1330 = vld [vmem:[%s374 + $0x50] sm:$0xf]
      %v1331 = vld [vmem:[%s374 + $0x54] sm:$0xf]
      %v1332 = vld [vmem:[%s374 + $0x58] sm:$0xf]
      %v1333 = vld [vmem:[%s374 + $0x5c] sm:$0xf]
      %v1334 = vld [vmem:[%s374 + $0x60] sm:$0xf]
      %v1335 = vld [vmem:[%s374 + $0x64] sm:$0xf]
      %v1336 = vld [vmem:[%s374 + $0x68] sm:$0xf]
      %v1337 = vld [vmem:[%s374 + $0x6c] sm:$0xf]
      %v1338 = vld [vmem:[%s374 + $0x70] sm:$0xf]
      %v1339 = vld [vmem:[%s374 + $0x74] sm:$0xf]
      %v1340 = vld [vmem:[%s374 + $0x78] sm:$0xf]
      %v1341 = vld [vmem:[%s374 + $0x7c] sm:$0xf]
      %1343 = vst [vmem:[#allocation1] ss:$9 sm:$0xff] %v1054
      %s1345 = scalar_lea.vmem [#allocation1], 1
      %1346 = vst [vmem:[%s1345] ss:$9 sm:$0xff] %v1055
      %s1348 = scalar_lea.vmem [#allocation1], 2
      %1349 = vst [vmem:[%s1348] ss:$9 sm:$0xff] %v1056
      %s1351 = scalar_lea.vmem [#allocation1], 3
      %1352 = vst [vmem:[%s1351] ss:$9 sm:$0xff] %v1057
      %s1354 = scalar_lea.vmem [#allocation1], 4
      %1355 = vst [vmem:[%s1354] ss:$9 sm:$0xff] %v1058
      %s1357 = scalar_lea.vmem [#allocation1], 5
      %1358 = vst [vmem:[%s1357] ss:$9 sm:$0xff] %v1059
      %s1360 = scalar_lea.vmem [#allocation1], 6
      %1361 = vst [vmem:[%s1360] ss:$9 sm:$0xff] %v1060
      %s1363 = scalar_lea.vmem [#allocation1], 7
      %1364 = vst [vmem:[%s1363] ss:$9 sm:$0xff] %v1061
      %v1365 = vld [vmem:[#allocation1] sm:$0xff]
      %1367 = vst [vmem:[#allocation1] ss:$9 sm:$0xff] %v1183
      %1369 = vst [vmem:[%s1345] ss:$9 sm:$0xff] %v1185
      %1371 = vst [vmem:[%s1348] ss:$9 sm:$0xff] %v1187
      %1373 = vst [vmem:[%s1351] ss:$9 sm:$0xff] %v1189
      %1375 = vst [vmem:[%s1354] ss:$9 sm:$0xff] %v1191
      %1377 = vst [vmem:[%s1357] ss:$9 sm:$0xff] %v1193
      %1379 = vst [vmem:[%s1360] ss:$9 sm:$0xff] %v1195
      %1381 = vst [vmem:[%s1363] ss:$9 sm:$0xff] %v1197
      %v1382 = vld [vmem:[#allocation1] sm:$0xff]
      %1384 = vst [vmem:[#allocation1] ss:$9 sm:$0xff] %v1062
      %1386 = vst [vmem:[%s1345] ss:$9 sm:$0xff] %v1063
      %1388 = vst [vmem:[%s1348] ss:$9 sm:$0xff] %v1064
      %1390 = vst [vmem:[%s1351] ss:$9 sm:$0xff] %v1065
      %1392 = vst [vmem:[%s1354] ss:$9 sm:$0xff] %v1066
      %1394 = vst [vmem:[%s1357] ss:$9 sm:$0xff] %v1067
      %1396 = vst [vmem:[%s1360] ss:$9 sm:$0xff] %v1068
      %1398 = vst [vmem:[%s1363] ss:$9 sm:$0xff] %v1069
      %v1399 = vld [vmem:[#allocation1] sm:$0xff]
      %1401 = vst [vmem:[#allocation1] ss:$9 sm:$0xff] %v1199
      %1403 = vst [vmem:[%s1345] ss:$9 sm:$0xff] %v1201
      %1405 = vst [vmem:[%s1348] ss:$9 sm:$0xff] %v1203
      %1407 = vst [vmem:[%s1351] ss:$9 sm:$0xff] %v1205
      %1409 = vst [vmem:[%s1354] ss:$9 sm:$0xff] %v1207
      %1411 = vst [vmem:[%s1357] ss:$9 sm:$0xff] %v1209
      %1413 = vst [vmem:[%s1360] ss:$9 sm:$0xff] %v1211
      %1415 = vst [vmem:[%s1363] ss:$9 sm:$0xff] %v1213
      %v1416 = vld [vmem:[#allocation1] sm:$0xff]
      %1418 = vst [vmem:[#allocation1] ss:$9 sm:$0xff] %v1070
      %1420 = vst [vmem:[%s1345] ss:$9 sm:$0xff] %v1071
      %1422 = vst [vmem:[%s1348] ss:$9 sm:$0xff] %v1072
      %1424 = vst [vmem:[%s1351] ss:$9 sm:$0xff] %v1073
      %1426 = vst [vmem:[%s1354] ss:$9 sm:$0xff] %v1074
      %1428 = vst [vmem:[%s1357] ss:$9 sm:$0xff] %v1075
      %1430 = vst [vmem:[%s1360] ss:$9 sm:$0xff] %v1076
      %1432 = vst [vmem:[%s1363] ss:$9 sm:$0xff] %v1077
      %v1433 = vld [vmem:[#allocation1] sm:$0xff]
      %1435 = vst [vmem:[#allocation1] ss:$9 sm:$0xff] %v1215
      %1437 = vst [vmem:[%s1345] ss:$9 sm:$0xff] %v1217
      %1439 = vst [vmem:[%s1348] ss:$9 sm:$0xff] %v1219
      %1441 = vst [vmem:[%s1351] ss:$9 sm:$0xff] %v1221
      %1443 = vst [vmem:[%s1354] ss:$9 sm:$0xff] %v1223
      %1445 = vst [vmem:[%s1357] ss:$9 sm:$0xff] %v1225
      %1447 = vst [vmem:[%s1360] ss:$9 sm:$0xff] %v1227
      %1449 = vst [vmem:[%s1363] ss:$9 sm:$0xff] %v1229
      %v1450 = vld [vmem:[#allocation1] sm:$0xff]
      %1452 = vst [vmem:[#allocation1] ss:$9 sm:$0xff] %v1078
      %1454 = vst [vmem:[%s1345] ss:$9 sm:$0xff] %v1079
      %1456 = vst [vmem:[%s1348] ss:$9 sm:$0xff] %v1080
      %1458 = vst [vmem:[%s1351] ss:$9 sm:$0xff] %v1081
      %1460 = vst [vmem:[%s1354] ss:$9 sm:$0xff] %v1082
      %1462 = vst [vmem:[%s1357] ss:$9 sm:$0xff] %v1083
      %1464 = vst [vmem:[%s1360] ss:$9 sm:$0xff] %v1084
      %1466 = vst [vmem:[%s1363] ss:$9 sm:$0xff] %v1085
      %v1467 = vld [vmem:[#allocation1] sm:$0xff]
      %1469 = vst [vmem:[#allocation1] ss:$9 sm:$0xff] %v1231
      %1471 = vst [vmem:[%s1345] ss:$9 sm:$0xff] %v1233
      %1473 = vst [vmem:[%s1348] ss:$9 sm:$0xff] %v1235
      %1475 = vst [vmem:[%s1351] ss:$9 sm:$0xff] %v1237
      %1477 = vst [vmem:[%s1354] ss:$9 sm:$0xff] %v1239
      %1479 = vst [vmem:[%s1357] ss:$9 sm:$0xff] %v1241
      %1481 = vst [vmem:[%s1360] ss:$9 sm:$0xff] %v1243
      %1483 = vst [vmem:[%s1363] ss:$9 sm:$0xff] %v1245
      %v1484 = vld [vmem:[#allocation1] sm:$0xff]
      %1486 = vst [vmem:[#allocation1] ss:$9 sm:$0xff] %v1086
      %1488 = vst [vmem:[%s1345] ss:$9 sm:$0xff] %v1087
      %1490 = vst [vmem:[%s1348] ss:$9 sm:$0xff] %v1088
      %1492 = vst [vmem:[%s1351] ss:$9 sm:$0xff] %v1089
      %1494 = vst [vmem:[%s1354] ss:$9 sm:$0xff] %v1090
      %1496 = vst [vmem:[%s1357] ss:$9 sm:$0xff] %v1091
      %1498 = vst [vmem:[%s1360] ss:$9 sm:$0xff] %v1092
      %1500 = vst [vmem:[%s1363] ss:$9 sm:$0xff] %v1093
      %v1501 = vld [vmem:[#allocation1] sm:$0xff]
      %1503 = vst [vmem:[#allocation1] ss:$9 sm:$0xff] %v1247
      %1505 = vst [vmem:[%s1345] ss:$9 sm:$0xff] %v1249
      %1507 = vst [vmem:[%s1348] ss:$9 sm:$0xff] %v1251
      %1509 = vst [vmem:[%s1351] ss:$9 sm:$0xff] %v1253
      %1511 = vst [vmem:[%s1354] ss:$9 sm:$0xff] %v1255
      %1513 = vst [vmem:[%s1357] ss:$9 sm:$0xff] %v1257
      %1515 = vst [vmem:[%s1360] ss:$9 sm:$0xff] %v1259
      %1517 = vst [vmem:[%s1363] ss:$9 sm:$0xff] %v1261
      %v1518 = vld [vmem:[#allocation1] sm:$0xff]
      %1520 = vst [vmem:[#allocation1] ss:$9 sm:$0xff] %v1094
      %1522 = vst [vmem:[%s1345] ss:$9 sm:$0xff] %v1095
      %1524 = vst [vmem:[%s1348] ss:$9 sm:$0xff] %v1096
      %1526 = vst [vmem:[%s1351] ss:$9 sm:$0xff] %v1097
      %1528 = vst [vmem:[%s1354] ss:$9 sm:$0xff] %v1098
      %1530 = vst [vmem:[%s1357] ss:$9 sm:$0xff] %v1099
      %1532 = vst [vmem:[%s1360] ss:$9 sm:$0xff] %v1100
      %1534 = vst [vmem:[%s1363] ss:$9 sm:$0xff] %v1101
      %v1535 = vld [vmem:[#allocation1] sm:$0xff]
      %1537 = vst [vmem:[#allocation1] ss:$9 sm:$0xff] %v1263
      %1539 = vst [vmem:[%s1345] ss:$9 sm:$0xff] %v1265
      %1541 = vst [vmem:[%s1348] ss:$9 sm:$0xff] %v1267
      %1543 = vst [vmem:[%s1351] ss:$9 sm:$0xff] %v1269
      %1545 = vst [vmem:[%s1354] ss:$9 sm:$0xff] %v1271
      %1547 = vst [vmem:[%s1357] ss:$9 sm:$0xff] %v1273
      %1549 = vst [vmem:[%s1360] ss:$9 sm:$0xff] %v1275
      %1551 = vst [vmem:[%s1363] ss:$9 sm:$0xff] %v1277
      %v1552 = vld [vmem:[#allocation1] sm:$0xff]
      %1554 = vst [vmem:[#allocation1] ss:$9 sm:$0xff] %v1102
      %1556 = vst [vmem:[%s1345] ss:$9 sm:$0xff] %v1103
      %1558 = vst [vmem:[%s1348] ss:$9 sm:$0xff] %v1104
      %1560 = vst [vmem:[%s1351] ss:$9 sm:$0xff] %v1105
      %1562 = vst [vmem:[%s1354] ss:$9 sm:$0xff] %v1106
      %1564 = vst [vmem:[%s1357] ss:$9 sm:$0xff] %v1107
      %1566 = vst [vmem:[%s1360] ss:$9 sm:$0xff] %v1108
      %1568 = vst [vmem:[%s1363] ss:$9 sm:$0xff] %v1109
      %v1569 = vld [vmem:[#allocation1] sm:$0xff]
      %1571 = vst [vmem:[#allocation1] ss:$9 sm:$0xff] %v1279
      %1573 = vst [vmem:[%s1345] ss:$9 sm:$0xff] %v1281
      %1575 = vst [vmem:[%s1348] ss:$9 sm:$0xff] %v1283
      %1577 = vst [vmem:[%s1351] ss:$9 sm:$0xff] %v1285
      %1579 = vst [vmem:[%s1354] ss:$9 sm:$0xff] %v1287
      %1581 = vst [vmem:[%s1357] ss:$9 sm:$0xff] %v1289
      %1583 = vst [vmem:[%s1360] ss:$9 sm:$0xff] %v1291
      %1585 = vst [vmem:[%s1363] ss:$9 sm:$0xff] %v1293
      %v1586 = vld [vmem:[#allocation1] sm:$0xff]
      %1588 = vst [vmem:[#allocation1] ss:$9 sm:$0xff] %v1110
      %1590 = vst [vmem:[%s1345] ss:$9 sm:$0xff] %v1111
      %1592 = vst [vmem:[%s1348] ss:$9 sm:$0xff] %v1112
      %1594 = vst [vmem:[%s1351] ss:$9 sm:$0xff] %v1113
      %1596 = vst [vmem:[%s1354] ss:$9 sm:$0xff] %v1114
      %1598 = vst [vmem:[%s1357] ss:$9 sm:$0xff] %v1115
      %1600 = vst [vmem:[%s1360] ss:$9 sm:$0xff] %v1116
      %1602 = vst [vmem:[%s1363] ss:$9 sm:$0xff] %v1117
      %v1603 = vld [vmem:[#allocation1] sm:$0xff]
      %1605 = vst [vmem:[#allocation1] ss:$9 sm:$0xff] %v1295
      %1607 = vst [vmem:[%s1345] ss:$9 sm:$0xff] %v1297
      %1609 = vst [vmem:[%s1348] ss:$9 sm:$0xff] %v1299
      %1611 = vst [vmem:[%s1351] ss:$9 sm:$0xff] %v1301
      %1613 = vst [vmem:[%s1354] ss:$9 sm:$0xff] %v1303
      %1615 = vst [vmem:[%s1357] ss:$9 sm:$0xff] %v1305
      %1617 = vst [vmem:[%s1360] ss:$9 sm:$0xff] %v1307
      %1619 = vst [vmem:[%s1363] ss:$9 sm:$0xff] %v1309
      %v1620 = vld [vmem:[#allocation1] sm:$0xff]
      %v1653 = vunpack.c.l.b16 %v1310
      %v1654 = vunpack.c.l.b16 %v1311
      %v1655 = vunpack.c.l.b16 %v1312
      %v1656 = vunpack.c.l.b16 %v1313
      %v1657 = vunpack.c.l.b16 %v1314
      %v1658 = vunpack.c.l.b16 %v1315
      %v1659 = vunpack.c.l.b16 %v1316
      %v1660 = vunpack.c.l.b16 %v1317
      %v1661 = vunpack.c.l.b16 %v1318
      %v1662 = vunpack.c.l.b16 %v1319
      %v1663 = vunpack.c.l.b16 %v1320
      %v1664 = vunpack.c.l.b16 %v1321
      %v1665 = vunpack.c.l.b16 %v1322
      %v1666 = vunpack.c.l.b16 %v1323
      %v1667 = vunpack.c.l.b16 %v1324
      %v1668 = vunpack.c.l.b16 %v1325
      %v1669 = vunpack.c.l.b16 %v1326
      %v1670 = vunpack.c.l.b16 %v1327
      %v1671 = vunpack.c.l.b16 %v1328
      %v1672 = vunpack.c.l.b16 %v1329
      %v1673 = vunpack.c.l.b16 %v1330
      %v1674 = vunpack.c.l.b16 %v1331
      %v1675 = vunpack.c.l.b16 %v1332
      %v1676 = vunpack.c.l.b16 %v1333
      %v1677 = vunpack.c.l.b16 %v1334
      %v1678 = vunpack.c.l.b16 %v1335
      %v1679 = vunpack.c.l.b16 %v1336
      %v1680 = vunpack.c.l.b16 %v1337
      %v1681 = vunpack.c.l.b16 %v1338
      %v1682 = vunpack.c.l.b16 %v1339
      %v1683 = vunpack.c.l.b16 %v1340
      %v1684 = vunpack.c.l.b16 %v1341
      %v1685 = vpack.c.b16 %v1654, %v1653
      %v1686 = vpack.c.b16 %v1656, %v1655
      %v1687 = vpack.c.b16 %v1658, %v1657
      %v1688 = vpack.c.b16 %v1660, %v1659
      %v1689 = vpack.c.b16 %v1662, %v1661
      %v1690 = vpack.c.b16 %v1664, %v1663
      %v1691 = vpack.c.b16 %v1666, %v1665
      %v1692 = vpack.c.b16 %v1668, %v1667
      %v1693 = vpack.c.b16 %v1670, %v1669
      %v1694 = vpack.c.b16 %v1672, %v1671
      %v1695 = vpack.c.b16 %v1674, %v1673
      %v1696 = vpack.c.b16 %v1676, %v1675
      %v1697 = vpack.c.b16 %v1678, %v1677
      %v1698 = vpack.c.b16 %v1680, %v1679
      %v1699 = vpack.c.b16 %v1682, %v1681
      %v1700 = vpack.c.b16 %v1684, %v1683
      %1701 = vrot.lane.b32.xlu0 %v1685, 16
      %v1702 = vpop.permute.xlu0 %1701
      %1703 = vrot.lane.b32.xlu0 %v1686, 16
      %v1704 = vpop.permute.xlu0 %1703
      %1705 = vrot.lane.b32.xlu0 %v1687, 16
      %v1706 = vpop.permute.xlu0 %1705
      %1707 = vrot.lane.b32.xlu0 %v1688, 16
      %v1708 = vpop.permute.xlu0 %1707
      %1709 = vrot.lane.b32.xlu0 %v1689, 16
      %v1710 = vpop.permute.xlu0 %1709
      %1711 = vrot.lane.b32.xlu0 %v1690, 16
      %v1712 = vpop.permute.xlu0 %1711
      %1713 = vrot.lane.b32.xlu0 %v1691, 16
      %v1714 = vpop.permute.xlu0 %1713
      %1715 = vrot.lane.b32.xlu0 %v1692, 16
      %v1716 = vpop.permute.xlu0 %1715
      %1717 = vrot.lane.b32.xlu0 %v1693, 16
      %v1718 = vpop.permute.xlu0 %1717
      %1719 = vrot.lane.b32.xlu0 %v1694, 16
      %v1720 = vpop.permute.xlu0 %1719
      %1721 = vrot.lane.b32.xlu0 %v1695, 16
      %v1722 = vpop.permute.xlu0 %1721
      %1723 = vrot.lane.b32.xlu0 %v1696, 16
      %v1724 = vpop.permute.xlu0 %1723
      %1725 = vrot.lane.b32.xlu0 %v1697, 16
      %v1726 = vpop.permute.xlu0 %1725
      %1727 = vrot.lane.b32.xlu0 %v1698, 16
      %v1728 = vpop.permute.xlu0 %1727
      %1729 = vrot.lane.b32.xlu0 %v1699, 16
      %v1730 = vpop.permute.xlu0 %1729
      %1731 = vrot.lane.b32.xlu0 %v1700, 16
      %v1732 = vpop.permute.xlu0 %1731
      %vm1733 = vcmask 130048
      %v1735 = vsel %vm1733, %v1365, %v1702
      %v1737 = vsel %vm1733, %v1382, %v1704
      %v1739 = vsel %vm1733, %v1399, %v1706
      %v1741 = vsel %vm1733, %v1416, %v1708
      %v1743 = vsel %vm1733, %v1433, %v1710
      %v1745 = vsel %vm1733, %v1450, %v1712
      %v1747 = vsel %vm1733, %v1467, %v1714
      %v1749 = vsel %vm1733, %v1484, %v1716
      %v1751 = vsel %vm1733, %v1501, %v1718
      %v1753 = vsel %vm1733, %v1518, %v1720
      %v1755 = vsel %vm1733, %v1535, %v1722
      %v1757 = vsel %vm1733, %v1552, %v1724
      %v1759 = vsel %vm1733, %v1569, %v1726
      %v1761 = vsel %vm1733, %v1586, %v1728
      %v1763 = vsel %vm1733, %v1603, %v1730
      %v1765 = vsel %vm1733, %v1620, %v1732
      %v1766 = vld [vmem:[%s5] sm:$0x1]
      %v1767 = vld [vmem:[%s6] sm:$0x1]
      %v1769 = vshrl.u32 0, 16
      %v1771 = vrot.slane %v1769, 7
      %v1772 = vshll.u32 0, 16
      %v1774 = vor.u32 %v1771, %v1772
      %v1775 = vshrl.u32 %v1735, 16
      %v1777 = vrot.slane %v1775, 7
      %v1778 = vshll.u32 %v1735, 16
      %v1780 = vor.u32 %v1777, %v1778
      %v1781 = vshrl.u32 %v1737, 16
      %v1783 = vrot.slane %v1781, 7
      %v1784 = vshll.u32 %v1737, 16
      %v1786 = vor.u32 %v1783, %v1784
      %v1787 = vshrl.u32 %v1739, 16
      %v1789 = vrot.slane %v1787, 7
      %v1790 = vshll.u32 %v1739, 16
      %v1792 = vor.u32 %v1789, %v1790
      %v1793 = vshrl.u32 %v1741, 16
      %v1795 = vrot.slane %v1793, 7
      %v1796 = vshll.u32 %v1741, 16
      %v1798 = vor.u32 %v1795, %v1796
      %v1799 = vshrl.u32 %v1743, 16
      %v1801 = vrot.slane %v1799, 7
      %v1802 = vshll.u32 %v1743, 16
      %v1804 = vor.u32 %v1801, %v1802
      %v1805 = vshrl.u32 %v1745, 16
      %v1807 = vrot.slane %v1805, 7
      %v1808 = vshll.u32 %v1745, 16
      %v1810 = vor.u32 %v1807, %v1808
      %v1811 = vshrl.u32 %v1747, 16
      %v1813 = vrot.slane %v1811, 7
      %v1814 = vshll.u32 %v1747, 16
      %v1816 = vor.u32 %v1813, %v1814
      %v1817 = vshrl.u32 %v1749, 16
      %v1819 = vrot.slane %v1817, 7
      %v1820 = vshll.u32 %v1749, 16
      %v1822 = vor.u32 %v1819, %v1820
      %v1823 = vshrl.u32 %v1751, 16
      %v1825 = vrot.slane %v1823, 7
      %v1826 = vshll.u32 %v1751, 16
      %v1828 = vor.u32 %v1825, %v1826
      %v1829 = vshrl.u32 %v1753, 16
      %v1831 = vrot.slane %v1829, 7
      %v1832 = vshll.u32 %v1753, 16
      %v1834 = vor.u32 %v1831, %v1832
      %v1835 = vshrl.u32 %v1755, 16
      %v1837 = vrot.slane %v1835, 7
      %v1838 = vshll.u32 %v1755, 16
      %v1840 = vor.u32 %v1837, %v1838
      %v1841 = vshrl.u32 %v1757, 16
      %v1843 = vrot.slane %v1841, 7
      %v1844 = vshll.u32 %v1757, 16
      %v1846 = vor.u32 %v1843, %v1844
      %v1847 = vshrl.u32 %v1759, 16
      %v1849 = vrot.slane %v1847, 7
      %v1850 = vshll.u32 %v1759, 16
      %v1852 = vor.u32 %v1849, %v1850
      %v1853 = vshrl.u32 %v1761, 16
      %v1855 = vrot.slane %v1853, 7
      %v1856 = vshll.u32 %v1761, 16
      %v1858 = vor.u32 %v1855, %v1856
      %v1859 = vshrl.u32 %v1763, 16
      %v1861 = vrot.slane %v1859, 7
      %v1862 = vshll.u32 %v1763, 16
      %v1864 = vor.u32 %v1861, %v1862
      %v1865 = vshrl.u32 %v1765, 16
      %v1867 = vrot.slane %v1865, 7
      %v1868 = vshll.u32 %v1765, 16
      %v1870 = vor.u32 %v1867, %v1868
      %v1905 = vsel %vm1053, 0, %v1774
      %v1906 = vsel %vm1053, 0, %v1780
      %v1907 = vsel %vm1053, 0, %v1786
      %v1908 = vsel %vm1053, 0, %v1792
      %v1909 = vsel %vm1053, 0, %v1798
      %v1910 = vsel %vm1053, 0, %v1804
      %v1911 = vsel %vm1053, 0, %v1810
      %v1912 = vsel %vm1053, 0, %v1816
      %v1913 = vsel %vm1053, 0, %v1822
      %v1914 = vsel %vm1053, 0, %v1828
      %v1915 = vsel %vm1053, 0, %v1834
      %v1916 = vsel %vm1053, 0, %v1840
      %v1917 = vsel %vm1053, 0, %v1846
      %v1918 = vsel %vm1053, 0, %v1852
      %v1919 = vsel %vm1053, 0, %v1858
      %v1920 = vsel %vm1053, 0, %v1864
      %v1921 = vsel %vm1053, 0, %v1870
      %v1922 = vsel %vm1053, %v1771, 0
      %v1923 = vsel %vm1053, %v1777, 0
      %v1924 = vsel %vm1053, %v1783, 0
      %v1925 = vsel %vm1053, %v1789, 0
      %v1926 = vsel %vm1053, %v1795, 0
      %v1927 = vsel %vm1053, %v1801, 0
      %v1928 = vsel %vm1053, %v1807, 0
      %v1929 = vsel %vm1053, %v1813, 0
      %v1930 = vsel %vm1053, %v1819, 0
      %v1931 = vsel %vm1053, %v1825, 0
      %v1932 = vsel %vm1053, %v1831, 0
      %v1933 = vsel %vm1053, %v1837, 0
      %v1934 = vsel %vm1053, %v1843, 0
      %v1935 = vsel %vm1053, %v1849, 0
      %v1936 = vsel %vm1053, %v1855, 0
      %v1937 = vsel %vm1053, %v1861, 0
      %v1938 = vsel %vm1053, %v1867, 0
      %v1939 = vld [vmem:[%s4] sm:$0xf]
      %v1940 = vld [vmem:[%s4 + $0x4] sm:$0xf]
      %v1941 = vld [vmem:[%s4 + $0x8] sm:$0xf]
      %v1942 = vld [vmem:[%s4 + $0xc] sm:$0xf]
      %vm1943 = vsmask.f32 7424
      %v1945 = vshrl.u32 %v1905, 16
      %v1947 = vshll.u32 %v1905, 16
      %v1949 = vrot.slane %v1947, 1
      %v1950 = vor.u32 %v1945, %v1949
      %v1952 = vshll.u32 %v1922, 16
      %v1954 = vrot.slane %v1952, 1
      %v1955 = vsel %vm1943, %v1950, %v1954
      %v1957 = vshrl.u32 %v1906, 16
      %v1959 = vshll.u32 %v1906, 16
      %v1961 = vrot.slane %v1959, 1
      %v1962 = vor.u32 %v1957, %v1961
      %v1964 = vshll.u32 %v1923, 16
      %v1966 = vrot.slane %v1964, 1
      %v1967 = vsel %vm1943, %v1962, %v1966
      %v1969 = vshrl.u32 %v1907, 16
      %v1971 = vshll.u32 %v1907, 16
      %v1973 = vrot.slane %v1971, 1
      %v1974 = vor.u32 %v1969, %v1973
      %v1976 = vshll.u32 %v1924, 16
      %v1978 = vrot.slane %v1976, 1
      %v1979 = vsel %vm1943, %v1974, %v1978
      %v1981 = vshrl.u32 %v1908, 16
      %v1983 = vshll.u32 %v1908, 16
      %v1985 = vrot.slane %v1983, 1
      %v1986 = vor.u32 %v1981, %v1985
      %v1988 = vshll.u32 %v1925, 16
      %v1990 = vrot.slane %v1988, 1
      %v1991 = vsel %vm1943, %v1986, %v1990
      %v1993 = vshrl.u32 %v1909, 16
      %v1995 = vshll.u32 %v1909, 16
      %v1997 = vrot.slane %v1995, 1
      %v1998 = vor.u32 %v1993, %v1997
      %v2000 = vshll.u32 %v1926, 16
      %v2002 = vrot.slane %v2000, 1
      %v2003 = vsel %vm1943, %v1998, %v2002
      %v2005 = vshrl.u32 %v1910, 16
      %v2007 = vshll.u32 %v1910, 16
      %v2009 = vrot.slane %v2007, 1
      %v2010 = vor.u32 %v2005, %v2009
      %v2012 = vshll.u32 %v1927, 16
      %v2014 = vrot.slane %v2012, 1
      %v2015 = vsel %vm1943, %v2010, %v2014
      %v2017 = vshrl.u32 %v1911, 16
      %v2019 = vshll.u32 %v1911, 16
      %v2021 = vrot.slane %v2019, 1
      %v2022 = vor.u32 %v2017, %v2021
      %v2024 = vshll.u32 %v1928, 16
      %v2026 = vrot.slane %v2024, 1
      %v2027 = vsel %vm1943, %v2022, %v2026
      %v2029 = vshrl.u32 %v1912, 16
      %v2031 = vshll.u32 %v1912, 16
      %v2033 = vrot.slane %v2031, 1
      %v2034 = vor.u32 %v2029, %v2033
      %v2036 = vshll.u32 %v1929, 16
      %v2038 = vrot.slane %v2036, 1
      %v2039 = vsel %vm1943, %v2034, %v2038
      %v2041 = vshrl.u32 %v1913, 16
      %v2043 = vshll.u32 %v1913, 16
      %v2045 = vrot.slane %v2043, 1
      %v2046 = vor.u32 %v2041, %v2045
      %v2048 = vshll.u32 %v1930, 16
      %v2050 = vrot.slane %v2048, 1
      %v2051 = vsel %vm1943, %v2046, %v2050
      %v2053 = vshrl.u32 %v1914, 16
      %v2055 = vshll.u32 %v1914, 16
      %v2057 = vrot.slane %v2055, 1
      %v2058 = vor.u32 %v2053, %v2057
      %v2060 = vshll.u32 %v1931, 16
      %v2062 = vrot.slane %v2060, 1
      %v2063 = vsel %vm1943, %v2058, %v2062
      %v2065 = vshrl.u32 %v1915, 16
      %v2067 = vshll.u32 %v1915, 16
      %v2069 = vrot.slane %v2067, 1
      %v2070 = vor.u32 %v2065, %v2069
      %v2072 = vshll.u32 %v1932, 16
      %v2074 = vrot.slane %v2072, 1
      %v2075 = vsel %vm1943, %v2070, %v2074
      %v2077 = vshrl.u32 %v1916, 16
      %v2079 = vshll.u32 %v1916, 16
      %v2081 = vrot.slane %v2079, 1
      %v2082 = vor.u32 %v2077, %v2081
      %v2084 = vshll.u32 %v1933, 16
      %v2086 = vrot.slane %v2084, 1
      %v2087 = vsel %vm1943, %v2082, %v2086
      %v2089 = vshrl.u32 %v1917, 16
      %v2091 = vshll.u32 %v1917, 16
      %v2093 = vrot.slane %v2091, 1
      %v2094 = vor.u32 %v2089, %v2093
      %v2096 = vshll.u32 %v1934, 16
      %v2098 = vrot.slane %v2096, 1
      %v2099 = vsel %vm1943, %v2094, %v2098
      %v2101 = vshrl.u32 %v1918, 16
      %v2103 = vshll.u32 %v1918, 16
      %v2105 = vrot.slane %v2103, 1
      %v2106 = vor.u32 %v2101, %v2105
      %v2108 = vshll.u32 %v1935, 16
      %v2110 = vrot.slane %v2108, 1
      %v2111 = vsel %vm1943, %v2106, %v2110
      %v2113 = vshrl.u32 %v1919, 16
      %v2115 = vshll.u32 %v1919, 16
      %v2117 = vrot.slane %v2115, 1
      %v2118 = vor.u32 %v2113, %v2117
      %v2120 = vshll.u32 %v1936, 16
      %v2122 = vrot.slane %v2120, 1
      %v2123 = vsel %vm1943, %v2118, %v2122
      %v2125 = vshrl.u32 %v1920, 16
      %v2127 = vshll.u32 %v1920, 16
      %v2129 = vrot.slane %v2127, 1
      %v2130 = vor.u32 %v2125, %v2129
      %v2132 = vshll.u32 %v1937, 16
      %v2134 = vrot.slane %v2132, 1
      %v2135 = vsel %vm1943, %v2130, %v2134
      %s2136 = scalar_lea.vmem %s4, 16
      %v2137 = vld [vmem:[%s2136] sm:$0xf]
      %v2138 = vld [vmem:[%s2136 + $0x4] sm:$0xf]
      %v2139 = vld [vmem:[%s2136 + $0x8] sm:$0xf]
      %v2140 = vld [vmem:[%s2136 + $0xc] sm:$0xf]
      %v2145 = vunpack.c.l.b16 %v2137
      %v2146 = vunpack.c.l.b16 %v2138
      %v2147 = vunpack.c.l.b16 %v2139
      %v2148 = vunpack.c.l.b16 %v2140
      %v2149 = vpack.c.b16 %v2146, %v2145
      %v2150 = vpack.c.b16 %v2148, %v2147
      %v2154 = vsel %vm429, %v1955, 0
      %v2157 = vsel %vm429, %v1967, 0
      %v2160 = vsel %vm429, %v1979, 0
      %v2163 = vsel %vm429, %v1991, 0
      %v2166 = vsel %vm429, %v2003, 0
      %v2169 = vsel %vm429, %v2015, 0
      %v2172 = vsel %vm429, %v2027, 0
      %v2175 = vsel %vm429, %v2039, 0
      %v2178 = vsel %vm429, %v2051, 0
      %v2181 = vsel %vm429, %v2063, 0
      %v2184 = vsel %vm429, %v2075, 0
      %v2187 = vsel %vm429, %v2087, 0
      %v2190 = vsel %vm429, %v2099, 0
      %v2193 = vsel %vm429, %v2111, 0
      %v2196 = vsel %vm429, %v2123, 0
      %v2199 = vsel %vm429, %v2135, 0
      %2201 = vmatpush.bf16.msra.mxu0 0
      %2202 = vmatpush.bf16.msra.mxu0 0
      %2203 = vmatpush.bf16.msra.mxu0 0
      %2204 = vmatpush.bf16.msra.mxu0 0
      %2205 = vmatpush.bf16.msra.mxu0 0
      %2206 = vmatpush.bf16.msra.mxu0 0
      %2207 = vmatpush.bf16.msra.mxu0 %v2150
      %2208 = vmatpush.bf16.msra.mxu0 %v2149
      %2209 = vmatmul.bf16.gmra.mxu0 %v2154
      %v2210 = vpop.f32.mrf.mxu0
      %v2211 = vadd.f32 0.0, %v2210
      %v2212 = vpop.f32.mrf.mxu0
      %v2213 = vadd.f32 0.0, %v2212
      %2214 = vmatmul.bf16.gmra.mxu0 %v2157
      %v2215 = vpop.f32.mrf.mxu0
      %v2216 = vadd.f32 0.0, %v2215
      %v2217 = vpop.f32.mrf.mxu0
      %v2218 = vadd.f32 0.0, %v2217
      %2219 = vmatmul.bf16.gmra.mxu0 %v2160
      %v2220 = vpop.f32.mrf.mxu0
      %v2221 = vadd.f32 0.0, %v2220
      %v2222 = vpop.f32.mrf.mxu0
      %v2223 = vadd.f32 0.0, %v2222
      %2224 = vmatmul.bf16.gmra.mxu0 %v2163
      %v2225 = vpop.f32.mrf.mxu0
      %v2226 = vadd.f32 0.0, %v2225
      %v2227 = vpop.f32.mrf.mxu0
      %v2228 = vadd.f32 0.0, %v2227
      %2229 = vmatmul.bf16.gmra.mxu0 %v2166
      %v2230 = vpop.f32.mrf.mxu0
      %v2231 = vadd.f32 0.0, %v2230
      %v2232 = vpop.f32.mrf.mxu0
      %v2233 = vadd.f32 0.0, %v2232
      %2234 = vmatmul.bf16.gmra.mxu0 %v2169
      %v2235 = vpop.f32.mrf.mxu0
      %v2236 = vadd.f32 0.0, %v2235
      %v2237 = vpop.f32.mrf.mxu0
      %v2238 = vadd.f32 0.0, %v2237
      %2239 = vmatmul.bf16.gmra.mxu0 %v2172
      %v2240 = vpop.f32.mrf.mxu0
      %v2241 = vadd.f32 0.0, %v2240
      %v2242 = vpop.f32.mrf.mxu0
      %v2243 = vadd.f32 0.0, %v2242
      %2244 = vmatmul.bf16.gmra.mxu0 %v2175
      %v2245 = vpop.f32.mrf.mxu0
      %v2246 = vadd.f32 0.0, %v2245
      %v2247 = vpop.f32.mrf.mxu0
      %v2248 = vadd.f32 0.0, %v2247
      %2249 = vmatmul.bf16.gmra.mxu0 %v2178
      %v2250 = vpop.f32.mrf.mxu0
      %v2251 = vadd.f32 0.0, %v2250
      %v2252 = vpop.f32.mrf.mxu0
      %v2253 = vadd.f32 0.0, %v2252
      %2254 = vmatmul.bf16.gmra.mxu0 %v2181
      %v2255 = vpop.f32.mrf.mxu0
      %v2256 = vadd.f32 0.0, %v2255
      %v2257 = vpop.f32.mrf.mxu0
      %v2258 = vadd.f32 0.0, %v2257
      %2259 = vmatmul.bf16.gmra.mxu0 %v2184
      %v2260 = vpop.f32.mrf.mxu0
      %v2261 = vadd.f32 0.0, %v2260
      %v2262 = vpop.f32.mrf.mxu0
      %v2263 = vadd.f32 0.0, %v2262
      %2264 = vmatmul.bf16.gmra.mxu0 %v2187
      %v2265 = vpop.f32.mrf.mxu0
      %v2266 = vadd.f32 0.0, %v2265
      %v2267 = vpop.f32.mrf.mxu0
      %v2268 = vadd.f32 0.0, %v2267
      %2269 = vmatmul.bf16.gmra.mxu0 %v2190
      %v2270 = vpop.f32.mrf.mxu0
      %v2271 = vadd.f32 0.0, %v2270
      %v2272 = vpop.f32.mrf.mxu0
      %v2273 = vadd.f32 0.0, %v2272
      %2274 = vmatmul.bf16.gmra.mxu0 %v2193
      %v2275 = vpop.f32.mrf.mxu0
      %v2276 = vadd.f32 0.0, %v2275
      %v2277 = vpop.f32.mrf.mxu0
      %v2278 = vadd.f32 0.0, %v2277
      %2279 = vmatmul.bf16.gmra.mxu0 %v2196
      %v2280 = vpop.f32.mrf.mxu0
      %v2281 = vadd.f32 0.0, %v2280
      %v2282 = vpop.f32.mrf.mxu0
      %v2283 = vadd.f32 0.0, %v2282
      %2284 = vmatmul.bf16.gmra.mxu0 %v2199
      %v2285 = vpop.f32.mrf.mxu0
      %v2286 = vadd.f32 0.0, %v2285
      %v2287 = vpop.f32.mrf.mxu0
      %v2288 = vadd.f32 0.0, %v2287
      %2289 = vdwg.mxu0
      %v2294 = vunpack.c.l.b16 %v1939
      %v2295 = vunpack.c.l.b16 %v1940
      %v2296 = vunpack.c.l.b16 %v1941
      %v2297 = vunpack.c.l.b16 %v1942
      %v2298 = vpack.c.b16 %v2295, %v2294
      %v2299 = vpack.c.b16 %v2297, %v2296
      %v2302 = vsel %vm429, %v1905, 0
      %v2304 = vsel %vm429, %v1906, 0
      %v2306 = vsel %vm429, %v1907, 0
      %v2308 = vsel %vm429, %v1908, 0
      %v2310 = vsel %vm429, %v1909, 0
      %v2312 = vsel %vm429, %v1910, 0
      %v2314 = vsel %vm429, %v1911, 0
      %v2316 = vsel %vm429, %v1912, 0
      %v2318 = vsel %vm429, %v1913, 0
      %v2320 = vsel %vm429, %v1914, 0
      %v2322 = vsel %vm429, %v1915, 0
      %v2324 = vsel %vm429, %v1916, 0
      %v2326 = vsel %vm429, %v1917, 0
      %v2328 = vsel %vm429, %v1918, 0
      %v2330 = vsel %vm429, %v1919, 0
      %v2332 = vsel %vm429, %v1920, 0
      %2334 = vmatpush.bf16.msra.mxu0 0
      %2335 = vmatpush.bf16.msra.mxu0 0
      %2336 = vmatpush.bf16.msra.mxu0 0
      %2337 = vmatpush.bf16.msra.mxu0 0
      %2338 = vmatpush.bf16.msra.mxu0 0
      %2339 = vmatpush.bf16.msra.mxu0 0
      %2340 = vmatpush.bf16.msra.mxu0 %v2299
      %2341 = vmatpush.bf16.msra.mxu0 %v2298
      %2342 = vmatmul.bf16.gmra.mxu0 %v2302
      %v2343 = vpop.f32.mrf.mxu0
      %v2344 = vadd.f32 %v2211, %v2343
      %v2345 = vpop.f32.mrf.mxu0
      %v2346 = vadd.f32 %v2213, %v2345
      %2347 = vmatmul.bf16.gmra.mxu0 %v2304
      %v2348 = vpop.f32.mrf.mxu0
      %v2349 = vadd.f32 %v2216, %v2348
      %v2350 = vpop.f32.mrf.mxu0
      %v2351 = vadd.f32 %v2218, %v2350
      %2352 = vmatmul.bf16.gmra.mxu0 %v2306
      %v2353 = vpop.f32.mrf.mxu0
      %v2354 = vadd.f32 %v2221, %v2353
      %v2355 = vpop.f32.mrf.mxu0
      %v2356 = vadd.f32 %v2223, %v2355
      %2357 = vmatmul.bf16.gmra.mxu0 %v2308
      %v2358 = vpop.f32.mrf.mxu0
      %v2359 = vadd.f32 %v2226, %v2358
      %v2360 = vpop.f32.mrf.mxu0
      %v2361 = vadd.f32 %v2228, %v2360
      %2362 = vmatmul.bf16.gmra.mxu0 %v2310
      %v2363 = vpop.f32.mrf.mxu0
      %v2364 = vadd.f32 %v2231, %v2363
      %v2365 = vpop.f32.mrf.mxu0
      %v2366 = vadd.f32 %v2233, %v2365
      %2367 = vmatmul.bf16.gmra.mxu0 %v2312
      %v2368 = vpop.f32.mrf.mxu0
      %v2369 = vadd.f32 %v2236, %v2368
      %v2370 = vpop.f32.mrf.mxu0
      %v2371 = vadd.f32 %v2238, %v2370
      %2372 = vmatmul.bf16.gmra.mxu0 %v2314
      %v2373 = vpop.f32.mrf.mxu0
      %v2374 = vadd.f32 %v2241, %v2373
      %v2375 = vpop.f32.mrf.mxu0
      %v2376 = vadd.f32 %v2243, %v2375
      %2377 = vmatmul.bf16.gmra.mxu0 %v2316
      %v2378 = vpop.f32.mrf.mxu0
      %v2379 = vadd.f32 %v2246, %v2378
      %v2380 = vpop.f32.mrf.mxu0
      %v2381 = vadd.f32 %v2248, %v2380
      %2382 = vmatmul.bf16.gmra.mxu0 %v2318
      %v2383 = vpop.f32.mrf.mxu0
      %v2384 = vadd.f32 %v2251, %v2383
      %v2385 = vpop.f32.mrf.mxu0
      %v2386 = vadd.f32 %v2253, %v2385
      %2387 = vmatmul.bf16.gmra.mxu0 %v2320
      %v2388 = vpop.f32.mrf.mxu0
      %v2389 = vadd.f32 %v2256, %v2388
      %v2390 = vpop.f32.mrf.mxu0
      %v2391 = vadd.f32 %v2258, %v2390
      %2392 = vmatmul.bf16.gmra.mxu0 %v2322
      %v2393 = vpop.f32.mrf.mxu0
      %v2394 = vadd.f32 %v2261, %v2393
      %v2395 = vpop.f32.mrf.mxu0
      %v2396 = vadd.f32 %v2263, %v2395
      %2397 = vmatmul.bf16.gmra.mxu0 %v2324
      %v2398 = vpop.f32.mrf.mxu0
      %v2399 = vadd.f32 %v2266, %v2398
      %v2400 = vpop.f32.mrf.mxu0
      %v2401 = vadd.f32 %v2268, %v2400
      %2402 = vmatmul.bf16.gmra.mxu0 %v2326
      %v2403 = vpop.f32.mrf.mxu0
      %v2404 = vadd.f32 %v2271, %v2403
      %v2405 = vpop.f32.mrf.mxu0
      %v2406 = vadd.f32 %v2273, %v2405
      %2407 = vmatmul.bf16.gmra.mxu0 %v2328
      %v2408 = vpop.f32.mrf.mxu0
      %v2409 = vadd.f32 %v2276, %v2408
      %v2410 = vpop.f32.mrf.mxu0
      %v2411 = vadd.f32 %v2278, %v2410
      %2412 = vmatmul.bf16.gmra.mxu0 %v2330
      %v2413 = vpop.f32.mrf.mxu0
      %v2414 = vadd.f32 %v2281, %v2413
      %v2415 = vpop.f32.mrf.mxu0
      %v2416 = vadd.f32 %v2283, %v2415
      %2417 = vmatmul.bf16.gmra.mxu0 %v2332
      %v2418 = vpop.f32.mrf.mxu0
      %v2419 = vadd.f32 %v2286, %v2418
      %v2420 = vpop.f32.mrf.mxu0
      %v2421 = vadd.f32 %v2288, %v2420
      %2422 = vdwg.mxu0
      %vm2455 = vcmask 1046528
      %v2456 = vrot.slane %v1905, 1
      %v2457 = vrot.slane %v1922, 1
      %v2458 = vsel %vm2455, %v2456, %v2457
      %v2459 = vrot.slane %v1906, 1
      %v2460 = vrot.slane %v1923, 1
      %v2461 = vsel %vm2455, %v2459, %v2460
      %v2462 = vrot.slane %v1907, 1
      %v2463 = vrot.slane %v1924, 1
      %v2464 = vsel %vm2455, %v2462, %v2463
      %v2465 = vrot.slane %v1908, 1
      %v2466 = vrot.slane %v1925, 1
      %v2467 = vsel %vm2455, %v2465, %v2466
      %v2468 = vrot.slane %v1909, 1
      %v2469 = vrot.slane %v1926, 1
      %v2470 = vsel %vm2455, %v2468, %v2469
      %v2471 = vrot.slane %v1910, 1
      %v2472 = vrot.slane %v1927, 1
      %v2473 = vsel %vm2455, %v2471, %v2472
      %v2474 = vrot.slane %v1911, 1
      %v2475 = vrot.slane %v1928, 1
      %v2476 = vsel %vm2455, %v2474, %v2475
      %v2477 = vrot.slane %v1912, 1
      %v2478 = vrot.slane %v1929, 1
      %v2479 = vsel %vm2455, %v2477, %v2478
      %v2480 = vrot.slane %v1913, 1
      %v2481 = vrot.slane %v1930, 1
      %v2482 = vsel %vm2455, %v2480, %v2481
      %v2483 = vrot.slane %v1914, 1
      %v2484 = vrot.slane %v1931, 1
      %v2485 = vsel %vm2455, %v2483, %v2484
      %v2486 = vrot.slane %v1915, 1
      %v2487 = vrot.slane %v1932, 1
      %v2488 = vsel %vm2455, %v2486, %v2487
      %v2489 = vrot.slane %v1916, 1
      %v2490 = vrot.slane %v1933, 1
      %v2491 = vsel %vm2455, %v2489, %v2490
      %v2492 = vrot.slane %v1917, 1
      %v2493 = vrot.slane %v1934, 1
      %v2494 = vsel %vm2455, %v2492, %v2493
      %v2495 = vrot.slane %v1918, 1
      %v2496 = vrot.slane %v1935, 1
      %v2497 = vsel %vm2455, %v2495, %v2496
      %v2498 = vrot.slane %v1919, 1
      %v2499 = vrot.slane %v1936, 1
      %v2500 = vsel %vm2455, %v2498, %v2499
      %v2501 = vrot.slane %v1920, 1
      %v2502 = vrot.slane %v1937, 1
      %v2503 = vsel %vm2455, %v2501, %v2502
      %s2504 = scalar_lea.vmem %s4, 32
      %v2505 = vld [vmem:[%s2504] sm:$0xf]
      %v2506 = vld [vmem:[%s2504 + $0x4] sm:$0xf]
      %v2507 = vld [vmem:[%s2504 + $0x8] sm:$0xf]
      %v2508 = vld [vmem:[%s2504 + $0xc] sm:$0xf]
      %v2513 = vunpack.c.l.b16 %v2505
      %v2514 = vunpack.c.l.b16 %v2506
      %v2515 = vunpack.c.l.b16 %v2507
      %v2516 = vunpack.c.l.b16 %v2508
      %v2517 = vpack.c.b16 %v2514, %v2513
      %v2518 = vpack.c.b16 %v2516, %v2515
      %v2522 = vsel %vm429, %v2458, 0
      %v2525 = vsel %vm429, %v2461, 0
      %v2528 = vsel %vm429, %v2464, 0
      %v2531 = vsel %vm429, %v2467, 0
      %v2534 = vsel %vm429, %v2470, 0
      %v2537 = vsel %vm429, %v2473, 0
      %v2540 = vsel %vm429, %v2476, 0
      %v2543 = vsel %vm429, %v2479, 0
      %v2546 = vsel %vm429, %v2482, 0
      %v2549 = vsel %vm429, %v2485, 0
      %v2552 = vsel %vm429, %v2488, 0
      %v2555 = vsel %vm429, %v2491, 0
      %v2558 = vsel %vm429, %v2494, 0
      %v2561 = vsel %vm429, %v2497, 0
      %v2564 = vsel %vm429, %v2500, 0
      %v2567 = vsel %vm429, %v2503, 0
      %2569 = vmatpush.bf16.msra.mxu0 0
      %2570 = vmatpush.bf16.msra.mxu0 0
      %2571 = vmatpush.bf16.msra.mxu0 0
      %2572 = vmatpush.bf16.msra.mxu0 0
      %2573 = vmatpush.bf16.msra.mxu0 0
      %2574 = vmatpush.bf16.msra.mxu0 0
      %2575 = vmatpush.bf16.msra.mxu0 %v2518
      %2576 = vmatpush.bf16.msra.mxu0 %v2517
      %2577 = vmatmul.bf16.gmra.mxu0 %v2522
      %v2578 = vpop.f32.mrf.mxu0
      %v2579 = vadd.f32 0.0, %v2578
      %v2580 = vpop.f32.mrf.mxu0
      %v2581 = vadd.f32 0.0, %v2580
      %2582 = vmatmul.bf16.gmra.mxu0 %v2525
      %v2583 = vpop.f32.mrf.mxu0
      %v2584 = vadd.f32 0.0, %v2583
      %v2585 = vpop.f32.mrf.mxu0
      %v2586 = vadd.f32 0.0, %v2585
      %2587 = vmatmul.bf16.gmra.mxu0 %v2528
      %v2588 = vpop.f32.mrf.mxu0
      %v2589 = vadd.f32 0.0, %v2588
      %v2590 = vpop.f32.mrf.mxu0
      %v2591 = vadd.f32 0.0, %v2590
      %2592 = vmatmul.bf16.gmra.mxu0 %v2531
      %v2593 = vpop.f32.mrf.mxu0
      %v2594 = vadd.f32 0.0, %v2593
      %v2595 = vpop.f32.mrf.mxu0
      %v2596 = vadd.f32 0.0, %v2595
      %2597 = vmatmul.bf16.gmra.mxu0 %v2534
      %v2598 = vpop.f32.mrf.mxu0
      %v2599 = vadd.f32 0.0, %v2598
      %v2600 = vpop.f32.mrf.mxu0
      %v2601 = vadd.f32 0.0, %v2600
      %2602 = vmatmul.bf16.gmra.mxu0 %v2537
      %v2603 = vpop.f32.mrf.mxu0
      %v2604 = vadd.f32 0.0, %v2603
      %v2605 = vpop.f32.mrf.mxu0
      %v2606 = vadd.f32 0.0, %v2605
      %2607 = vmatmul.bf16.gmra.mxu0 %v2540
      %v2608 = vpop.f32.mrf.mxu0
      %v2609 = vadd.f32 0.0, %v2608
      %v2610 = vpop.f32.mrf.mxu0
      %v2611 = vadd.f32 0.0, %v2610
      %2612 = vmatmul.bf16.gmra.mxu0 %v2543
      %v2613 = vpop.f32.mrf.mxu0
      %v2614 = vadd.f32 0.0, %v2613
      %v2615 = vpop.f32.mrf.mxu0
      %v2616 = vadd.f32 0.0, %v2615
      %2617 = vmatmul.bf16.gmra.mxu0 %v2546
      %v2618 = vpop.f32.mrf.mxu0
      %v2619 = vadd.f32 0.0, %v2618
      %v2620 = vpop.f32.mrf.mxu0
      %v2621 = vadd.f32 0.0, %v2620
      %2622 = vmatmul.bf16.gmra.mxu0 %v2549
      %v2623 = vpop.f32.mrf.mxu0
      %v2624 = vadd.f32 0.0, %v2623
      %v2625 = vpop.f32.mrf.mxu0
      %v2626 = vadd.f32 0.0, %v2625
      %2627 = vmatmul.bf16.gmra.mxu0 %v2552
      %v2628 = vpop.f32.mrf.mxu0
      %v2629 = vadd.f32 0.0, %v2628
      %v2630 = vpop.f32.mrf.mxu0
      %v2631 = vadd.f32 0.0, %v2630
      %2632 = vmatmul.bf16.gmra.mxu0 %v2555
      %v2633 = vpop.f32.mrf.mxu0
      %v2634 = vadd.f32 0.0, %v2633
      %v2635 = vpop.f32.mrf.mxu0
      %v2636 = vadd.f32 0.0, %v2635
      %2637 = vmatmul.bf16.gmra.mxu0 %v2558
      %v2638 = vpop.f32.mrf.mxu0
      %v2639 = vadd.f32 0.0, %v2638
      %v2640 = vpop.f32.mrf.mxu0
      %v2641 = vadd.f32 0.0, %v2640
      %2642 = vmatmul.bf16.gmra.mxu0 %v2561
      %v2643 = vpop.f32.mrf.mxu0
      %v2644 = vadd.f32 0.0, %v2643
      %v2645 = vpop.f32.mrf.mxu0
      %v2646 = vadd.f32 0.0, %v2645
      %2647 = vmatmul.bf16.gmra.mxu0 %v2564
      %v2648 = vpop.f32.mrf.mxu0
      %v2649 = vadd.f32 0.0, %v2648
      %v2650 = vpop.f32.mrf.mxu0
      %v2651 = vadd.f32 0.0, %v2650
      %2652 = vmatmul.bf16.gmra.mxu0 %v2567
      %v2653 = vpop.f32.mrf.mxu0
      %v2654 = vadd.f32 0.0, %v2653
      %v2655 = vpop.f32.mrf.mxu0
      %v2656 = vadd.f32 0.0, %v2655
      %2657 = vdwg.mxu0
      %v2658 = vadd.f32 %v2344, %v2579
      %v2659 = vadd.f32 %v2346, %v2581
      %v2660 = vadd.f32 %v2349, %v2584
      %v2661 = vadd.f32 %v2351, %v2586
      %v2662 = vadd.f32 %v2354, %v2589
      %v2663 = vadd.f32 %v2356, %v2591
      %v2664 = vadd.f32 %v2359, %v2594
      %v2665 = vadd.f32 %v2361, %v2596
      %v2666 = vadd.f32 %v2364, %v2599
      %v2667 = vadd.f32 %v2366, %v2601
      %v2668 = vadd.f32 %v2369, %v2604
      %v2669 = vadd.f32 %v2371, %v2606
      %v2670 = vadd.f32 %v2374, %v2609
      %v2671 = vadd.f32 %v2376, %v2611
      %v2672 = vadd.f32 %v2379, %v2614
      %v2673 = vadd.f32 %v2381, %v2616
      %v2674 = vadd.f32 %v2384, %v2619
      %v2675 = vadd.f32 %v2386, %v2621
      %v2676 = vadd.f32 %v2389, %v2624
      %v2677 = vadd.f32 %v2391, %v2626
      %v2678 = vadd.f32 %v2394, %v2629
      %v2679 = vadd.f32 %v2396, %v2631
      %v2680 = vadd.f32 %v2399, %v2634
      %v2681 = vadd.f32 %v2401, %v2636
      %v2682 = vadd.f32 %v2404, %v2639
      %v2683 = vadd.f32 %v2406, %v2641
      %v2684 = vadd.f32 %v2409, %v2644
      %v2685 = vadd.f32 %v2411, %v2646
      %v2686 = vadd.f32 %v2414, %v2649
      %v2687 = vadd.f32 %v2416, %v2651
      %v2688 = vadd.f32 %v2419, %v2654
      %v2689 = vadd.f32 %v2421, %v2656
      %s2690 = scalar_lea.vmem %s4, 48
      %v2691 = vld [vmem:[%s2690] sm:$0xf]
      %v2692 = vld [vmem:[%s2690 + $0x4] sm:$0xf]
      %v2693 = vld [vmem:[%s2690 + $0x8] sm:$0xf]
      %v2694 = vld [vmem:[%s2690 + $0xc] sm:$0xf]
      %v2699 = vunpack.c.l.b16 %v2691
      %v2700 = vunpack.c.l.b16 %v2692
      %v2701 = vunpack.c.l.b16 %v2693
      %v2702 = vunpack.c.l.b16 %v2694
      %v2703 = vpack.c.b16 %v2700, %v2699
      %v2704 = vpack.c.b16 %v2702, %v2701
      %v2708 = vsel %vm429, %v1921, 0
      %2710 = vmatpush.bf16.msra.mxu0 0
      %2711 = vmatpush.bf16.msra.mxu0 0
      %2712 = vmatpush.bf16.msra.mxu0 0
      %2713 = vmatpush.bf16.msra.mxu0 0
      %2714 = vmatpush.bf16.msra.mxu0 0
      %2715 = vmatpush.bf16.msra.mxu0 0
      %2716 = vmatpush.bf16.msra.mxu0 %v2704
      %2717 = vmatpush.bf16.msra.mxu0 %v2703
      %2718 = vmatmul.bf16.gmra.mxu0 %v2304
      %v2719 = vpop.f32.mrf.mxu0
      %v2720 = vadd.f32 0.0, %v2719
      %v2721 = vpop.f32.mrf.mxu0
      %v2722 = vadd.f32 0.0, %v2721
      %2723 = vmatmul.bf16.gmra.mxu0 %v2306
      %v2724 = vpop.f32.mrf.mxu0
      %v2725 = vadd.f32 0.0, %v2724
      %v2726 = vpop.f32.mrf.mxu0
      %v2727 = vadd.f32 0.0, %v2726
      %2728 = vmatmul.bf16.gmra.mxu0 %v2308
      %v2729 = vpop.f32.mrf.mxu0
      %v2730 = vadd.f32 0.0, %v2729
      %v2731 = vpop.f32.mrf.mxu0
      %v2732 = vadd.f32 0.0, %v2731
      %2733 = vmatmul.bf16.gmra.mxu0 %v2310
      %v2734 = vpop.f32.mrf.mxu0
      %v2735 = vadd.f32 0.0, %v2734
      %v2736 = vpop.f32.mrf.mxu0
      %v2737 = vadd.f32 0.0, %v2736
      %2738 = vmatmul.bf16.gmra.mxu0 %v2312
      %v2739 = vpop.f32.mrf.mxu0
      %v2740 = vadd.f32 0.0, %v2739
      %v2741 = vpop.f32.mrf.mxu0
      %v2742 = vadd.f32 0.0, %v2741
      %2743 = vmatmul.bf16.gmra.mxu0 %v2314
      %v2744 = vpop.f32.mrf.mxu0
      %v2745 = vadd.f32 0.0, %v2744
      %v2746 = vpop.f32.mrf.mxu0
      %v2747 = vadd.f32 0.0, %v2746
      %2748 = vmatmul.bf16.gmra.mxu0 %v2316
      %v2749 = vpop.f32.mrf.mxu0
      %v2750 = vadd.f32 0.0, %v2749
      %v2751 = vpop.f32.mrf.mxu0
      %v2752 = vadd.f32 0.0, %v2751
      %2753 = vmatmul.bf16.gmra.mxu0 %v2318
      %v2754 = vpop.f32.mrf.mxu0
      %v2755 = vadd.f32 0.0, %v2754
      %v2756 = vpop.f32.mrf.mxu0
      %v2757 = vadd.f32 0.0, %v2756
      %2758 = vmatmul.bf16.gmra.mxu0 %v2320
      %v2759 = vpop.f32.mrf.mxu0
      %v2760 = vadd.f32 0.0, %v2759
      %v2761 = vpop.f32.mrf.mxu0
      %v2762 = vadd.f32 0.0, %v2761
      %2763 = vmatmul.bf16.gmra.mxu0 %v2322
      %v2764 = vpop.f32.mrf.mxu0
      %v2765 = vadd.f32 0.0, %v2764
      %v2766 = vpop.f32.mrf.mxu0
      %v2767 = vadd.f32 0.0, %v2766
      %2768 = vmatmul.bf16.gmra.mxu0 %v2324
      %v2769 = vpop.f32.mrf.mxu0
      %v2770 = vadd.f32 0.0, %v2769
      %v2771 = vpop.f32.mrf.mxu0
      %v2772 = vadd.f32 0.0, %v2771
      %2773 = vmatmul.bf16.gmra.mxu0 %v2326
      %v2774 = vpop.f32.mrf.mxu0
      %v2775 = vadd.f32 0.0, %v2774
      %v2776 = vpop.f32.mrf.mxu0
      %v2777 = vadd.f32 0.0, %v2776
      %2778 = vmatmul.bf16.gmra.mxu0 %v2328
      %v2779 = vpop.f32.mrf.mxu0
      %v2780 = vadd.f32 0.0, %v2779
      %v2781 = vpop.f32.mrf.mxu0
      %v2782 = vadd.f32 0.0, %v2781
      %2783 = vmatmul.bf16.gmra.mxu0 %v2330
      %v2784 = vpop.f32.mrf.mxu0
      %v2785 = vadd.f32 0.0, %v2784
      %v2786 = vpop.f32.mrf.mxu0
      %v2787 = vadd.f32 0.0, %v2786
      %2788 = vmatmul.bf16.gmra.mxu0 %v2332
      %v2789 = vpop.f32.mrf.mxu0
      %v2790 = vadd.f32 0.0, %v2789
      %v2791 = vpop.f32.mrf.mxu0
      %v2792 = vadd.f32 0.0, %v2791
      %2793 = vmatmul.bf16.gmra.mxu0 %v2708
      %v2794 = vpop.f32.mrf.mxu0
      %v2795 = vadd.f32 0.0, %v2794
      %v2796 = vpop.f32.mrf.mxu0
      %v2797 = vadd.f32 0.0, %v2796
      %2798 = vdwg.mxu0
      %v2799 = vadd.f32 %v2658, %v2720
      %v2800 = vadd.f32 %v2659, %v2722
      %v2801 = vadd.f32 %v2660, %v2725
      %v2802 = vadd.f32 %v2661, %v2727
      %v2803 = vadd.f32 %v2662, %v2730
      %v2804 = vadd.f32 %v2663, %v2732
      %v2805 = vadd.f32 %v2664, %v2735
      %v2806 = vadd.f32 %v2665, %v2737
      %v2807 = vadd.f32 %v2666, %v2740
      %v2808 = vadd.f32 %v2667, %v2742
      %v2809 = vadd.f32 %v2668, %v2745
      %v2810 = vadd.f32 %v2669, %v2747
      %v2811 = vadd.f32 %v2670, %v2750
      %v2812 = vadd.f32 %v2671, %v2752
      %v2813 = vadd.f32 %v2672, %v2755
      %v2814 = vadd.f32 %v2673, %v2757
      %v2815 = vadd.f32 %v2674, %v2760
      %v2816 = vadd.f32 %v2675, %v2762
      %v2817 = vadd.f32 %v2676, %v2765
      %v2818 = vadd.f32 %v2677, %v2767
      %v2819 = vadd.f32 %v2678, %v2770
      %v2820 = vadd.f32 %v2679, %v2772
      %v2821 = vadd.f32 %v2680, %v2775
      %v2822 = vadd.f32 %v2681, %v2777
      %v2823 = vadd.f32 %v2682, %v2780
      %v2824 = vadd.f32 %v2683, %v2782
      %v2825 = vadd.f32 %v2684, %v2785
      %v2826 = vadd.f32 %v2685, %v2787
      %v2827 = vadd.f32 %v2686, %v2790
      %v2828 = vadd.f32 %v2687, %v2792
      %v2829 = vadd.f32 %v2688, %v2795
      %v2830 = vadd.f32 %v2689, %v2797
      %v2831 = vshrl.u32 %v1921, 16
      %v2833 = vshll.u32 %v1921, 16
      %v2835 = vrot.slane %v2833, 1
      %v2836 = vor.u32 %v2831, %v2835
      %v2838 = vshll.u32 %v1938, 16
      %v2840 = vrot.slane %v2838, 1
      %v2841 = vsel %vm1943, %v2836, %v2840
      %s2842 = scalar_lea.vmem %s4, 64
      %v2843 = vld [vmem:[%s2842] sm:$0xf]
      %v2844 = vld [vmem:[%s2842 + $0x4] sm:$0xf]
      %v2845 = vld [vmem:[%s2842 + $0x8] sm:$0xf]
      %v2846 = vld [vmem:[%s2842 + $0xc] sm:$0xf]
      %v2851 = vunpack.c.l.b16 %v2843
      %v2852 = vunpack.c.l.b16 %v2844
      %v2853 = vunpack.c.l.b16 %v2845
      %v2854 = vunpack.c.l.b16 %v2846
      %v2855 = vpack.c.b16 %v2852, %v2851
      %v2856 = vpack.c.b16 %v2854, %v2853
      %v2860 = vsel %vm429, %v2841, 0
      %2862 = vmatpush.bf16.msra.mxu0 0
      %2863 = vmatpush.bf16.msra.mxu0 0
      %2864 = vmatpush.bf16.msra.mxu0 0
      %2865 = vmatpush.bf16.msra.mxu0 0
      %2866 = vmatpush.bf16.msra.mxu0 0
      %2867 = vmatpush.bf16.msra.mxu0 0
      %2868 = vmatpush.bf16.msra.mxu0 %v2856
      %2869 = vmatpush.bf16.msra.mxu0 %v2855
      %2870 = vmatmul.bf16.gmra.mxu0 %v2157
      %v2871 = vpop.f32.mrf.mxu0
      %v2872 = vadd.f32 0.0, %v2871
      %v2873 = vpop.f32.mrf.mxu0
      %v2874 = vadd.f32 0.0, %v2873
      %2875 = vmatmul.bf16.gmra.mxu0 %v2160
      %v2876 = vpop.f32.mrf.mxu0
      %v2877 = vadd.f32 0.0, %v2876
      %v2878 = vpop.f32.mrf.mxu0
      %v2879 = vadd.f32 0.0, %v2878
      %2880 = vmatmul.bf16.gmra.mxu0 %v2163
      %v2881 = vpop.f32.mrf.mxu0
      %v2882 = vadd.f32 0.0, %v2881
      %v2883 = vpop.f32.mrf.mxu0
      %v2884 = vadd.f32 0.0, %v2883
      %2885 = vmatmul.bf16.gmra.mxu0 %v2166
      %v2886 = vpop.f32.mrf.mxu0
      %v2887 = vadd.f32 0.0, %v2886
      %v2888 = vpop.f32.mrf.mxu0
      %v2889 = vadd.f32 0.0, %v2888
      %2890 = vmatmul.bf16.gmra.mxu0 %v2169
      %v2891 = vpop.f32.mrf.mxu0
      %v2892 = vadd.f32 0.0, %v2891
      %v2893 = vpop.f32.mrf.mxu0
      %v2894 = vadd.f32 0.0, %v2893
      %2895 = vmatmul.bf16.gmra.mxu0 %v2172
      %v2896 = vpop.f32.mrf.mxu0
      %v2897 = vadd.f32 0.0, %v2896
      %v2898 = vpop.f32.mrf.mxu0
      %v2899 = vadd.f32 0.0, %v2898
      %2900 = vmatmul.bf16.gmra.mxu0 %v2175
      %v2901 = vpop.f32.mrf.mxu0
      %v2902 = vadd.f32 0.0, %v2901
      %v2903 = vpop.f32.mrf.mxu0
      %v2904 = vadd.f32 0.0, %v2903
      %2905 = vmatmul.bf16.gmra.mxu0 %v2178
      %v2906 = vpop.f32.mrf.mxu0
      %v2907 = vadd.f32 0.0, %v2906
      %v2908 = vpop.f32.mrf.mxu0
      %v2909 = vadd.f32 0.0, %v2908
      %2910 = vmatmul.bf16.gmra.mxu0 %v2181
      %v2911 = vpop.f32.mrf.mxu0
      %v2912 = vadd.f32 0.0, %v2911
      %v2913 = vpop.f32.mrf.mxu0
      %v2914 = vadd.f32 0.0, %v2913
      %2915 = vmatmul.bf16.gmra.mxu0 %v2184
      %v2916 = vpop.f32.mrf.mxu0
      %v2917 = vadd.f32 0.0, %v2916
      %v2918 = vpop.f32.mrf.mxu0
      %v2919 = vadd.f32 0.0, %v2918
      %2920 = vmatmul.bf16.gmra.mxu0 %v2187
      %v2921 = vpop.f32.mrf.mxu0
      %v2922 = vadd.f32 0.0, %v2921
      %v2923 = vpop.f32.mrf.mxu0
      %v2924 = vadd.f32 0.0, %v2923
      %2925 = vmatmul.bf16.gmra.mxu0 %v2190
      %v2926 = vpop.f32.mrf.mxu0
      %v2927 = vadd.f32 0.0, %v2926
      %v2928 = vpop.f32.mrf.mxu0
      %v2929 = vadd.f32 0.0, %v2928
      %2930 = vmatmul.bf16.gmra.mxu0 %v2193
      %v2931 = vpop.f32.mrf.mxu0
      %v2932 = vadd.f32 0.0, %v2931
      %v2933 = vpop.f32.mrf.mxu0
      %v2934 = vadd.f32 0.0, %v2933
      %2935 = vmatmul.bf16.gmra.mxu0 %v2196
      %v2936 = vpop.f32.mrf.mxu0
      %v2937 = vadd.f32 0.0, %v2936
      %v2938 = vpop.f32.mrf.mxu0
      %v2939 = vadd.f32 0.0, %v2938
      %2940 = vmatmul.bf16.gmra.mxu0 %v2199
      %v2941 = vpop.f32.mrf.mxu0
      %v2942 = vadd.f32 0.0, %v2941
      %v2943 = vpop.f32.mrf.mxu0
      %v2944 = vadd.f32 0.0, %v2943
      %2945 = vmatmul.bf16.gmra.mxu0 %v2860
      %v2946 = vpop.f32.mrf.mxu0
      %v2947 = vadd.f32 0.0, %v2946
      %v2948 = vpop.f32.mrf.mxu0
      %v2949 = vadd.f32 0.0, %v2948
      %2950 = vdwg.mxu0
      %v2951 = vadd.f32 %v2799, %v2872
      %v2952 = vadd.f32 %v2800, %v2874
      %v2953 = vadd.f32 %v2801, %v2877
      %v2954 = vadd.f32 %v2802, %v2879
      %v2955 = vadd.f32 %v2803, %v2882
      %v2956 = vadd.f32 %v2804, %v2884
      %v2957 = vadd.f32 %v2805, %v2887
      %v2958 = vadd.f32 %v2806, %v2889
      %v2959 = vadd.f32 %v2807, %v2892
      %v2960 = vadd.f32 %v2808, %v2894
      %v2961 = vadd.f32 %v2809, %v2897
      %v2962 = vadd.f32 %v2810, %v2899
      %v2963 = vadd.f32 %v2811, %v2902
      %v2964 = vadd.f32 %v2812, %v2904
      %v2965 = vadd.f32 %v2813, %v2907
      %v2966 = vadd.f32 %v2814, %v2909
      %v2967 = vadd.f32 %v2815, %v2912
      %v2968 = vadd.f32 %v2816, %v2914
      %v2969 = vadd.f32 %v2817, %v2917
      %v2970 = vadd.f32 %v2818, %v2919
      %v2971 = vadd.f32 %v2819, %v2922
      %v2972 = vadd.f32 %v2820, %v2924
      %v2973 = vadd.f32 %v2821, %v2927
      %v2974 = vadd.f32 %v2822, %v2929
      %v2975 = vadd.f32 %v2823, %v2932
      %v2976 = vadd.f32 %v2824, %v2934
      %v2977 = vadd.f32 %v2825, %v2937
      %v2978 = vadd.f32 %v2826, %v2939
      %v2979 = vadd.f32 %v2827, %v2942
      %v2980 = vadd.f32 %v2828, %v2944
      %v2981 = vadd.f32 %v2829, %v2947
      %v2982 = vadd.f32 %v2830, %v2949
      %v2985 = vrot.slane %v1921, 1
      %v2986 = vrot.slane %v1938, 1
      %v2987 = vsel %vm2455, %v2985, %v2986
      %s2988 = scalar_lea.vmem %s4, 80
      %v2989 = vld [vmem:[%s2988] sm:$0xf]
      %v2990 = vld [vmem:[%s2988 + $0x4] sm:$0xf]
      %v2991 = vld [vmem:[%s2988 + $0x8] sm:$0xf]
      %v2992 = vld [vmem:[%s2988 + $0xc] sm:$0xf]
      %v2997 = vunpack.c.l.b16 %v2989
      %v2998 = vunpack.c.l.b16 %v2990
      %v2999 = vunpack.c.l.b16 %v2991
      %v3000 = vunpack.c.l.b16 %v2992
      %v3001 = vpack.c.b16 %v2998, %v2997
      %v3002 = vpack.c.b16 %v3000, %v2999
      %v3006 = vsel %vm429, %v2987, 0
      %3008 = vmatpush.bf16.msra.mxu0 0
      %3009 = vmatpush.bf16.msra.mxu0 0
      %3010 = vmatpush.bf16.msra.mxu0 0
      %3011 = vmatpush.bf16.msra.mxu0 0
      %3012 = vmatpush.bf16.msra.mxu0 0
      %3013 = vmatpush.bf16.msra.mxu0 0
      %3014 = vmatpush.bf16.msra.mxu0 %v3002
      %3015 = vmatpush.bf16.msra.mxu0 %v3001
      %3016 = vmatmul.bf16.gmra.mxu0 %v2525
      %v3017 = vpop.f32.mrf.mxu0
      %v3018 = vadd.f32 0.0, %v3017
      %v3019 = vpop.f32.mrf.mxu0
      %v3020 = vadd.f32 0.0, %v3019
      %3021 = vmatmul.bf16.gmra.mxu0 %v2528
      %v3022 = vpop.f32.mrf.mxu0
      %v3023 = vadd.f32 0.0, %v3022
      %v3024 = vpop.f32.mrf.mxu0
      %v3025 = vadd.f32 0.0, %v3024
      %3026 = vmatmul.bf16.gmra.mxu0 %v2531
      %v3027 = vpop.f32.mrf.mxu0
      %v3028 = vadd.f32 0.0, %v3027
      %v3029 = vpop.f32.mrf.mxu0
      %v3030 = vadd.f32 0.0, %v3029
      %3031 = vmatmul.bf16.gmra.mxu0 %v2534
      %v3032 = vpop.f32.mrf.mxu0
      %v3033 = vadd.f32 0.0, %v3032
      %v3034 = vpop.f32.mrf.mxu0
      %v3035 = vadd.f32 0.0, %v3034
      %3036 = vmatmul.bf16.gmra.mxu0 %v2537
      %v3037 = vpop.f32.mrf.mxu0
      %v3038 = vadd.f32 0.0, %v3037
      %v3039 = vpop.f32.mrf.mxu0
      %v3040 = vadd.f32 0.0, %v3039
      %3041 = vmatmul.bf16.gmra.mxu0 %v2540
      %v3042 = vpop.f32.mrf.mxu0
      %v3043 = vadd.f32 0.0, %v3042
      %v3044 = vpop.f32.mrf.mxu0
      %v3045 = vadd.f32 0.0, %v3044
      %3046 = vmatmul.bf16.gmra.mxu0 %v2543
      %v3047 = vpop.f32.mrf.mxu0
      %v3048 = vadd.f32 0.0, %v3047
      %v3049 = vpop.f32.mrf.mxu0
      %v3050 = vadd.f32 0.0, %v3049
      %3051 = vmatmul.bf16.gmra.mxu0 %v2546
      %v3052 = vpop.f32.mrf.mxu0
      %v3053 = vadd.f32 0.0, %v3052
      %v3054 = vpop.f32.mrf.mxu0
      %v3055 = vadd.f32 0.0, %v3054
      %3056 = vmatmul.bf16.gmra.mxu0 %v2549
      %v3057 = vpop.f32.mrf.mxu0
      %v3058 = vadd.f32 0.0, %v3057
      %v3059 = vpop.f32.mrf.mxu0
      %v3060 = vadd.f32 0.0, %v3059
      %3061 = vmatmul.bf16.gmra.mxu0 %v2552
      %v3062 = vpop.f32.mrf.mxu0
      %v3063 = vadd.f32 0.0, %v3062
      %v3064 = vpop.f32.mrf.mxu0
      %v3065 = vadd.f32 0.0, %v3064
      %3066 = vmatmul.bf16.gmra.mxu0 %v2555
      %v3067 = vpop.f32.mrf.mxu0
      %v3068 = vadd.f32 0.0, %v3067
      %v3069 = vpop.f32.mrf.mxu0
      %v3070 = vadd.f32 0.0, %v3069
      %3071 = vmatmul.bf16.gmra.mxu0 %v2558
      %v3072 = vpop.f32.mrf.mxu0
      %v3073 = vadd.f32 0.0, %v3072
      %v3074 = vpop.f32.mrf.mxu0
      %v3075 = vadd.f32 0.0, %v3074
      %3076 = vmatmul.bf16.gmra.mxu0 %v2561
      %v3077 = vpop.f32.mrf.mxu0
      %v3078 = vadd.f32 0.0, %v3077
      %v3079 = vpop.f32.mrf.mxu0
      %v3080 = vadd.f32 0.0, %v3079
      %3081 = vmatmul.bf16.gmra.mxu0 %v2564
      %v3082 = vpop.f32.mrf.mxu0
      %v3083 = vadd.f32 0.0, %v3082
      %v3084 = vpop.f32.mrf.mxu0
      %v3085 = vadd.f32 0.0, %v3084
      %3086 = vmatmul.bf16.gmra.mxu0 %v2567
      %v3087 = vpop.f32.mrf.mxu0
      %v3088 = vadd.f32 0.0, %v3087
      %v3089 = vpop.f32.mrf.mxu0
      %v3090 = vadd.f32 0.0, %v3089
      %3091 = vmatmul.bf16.gmra.mxu0 %v3006
      %v3092 = vpop.f32.mrf.mxu0
      %v3093 = vadd.f32 0.0, %v3092
      %v3094 = vpop.f32.mrf.mxu0
      %v3095 = vadd.f32 0.0, %v3094
      %3096 = vdwg.mxu0
      %v3097 = vadd.f32 %v2951, %v3018
      %v3098 = vadd.f32 %v2952, %v3020
      %v3099 = vadd.f32 %v2953, %v3023
      %v3100 = vadd.f32 %v2954, %v3025
      %v3101 = vadd.f32 %v2955, %v3028
      %v3102 = vadd.f32 %v2956, %v3030
      %v3103 = vadd.f32 %v2957, %v3033
      %v3104 = vadd.f32 %v2958, %v3035
      %v3105 = vadd.f32 %v2959, %v3038
      %v3106 = vadd.f32 %v2960, %v3040
      %v3107 = vadd.f32 %v2961, %v3043
      %v3108 = vadd.f32 %v2962, %v3045
      %v3109 = vadd.f32 %v2963, %v3048
      %v3110 = vadd.f32 %v2964, %v3050
      %v3111 = vadd.f32 %v2965, %v3053
      %v3112 = vadd.f32 %v2966, %v3055
      %v3113 = vadd.f32 %v2967, %v3058
      %v3114 = vadd.f32 %v2968, %v3060
      %v3115 = vadd.f32 %v2969, %v3063
      %v3116 = vadd.f32 %v2970, %v3065
      %v3117 = vadd.f32 %v2971, %v3068
      %v3118 = vadd.f32 %v2972, %v3070
      %v3119 = vadd.f32 %v2973, %v3073
      %v3120 = vadd.f32 %v2974, %v3075
      %v3121 = vadd.f32 %v2975, %v3078
      %v3122 = vadd.f32 %v2976, %v3080
      %v3123 = vadd.f32 %v2977, %v3083
      %v3124 = vadd.f32 %v2978, %v3085
      %v3125 = vadd.f32 %v2979, %v3088
      %v3126 = vadd.f32 %v2980, %v3090
      %v3127 = vadd.f32 %v2981, %v3093
      %v3128 = vadd.f32 %v2982, %v3095
      %s3129 = scalar_lea.vmem %s4, 96
      %v3130 = vld [vmem:[%s3129] sm:$0xf]
      %v3131 = vld [vmem:[%s3129 + $0x4] sm:$0xf]
      %v3132 = vld [vmem:[%s3129 + $0x8] sm:$0xf]
      %v3133 = vld [vmem:[%s3129 + $0xc] sm:$0xf]
      %v3138 = vunpack.c.l.b16 %v3130
      %v3139 = vunpack.c.l.b16 %v3131
      %v3140 = vunpack.c.l.b16 %v3132
      %v3141 = vunpack.c.l.b16 %v3133
      %v3142 = vpack.c.b16 %v3139, %v3138
      %v3143 = vpack.c.b16 %v3141, %v3140
      %3146 = vmatpush.bf16.msra.mxu0 0
      %3147 = vmatpush.bf16.msra.mxu0 0
      %3148 = vmatpush.bf16.msra.mxu0 0
      %3149 = vmatpush.bf16.msra.mxu0 0
      %3150 = vmatpush.bf16.msra.mxu0 0
      %3151 = vmatpush.bf16.msra.mxu0 0
      %3152 = vmatpush.bf16.msra.mxu0 %v3143
      %3153 = vmatpush.bf16.msra.mxu0 %v3142
      %3154 = vmatmul.bf16.gmra.mxu0 %v2306
      %v3155 = vpop.f32.mrf.mxu0
      %v3156 = vadd.f32 0.0, %v3155
      %v3157 = vpop.f32.mrf.mxu0
      %v3158 = vadd.f32 0.0, %v3157
      %3159 = vmatmul.bf16.gmra.mxu0 %v2308
      %v3160 = vpop.f32.mrf.mxu0
      %v3161 = vadd.f32 0.0, %v3160
      %v3162 = vpop.f32.mrf.mxu0
      %v3163 = vadd.f32 0.0, %v3162
      %3164 = vmatmul.bf16.gmra.mxu0 %v2310
      %v3165 = vpop.f32.mrf.mxu0
      %v3166 = vadd.f32 0.0, %v3165
      %v3167 = vpop.f32.mrf.mxu0
      %v3168 = vadd.f32 0.0, %v3167
      %3169 = vmatmul.bf16.gmra.mxu0 %v2312
      %v3170 = vpop.f32.mrf.mxu0
      %v3171 = vadd.f32 0.0, %v3170
      %v3172 = vpop.f32.mrf.mxu0
      %v3173 = vadd.f32 0.0, %v3172
      %3174 = vmatmul.bf16.gmra.mxu0 %v2314
      %v3175 = vpop.f32.mrf.mxu0
      %v3176 = vadd.f32 0.0, %v3175
      %v3177 = vpop.f32.mrf.mxu0
      %v3178 = vadd.f32 0.0, %v3177
      %3179 = vmatmul.bf16.gmra.mxu0 %v2316
      %v3180 = vpop.f32.mrf.mxu0
      %v3181 = vadd.f32 0.0, %v3180
      %v3182 = vpop.f32.mrf.mxu0
      %v3183 = vadd.f32 0.0, %v3182
      %3184 = vmatmul.bf16.gmra.mxu0 %v2318
      %v3185 = vpop.f32.mrf.mxu0
      %v3186 = vadd.f32 0.0, %v3185
      %v3187 = vpop.f32.mrf.mxu0
      %v3188 = vadd.f32 0.0, %v3187
      %3189 = vmatmul.bf16.gmra.mxu0 %v2320
      %v3190 = vpop.f32.mrf.mxu0
      %v3191 = vadd.f32 0.0, %v3190
      %v3192 = vpop.f32.mrf.mxu0
      %v3193 = vadd.f32 0.0, %v3192
      %3194 = vmatmul.bf16.gmra.mxu0 %v2322
      %v3195 = vpop.f32.mrf.mxu0
      %v3196 = vadd.f32 0.0, %v3195
      %v3197 = vpop.f32.mrf.mxu0
      %v3198 = vadd.f32 0.0, %v3197
      %3199 = vmatmul.bf16.gmra.mxu0 %v2324
      %v3200 = vpop.f32.mrf.mxu0
      %v3201 = vadd.f32 0.0, %v3200
      %v3202 = vpop.f32.mrf.mxu0
      %v3203 = vadd.f32 0.0, %v3202
      %3204 = vmatmul.bf16.gmra.mxu0 %v2326
      %v3205 = vpop.f32.mrf.mxu0
      %v3206 = vadd.f32 0.0, %v3205
      %v3207 = vpop.f32.mrf.mxu0
      %v3208 = vadd.f32 0.0, %v3207
      %3209 = vmatmul.bf16.gmra.mxu0 %v2328
      %v3210 = vpop.f32.mrf.mxu0
      %v3211 = vadd.f32 0.0, %v3210
      %v3212 = vpop.f32.mrf.mxu0
      %v3213 = vadd.f32 0.0, %v3212
      %3214 = vmatmul.bf16.gmra.mxu0 %v2330
      %v3215 = vpop.f32.mrf.mxu0
      %v3216 = vadd.f32 0.0, %v3215
      %v3217 = vpop.f32.mrf.mxu0
      %v3218 = vadd.f32 0.0, %v3217
      %3219 = vmatmul.bf16.gmra.mxu0 %v2332
      %v3220 = vpop.f32.mrf.mxu0
      %v3221 = vadd.f32 0.0, %v3220
      %v3222 = vpop.f32.mrf.mxu0
      %v3223 = vadd.f32 0.0, %v3222
      %3224 = vmatmul.bf16.gmra.mxu0 %v2708
      %v3225 = vpop.f32.mrf.mxu0
      %v3226 = vadd.f32 0.0, %v3225
      %v3227 = vpop.f32.mrf.mxu0
      %v3228 = vadd.f32 0.0, %v3227
      %3229 = vmatmul.bf16.gmra.mxu0 %v2302
      %v3230 = vpop.f32.mrf.mxu0
      %v3231 = vadd.f32 0.0, %v3230
      %v3232 = vpop.f32.mrf.mxu0
      %v3233 = vadd.f32 0.0, %v3232
      %3234 = vdwg.mxu0
      %v3235 = vadd.f32 %v3097, %v3156
      %v3236 = vadd.f32 %v3098, %v3158
      %v3237 = vadd.f32 %v3099, %v3161
      %v3238 = vadd.f32 %v3100, %v3163
      %v3239 = vadd.f32 %v3101, %v3166
      %v3240 = vadd.f32 %v3102, %v3168
      %v3241 = vadd.f32 %v3103, %v3171
      %v3242 = vadd.f32 %v3104, %v3173
      %v3243 = vadd.f32 %v3105, %v3176
      %v3244 = vadd.f32 %v3106, %v3178
      %v3245 = vadd.f32 %v3107, %v3181
      %v3246 = vadd.f32 %v3108, %v3183
      %v3247 = vadd.f32 %v3109, %v3186
      %v3248 = vadd.f32 %v3110, %v3188
      %v3249 = vadd.f32 %v3111, %v3191
      %v3250 = vadd.f32 %v3112, %v3193
      %v3251 = vadd.f32 %v3113, %v3196
      %v3252 = vadd.f32 %v3114, %v3198
      %v3253 = vadd.f32 %v3115, %v3201
      %v3254 = vadd.f32 %v3116, %v3203
      %v3255 = vadd.f32 %v3117, %v3206
      %v3256 = vadd.f32 %v3118, %v3208
      %v3257 = vadd.f32 %v3119, %v3211
      %v3258 = vadd.f32 %v3120, %v3213
      %v3259 = vadd.f32 %v3121, %v3216
      %v3260 = vadd.f32 %v3122, %v3218
      %v3261 = vadd.f32 %v3123, %v3221
      %v3262 = vadd.f32 %v3124, %v3223
      %v3263 = vadd.f32 %v3125, %v3226
      %v3264 = vadd.f32 %v3126, %v3228
      %v3265 = vadd.f32 %v3127, %v3231
      %v3266 = vadd.f32 %v3128, %v3233
      %s3267 = scalar_lea.vmem %s4, 112
      %v3268 = vld [vmem:[%s3267] sm:$0xf]
      %v3269 = vld [vmem:[%s3267 + $0x4] sm:$0xf]
      %v3270 = vld [vmem:[%s3267 + $0x8] sm:$0xf]
      %v3271 = vld [vmem:[%s3267 + $0xc] sm:$0xf]
      %v3276 = vunpack.c.l.b16 %v3268
      %v3277 = vunpack.c.l.b16 %v3269
      %v3278 = vunpack.c.l.b16 %v3270
      %v3279 = vunpack.c.l.b16 %v3271
      %v3280 = vpack.c.b16 %v3277, %v3276
      %v3281 = vpack.c.b16 %v3279, %v3278
      %3284 = vmatpush.bf16.msra.mxu0 0
      %3285 = vmatpush.bf16.msra.mxu0 0
      %3286 = vmatpush.bf16.msra.mxu0 0
      %3287 = vmatpush.bf16.msra.mxu0 0
      %3288 = vmatpush.bf16.msra.mxu0 0
      %3289 = vmatpush.bf16.msra.mxu0 0
      %3290 = vmatpush.bf16.msra.mxu0 %v3281
      %3291 = vmatpush.bf16.msra.mxu0 %v3280
      %3292 = vmatmul.bf16.gmra.mxu0 %v2160
      %v3293 = vpop.f32.mrf.mxu0
      %v3294 = vadd.f32 0.0, %v3293
      %v3295 = vpop.f32.mrf.mxu0
      %v3296 = vadd.f32 0.0, %v3295
      %3297 = vmatmul.bf16.gmra.mxu0 %v2163
      %v3298 = vpop.f32.mrf.mxu0
      %v3299 = vadd.f32 0.0, %v3298
      %v3300 = vpop.f32.mrf.mxu0
      %v3301 = vadd.f32 0.0, %v3300
      %3302 = vmatmul.bf16.gmra.mxu0 %v2166
      %v3303 = vpop.f32.mrf.mxu0
      %v3304 = vadd.f32 0.0, %v3303
      %v3305 = vpop.f32.mrf.mxu0
      %v3306 = vadd.f32 0.0, %v3305
      %3307 = vmatmul.bf16.gmra.mxu0 %v2169
      %v3308 = vpop.f32.mrf.mxu0
      %v3309 = vadd.f32 0.0, %v3308
      %v3310 = vpop.f32.mrf.mxu0
      %v3311 = vadd.f32 0.0, %v3310
      %3312 = vmatmul.bf16.gmra.mxu0 %v2172
      %v3313 = vpop.f32.mrf.mxu0
      %v3314 = vadd.f32 0.0, %v3313
      %v3315 = vpop.f32.mrf.mxu0
      %v3316 = vadd.f32 0.0, %v3315
      %3317 = vmatmul.bf16.gmra.mxu0 %v2175
      %v3318 = vpop.f32.mrf.mxu0
      %v3319 = vadd.f32 0.0, %v3318
      %v3320 = vpop.f32.mrf.mxu0
      %v3321 = vadd.f32 0.0, %v3320
      %3322 = vmatmul.bf16.gmra.mxu0 %v2178
      %v3323 = vpop.f32.mrf.mxu0
      %v3324 = vadd.f32 0.0, %v3323
      %v3325 = vpop.f32.mrf.mxu0
      %v3326 = vadd.f32 0.0, %v3325
      %3327 = vmatmul.bf16.gmra.mxu0 %v2181
      %v3328 = vpop.f32.mrf.mxu0
      %v3329 = vadd.f32 0.0, %v3328
      %v3330 = vpop.f32.mrf.mxu0
      %v3331 = vadd.f32 0.0, %v3330
      %3332 = vmatmul.bf16.gmra.mxu0 %v2184
      %v3333 = vpop.f32.mrf.mxu0
      %v3334 = vadd.f32 0.0, %v3333
      %v3335 = vpop.f32.mrf.mxu0
      %v3336 = vadd.f32 0.0, %v3335
      %3337 = vmatmul.bf16.gmra.mxu0 %v2187
      %v3338 = vpop.f32.mrf.mxu0
      %v3339 = vadd.f32 0.0, %v3338
      %v3340 = vpop.f32.mrf.mxu0
      %v3341 = vadd.f32 0.0, %v3340
      %3342 = vmatmul.bf16.gmra.mxu0 %v2190
      %v3343 = vpop.f32.mrf.mxu0
      %v3344 = vadd.f32 0.0, %v3343
      %v3345 = vpop.f32.mrf.mxu0
      %v3346 = vadd.f32 0.0, %v3345
      %3347 = vmatmul.bf16.gmra.mxu0 %v2193
      %v3348 = vpop.f32.mrf.mxu0
      %v3349 = vadd.f32 0.0, %v3348
      %v3350 = vpop.f32.mrf.mxu0
      %v3351 = vadd.f32 0.0, %v3350
      %3352 = vmatmul.bf16.gmra.mxu0 %v2196
      %v3353 = vpop.f32.mrf.mxu0
      %v3354 = vadd.f32 0.0, %v3353
      %v3355 = vpop.f32.mrf.mxu0
      %v3356 = vadd.f32 0.0, %v3355
      %3357 = vmatmul.bf16.gmra.mxu0 %v2199
      %v3358 = vpop.f32.mrf.mxu0
      %v3359 = vadd.f32 0.0, %v3358
      %v3360 = vpop.f32.mrf.mxu0
      %v3361 = vadd.f32 0.0, %v3360
      %3362 = vmatmul.bf16.gmra.mxu0 %v2860
      %v3363 = vpop.f32.mrf.mxu0
      %v3364 = vadd.f32 0.0, %v3363
      %v3365 = vpop.f32.mrf.mxu0
      %v3366 = vadd.f32 0.0, %v3365
      %3367 = vmatmul.bf16.gmra.mxu0 %v2154
      %v3368 = vpop.f32.mrf.mxu0
      %v3369 = vadd.f32 0.0, %v3368
      %v3370 = vpop.f32.mrf.mxu0
      %v3371 = vadd.f32 0.0, %v3370
      %3372 = vdwg.mxu0
      %v3373 = vadd.f32 %v3235, %v3294
      %v3374 = vadd.f32 %v3236, %v3296
      %v3375 = vadd.f32 %v3237, %v3299
      %v3376 = vadd.f32 %v3238, %v3301
      %v3377 = vadd.f32 %v3239, %v3304
      %v3378 = vadd.f32 %v3240, %v3306
      %v3379 = vadd.f32 %v3241, %v3309
      %v3380 = vadd.f32 %v3242, %v3311
      %v3381 = vadd.f32 %v3243, %v3314
      %v3382 = vadd.f32 %v3244, %v3316
      %v3383 = vadd.f32 %v3245, %v3319
      %v3384 = vadd.f32 %v3246, %v3321
      %v3385 = vadd.f32 %v3247, %v3324
      %v3386 = vadd.f32 %v3248, %v3326
      %v3387 = vadd.f32 %v3249, %v3329
      %v3388 = vadd.f32 %v3250, %v3331
      %v3389 = vadd.f32 %v3251, %v3334
      %v3390 = vadd.f32 %v3252, %v3336
      %v3391 = vadd.f32 %v3253, %v3339
      %v3392 = vadd.f32 %v3254, %v3341
      %v3393 = vadd.f32 %v3255, %v3344
      %v3394 = vadd.f32 %v3256, %v3346
      %v3395 = vadd.f32 %v3257, %v3349
      %v3396 = vadd.f32 %v3258, %v3351
      %v3397 = vadd.f32 %v3259, %v3354
      %v3398 = vadd.f32 %v3260, %v3356
      %v3399 = vadd.f32 %v3261, %v3359
      %v3400 = vadd.f32 %v3262, %v3361
      %v3401 = vadd.f32 %v3263, %v3364
      %v3402 = vadd.f32 %v3264, %v3366
      %v3403 = vadd.f32 %v3265, %v3369
      %v3404 = vadd.f32 %v3266, %v3371
      %s3405 = scalar_lea.vmem %s4, 128
      %v3406 = vld [vmem:[%s3405] sm:$0xf]
      %v3407 = vld [vmem:[%s3405 + $0x4] sm:$0xf]
      %v3408 = vld [vmem:[%s3405 + $0x8] sm:$0xf]
      %v3409 = vld [vmem:[%s3405 + $0xc] sm:$0xf]
      %v3414 = vunpack.c.l.b16 %v3406
      %v3415 = vunpack.c.l.b16 %v3407
      %v3416 = vunpack.c.l.b16 %v3408
      %v3417 = vunpack.c.l.b16 %v3409
      %v3418 = vpack.c.b16 %v3415, %v3414
      %v3419 = vpack.c.b16 %v3417, %v3416
      %3422 = vmatpush.bf16.msra.mxu0 0
      %3423 = vmatpush.bf16.msra.mxu0 0
      %3424 = vmatpush.bf16.msra.mxu0 0
      %3425 = vmatpush.bf16.msra.mxu0 0
      %3426 = vmatpush.bf16.msra.mxu0 0
      %3427 = vmatpush.bf16.msra.mxu0 0
      %3428 = vmatpush.bf16.msra.mxu0 %v3419
      %3429 = vmatpush.bf16.msra.mxu0 %v3418
      %3430 = vmatmul.bf16.gmra.mxu0 %v2528
      %v3431 = vpop.f32.mrf.mxu0
      %v3432 = vadd.f32 0.0, %v3431
      %v3433 = vpop.f32.mrf.mxu0
      %v3434 = vadd.f32 0.0, %v3433
      %3435 = vmatmul.bf16.gmra.mxu0 %v2531
      %v3436 = vpop.f32.mrf.mxu0
      %v3437 = vadd.f32 0.0, %v3436
      %v3438 = vpop.f32.mrf.mxu0
      %v3439 = vadd.f32 0.0, %v3438
      %3440 = vmatmul.bf16.gmra.mxu0 %v2534
      %v3441 = vpop.f32.mrf.mxu0
      %v3442 = vadd.f32 0.0, %v3441
      %v3443 = vpop.f32.mrf.mxu0
      %v3444 = vadd.f32 0.0, %v3443
      %3445 = vmatmul.bf16.gmra.mxu0 %v2537
      %v3446 = vpop.f32.mrf.mxu0
      %v3447 = vadd.f32 0.0, %v3446
      %v3448 = vpop.f32.mrf.mxu0
      %v3449 = vadd.f32 0.0, %v3448
      %3450 = vmatmul.bf16.gmra.mxu0 %v2540
      %v3451 = vpop.f32.mrf.mxu0
      %v3452 = vadd.f32 0.0, %v3451
      %v3453 = vpop.f32.mrf.mxu0
      %v3454 = vadd.f32 0.0, %v3453
      %3455 = vmatmul.bf16.gmra.mxu0 %v2543
      %v3456 = vpop.f32.mrf.mxu0
      %v3457 = vadd.f32 0.0, %v3456
      %v3458 = vpop.f32.mrf.mxu0
      %v3459 = vadd.f32 0.0, %v3458
      %3460 = vmatmul.bf16.gmra.mxu0 %v2546
      %v3461 = vpop.f32.mrf.mxu0
      %v3462 = vadd.f32 0.0, %v3461
      %v3463 = vpop.f32.mrf.mxu0
      %v3464 = vadd.f32 0.0, %v3463
      %3465 = vmatmul.bf16.gmra.mxu0 %v2549
      %v3466 = vpop.f32.mrf.mxu0
      %v3467 = vadd.f32 0.0, %v3466
      %v3468 = vpop.f32.mrf.mxu0
      %v3469 = vadd.f32 0.0, %v3468
      %3470 = vmatmul.bf16.gmra.mxu0 %v2552
      %v3471 = vpop.f32.mrf.mxu0
      %v3472 = vadd.f32 0.0, %v3471
      %v3473 = vpop.f32.mrf.mxu0
      %v3474 = vadd.f32 0.0, %v3473
      %3475 = vmatmul.bf16.gmra.mxu0 %v2555
      %v3476 = vpop.f32.mrf.mxu0
      %v3477 = vadd.f32 0.0, %v3476
      %v3478 = vpop.f32.mrf.mxu0
      %v3479 = vadd.f32 0.0, %v3478
      %3480 = vmatmul.bf16.gmra.mxu0 %v2558
      %v3481 = vpop.f32.mrf.mxu0
      %v3482 = vadd.f32 0.0, %v3481
      %v3483 = vpop.f32.mrf.mxu0
      %v3484 = vadd.f32 0.0, %v3483
      %3485 = vmatmul.bf16.gmra.mxu0 %v2561
      %v3486 = vpop.f32.mrf.mxu0
      %v3487 = vadd.f32 0.0, %v3486
      %v3488 = vpop.f32.mrf.mxu0
      %v3489 = vadd.f32 0.0, %v3488
      %3490 = vmatmul.bf16.gmra.mxu0 %v2564
      %v3491 = vpop.f32.mrf.mxu0
      %v3492 = vadd.f32 0.0, %v3491
      %v3493 = vpop.f32.mrf.mxu0
      %v3494 = vadd.f32 0.0, %v3493
      %3495 = vmatmul.bf16.gmra.mxu0 %v2567
      %v3496 = vpop.f32.mrf.mxu0
      %v3497 = vadd.f32 0.0, %v3496
      %v3498 = vpop.f32.mrf.mxu0
      %v3499 = vadd.f32 0.0, %v3498
      %3500 = vmatmul.bf16.gmra.mxu0 %v3006
      %v3501 = vpop.f32.mrf.mxu0
      %v3502 = vadd.f32 0.0, %v3501
      %v3503 = vpop.f32.mrf.mxu0
      %v3504 = vadd.f32 0.0, %v3503
      %3505 = vmatmul.bf16.gmra.mxu0 %v2522
      %v3506 = vpop.f32.mrf.mxu0
      %v3507 = vadd.f32 0.0, %v3506
      %v3508 = vpop.f32.mrf.mxu0
      %v3509 = vadd.f32 0.0, %v3508
      %3510 = vdwg.mxu0
      %v3511 = vadd.f32 %v3373, %v3432
      %v3512 = vadd.f32 %v3374, %v3434
      %v3513 = vadd.f32 %v3375, %v3437
      %v3514 = vadd.f32 %v3376, %v3439
      %v3515 = vadd.f32 %v3377, %v3442
      %v3516 = vadd.f32 %v3378, %v3444
      %v3517 = vadd.f32 %v3379, %v3447
      %v3518 = vadd.f32 %v3380, %v3449
      %v3519 = vadd.f32 %v3381, %v3452
      %v3520 = vadd.f32 %v3382, %v3454
      %v3521 = vadd.f32 %v3383, %v3457
      %v3522 = vadd.f32 %v3384, %v3459
      %v3523 = vadd.f32 %v3385, %v3462
      %v3524 = vadd.f32 %v3386, %v3464
      %v3525 = vadd.f32 %v3387, %v3467
      %v3526 = vadd.f32 %v3388, %v3469
      %v3527 = vadd.f32 %v3389, %v3472
      %v3528 = vadd.f32 %v3390, %v3474
      %v3529 = vadd.f32 %v3391, %v3477
      %v3530 = vadd.f32 %v3392, %v3479
      %v3531 = vadd.f32 %v3393, %v3482
      %v3532 = vadd.f32 %v3394, %v3484
      %v3533 = vadd.f32 %v3395, %v3487
      %v3534 = vadd.f32 %v3396, %v3489
      %v3535 = vadd.f32 %v3397, %v3492
      %v3536 = vadd.f32 %v3398, %v3494
      %v3537 = vadd.f32 %v3399, %v3497
      %v3538 = vadd.f32 %v3400, %v3499
      %v3539 = vadd.f32 %v3401, %v3502
      %v3540 = vadd.f32 %v3402, %v3504
      %v3541 = vadd.f32 %v3403, %v3507
      %v3542 = vadd.f32 %v3404, %v3509
      %v3544 = vperm.slane %v1766, 0
      %v3546 = vmul.f32 %v3511, %v3544
      %v3547 = vmul.f32 %v3512, %v3544
      %v3548 = vmul.f32 %v3513, %v3544
      %v3549 = vmul.f32 %v3514, %v3544
      %v3550 = vmul.f32 %v3515, %v3544
      %v3551 = vmul.f32 %v3516, %v3544
      %v3552 = vmul.f32 %v3517, %v3544
      %v3553 = vmul.f32 %v3518, %v3544
      %v3554 = vmul.f32 %v3519, %v3544
      %v3555 = vmul.f32 %v3520, %v3544
      %v3556 = vmul.f32 %v3521, %v3544
      %v3557 = vmul.f32 %v3522, %v3544
      %v3558 = vmul.f32 %v3523, %v3544
      %v3559 = vmul.f32 %v3524, %v3544
      %v3560 = vmul.f32 %v3525, %v3544
      %v3561 = vmul.f32 %v3526, %v3544
      %v3562 = vmul.f32 %v3527, %v3544
      %v3563 = vmul.f32 %v3528, %v3544
      %v3564 = vmul.f32 %v3529, %v3544
      %v3565 = vmul.f32 %v3530, %v3544
      %v3566 = vmul.f32 %v3531, %v3544
      %v3567 = vmul.f32 %v3532, %v3544
      %v3568 = vmul.f32 %v3533, %v3544
      %v3569 = vmul.f32 %v3534, %v3544
      %v3570 = vmul.f32 %v3535, %v3544
      %v3571 = vmul.f32 %v3536, %v3544
      %v3572 = vmul.f32 %v3537, %v3544
      %v3573 = vmul.f32 %v3538, %v3544
      %v3574 = vmul.f32 %v3539, %v3544
      %v3575 = vmul.f32 %v3540, %v3544
      %v3576 = vmul.f32 %v3541, %v3544
      %v3577 = vmul.f32 %v3542, %v3544
      %v3579 = vperm.slane %v1767, 0
      %v3581 = vadd.f32 %v3546, %v3579
      %v3582 = vadd.f32 %v3547, %v3579
      %v3583 = vadd.f32 %v3548, %v3579
      %v3584 = vadd.f32 %v3549, %v3579
      %v3585 = vadd.f32 %v3550, %v3579
      %v3586 = vadd.f32 %v3551, %v3579
      %v3587 = vadd.f32 %v3552, %v3579
      %v3588 = vadd.f32 %v3553, %v3579
      %v3589 = vadd.f32 %v3554, %v3579
      %v3590 = vadd.f32 %v3555, %v3579
      %v3591 = vadd.f32 %v3556, %v3579
      %v3592 = vadd.f32 %v3557, %v3579
      %v3593 = vadd.f32 %v3558, %v3579
      %v3594 = vadd.f32 %v3559, %v3579
      %v3595 = vadd.f32 %v3560, %v3579
      %v3596 = vadd.f32 %v3561, %v3579
      %v3597 = vadd.f32 %v3562, %v3579
      %v3598 = vadd.f32 %v3563, %v3579
      %v3599 = vadd.f32 %v3564, %v3579
      %v3600 = vadd.f32 %v3565, %v3579
      %v3601 = vadd.f32 %v3566, %v3579
      %v3602 = vadd.f32 %v3567, %v3579
      %v3603 = vadd.f32 %v3568, %v3579
      %v3604 = vadd.f32 %v3569, %v3579
      %v3605 = vadd.f32 %v3570, %v3579
      %v3606 = vadd.f32 %v3571, %v3579
      %v3607 = vadd.f32 %v3572, %v3579
      %v3608 = vadd.f32 %v3573, %v3579
      %v3609 = vadd.f32 %v3574, %v3579
      %v3610 = vadd.f32 %v3575, %v3579
      %v3611 = vadd.f32 %v3576, %v3579
      %v3612 = vadd.f32 %v3577, %v3579
      %v3613 = vmax.f32 %v3581, 0.0
      %v3614 = vmax.f32 %v3582, 0.0
      %v3615 = vmax.f32 %v3583, 0.0
      %v3616 = vmax.f32 %v3584, 0.0
      %v3617 = vmax.f32 %v3585, 0.0
      %v3618 = vmax.f32 %v3586, 0.0
      %v3619 = vmax.f32 %v3587, 0.0
      %v3620 = vmax.f32 %v3588, 0.0
      %v3621 = vmax.f32 %v3589, 0.0
      %v3622 = vmax.f32 %v3590, 0.0
      %v3623 = vmax.f32 %v3591, 0.0
      %v3624 = vmax.f32 %v3592, 0.0
      %v3625 = vmax.f32 %v3593, 0.0
      %v3626 = vmax.f32 %v3594, 0.0
      %v3627 = vmax.f32 %v3595, 0.0
      %v3628 = vmax.f32 %v3596, 0.0
      %v3629 = vmax.f32 %v3597, 0.0
      %v3630 = vmax.f32 %v3598, 0.0
      %v3631 = vmax.f32 %v3599, 0.0
      %v3632 = vmax.f32 %v3600, 0.0
      %v3633 = vmax.f32 %v3601, 0.0
      %v3634 = vmax.f32 %v3602, 0.0
      %v3635 = vmax.f32 %v3603, 0.0
      %v3636 = vmax.f32 %v3604, 0.0
      %v3637 = vmax.f32 %v3605, 0.0
      %v3638 = vmax.f32 %v3606, 0.0
      %v3639 = vmax.f32 %v3607, 0.0
      %v3640 = vmax.f32 %v3608, 0.0
      %v3641 = vmax.f32 %v3609, 0.0
      %v3642 = vmax.f32 %v3610, 0.0
      %v3643 = vmax.f32 %v3611, 0.0
      %v3644 = vmax.f32 %v3612, 0.0
      %v3645 = vpack.c.bf16 %v3613, %v3613
      %v3646 = vpack.c.bf16 %v3614, %v3614
      %v3647 = vpack.c.bf16 %v3615, %v3615
      %v3648 = vpack.c.bf16 %v3616, %v3616
      %v3649 = vpack.c.bf16 %v3617, %v3617
      %v3650 = vpack.c.bf16 %v3618, %v3618
      %v3651 = vpack.c.bf16 %v3619, %v3619
      %v3652 = vpack.c.bf16 %v3620, %v3620
      %v3653 = vpack.c.bf16 %v3621, %v3621
      %v3654 = vpack.c.bf16 %v3622, %v3622
      %v3655 = vpack.c.bf16 %v3623, %v3623
      %v3656 = vpack.c.bf16 %v3624, %v3624
      %v3657 = vpack.c.bf16 %v3625, %v3625
      %v3658 = vpack.c.bf16 %v3626, %v3626
      %v3659 = vpack.c.bf16 %v3627, %v3627
      %v3660 = vpack.c.bf16 %v3628, %v3628
      %v3661 = vpack.c.bf16 %v3629, %v3629
      %v3662 = vpack.c.bf16 %v3630, %v3630
      %v3663 = vpack.c.bf16 %v3631, %v3631
      %v3664 = vpack.c.bf16 %v3632, %v3632
      %v3665 = vpack.c.bf16 %v3633, %v3633
      %v3666 = vpack.c.bf16 %v3634, %v3634
      %v3667 = vpack.c.bf16 %v3635, %v3635
      %v3668 = vpack.c.bf16 %v3636, %v3636
      %v3669 = vpack.c.bf16 %v3637, %v3637
      %v3670 = vpack.c.bf16 %v3638, %v3638
      %v3671 = vpack.c.bf16 %v3639, %v3639
      %v3672 = vpack.c.bf16 %v3640, %v3640
      %v3673 = vpack.c.bf16 %v3641, %v3641
      %v3674 = vpack.c.bf16 %v3642, %v3642
      %v3675 = vpack.c.bf16 %v3643, %v3643
      %v3676 = vpack.c.bf16 %v3644, %v3644
      %v3677 = vld [vmem:[%s8] sm:$0x1]
      %v3678 = vld [vmem:[%s9] sm:$0x1]
      %v3711 = vunpack.c.l.b16 %v3645
      %v3712 = vunpack.c.l.b16 %v3646
      %v3713 = vunpack.c.l.b16 %v3647
      %v3714 = vunpack.c.l.b16 %v3648
      %v3715 = vunpack.c.l.b16 %v3649
      %v3716 = vunpack.c.l.b16 %v3650
      %v3717 = vunpack.c.l.b16 %v3651
      %v3718 = vunpack.c.l.b16 %v3652
      %v3719 = vunpack.c.l.b16 %v3653
      %v3720 = vunpack.c.l.b16 %v3654
      %v3721 = vunpack.c.l.b16 %v3655
      %v3722 = vunpack.c.l.b16 %v3656
      %v3723 = vunpack.c.l.b16 %v3657
      %v3724 = vunpack.c.l.b16 %v3658
      %v3725 = vunpack.c.l.b16 %v3659
      %v3726 = vunpack.c.l.b16 %v3660
      %v3727 = vunpack.c.l.b16 %v3661
      %v3728 = vunpack.c.l.b16 %v3662
      %v3729 = vunpack.c.l.b16 %v3663
      %v3730 = vunpack.c.l.b16 %v3664
      %v3731 = vunpack.c.l.b16 %v3665
      %v3732 = vunpack.c.l.b16 %v3666
      %v3733 = vunpack.c.l.b16 %v3667
      %v3734 = vunpack.c.l.b16 %v3668
      %v3735 = vunpack.c.l.b16 %v3669
      %v3736 = vunpack.c.l.b16 %v3670
      %v3737 = vunpack.c.l.b16 %v3671
      %v3738 = vunpack.c.l.b16 %v3672
      %v3739 = vunpack.c.l.b16 %v3673
      %v3740 = vunpack.c.l.b16 %v3674
      %v3741 = vunpack.c.l.b16 %v3675
      %v3742 = vunpack.c.l.b16 %v3676
      %v3743 = vpack.c.b16 %v3712, %v3711
      %v3744 = vpack.c.b16 %v3714, %v3713
      %v3745 = vpack.c.b16 %v3716, %v3715
      %v3746 = vpack.c.b16 %v3718, %v3717
      %v3747 = vpack.c.b16 %v3720, %v3719
      %v3748 = vpack.c.b16 %v3722, %v3721
      %v3749 = vpack.c.b16 %v3724, %v3723
      %v3750 = vpack.c.b16 %v3726, %v3725
      %v3751 = vpack.c.b16 %v3728, %v3727
      %v3752 = vpack.c.b16 %v3730, %v3729
      %v3753 = vpack.c.b16 %v3732, %v3731
      %v3754 = vpack.c.b16 %v3734, %v3733
      %v3755 = vpack.c.b16 %v3736, %v3735
      %v3756 = vpack.c.b16 %v3738, %v3737
      %v3757 = vpack.c.b16 %v3740, %v3739
      %v3758 = vpack.c.b16 %v3742, %v3741
      %v3760 = vshrl.u32 %v3743, 16
      %v3762 = vrot.slane %v3760, 7
      %v3763 = vshll.u32 %v3743, 16
      %v3765 = vor.u32 %v3762, %v3763
      %v3767 = vshrl.u32 %v3744, 16
      %v3769 = vrot.slane %v3767, 7
      %v3770 = vshll.u32 %v3744, 16
      %v3772 = vor.u32 %v3769, %v3770
      %v3774 = vshrl.u32 %v3745, 16
      %v3776 = vrot.slane %v3774, 7
      %v3777 = vshll.u32 %v3745, 16
      %v3779 = vor.u32 %v3776, %v3777
      %v3781 = vshrl.u32 %v3746, 16
      %v3783 = vrot.slane %v3781, 7
      %v3784 = vshll.u32 %v3746, 16
      %v3786 = vor.u32 %v3783, %v3784
      %v3788 = vshrl.u32 %v3747, 16
      %v3790 = vrot.slane %v3788, 7
      %v3791 = vshll.u32 %v3747, 16
      %v3793 = vor.u32 %v3790, %v3791
      %v3795 = vshrl.u32 %v3748, 16
      %v3797 = vrot.slane %v3795, 7
      %v3798 = vshll.u32 %v3748, 16
      %v3800 = vor.u32 %v3797, %v3798
      %v3802 = vshrl.u32 %v3749, 16
      %v3804 = vrot.slane %v3802, 7
      %v3805 = vshll.u32 %v3749, 16
      %v3807 = vor.u32 %v3804, %v3805
      %v3809 = vshrl.u32 %v3750, 16
      %v3811 = vrot.slane %v3809, 7
      %v3812 = vshll.u32 %v3750, 16
      %v3814 = vor.u32 %v3811, %v3812
      %v3816 = vshrl.u32 %v3751, 16
      %v3818 = vrot.slane %v3816, 7
      %v3819 = vshll.u32 %v3751, 16
      %v3821 = vor.u32 %v3818, %v3819
      %v3823 = vshrl.u32 %v3752, 16
      %v3825 = vrot.slane %v3823, 7
      %v3826 = vshll.u32 %v3752, 16
      %v3828 = vor.u32 %v3825, %v3826
      %v3830 = vshrl.u32 %v3753, 16
      %v3832 = vrot.slane %v3830, 7
      %v3833 = vshll.u32 %v3753, 16
      %v3835 = vor.u32 %v3832, %v3833
      %v3837 = vshrl.u32 %v3754, 16
      %v3839 = vrot.slane %v3837, 7
      %v3840 = vshll.u32 %v3754, 16
      %v3842 = vor.u32 %v3839, %v3840
      %v3844 = vshrl.u32 %v3755, 16
      %v3846 = vrot.slane %v3844, 7
      %v3847 = vshll.u32 %v3755, 16
      %v3849 = vor.u32 %v3846, %v3847
      %v3851 = vshrl.u32 %v3756, 16
      %v3853 = vrot.slane %v3851, 7
      %v3854 = vshll.u32 %v3756, 16
      %v3856 = vor.u32 %v3853, %v3854
      %v3858 = vshrl.u32 %v3757, 16
      %v3860 = vrot.slane %v3858, 7
      %v3861 = vshll.u32 %v3757, 16
      %v3863 = vor.u32 %v3860, %v3861
      %v3865 = vshrl.u32 %v3758, 16
      %v3867 = vrot.slane %v3865, 7
      %v3868 = vshll.u32 %v3758, 16
      %v3870 = vor.u32 %v3867, %v3868
      %v3903 = vsel %vm1053, 0, %v3765
      %v3904 = vsel %vm1053, 0, %v3772
      %v3905 = vsel %vm1053, 0, %v3779
      %v3906 = vsel %vm1053, 0, %v3786
      %v3907 = vsel %vm1053, 0, %v3793
      %v3908 = vsel %vm1053, 0, %v3800
      %v3909 = vsel %vm1053, 0, %v3807
      %v3910 = vsel %vm1053, 0, %v3814
      %v3911 = vsel %vm1053, 0, %v3821
      %v3912 = vsel %vm1053, 0, %v3828
      %v3913 = vsel %vm1053, 0, %v3835
      %v3914 = vsel %vm1053, 0, %v3842
      %v3915 = vsel %vm1053, 0, %v3849
      %v3916 = vsel %vm1053, 0, %v3856
      %v3917 = vsel %vm1053, 0, %v3863
      %v3918 = vsel %vm1053, 0, %v3870
      %v3919 = vsel %vm1053, %v3762, 0
      %v3920 = vsel %vm1053, %v3769, 0
      %v3921 = vsel %vm1053, %v3776, 0
      %v3922 = vsel %vm1053, %v3783, 0
      %v3923 = vsel %vm1053, %v3790, 0
      %v3924 = vsel %vm1053, %v3797, 0
      %v3925 = vsel %vm1053, %v3804, 0
      %v3926 = vsel %vm1053, %v3811, 0
      %v3927 = vsel %vm1053, %v3818, 0
      %v3928 = vsel %vm1053, %v3825, 0
      %v3929 = vsel %vm1053, %v3832, 0
      %v3930 = vsel %vm1053, %v3839, 0
      %v3931 = vsel %vm1053, %v3846, 0
      %v3932 = vsel %vm1053, %v3853, 0
      %v3933 = vsel %vm1053, %v3860, 0
      %v3934 = vsel %vm1053, %v3867, 0
      %v3935 = vld [vmem:[%s7] sm:$0xf]
      %v3936 = vld [vmem:[%s7 + $0x4] sm:$0xf]
      %v3938 = vshrl.u32 %v3903, 16
      %v3940 = vshll.u32 %v3903, 16
      %v3942 = vrot.slane %v3940, 1
      %v3943 = vor.u32 %v3938, %v3942
      %v3945 = vshll.u32 %v3919, 16
      %v3947 = vrot.slane %v3945, 1
      %v3948 = vsel %vm1943, %v3943, %v3947
      %v3950 = vshrl.u32 %v3904, 16
      %v3952 = vshll.u32 %v3904, 16
      %v3954 = vrot.slane %v3952, 1
      %v3955 = vor.u32 %v3950, %v3954
      %v3957 = vshll.u32 %v3920, 16
      %v3959 = vrot.slane %v3957, 1
      %v3960 = vsel %vm1943, %v3955, %v3959
      %v3962 = vshrl.u32 %v3905, 16
      %v3964 = vshll.u32 %v3905, 16
      %v3966 = vrot.slane %v3964, 1
      %v3967 = vor.u32 %v3962, %v3966
      %v3969 = vshll.u32 %v3921, 16
      %v3971 = vrot.slane %v3969, 1
      %v3972 = vsel %vm1943, %v3967, %v3971
      %v3974 = vshrl.u32 %v3906, 16
      %v3976 = vshll.u32 %v3906, 16
      %v3978 = vrot.slane %v3976, 1
      %v3979 = vor.u32 %v3974, %v3978
      %v3981 = vshll.u32 %v3922, 16
      %v3983 = vrot.slane %v3981, 1
      %v3984 = vsel %vm1943, %v3979, %v3983
      %v3986 = vshrl.u32 %v3907, 16
      %v3988 = vshll.u32 %v3907, 16
      %v3990 = vrot.slane %v3988, 1
      %v3991 = vor.u32 %v3986, %v3990
      %v3993 = vshll.u32 %v3923, 16
      %v3995 = vrot.slane %v3993, 1
      %v3996 = vsel %vm1943, %v3991, %v3995
      %v3998 = vshrl.u32 %v3908, 16
      %v4000 = vshll.u32 %v3908, 16
      %v4002 = vrot.slane %v4000, 1
      %v4003 = vor.u32 %v3998, %v4002
      %v4005 = vshll.u32 %v3924, 16
      %v4007 = vrot.slane %v4005, 1
      %v4008 = vsel %vm1943, %v4003, %v4007
      %v4010 = vshrl.u32 %v3909, 16
      %v4012 = vshll.u32 %v3909, 16
      %v4014 = vrot.slane %v4012, 1
      %v4015 = vor.u32 %v4010, %v4014
      %v4017 = vshll.u32 %v3925, 16
      %v4019 = vrot.slane %v4017, 1
      %v4020 = vsel %vm1943, %v4015, %v4019
      %v4022 = vshrl.u32 %v3910, 16
      %v4024 = vshll.u32 %v3910, 16
      %v4026 = vrot.slane %v4024, 1
      %v4027 = vor.u32 %v4022, %v4026
      %v4029 = vshll.u32 %v3926, 16
      %v4031 = vrot.slane %v4029, 1
      %v4032 = vsel %vm1943, %v4027, %v4031
      %v4034 = vshrl.u32 %v3911, 16
      %v4036 = vshll.u32 %v3911, 16
      %v4038 = vrot.slane %v4036, 1
      %v4039 = vor.u32 %v4034, %v4038
      %v4041 = vshll.u32 %v3927, 16
      %v4043 = vrot.slane %v4041, 1
      %v4044 = vsel %vm1943, %v4039, %v4043
      %v4046 = vshrl.u32 %v3912, 16
      %v4048 = vshll.u32 %v3912, 16
      %v4050 = vrot.slane %v4048, 1
      %v4051 = vor.u32 %v4046, %v4050
      %v4053 = vshll.u32 %v3928, 16
      %v4055 = vrot.slane %v4053, 1
      %v4056 = vsel %vm1943, %v4051, %v4055
      %v4058 = vshrl.u32 %v3913, 16
      %v4060 = vshll.u32 %v3913, 16
      %v4062 = vrot.slane %v4060, 1
      %v4063 = vor.u32 %v4058, %v4062
      %v4065 = vshll.u32 %v3929, 16
      %v4067 = vrot.slane %v4065, 1
      %v4068 = vsel %vm1943, %v4063, %v4067
      %v4070 = vshrl.u32 %v3914, 16
      %v4072 = vshll.u32 %v3914, 16
      %v4074 = vrot.slane %v4072, 1
      %v4075 = vor.u32 %v4070, %v4074
      %v4077 = vshll.u32 %v3930, 16
      %v4079 = vrot.slane %v4077, 1
      %v4080 = vsel %vm1943, %v4075, %v4079
      %v4082 = vshrl.u32 %v3915, 16
      %v4084 = vshll.u32 %v3915, 16
      %v4086 = vrot.slane %v4084, 1
      %v4087 = vor.u32 %v4082, %v4086
      %v4089 = vshll.u32 %v3931, 16
      %v4091 = vrot.slane %v4089, 1
      %v4092 = vsel %vm1943, %v4087, %v4091
      %v4094 = vshrl.u32 %v3916, 16
      %v4096 = vshll.u32 %v3916, 16
      %v4098 = vrot.slane %v4096, 1
      %v4099 = vor.u32 %v4094, %v4098
      %v4101 = vshll.u32 %v3932, 16
      %v4103 = vrot.slane %v4101, 1
      %v4104 = vsel %vm1943, %v4099, %v4103
      %v4106 = vshrl.u32 %v3917, 16
      %v4108 = vshll.u32 %v3917, 16
      %v4110 = vrot.slane %v4108, 1
      %v4111 = vor.u32 %v4106, %v4110
      %v4113 = vshll.u32 %v3933, 16
      %v4115 = vrot.slane %v4113, 1
      %v4116 = vsel %vm1943, %v4111, %v4115
      %s4117 = scalar_lea.vmem %s7, 8
      %v4118 = vld [vmem:[%s4117] sm:$0xf]
      %v4119 = vld [vmem:[%s4117 + $0x4] sm:$0xf]
      %v4122 = vunpack.c.l.b16 %v4118
      %v4123 = vunpack.c.l.b16 %v4119
      %v4124 = vpack.c.b16 %v4123, %v4122
      %v4126 = vsel %vm1733, %v1955, 0
      %v4129 = vsel %vm1733, %v3948, 0
      %v4132 = vsel %vm1733, %v3960, 0
      %v4135 = vsel %vm1733, %v3972, 0
      %v4138 = vsel %vm1733, %v3984, 0
      %v4141 = vsel %vm1733, %v3996, 0
      %v4144 = vsel %vm1733, %v4008, 0
      %v4147 = vsel %vm1733, %v4020, 0
      %v4150 = vsel %vm1733, %v4032, 0
      %v4153 = vsel %vm1733, %v4044, 0
      %v4156 = vsel %vm1733, %v4056, 0
      %v4159 = vsel %vm1733, %v4068, 0
      %v4162 = vsel %vm1733, %v4080, 0
      %v4165 = vsel %vm1733, %v4092, 0
      %v4168 = vsel %vm1733, %v4104, 0
      %v4171 = vsel %vm1733, %v4116, 0
      %4173 = vmatpush.bf16.msra.mxu0 0
      %4174 = vmatpush.bf16.msra.mxu0 0
      %4175 = vmatpush.bf16.msra.mxu0 0
      %4176 = vmatpush.bf16.msra.mxu0 0
      %4177 = vmatpush.bf16.msra.mxu0 0
      %4178 = vmatpush.bf16.msra.mxu0 0
      %4179 = vmatpush.bf16.msra.mxu0 0
      %4180 = vmatpush.bf16.msra.mxu0 %v4124
      %4181 = vmatmul.bf16.gmra.mxu0 %v4126
      %v4182 = vpop.f32.mrf.mxu0
      %v4183 = vadd.f32 0.0, %v4182
      %v4184 = vpop.f32.mrf.mxu0
      %v4185 = vadd.f32 0.0, %v4184
      %4186 = vmatmul.bf16.gmra.mxu0 %v4129
      %v4187 = vpop.f32.mrf.mxu0
      %v4188 = vadd.f32 0.0, %v4187
      %v4189 = vpop.f32.mrf.mxu0
      %v4190 = vadd.f32 0.0, %v4189
      %4191 = vmatmul.bf16.gmra.mxu0 %v4132
      %v4192 = vpop.f32.mrf.mxu0
      %v4193 = vadd.f32 0.0, %v4192
      %v4194 = vpop.f32.mrf.mxu0
      %v4195 = vadd.f32 0.0, %v4194
      %4196 = vmatmul.bf16.gmra.mxu0 %v4135
      %v4197 = vpop.f32.mrf.mxu0
      %v4198 = vadd.f32 0.0, %v4197
      %v4199 = vpop.f32.mrf.mxu0
      %v4200 = vadd.f32 0.0, %v4199
      %4201 = vmatmul.bf16.gmra.mxu0 %v4138
      %v4202 = vpop.f32.mrf.mxu0
      %v4203 = vadd.f32 0.0, %v4202
      %v4204 = vpop.f32.mrf.mxu0
      %v4205 = vadd.f32 0.0, %v4204
      %4206 = vmatmul.bf16.gmra.mxu0 %v4141
      %v4207 = vpop.f32.mrf.mxu0
      %v4208 = vadd.f32 0.0, %v4207
      %v4209 = vpop.f32.mrf.mxu0
      %v4210 = vadd.f32 0.0, %v4209
      %4211 = vmatmul.bf16.gmra.mxu0 %v4144
      %v4212 = vpop.f32.mrf.mxu0
      %v4213 = vadd.f32 0.0, %v4212
      %v4214 = vpop.f32.mrf.mxu0
      %v4215 = vadd.f32 0.0, %v4214
      %4216 = vmatmul.bf16.gmra.mxu0 %v4147
      %v4217 = vpop.f32.mrf.mxu0
      %v4218 = vadd.f32 0.0, %v4217
      %v4219 = vpop.f32.mrf.mxu0
      %v4220 = vadd.f32 0.0, %v4219
      %4221 = vmatmul.bf16.gmra.mxu0 %v4150
      %v4222 = vpop.f32.mrf.mxu0
      %v4223 = vadd.f32 0.0, %v4222
      %v4224 = vpop.f32.mrf.mxu0
      %v4225 = vadd.f32 0.0, %v4224
      %4226 = vmatmul.bf16.gmra.mxu0 %v4153
      %v4227 = vpop.f32.mrf.mxu0
      %v4228 = vadd.f32 0.0, %v4227
      %v4229 = vpop.f32.mrf.mxu0
      %v4230 = vadd.f32 0.0, %v4229
      %4231 = vmatmul.bf16.gmra.mxu0 %v4156
      %v4232 = vpop.f32.mrf.mxu0
      %v4233 = vadd.f32 0.0, %v4232
      %v4234 = vpop.f32.mrf.mxu0
      %v4235 = vadd.f32 0.0, %v4234
      %4236 = vmatmul.bf16.gmra.mxu0 %v4159
      %v4237 = vpop.f32.mrf.mxu0
      %v4238 = vadd.f32 0.0, %v4237
      %v4239 = vpop.f32.mrf.mxu0
      %v4240 = vadd.f32 0.0, %v4239
      %4241 = vmatmul.bf16.gmra.mxu0 %v4162
      %v4242 = vpop.f32.mrf.mxu0
      %v4243 = vadd.f32 0.0, %v4242
      %v4244 = vpop.f32.mrf.mxu0
      %v4245 = vadd.f32 0.0, %v4244
      %4246 = vmatmul.bf16.gmra.mxu0 %v4165
      %v4247 = vpop.f32.mrf.mxu0
      %v4248 = vadd.f32 0.0, %v4247
      %v4249 = vpop.f32.mrf.mxu0
      %v4250 = vadd.f32 0.0, %v4249
      %4251 = vmatmul.bf16.gmra.mxu0 %v4168
      %v4252 = vpop.f32.mrf.mxu0
      %v4253 = vadd.f32 0.0, %v4252
      %v4254 = vpop.f32.mrf.mxu0
      %v4255 = vadd.f32 0.0, %v4254
      %4256 = vmatmul.bf16.gmra.mxu0 %v4171
      %v4257 = vpop.f32.mrf.mxu0
      %v4258 = vadd.f32 0.0, %v4257
      %v4259 = vpop.f32.mrf.mxu0
      %v4260 = vadd.f32 0.0, %v4259
      %4261 = vdwg.mxu0
      %v4264 = vunpack.c.l.b16 %v3935
      %v4265 = vunpack.c.l.b16 %v3936
      %v4266 = vpack.c.b16 %v4265, %v4264
      %v4268 = vsel %vm1733, %v1905, 0
      %v4270 = vsel %vm1733, %v3903, 0
      %v4272 = vsel %vm1733, %v3904, 0
      %v4274 = vsel %vm1733, %v3905, 0
      %v4276 = vsel %vm1733, %v3906, 0
      %v4278 = vsel %vm1733, %v3907, 0
      %v4280 = vsel %vm1733, %v3908, 0
      %v4282 = vsel %vm1733, %v3909, 0
      %v4284 = vsel %vm1733, %v3910, 0
      %v4286 = vsel %vm1733, %v3911, 0
      %v4288 = vsel %vm1733, %v3912, 0
      %v4290 = vsel %vm1733, %v3913, 0
      %v4292 = vsel %vm1733, %v3914, 0
      %v4294 = vsel %vm1733, %v3915, 0
      %v4296 = vsel %vm1733, %v3916, 0
      %v4298 = vsel %vm1733, %v3917, 0
      %4300 = vmatpush.bf16.msra.mxu0 0
      %4301 = vmatpush.bf16.msra.mxu0 0
      %4302 = vmatpush.bf16.msra.mxu0 0
      %4303 = vmatpush.bf16.msra.mxu0 0
      %4304 = vmatpush.bf16.msra.mxu0 0
      %4305 = vmatpush.bf16.msra.mxu0 0
      %4306 = vmatpush.bf16.msra.mxu0 0
      %4307 = vmatpush.bf16.msra.mxu0 %v4266
      %4308 = vmatmul.bf16.gmra.mxu0 %v4268
      %v4309 = vpop.f32.mrf.mxu0
      %v4310 = vadd.f32 %v4183, %v4309
      %v4311 = vpop.f32.mrf.mxu0
      %v4312 = vadd.f32 %v4185, %v4311
      %4313 = vmatmul.bf16.gmra.mxu0 %v4270
      %v4314 = vpop.f32.mrf.mxu0
      %v4315 = vadd.f32 %v4188, %v4314
      %v4316 = vpop.f32.mrf.mxu0
      %v4317 = vadd.f32 %v4190, %v4316
      %4318 = vmatmul.bf16.gmra.mxu0 %v4272
      %v4319 = vpop.f32.mrf.mxu0
      %v4320 = vadd.f32 %v4193, %v4319
      %v4321 = vpop.f32.mrf.mxu0
      %v4322 = vadd.f32 %v4195, %v4321
      %4323 = vmatmul.bf16.gmra.mxu0 %v4274
      %v4324 = vpop.f32.mrf.mxu0
      %v4325 = vadd.f32 %v4198, %v4324
      %v4326 = vpop.f32.mrf.mxu0
      %v4327 = vadd.f32 %v4200, %v4326
      %4328 = vmatmul.bf16.gmra.mxu0 %v4276
      %v4329 = vpop.f32.mrf.mxu0
      %v4330 = vadd.f32 %v4203, %v4329
      %v4331 = vpop.f32.mrf.mxu0
      %v4332 = vadd.f32 %v4205, %v4331
      %4333 = vmatmul.bf16.gmra.mxu0 %v4278
      %v4334 = vpop.f32.mrf.mxu0
      %v4335 = vadd.f32 %v4208, %v4334
      %v4336 = vpop.f32.mrf.mxu0
      %v4337 = vadd.f32 %v4210, %v4336
      %4338 = vmatmul.bf16.gmra.mxu0 %v4280
      %v4339 = vpop.f32.mrf.mxu0
      %v4340 = vadd.f32 %v4213, %v4339
      %v4341 = vpop.f32.mrf.mxu0
      %v4342 = vadd.f32 %v4215, %v4341
      %4343 = vmatmul.bf16.gmra.mxu0 %v4282
      %v4344 = vpop.f32.mrf.mxu0
      %v4345 = vadd.f32 %v4218, %v4344
      %v4346 = vpop.f32.mrf.mxu0
      %v4347 = vadd.f32 %v4220, %v4346
      %4348 = vmatmul.bf16.gmra.mxu0 %v4284
      %v4349 = vpop.f32.mrf.mxu0
      %v4350 = vadd.f32 %v4223, %v4349
      %v4351 = vpop.f32.mrf.mxu0
      %v4352 = vadd.f32 %v4225, %v4351
      %4353 = vmatmul.bf16.gmra.mxu0 %v4286
      %v4354 = vpop.f32.mrf.mxu0
      %v4355 = vadd.f32 %v4228, %v4354
      %v4356 = vpop.f32.mrf.mxu0
      %v4357 = vadd.f32 %v4230, %v4356
      %4358 = vmatmul.bf16.gmra.mxu0 %v4288
      %v4359 = vpop.f32.mrf.mxu0
      %v4360 = vadd.f32 %v4233, %v4359
      %v4361 = vpop.f32.mrf.mxu0
      %v4362 = vadd.f32 %v4235, %v4361
      %4363 = vmatmul.bf16.gmra.mxu0 %v4290
      %v4364 = vpop.f32.mrf.mxu0
      %v4365 = vadd.f32 %v4238, %v4364
      %v4366 = vpop.f32.mrf.mxu0
      %v4367 = vadd.f32 %v4240, %v4366
      %4368 = vmatmul.bf16.gmra.mxu0 %v4292
      %v4369 = vpop.f32.mrf.mxu0
      %v4370 = vadd.f32 %v4243, %v4369
      %v4371 = vpop.f32.mrf.mxu0
      %v4372 = vadd.f32 %v4245, %v4371
      %4373 = vmatmul.bf16.gmra.mxu0 %v4294
      %v4374 = vpop.f32.mrf.mxu0
      %v4375 = vadd.f32 %v4248, %v4374
      %v4376 = vpop.f32.mrf.mxu0
      %v4377 = vadd.f32 %v4250, %v4376
      %4378 = vmatmul.bf16.gmra.mxu0 %v4296
      %v4379 = vpop.f32.mrf.mxu0
      %v4380 = vadd.f32 %v4253, %v4379
      %v4381 = vpop.f32.mrf.mxu0
      %v4382 = vadd.f32 %v4255, %v4381
      %4383 = vmatmul.bf16.gmra.mxu0 %v4298
      %v4384 = vpop.f32.mrf.mxu0
      %v4385 = vadd.f32 %v4258, %v4384
      %v4386 = vpop.f32.mrf.mxu0
      %v4387 = vadd.f32 %v4260, %v4386
      %4388 = vdwg.mxu0
      %v4419 = vrot.slane %v3903, 1
      %v4420 = vrot.slane %v3919, 1
      %v4421 = vsel %vm2455, %v4419, %v4420
      %v4422 = vrot.slane %v3904, 1
      %v4423 = vrot.slane %v3920, 1
      %v4424 = vsel %vm2455, %v4422, %v4423
      %v4425 = vrot.slane %v3905, 1
      %v4426 = vrot.slane %v3921, 1
      %v4427 = vsel %vm2455, %v4425, %v4426
      %v4428 = vrot.slane %v3906, 1
      %v4429 = vrot.slane %v3922, 1
      %v4430 = vsel %vm2455, %v4428, %v4429
      %v4431 = vrot.slane %v3907, 1
      %v4432 = vrot.slane %v3923, 1
      %v4433 = vsel %vm2455, %v4431, %v4432
      %v4434 = vrot.slane %v3908, 1
      %v4435 = vrot.slane %v3924, 1
      %v4436 = vsel %vm2455, %v4434, %v4435
      %v4437 = vrot.slane %v3909, 1
      %v4438 = vrot.slane %v3925, 1
      %v4439 = vsel %vm2455, %v4437, %v4438
      %v4440 = vrot.slane %v3910, 1
      %v4441 = vrot.slane %v3926, 1
      %v4442 = vsel %vm2455, %v4440, %v4441
      %v4443 = vrot.slane %v3911, 1
      %v4444 = vrot.slane %v3927, 1
      %v4445 = vsel %vm2455, %v4443, %v4444
      %v4446 = vrot.slane %v3912, 1
      %v4447 = vrot.slane %v3928, 1
      %v4448 = vsel %vm2455, %v4446, %v4447
      %v4449 = vrot.slane %v3913, 1
      %v4450 = vrot.slane %v3929, 1
      %v4451 = vsel %vm2455, %v4449, %v4450
      %v4452 = vrot.slane %v3914, 1
      %v4453 = vrot.slane %v3930, 1
      %v4454 = vsel %vm2455, %v4452, %v4453
      %v4455 = vrot.slane %v3915, 1
      %v4456 = vrot.slane %v3931, 1
      %v4457 = vsel %vm2455, %v4455, %v4456
      %v4458 = vrot.slane %v3916, 1
      %v4459 = vrot.slane %v3932, 1
      %v4460 = vsel %vm2455, %v4458, %v4459
      %v4461 = vrot.slane %v3917, 1
      %v4462 = vrot.slane %v3933, 1
      %v4463 = vsel %vm2455, %v4461, %v4462
      %s4464 = scalar_lea.vmem %s7, 16
      %v4465 = vld [vmem:[%s4464] sm:$0xf]
      %v4466 = vld [vmem:[%s4464 + $0x4] sm:$0xf]
      %v4469 = vunpack.c.l.b16 %v4465
      %v4470 = vunpack.c.l.b16 %v4466
      %v4471 = vpack.c.b16 %v4470, %v4469
      %v4473 = vsel %vm1733, %v2458, 0
      %v4476 = vsel %vm1733, %v4421, 0
      %v4479 = vsel %vm1733, %v4424, 0
      %v4482 = vsel %vm1733, %v4427, 0
      %v4485 = vsel %vm1733, %v4430, 0
      %v4488 = vsel %vm1733, %v4433, 0
      %v4491 = vsel %vm1733, %v4436, 0
      %v4494 = vsel %vm1733, %v4439, 0
      %v4497 = vsel %vm1733, %v4442, 0
      %v4500 = vsel %vm1733, %v4445, 0
      %v4503 = vsel %vm1733, %v4448, 0
      %v4506 = vsel %vm1733, %v4451, 0
      %v4509 = vsel %vm1733, %v4454, 0
      %v4512 = vsel %vm1733, %v4457, 0
      %v4515 = vsel %vm1733, %v4460, 0
      %v4518 = vsel %vm1733, %v4463, 0
      %4520 = vmatpush.bf16.msra.mxu0 0
      %4521 = vmatpush.bf16.msra.mxu0 0
      %4522 = vmatpush.bf16.msra.mxu0 0
      %4523 = vmatpush.bf16.msra.mxu0 0
      %4524 = vmatpush.bf16.msra.mxu0 0
      %4525 = vmatpush.bf16.msra.mxu0 0
      %4526 = vmatpush.bf16.msra.mxu0 0
      %4527 = vmatpush.bf16.msra.mxu0 %v4471
      %4528 = vmatmul.bf16.gmra.mxu0 %v4473
      %v4529 = vpop.f32.mrf.mxu0
      %v4530 = vadd.f32 0.0, %v4529
      %v4531 = vpop.f32.mrf.mxu0
      %v4532 = vadd.f32 0.0, %v4531
      %4533 = vmatmul.bf16.gmra.mxu0 %v4476
      %v4534 = vpop.f32.mrf.mxu0
      %v4535 = vadd.f32 0.0, %v4534
      %v4536 = vpop.f32.mrf.mxu0
      %v4537 = vadd.f32 0.0, %v4536
      %4538 = vmatmul.bf16.gmra.mxu0 %v4479
      %v4539 = vpop.f32.mrf.mxu0
      %v4540 = vadd.f32 0.0, %v4539
      %v4541 = vpop.f32.mrf.mxu0
      %v4542 = vadd.f32 0.0, %v4541
      %4543 = vmatmul.bf16.gmra.mxu0 %v4482
      %v4544 = vpop.f32.mrf.mxu0
      %v4545 = vadd.f32 0.0, %v4544
      %v4546 = vpop.f32.mrf.mxu0
      %v4547 = vadd.f32 0.0, %v4546
      %4548 = vmatmul.bf16.gmra.mxu0 %v4485
      %v4549 = vpop.f32.mrf.mxu0
      %v4550 = vadd.f32 0.0, %v4549
      %v4551 = vpop.f32.mrf.mxu0
      %v4552 = vadd.f32 0.0, %v4551
      %4553 = vmatmul.bf16.gmra.mxu0 %v4488
      %v4554 = vpop.f32.mrf.mxu0
      %v4555 = vadd.f32 0.0, %v4554
      %v4556 = vpop.f32.mrf.mxu0
      %v4557 = vadd.f32 0.0, %v4556
      %4558 = vmatmul.bf16.gmra.mxu0 %v4491
      %v4559 = vpop.f32.mrf.mxu0
      %v4560 = vadd.f32 0.0, %v4559
      %v4561 = vpop.f32.mrf.mxu0
      %v4562 = vadd.f32 0.0, %v4561
      %4563 = vmatmul.bf16.gmra.mxu0 %v4494
      %v4564 = vpop.f32.mrf.mxu0
      %v4565 = vadd.f32 0.0, %v4564
      %v4566 = vpop.f32.mrf.mxu0
      %v4567 = vadd.f32 0.0, %v4566
      %4568 = vmatmul.bf16.gmra.mxu0 %v4497
      %v4569 = vpop.f32.mrf.mxu0
      %v4570 = vadd.f32 0.0, %v4569
      %v4571 = vpop.f32.mrf.mxu0
      %v4572 = vadd.f32 0.0, %v4571
      %4573 = vmatmul.bf16.gmra.mxu0 %v4500
      %v4574 = vpop.f32.mrf.mxu0
      %v4575 = vadd.f32 0.0, %v4574
      %v4576 = vpop.f32.mrf.mxu0
      %v4577 = vadd.f32 0.0, %v4576
      %4578 = vmatmul.bf16.gmra.mxu0 %v4503
      %v4579 = vpop.f32.mrf.mxu0
      %v4580 = vadd.f32 0.0, %v4579
      %v4581 = vpop.f32.mrf.mxu0
      %v4582 = vadd.f32 0.0, %v4581
      %4583 = vmatmul.bf16.gmra.mxu0 %v4506
      %v4584 = vpop.f32.mrf.mxu0
      %v4585 = vadd.f32 0.0, %v4584
      %v4586 = vpop.f32.mrf.mxu0
      %v4587 = vadd.f32 0.0, %v4586
      %4588 = vmatmul.bf16.gmra.mxu0 %v4509
      %v4589 = vpop.f32.mrf.mxu0
      %v4590 = vadd.f32 0.0, %v4589
      %v4591 = vpop.f32.mrf.mxu0
      %v4592 = vadd.f32 0.0, %v4591
      %4593 = vmatmul.bf16.gmra.mxu0 %v4512
      %v4594 = vpop.f32.mrf.mxu0
      %v4595 = vadd.f32 0.0, %v4594
      %v4596 = vpop.f32.mrf.mxu0
      %v4597 = vadd.f32 0.0, %v4596
      %4598 = vmatmul.bf16.gmra.mxu0 %v4515
      %v4599 = vpop.f32.mrf.mxu0
      %v4600 = vadd.f32 0.0, %v4599
      %v4601 = vpop.f32.mrf.mxu0
      %v4602 = vadd.f32 0.0, %v4601
      %4603 = vmatmul.bf16.gmra.mxu0 %v4518
      %v4604 = vpop.f32.mrf.mxu0
      %v4605 = vadd.f32 0.0, %v4604
      %v4606 = vpop.f32.mrf.mxu0
      %v4607 = vadd.f32 0.0, %v4606
      %4608 = vdwg.mxu0
      %v4609 = vadd.f32 %v4310, %v4530
      %v4610 = vadd.f32 %v4312, %v4532
      %v4611 = vadd.f32 %v4315, %v4535
      %v4612 = vadd.f32 %v4317, %v4537
      %v4613 = vadd.f32 %v4320, %v4540
      %v4614 = vadd.f32 %v4322, %v4542
      %v4615 = vadd.f32 %v4325, %v4545
      %v4616 = vadd.f32 %v4327, %v4547
      %v4617 = vadd.f32 %v4330, %v4550
      %v4618 = vadd.f32 %v4332, %v4552
      %v4619 = vadd.f32 %v4335, %v4555
      %v4620 = vadd.f32 %v4337, %v4557
      %v4621 = vadd.f32 %v4340, %v4560
      %v4622 = vadd.f32 %v4342, %v4562
      %v4623 = vadd.f32 %v4345, %v4565
      %v4624 = vadd.f32 %v4347, %v4567
      %v4625 = vadd.f32 %v4350, %v4570
      %v4626 = vadd.f32 %v4352, %v4572
      %v4627 = vadd.f32 %v4355, %v4575
      %v4628 = vadd.f32 %v4357, %v4577
      %v4629 = vadd.f32 %v4360, %v4580
      %v4630 = vadd.f32 %v4362, %v4582
      %v4631 = vadd.f32 %v4365, %v4585
      %v4632 = vadd.f32 %v4367, %v4587
      %v4633 = vadd.f32 %v4370, %v4590
      %v4634 = vadd.f32 %v4372, %v4592
      %v4635 = vadd.f32 %v4375, %v4595
      %v4636 = vadd.f32 %v4377, %v4597
      %v4637 = vadd.f32 %v4380, %v4600
      %v4638 = vadd.f32 %v4382, %v4602
      %v4639 = vadd.f32 %v4385, %v4605
      %v4640 = vadd.f32 %v4387, %v4607
      %s4641 = scalar_lea.vmem %s7, 24
      %v4642 = vld [vmem:[%s4641] sm:$0xf]
      %v4643 = vld [vmem:[%s4641 + $0x4] sm:$0xf]
      %v4646 = vunpack.c.l.b16 %v4642
      %v4647 = vunpack.c.l.b16 %v4643
      %v4648 = vpack.c.b16 %v4647, %v4646
      %v4651 = vsel %vm1733, %v3918, 0
      %4653 = vmatpush.bf16.msra.mxu0 0
      %4654 = vmatpush.bf16.msra.mxu0 0
      %4655 = vmatpush.bf16.msra.mxu0 0
      %4656 = vmatpush.bf16.msra.mxu0 0
      %4657 = vmatpush.bf16.msra.mxu0 0
      %4658 = vmatpush.bf16.msra.mxu0 0
      %4659 = vmatpush.bf16.msra.mxu0 0
      %4660 = vmatpush.bf16.msra.mxu0 %v4648
      %4661 = vmatmul.bf16.gmra.mxu0 %v4270
      %v4662 = vpop.f32.mrf.mxu0
      %v4663 = vadd.f32 0.0, %v4662
      %v4664 = vpop.f32.mrf.mxu0
      %v4665 = vadd.f32 0.0, %v4664
      %4666 = vmatmul.bf16.gmra.mxu0 %v4272
      %v4667 = vpop.f32.mrf.mxu0
      %v4668 = vadd.f32 0.0, %v4667
      %v4669 = vpop.f32.mrf.mxu0
      %v4670 = vadd.f32 0.0, %v4669
      %4671 = vmatmul.bf16.gmra.mxu0 %v4274
      %v4672 = vpop.f32.mrf.mxu0
      %v4673 = vadd.f32 0.0, %v4672
      %v4674 = vpop.f32.mrf.mxu0
      %v4675 = vadd.f32 0.0, %v4674
      %4676 = vmatmul.bf16.gmra.mxu0 %v4276
      %v4677 = vpop.f32.mrf.mxu0
      %v4678 = vadd.f32 0.0, %v4677
      %v4679 = vpop.f32.mrf.mxu0
      %v4680 = vadd.f32 0.0, %v4679
      %4681 = vmatmul.bf16.gmra.mxu0 %v4278
      %v4682 = vpop.f32.mrf.mxu0
      %v4683 = vadd.f32 0.0, %v4682
      %v4684 = vpop.f32.mrf.mxu0
      %v4685 = vadd.f32 0.0, %v4684
      %4686 = vmatmul.bf16.gmra.mxu0 %v4280
      %v4687 = vpop.f32.mrf.mxu0
      %v4688 = vadd.f32 0.0, %v4687
      %v4689 = vpop.f32.mrf.mxu0
      %v4690 = vadd.f32 0.0, %v4689
      %4691 = vmatmul.bf16.gmra.mxu0 %v4282
      %v4692 = vpop.f32.mrf.mxu0
      %v4693 = vadd.f32 0.0, %v4692
      %v4694 = vpop.f32.mrf.mxu0
      %v4695 = vadd.f32 0.0, %v4694
      %4696 = vmatmul.bf16.gmra.mxu0 %v4284
      %v4697 = vpop.f32.mrf.mxu0
      %v4698 = vadd.f32 0.0, %v4697
      %v4699 = vpop.f32.mrf.mxu0
      %v4700 = vadd.f32 0.0, %v4699
      %4701 = vmatmul.bf16.gmra.mxu0 %v4286
      %v4702 = vpop.f32.mrf.mxu0
      %v4703 = vadd.f32 0.0, %v4702
      %v4704 = vpop.f32.mrf.mxu0
      %v4705 = vadd.f32 0.0, %v4704
      %4706 = vmatmul.bf16.gmra.mxu0 %v4288
      %v4707 = vpop.f32.mrf.mxu0
      %v4708 = vadd.f32 0.0, %v4707
      %v4709 = vpop.f32.mrf.mxu0
      %v4710 = vadd.f32 0.0, %v4709
      %4711 = vmatmul.bf16.gmra.mxu0 %v4290
      %v4712 = vpop.f32.mrf.mxu0
      %v4713 = vadd.f32 0.0, %v4712
      %v4714 = vpop.f32.mrf.mxu0
      %v4715 = vadd.f32 0.0, %v4714
      %4716 = vmatmul.bf16.gmra.mxu0 %v4292
      %v4717 = vpop.f32.mrf.mxu0
      %v4718 = vadd.f32 0.0, %v4717
      %v4719 = vpop.f32.mrf.mxu0
      %v4720 = vadd.f32 0.0, %v4719
      %4721 = vmatmul.bf16.gmra.mxu0 %v4294
      %v4722 = vpop.f32.mrf.mxu0
      %v4723 = vadd.f32 0.0, %v4722
      %v4724 = vpop.f32.mrf.mxu0
      %v4725 = vadd.f32 0.0, %v4724
      %4726 = vmatmul.bf16.gmra.mxu0 %v4296
      %v4727 = vpop.f32.mrf.mxu0
      %v4728 = vadd.f32 0.0, %v4727
      %v4729 = vpop.f32.mrf.mxu0
      %v4730 = vadd.f32 0.0, %v4729
      %4731 = vmatmul.bf16.gmra.mxu0 %v4298
      %v4732 = vpop.f32.mrf.mxu0
      %v4733 = vadd.f32 0.0, %v4732
      %v4734 = vpop.f32.mrf.mxu0
      %v4735 = vadd.f32 0.0, %v4734
      %4736 = vmatmul.bf16.gmra.mxu0 %v4651
      %v4737 = vpop.f32.mrf.mxu0
      %v4738 = vadd.f32 0.0, %v4737
      %v4739 = vpop.f32.mrf.mxu0
      %v4740 = vadd.f32 0.0, %v4739
      %4741 = vdwg.mxu0
      %v4742 = vadd.f32 %v4609, %v4663
      %v4743 = vadd.f32 %v4610, %v4665
      %v4744 = vadd.f32 %v4611, %v4668
      %v4745 = vadd.f32 %v4612, %v4670
      %v4746 = vadd.f32 %v4613, %v4673
      %v4747 = vadd.f32 %v4614, %v4675
      %v4748 = vadd.f32 %v4615, %v4678
      %v4749 = vadd.f32 %v4616, %v4680
      %v4750 = vadd.f32 %v4617, %v4683
      %v4751 = vadd.f32 %v4618, %v4685
      %v4752 = vadd.f32 %v4619, %v4688
      %v4753 = vadd.f32 %v4620, %v4690
      %v4754 = vadd.f32 %v4621, %v4693
      %v4755 = vadd.f32 %v4622, %v4695
      %v4756 = vadd.f32 %v4623, %v4698
      %v4757 = vadd.f32 %v4624, %v4700
      %v4758 = vadd.f32 %v4625, %v4703
      %v4759 = vadd.f32 %v4626, %v4705
      %v4760 = vadd.f32 %v4627, %v4708
      %v4761 = vadd.f32 %v4628, %v4710
      %v4762 = vadd.f32 %v4629, %v4713
      %v4763 = vadd.f32 %v4630, %v4715
      %v4764 = vadd.f32 %v4631, %v4718
      %v4765 = vadd.f32 %v4632, %v4720
      %v4766 = vadd.f32 %v4633, %v4723
      %v4767 = vadd.f32 %v4634, %v4725
      %v4768 = vadd.f32 %v4635, %v4728
      %v4769 = vadd.f32 %v4636, %v4730
      %v4770 = vadd.f32 %v4637, %v4733
      %v4771 = vadd.f32 %v4638, %v4735
      %v4772 = vadd.f32 %v4639, %v4738
      %v4773 = vadd.f32 %v4640, %v4740
      %v4774 = vshrl.u32 %v3918, 16
      %v4776 = vshll.u32 %v3918, 16
      %v4778 = vrot.slane %v4776, 1
      %v4779 = vor.u32 %v4774, %v4778
      %v4781 = vshll.u32 %v3934, 16
      %v4783 = vrot.slane %v4781, 1
      %v4784 = vsel %vm1943, %v4779, %v4783
      %s4785 = scalar_lea.vmem %s7, 32
      %v4786 = vld [vmem:[%s4785] sm:$0xf]
      %v4787 = vld [vmem:[%s4785 + $0x4] sm:$0xf]
      %v4790 = vunpack.c.l.b16 %v4786
      %v4791 = vunpack.c.l.b16 %v4787
      %v4792 = vpack.c.b16 %v4791, %v4790
      %v4795 = vsel %vm1733, %v4784, 0
      %4797 = vmatpush.bf16.msra.mxu0 0
      %4798 = vmatpush.bf16.msra.mxu0 0
      %4799 = vmatpush.bf16.msra.mxu0 0
      %4800 = vmatpush.bf16.msra.mxu0 0
      %4801 = vmatpush.bf16.msra.mxu0 0
      %4802 = vmatpush.bf16.msra.mxu0 0
      %4803 = vmatpush.bf16.msra.mxu0 0
      %4804 = vmatpush.bf16.msra.mxu0 %v4792
      %4805 = vmatmul.bf16.gmra.mxu0 %v4129
      %v4806 = vpop.f32.mrf.mxu0
      %v4807 = vadd.f32 0.0, %v4806
      %v4808 = vpop.f32.mrf.mxu0
      %v4809 = vadd.f32 0.0, %v4808
      %4810 = vmatmul.bf16.gmra.mxu0 %v4132
      %v4811 = vpop.f32.mrf.mxu0
      %v4812 = vadd.f32 0.0, %v4811
      %v4813 = vpop.f32.mrf.mxu0
      %v4814 = vadd.f32 0.0, %v4813
      %4815 = vmatmul.bf16.gmra.mxu0 %v4135
      %v4816 = vpop.f32.mrf.mxu0
      %v4817 = vadd.f32 0.0, %v4816
      %v4818 = vpop.f32.mrf.mxu0
      %v4819 = vadd.f32 0.0, %v4818
      %4820 = vmatmul.bf16.gmra.mxu0 %v4138
      %v4821 = vpop.f32.mrf.mxu0
      %v4822 = vadd.f32 0.0, %v4821
      %v4823 = vpop.f32.mrf.mxu0
      %v4824 = vadd.f32 0.0, %v4823
      %4825 = vmatmul.bf16.gmra.mxu0 %v4141
      %v4826 = vpop.f32.mrf.mxu0
      %v4827 = vadd.f32 0.0, %v4826
      %v4828 = vpop.f32.mrf.mxu0
      %v4829 = vadd.f32 0.0, %v4828
      %4830 = vmatmul.bf16.gmra.mxu0 %v4144
      %v4831 = vpop.f32.mrf.mxu0
      %v4832 = vadd.f32 0.0, %v4831
      %v4833 = vpop.f32.mrf.mxu0
      %v4834 = vadd.f32 0.0, %v4833
      %4835 = vmatmul.bf16.gmra.mxu0 %v4147
      %v4836 = vpop.f32.mrf.mxu0
      %v4837 = vadd.f32 0.0, %v4836
      %v4838 = vpop.f32.mrf.mxu0
      %v4839 = vadd.f32 0.0, %v4838
      %4840 = vmatmul.bf16.gmra.mxu0 %v4150
      %v4841 = vpop.f32.mrf.mxu0
      %v4842 = vadd.f32 0.0, %v4841
      %v4843 = vpop.f32.mrf.mxu0
      %v4844 = vadd.f32 0.0, %v4843
      %4845 = vmatmul.bf16.gmra.mxu0 %v4153
      %v4846 = vpop.f32.mrf.mxu0
      %v4847 = vadd.f32 0.0, %v4846
      %v4848 = vpop.f32.mrf.mxu0
      %v4849 = vadd.f32 0.0, %v4848
      %4850 = vmatmul.bf16.gmra.mxu0 %v4156
      %v4851 = vpop.f32.mrf.mxu0
      %v4852 = vadd.f32 0.0, %v4851
      %v4853 = vpop.f32.mrf.mxu0
      %v4854 = vadd.f32 0.0, %v4853
      %4855 = vmatmul.bf16.gmra.mxu0 %v4159
      %v4856 = vpop.f32.mrf.mxu0
      %v4857 = vadd.f32 0.0, %v4856
      %v4858 = vpop.f32.mrf.mxu0
      %v4859 = vadd.f32 0.0, %v4858
      %4860 = vmatmul.bf16.gmra.mxu0 %v4162
      %v4861 = vpop.f32.mrf.mxu0
      %v4862 = vadd.f32 0.0, %v4861
      %v4863 = vpop.f32.mrf.mxu0
      %v4864 = vadd.f32 0.0, %v4863
      %4865 = vmatmul.bf16.gmra.mxu0 %v4165
      %v4866 = vpop.f32.mrf.mxu0
      %v4867 = vadd.f32 0.0, %v4866
      %v4868 = vpop.f32.mrf.mxu0
      %v4869 = vadd.f32 0.0, %v4868
      %4870 = vmatmul.bf16.gmra.mxu0 %v4168
      %v4871 = vpop.f32.mrf.mxu0
      %v4872 = vadd.f32 0.0, %v4871
      %v4873 = vpop.f32.mrf.mxu0
      %v4874 = vadd.f32 0.0, %v4873
      %4875 = vmatmul.bf16.gmra.mxu0 %v4171
      %v4876 = vpop.f32.mrf.mxu0
      %v4877 = vadd.f32 0.0, %v4876
      %v4878 = vpop.f32.mrf.mxu0
      %v4879 = vadd.f32 0.0, %v4878
      %4880 = vmatmul.bf16.gmra.mxu0 %v4795
      %v4881 = vpop.f32.mrf.mxu0
      %v4882 = vadd.f32 0.0, %v4881
      %v4883 = vpop.f32.mrf.mxu0
      %v4884 = vadd.f32 0.0, %v4883
      %4885 = vdwg.mxu0
      %v4886 = vadd.f32 %v4742, %v4807
      %v4887 = vadd.f32 %v4743, %v4809
      %v4888 = vadd.f32 %v4744, %v4812
      %v4889 = vadd.f32 %v4745, %v4814
      %v4890 = vadd.f32 %v4746, %v4817
      %v4891 = vadd.f32 %v4747, %v4819
      %v4892 = vadd.f32 %v4748, %v4822
      %v4893 = vadd.f32 %v4749, %v4824
      %v4894 = vadd.f32 %v4750, %v4827
      %v4895 = vadd.f32 %v4751, %v4829
      %v4896 = vadd.f32 %v4752, %v4832
      %v4897 = vadd.f32 %v4753, %v4834
      %v4898 = vadd.f32 %v4754, %v4837
      %v4899 = vadd.f32 %v4755, %v4839
      %v4900 = vadd.f32 %v4756, %v4842
      %v4901 = vadd.f32 %v4757, %v4844
      %v4902 = vadd.f32 %v4758, %v4847
      %v4903 = vadd.f32 %v4759, %v4849
      %v4904 = vadd.f32 %v4760, %v4852
      %v4905 = vadd.f32 %v4761, %v4854
      %v4906 = vadd.f32 %v4762, %v4857
      %v4907 = vadd.f32 %v4763, %v4859
      %v4908 = vadd.f32 %v4764, %v4862
      %v4909 = vadd.f32 %v4765, %v4864
      %v4910 = vadd.f32 %v4766, %v4867
      %v4911 = vadd.f32 %v4767, %v4869
      %v4912 = vadd.f32 %v4768, %v4872
      %v4913 = vadd.f32 %v4769, %v4874
      %v4914 = vadd.f32 %v4770, %v4877
      %v4915 = vadd.f32 %v4771, %v4879
      %v4916 = vadd.f32 %v4772, %v4882
      %v4917 = vadd.f32 %v4773, %v4884
      %v4920 = vrot.slane %v3918, 1
      %v4921 = vrot.slane %v3934, 1
      %v4922 = vsel %vm2455, %v4920, %v4921
      %s4923 = scalar_lea.vmem %s7, 40
      %v4924 = vld [vmem:[%s4923] sm:$0xf]
      %v4925 = vld [vmem:[%s4923 + $0x4] sm:$0xf]
      %v4928 = vunpack.c.l.b16 %v4924
      %v4929 = vunpack.c.l.b16 %v4925
      %v4930 = vpack.c.b16 %v4929, %v4928
      %v4933 = vsel %vm1733, %v4922, 0
      %4935 = vmatpush.bf16.msra.mxu0 0
      %4936 = vmatpush.bf16.msra.mxu0 0
      %4937 = vmatpush.bf16.msra.mxu0 0
      %4938 = vmatpush.bf16.msra.mxu0 0
      %4939 = vmatpush.bf16.msra.mxu0 0
      %4940 = vmatpush.bf16.msra.mxu0 0
      %4941 = vmatpush.bf16.msra.mxu0 0
      %4942 = vmatpush.bf16.msra.mxu0 %v4930
      %4943 = vmatmul.bf16.gmra.mxu0 %v4476
      %v4944 = vpop.f32.mrf.mxu0
      %v4945 = vadd.f32 0.0, %v4944
      %v4946 = vpop.f32.mrf.mxu0
      %v4947 = vadd.f32 0.0, %v4946
      %4948 = vmatmul.bf16.gmra.mxu0 %v4479
      %v4949 = vpop.f32.mrf.mxu0
      %v4950 = vadd.f32 0.0, %v4949
      %v4951 = vpop.f32.mrf.mxu0
      %v4952 = vadd.f32 0.0, %v4951
      %4953 = vmatmul.bf16.gmra.mxu0 %v4482
      %v4954 = vpop.f32.mrf.mxu0
      %v4955 = vadd.f32 0.0, %v4954
      %v4956 = vpop.f32.mrf.mxu0
      %v4957 = vadd.f32 0.0, %v4956
      %4958 = vmatmul.bf16.gmra.mxu0 %v4485
      %v4959 = vpop.f32.mrf.mxu0
      %v4960 = vadd.f32 0.0, %v4959
      %v4961 = vpop.f32.mrf.mxu0
      %v4962 = vadd.f32 0.0, %v4961
      %4963 = vmatmul.bf16.gmra.mxu0 %v4488
      %v4964 = vpop.f32.mrf.mxu0
      %v4965 = vadd.f32 0.0, %v4964
      %v4966 = vpop.f32.mrf.mxu0
      %v4967 = vadd.f32 0.0, %v4966
      %4968 = vmatmul.bf16.gmra.mxu0 %v4491
      %v4969 = vpop.f32.mrf.mxu0
      %v4970 = vadd.f32 0.0, %v4969
      %v4971 = vpop.f32.mrf.mxu0
      %v4972 = vadd.f32 0.0, %v4971
      %4973 = vmatmul.bf16.gmra.mxu0 %v4494
      %v4974 = vpop.f32.mrf.mxu0
      %v4975 = vadd.f32 0.0, %v4974
      %v4976 = vpop.f32.mrf.mxu0
      %v4977 = vadd.f32 0.0, %v4976
      %4978 = vmatmul.bf16.gmra.mxu0 %v4497
      %v4979 = vpop.f32.mrf.mxu0
      %v4980 = vadd.f32 0.0, %v4979
      %v4981 = vpop.f32.mrf.mxu0
      %v4982 = vadd.f32 0.0, %v4981
      %4983 = vmatmul.bf16.gmra.mxu0 %v4500
      %v4984 = vpop.f32.mrf.mxu0
      %v4985 = vadd.f32 0.0, %v4984
      %v4986 = vpop.f32.mrf.mxu0
      %v4987 = vadd.f32 0.0, %v4986
      %4988 = vmatmul.bf16.gmra.mxu0 %v4503
      %v4989 = vpop.f32.mrf.mxu0
      %v4990 = vadd.f32 0.0, %v4989
      %v4991 = vpop.f32.mrf.mxu0
      %v4992 = vadd.f32 0.0, %v4991
      %4993 = vmatmul.bf16.gmra.mxu0 %v4506
      %v4994 = vpop.f32.mrf.mxu0
      %v4995 = vadd.f32 0.0, %v4994
      %v4996 = vpop.f32.mrf.mxu0
      %v4997 = vadd.f32 0.0, %v4996
      %4998 = vmatmul.bf16.gmra.mxu0 %v4509
      %v4999 = vpop.f32.mrf.mxu0
      %v5000 = vadd.f32 0.0, %v4999
      %v5001 = vpop.f32.mrf.mxu0
      %v5002 = vadd.f32 0.0, %v5001
      %5003 = vmatmul.bf16.gmra.mxu0 %v4512
      %v5004 = vpop.f32.mrf.mxu0
      %v5005 = vadd.f32 0.0, %v5004
      %v5006 = vpop.f32.mrf.mxu0
      %v5007 = vadd.f32 0.0, %v5006
      %5008 = vmatmul.bf16.gmra.mxu0 %v4515
      %v5009 = vpop.f32.mrf.mxu0
      %v5010 = vadd.f32 0.0, %v5009
      %v5011 = vpop.f32.mrf.mxu0
      %v5012 = vadd.f32 0.0, %v5011
      %5013 = vmatmul.bf16.gmra.mxu0 %v4518
      %v5014 = vpop.f32.mrf.mxu0
      %v5015 = vadd.f32 0.0, %v5014
      %v5016 = vpop.f32.mrf.mxu0
      %v5017 = vadd.f32 0.0, %v5016
      %5018 = vmatmul.bf16.gmra.mxu0 %v4933
      %v5019 = vpop.f32.mrf.mxu0
      %v5020 = vadd.f32 0.0, %v5019
      %v5021 = vpop.f32.mrf.mxu0
      %v5022 = vadd.f32 0.0, %v5021
      %5023 = vdwg.mxu0
      %v5024 = vadd.f32 %v4886, %v4945
      %v5025 = vadd.f32 %v4887, %v4947
      %v5026 = vadd.f32 %v4888, %v4950
      %v5027 = vadd.f32 %v4889, %v4952
      %v5028 = vadd.f32 %v4890, %v4955
      %v5029 = vadd.f32 %v4891, %v4957
      %v5030 = vadd.f32 %v4892, %v4960
      %v5031 = vadd.f32 %v4893, %v4962
      %v5032 = vadd.f32 %v4894, %v4965
      %v5033 = vadd.f32 %v4895, %v4967
      %v5034 = vadd.f32 %v4896, %v4970
      %v5035 = vadd.f32 %v4897, %v4972
      %v5036 = vadd.f32 %v4898, %v4975
      %v5037 = vadd.f32 %v4899, %v4977
      %v5038 = vadd.f32 %v4900, %v4980
      %v5039 = vadd.f32 %v4901, %v4982
      %v5040 = vadd.f32 %v4902, %v4985
      %v5041 = vadd.f32 %v4903, %v4987
      %v5042 = vadd.f32 %v4904, %v4990
      %v5043 = vadd.f32 %v4905, %v4992
      %v5044 = vadd.f32 %v4906, %v4995
      %v5045 = vadd.f32 %v4907, %v4997
      %v5046 = vadd.f32 %v4908, %v5000
      %v5047 = vadd.f32 %v4909, %v5002
      %v5048 = vadd.f32 %v4910, %v5005
      %v5049 = vadd.f32 %v4911, %v5007
      %v5050 = vadd.f32 %v4912, %v5010
      %v5051 = vadd.f32 %v4913, %v5012
      %v5052 = vadd.f32 %v4914, %v5015
      %v5053 = vadd.f32 %v4915, %v5017
      %v5054 = vadd.f32 %v4916, %v5020
      %v5055 = vadd.f32 %v4917, %v5022
      %s5056 = scalar_lea.vmem %s7, 48
      %v5057 = vld [vmem:[%s5056] sm:$0xf]
      %v5058 = vld [vmem:[%s5056 + $0x4] sm:$0xf]
      %v5061 = vunpack.c.l.b16 %v5057
      %v5062 = vunpack.c.l.b16 %v5058
      %v5063 = vpack.c.b16 %v5062, %v5061
      %5065 = vmatpush.bf16.msra.mxu0 0
      %5066 = vmatpush.bf16.msra.mxu0 0
      %5067 = vmatpush.bf16.msra.mxu0 0
      %5068 = vmatpush.bf16.msra.mxu0 0
      %5069 = vmatpush.bf16.msra.mxu0 0
      %5070 = vmatpush.bf16.msra.mxu0 0
      %5071 = vmatpush.bf16.msra.mxu0 0
      %5072 = vmatpush.bf16.msra.mxu0 %v5063
      %5073 = vmatmul.bf16.gmra.mxu0 %v4272
      %v5074 = vpop.f32.mrf.mxu0
      %v5075 = vadd.f32 0.0, %v5074
      %v5076 = vpop.f32.mrf.mxu0
      %v5077 = vadd.f32 0.0, %v5076
      %5078 = vmatmul.bf16.gmra.mxu0 %v4274
      %v5079 = vpop.f32.mrf.mxu0
      %v5080 = vadd.f32 0.0, %v5079
      %v5081 = vpop.f32.mrf.mxu0
      %v5082 = vadd.f32 0.0, %v5081
      %5083 = vmatmul.bf16.gmra.mxu0 %v4276
      %v5084 = vpop.f32.mrf.mxu0
      %v5085 = vadd.f32 0.0, %v5084
      %v5086 = vpop.f32.mrf.mxu0
      %v5087 = vadd.f32 0.0, %v5086
      %5088 = vmatmul.bf16.gmra.mxu0 %v4278
      %v5089 = vpop.f32.mrf.mxu0
      %v5090 = vadd.f32 0.0, %v5089
      %v5091 = vpop.f32.mrf.mxu0
      %v5092 = vadd.f32 0.0, %v5091
      %5093 = vmatmul.bf16.gmra.mxu0 %v4280
      %v5094 = vpop.f32.mrf.mxu0
      %v5095 = vadd.f32 0.0, %v5094
      %v5096 = vpop.f32.mrf.mxu0
      %v5097 = vadd.f32 0.0, %v5096
      %5098 = vmatmul.bf16.gmra.mxu0 %v4282
      %v5099 = vpop.f32.mrf.mxu0
      %v5100 = vadd.f32 0.0, %v5099
      %v5101 = vpop.f32.mrf.mxu0
      %v5102 = vadd.f32 0.0, %v5101
      %5103 = vmatmul.bf16.gmra.mxu0 %v4284
      %v5104 = vpop.f32.mrf.mxu0
      %v5105 = vadd.f32 0.0, %v5104
      %v5106 = vpop.f32.mrf.mxu0
      %v5107 = vadd.f32 0.0, %v5106
      %5108 = vmatmul.bf16.gmra.mxu0 %v4286
      %v5109 = vpop.f32.mrf.mxu0
      %v5110 = vadd.f32 0.0, %v5109
      %v5111 = vpop.f32.mrf.mxu0
      %v5112 = vadd.f32 0.0, %v5111
      %5113 = vmatmul.bf16.gmra.mxu0 %v4288
      %v5114 = vpop.f32.mrf.mxu0
      %v5115 = vadd.f32 0.0, %v5114
      %v5116 = vpop.f32.mrf.mxu0
      %v5117 = vadd.f32 0.0, %v5116
      %5118 = vmatmul.bf16.gmra.mxu0 %v4290
      %v5119 = vpop.f32.mrf.mxu0
      %v5120 = vadd.f32 0.0, %v5119
      %v5121 = vpop.f32.mrf.mxu0
      %v5122 = vadd.f32 0.0, %v5121
      %5123 = vmatmul.bf16.gmra.mxu0 %v4292
      %v5124 = vpop.f32.mrf.mxu0
      %v5125 = vadd.f32 0.0, %v5124
      %v5126 = vpop.f32.mrf.mxu0
      %v5127 = vadd.f32 0.0, %v5126
      %5128 = vmatmul.bf16.gmra.mxu0 %v4294
      %v5129 = vpop.f32.mrf.mxu0
      %v5130 = vadd.f32 0.0, %v5129
      %v5131 = vpop.f32.mrf.mxu0
      %v5132 = vadd.f32 0.0, %v5131
      %5133 = vmatmul.bf16.gmra.mxu0 %v4296
      %v5134 = vpop.f32.mrf.mxu0
      %v5135 = vadd.f32 0.0, %v5134
      %v5136 = vpop.f32.mrf.mxu0
      %v5137 = vadd.f32 0.0, %v5136
      %5138 = vmatmul.bf16.gmra.mxu0 %v4298
      %v5139 = vpop.f32.mrf.mxu0
      %v5140 = vadd.f32 0.0, %v5139
      %v5141 = vpop.f32.mrf.mxu0
      %v5142 = vadd.f32 0.0, %v5141
      %5143 = vmatmul.bf16.gmra.mxu0 %v4651
      %v5144 = vpop.f32.mrf.mxu0
      %v5145 = vadd.f32 0.0, %v5144
      %v5146 = vpop.f32.mrf.mxu0
      %v5147 = vadd.f32 0.0, %v5146
      %5148 = vmatmul.bf16.gmra.mxu0 %v4268
      %v5149 = vpop.f32.mrf.mxu0
      %v5150 = vadd.f32 0.0, %v5149
      %v5151 = vpop.f32.mrf.mxu0
      %v5152 = vadd.f32 0.0, %v5151
      %5153 = vdwg.mxu0
      %v5154 = vadd.f32 %v5024, %v5075
      %v5155 = vadd.f32 %v5025, %v5077
      %v5156 = vadd.f32 %v5026, %v5080
      %v5157 = vadd.f32 %v5027, %v5082
      %v5158 = vadd.f32 %v5028, %v5085
      %v5159 = vadd.f32 %v5029, %v5087
      %v5160 = vadd.f32 %v5030, %v5090
      %v5161 = vadd.f32 %v5031, %v5092
      %v5162 = vadd.f32 %v5032, %v5095
      %v5163 = vadd.f32 %v5033, %v5097
      %v5164 = vadd.f32 %v5034, %v5100
      %v5165 = vadd.f32 %v5035, %v5102
      %v5166 = vadd.f32 %v5036, %v5105
      %v5167 = vadd.f32 %v5037, %v5107
      %v5168 = vadd.f32 %v5038, %v5110
      %v5169 = vadd.f32 %v5039, %v5112
      %v5170 = vadd.f32 %v5040, %v5115
      %v5171 = vadd.f32 %v5041, %v5117
      %v5172 = vadd.f32 %v5042, %v5120
      %v5173 = vadd.f32 %v5043, %v5122
      %v5174 = vadd.f32 %v5044, %v5125
      %v5175 = vadd.f32 %v5045, %v5127
      %v5176 = vadd.f32 %v5046, %v5130
      %v5177 = vadd.f32 %v5047, %v5132
      %v5178 = vadd.f32 %v5048, %v5135
      %v5179 = vadd.f32 %v5049, %v5137
      %v5180 = vadd.f32 %v5050, %v5140
      %v5181 = vadd.f32 %v5051, %v5142
      %v5182 = vadd.f32 %v5052, %v5145
      %v5183 = vadd.f32 %v5053, %v5147
      %v5184 = vadd.f32 %v5054, %v5150
      %v5185 = vadd.f32 %v5055, %v5152
      %s5186 = scalar_lea.vmem %s7, 56
      %v5187 = vld [vmem:[%s5186] sm:$0xf]
      %v5188 = vld [vmem:[%s5186 + $0x4] sm:$0xf]
      %v5191 = vunpack.c.l.b16 %v5187
      %v5192 = vunpack.c.l.b16 %v5188
      %v5193 = vpack.c.b16 %v5192, %v5191
      %5195 = vmatpush.bf16.msra.mxu0 0
      %5196 = vmatpush.bf16.msra.mxu0 0
      %5197 = vmatpush.bf16.msra.mxu0 0
      %5198 = vmatpush.bf16.msra.mxu0 0
      %5199 = vmatpush.bf16.msra.mxu0 0
      %5200 = vmatpush.bf16.msra.mxu0 0
      %5201 = vmatpush.bf16.msra.mxu0 0
      %5202 = vmatpush.bf16.msra.mxu0 %v5193
      %5203 = vmatmul.bf16.gmra.mxu0 %v4132
      %v5204 = vpop.f32.mrf.mxu0
      %v5205 = vadd.f32 0.0, %v5204
      %v5206 = vpop.f32.mrf.mxu0
      %v5207 = vadd.f32 0.0, %v5206
      %5208 = vmatmul.bf16.gmra.mxu0 %v4135
      %v5209 = vpop.f32.mrf.mxu0
      %v5210 = vadd.f32 0.0, %v5209
      %v5211 = vpop.f32.mrf.mxu0
      %v5212 = vadd.f32 0.0, %v5211
      %5213 = vmatmul.bf16.gmra.mxu0 %v4138
      %v5214 = vpop.f32.mrf.mxu0
      %v5215 = vadd.f32 0.0, %v5214
      %v5216 = vpop.f32.mrf.mxu0
      %v5217 = vadd.f32 0.0, %v5216
      %5218 = vmatmul.bf16.gmra.mxu0 %v4141
      %v5219 = vpop.f32.mrf.mxu0
      %v5220 = vadd.f32 0.0, %v5219
      %v5221 = vpop.f32.mrf.mxu0
      %v5222 = vadd.f32 0.0, %v5221
      %5223 = vmatmul.bf16.gmra.mxu0 %v4144
      %v5224 = vpop.f32.mrf.mxu0
      %v5225 = vadd.f32 0.0, %v5224
      %v5226 = vpop.f32.mrf.mxu0
      %v5227 = vadd.f32 0.0, %v5226
      %5228 = vmatmul.bf16.gmra.mxu0 %v4147
      %v5229 = vpop.f32.mrf.mxu0
      %v5230 = vadd.f32 0.0, %v5229
      %v5231 = vpop.f32.mrf.mxu0
      %v5232 = vadd.f32 0.0, %v5231
      %5233 = vmatmul.bf16.gmra.mxu0 %v4150
      %v5234 = vpop.f32.mrf.mxu0
      %v5235 = vadd.f32 0.0, %v5234
      %v5236 = vpop.f32.mrf.mxu0
      %v5237 = vadd.f32 0.0, %v5236
      %5238 = vmatmul.bf16.gmra.mxu0 %v4153
      %v5239 = vpop.f32.mrf.mxu0
      %v5240 = vadd.f32 0.0, %v5239
      %v5241 = vpop.f32.mrf.mxu0
      %v5242 = vadd.f32 0.0, %v5241
      %5243 = vmatmul.bf16.gmra.mxu0 %v4156
      %v5244 = vpop.f32.mrf.mxu0
      %v5245 = vadd.f32 0.0, %v5244
      %v5246 = vpop.f32.mrf.mxu0
      %v5247 = vadd.f32 0.0, %v5246
      %5248 = vmatmul.bf16.gmra.mxu0 %v4159
      %v5249 = vpop.f32.mrf.mxu0
      %v5250 = vadd.f32 0.0, %v5249
      %v5251 = vpop.f32.mrf.mxu0
      %v5252 = vadd.f32 0.0, %v5251
      %5253 = vmatmul.bf16.gmra.mxu0 %v4162
      %v5254 = vpop.f32.mrf.mxu0
      %v5255 = vadd.f32 0.0, %v5254
      %v5256 = vpop.f32.mrf.mxu0
      %v5257 = vadd.f32 0.0, %v5256
      %5258 = vmatmul.bf16.gmra.mxu0 %v4165
      %v5259 = vpop.f32.mrf.mxu0
      %v5260 = vadd.f32 0.0, %v5259
      %v5261 = vpop.f32.mrf.mxu0
      %v5262 = vadd.f32 0.0, %v5261
      %5263 = vmatmul.bf16.gmra.mxu0 %v4168
      %v5264 = vpop.f32.mrf.mxu0
      %v5265 = vadd.f32 0.0, %v5264
      %v5266 = vpop.f32.mrf.mxu0
      %v5267 = vadd.f32 0.0, %v5266
      %5268 = vmatmul.bf16.gmra.mxu0 %v4171
      %v5269 = vpop.f32.mrf.mxu0
      %v5270 = vadd.f32 0.0, %v5269
      %v5271 = vpop.f32.mrf.mxu0
      %v5272 = vadd.f32 0.0, %v5271
      %5273 = vmatmul.bf16.gmra.mxu0 %v4795
      %v5274 = vpop.f32.mrf.mxu0
      %v5275 = vadd.f32 0.0, %v5274
      %v5276 = vpop.f32.mrf.mxu0
      %v5277 = vadd.f32 0.0, %v5276
      %5278 = vmatmul.bf16.gmra.mxu0 %v4126
      %v5279 = vpop.f32.mrf.mxu0
      %v5280 = vadd.f32 0.0, %v5279
      %v5281 = vpop.f32.mrf.mxu0
      %v5282 = vadd.f32 0.0, %v5281
      %5283 = vdwg.mxu0
      %v5284 = vadd.f32 %v5154, %v5205
      %v5285 = vadd.f32 %v5155, %v5207
      %v5286 = vadd.f32 %v5156, %v5210
      %v5287 = vadd.f32 %v5157, %v5212
      %v5288 = vadd.f32 %v5158, %v5215
      %v5289 = vadd.f32 %v5159, %v5217
      %v5290 = vadd.f32 %v5160, %v5220
      %v5291 = vadd.f32 %v5161, %v5222
      %v5292 = vadd.f32 %v5162, %v5225
      %v5293 = vadd.f32 %v5163, %v5227
      %v5294 = vadd.f32 %v5164, %v5230
      %v5295 = vadd.f32 %v5165, %v5232
      %v5296 = vadd.f32 %v5166, %v5235
      %v5297 = vadd.f32 %v5167, %v5237
      %v5298 = vadd.f32 %v5168, %v5240
      %v5299 = vadd.f32 %v5169, %v5242
      %v5300 = vadd.f32 %v5170, %v5245
      %v5301 = vadd.f32 %v5171, %v5247
      %v5302 = vadd.f32 %v5172, %v5250
      %v5303 = vadd.f32 %v5173, %v5252
      %v5304 = vadd.f32 %v5174, %v5255
      %v5305 = vadd.f32 %v5175, %v5257
      %v5306 = vadd.f32 %v5176, %v5260
      %v5307 = vadd.f32 %v5177, %v5262
      %v5308 = vadd.f32 %v5178, %v5265
      %v5309 = vadd.f32 %v5179, %v5267
      %v5310 = vadd.f32 %v5180, %v5270
      %v5311 = vadd.f32 %v5181, %v5272
      %v5312 = vadd.f32 %v5182, %v5275
      %v5313 = vadd.f32 %v5183, %v5277
      %v5314 = vadd.f32 %v5184, %v5280
      %v5315 = vadd.f32 %v5185, %v5282
      %s5316 = scalar_lea.vmem %s7, 64
      %v5317 = vld [vmem:[%s5316] sm:$0xf]
      %v5318 = vld [vmem:[%s5316 + $0x4] sm:$0xf]
      %v5321 = vunpack.c.l.b16 %v5317
      %v5322 = vunpack.c.l.b16 %v5318
      %v5323 = vpack.c.b16 %v5322, %v5321
      %5325 = vmatpush.bf16.msra.mxu0 0
      %5326 = vmatpush.bf16.msra.mxu0 0
      %5327 = vmatpush.bf16.msra.mxu0 0
      %5328 = vmatpush.bf16.msra.mxu0 0
      %5329 = vmatpush.bf16.msra.mxu0 0
      %5330 = vmatpush.bf16.msra.mxu0 0
      %5331 = vmatpush.bf16.msra.mxu0 0
      %5332 = vmatpush.bf16.msra.mxu0 %v5323
      %5333 = vmatmul.bf16.gmra.mxu0 %v4479
      %v5334 = vpop.f32.mrf.mxu0
      %v5335 = vadd.f32 0.0, %v5334
      %v5336 = vpop.f32.mrf.mxu0
      %v5337 = vadd.f32 0.0, %v5336
      %5338 = vmatmul.bf16.gmra.mxu0 %v4482
      %v5339 = vpop.f32.mrf.mxu0
      %v5340 = vadd.f32 0.0, %v5339
      %v5341 = vpop.f32.mrf.mxu0
      %v5342 = vadd.f32 0.0, %v5341
      %5343 = vmatmul.bf16.gmra.mxu0 %v4485
      %v5344 = vpop.f32.mrf.mxu0
      %v5345 = vadd.f32 0.0, %v5344
      %v5346 = vpop.f32.mrf.mxu0
      %v5347 = vadd.f32 0.0, %v5346
      %5348 = vmatmul.bf16.gmra.mxu0 %v4488
      %v5349 = vpop.f32.mrf.mxu0
      %v5350 = vadd.f32 0.0, %v5349
      %v5351 = vpop.f32.mrf.mxu0
      %v5352 = vadd.f32 0.0, %v5351
      %5353 = vmatmul.bf16.gmra.mxu0 %v4491
      %v5354 = vpop.f32.mrf.mxu0
      %v5355 = vadd.f32 0.0, %v5354
      %v5356 = vpop.f32.mrf.mxu0
      %v5357 = vadd.f32 0.0, %v5356
      %5358 = vmatmul.bf16.gmra.mxu0 %v4494
      %v5359 = vpop.f32.mrf.mxu0
      %v5360 = vadd.f32 0.0, %v5359
      %v5361 = vpop.f32.mrf.mxu0
      %v5362 = vadd.f32 0.0, %v5361
      %5363 = vmatmul.bf16.gmra.mxu0 %v4497
      %v5364 = vpop.f32.mrf.mxu0
      %v5365 = vadd.f32 0.0, %v5364
      %v5366 = vpop.f32.mrf.mxu0
      %v5367 = vadd.f32 0.0, %v5366
      %5368 = vmatmul.bf16.gmra.mxu0 %v4500
      %v5369 = vpop.f32.mrf.mxu0
      %v5370 = vadd.f32 0.0, %v5369
      %v5371 = vpop.f32.mrf.mxu0
      %v5372 = vadd.f32 0.0, %v5371
      %5373 = vmatmul.bf16.gmra.mxu0 %v4503
      %v5374 = vpop.f32.mrf.mxu0
      %v5375 = vadd.f32 0.0, %v5374
      %v5376 = vpop.f32.mrf.mxu0
      %v5377 = vadd.f32 0.0, %v5376
      %5378 = vmatmul.bf16.gmra.mxu0 %v4506
      %v5379 = vpop.f32.mrf.mxu0
      %v5380 = vadd.f32 0.0, %v5379
      %v5381 = vpop.f32.mrf.mxu0
      %v5382 = vadd.f32 0.0, %v5381
      %5383 = vmatmul.bf16.gmra.mxu0 %v4509
      %v5384 = vpop.f32.mrf.mxu0
      %v5385 = vadd.f32 0.0, %v5384
      %v5386 = vpop.f32.mrf.mxu0
      %v5387 = vadd.f32 0.0, %v5386
      %5388 = vmatmul.bf16.gmra.mxu0 %v4512
      %v5389 = vpop.f32.mrf.mxu0
      %v5390 = vadd.f32 0.0, %v5389
      %v5391 = vpop.f32.mrf.mxu0
      %v5392 = vadd.f32 0.0, %v5391
      %5393 = vmatmul.bf16.gmra.mxu0 %v4515
      %v5394 = vpop.f32.mrf.mxu0
      %v5395 = vadd.f32 0.0, %v5394
      %v5396 = vpop.f32.mrf.mxu0
      %v5397 = vadd.f32 0.0, %v5396
      %5398 = vmatmul.bf16.gmra.mxu0 %v4518
      %v5399 = vpop.f32.mrf.mxu0
      %v5400 = vadd.f32 0.0, %v5399
      %v5401 = vpop.f32.mrf.mxu0
      %v5402 = vadd.f32 0.0, %v5401
      %5403 = vmatmul.bf16.gmra.mxu0 %v4933
      %v5404 = vpop.f32.mrf.mxu0
      %v5405 = vadd.f32 0.0, %v5404
      %v5406 = vpop.f32.mrf.mxu0
      %v5407 = vadd.f32 0.0, %v5406
      %5408 = vmatmul.bf16.gmra.mxu0 %v4473
      %v5409 = vpop.f32.mrf.mxu0
      %v5410 = vadd.f32 0.0, %v5409
      %v5411 = vpop.f32.mrf.mxu0
      %v5412 = vadd.f32 0.0, %v5411
      %5413 = vdwg.mxu0
      %v5414 = vadd.f32 %v5284, %v5335
      %v5415 = vadd.f32 %v5285, %v5337
      %v5416 = vadd.f32 %v5286, %v5340
      %v5417 = vadd.f32 %v5287, %v5342
      %v5418 = vadd.f32 %v5288, %v5345
      %v5419 = vadd.f32 %v5289, %v5347
      %v5420 = vadd.f32 %v5290, %v5350
      %v5421 = vadd.f32 %v5291, %v5352
      %v5422 = vadd.f32 %v5292, %v5355
      %v5423 = vadd.f32 %v5293, %v5357
      %v5424 = vadd.f32 %v5294, %v5360
      %v5425 = vadd.f32 %v5295, %v5362
      %v5426 = vadd.f32 %v5296, %v5365
      %v5427 = vadd.f32 %v5297, %v5367
      %v5428 = vadd.f32 %v5298, %v5370
      %v5429 = vadd.f32 %v5299, %v5372
      %v5430 = vadd.f32 %v5300, %v5375
      %v5431 = vadd.f32 %v5301, %v5377
      %v5432 = vadd.f32 %v5302, %v5380
      %v5433 = vadd.f32 %v5303, %v5382
      %v5434 = vadd.f32 %v5304, %v5385
      %v5435 = vadd.f32 %v5305, %v5387
      %v5436 = vadd.f32 %v5306, %v5390
      %v5437 = vadd.f32 %v5307, %v5392
      %v5438 = vadd.f32 %v5308, %v5395
      %v5439 = vadd.f32 %v5309, %v5397
      %v5440 = vadd.f32 %v5310, %v5400
      %v5441 = vadd.f32 %v5311, %v5402
      %v5442 = vadd.f32 %v5312, %v5405
      %v5443 = vadd.f32 %v5313, %v5407
      %v5444 = vadd.f32 %v5314, %v5410
      %v5445 = vadd.f32 %v5315, %v5412
      %v5447 = vperm.slane %v3677, 0
      %v5449 = vmul.f32 %v5414, %v5447
      %v5450 = vmul.f32 %v5415, %v5447
      %v5451 = vmul.f32 %v5416, %v5447
      %v5452 = vmul.f32 %v5417, %v5447
      %v5453 = vmul.f32 %v5418, %v5447
      %v5454 = vmul.f32 %v5419, %v5447
      %v5455 = vmul.f32 %v5420, %v5447
      %v5456 = vmul.f32 %v5421, %v5447
      %v5457 = vmul.f32 %v5422, %v5447
      %v5458 = vmul.f32 %v5423, %v5447
      %v5459 = vmul.f32 %v5424, %v5447
      %v5460 = vmul.f32 %v5425, %v5447
      %v5461 = vmul.f32 %v5426, %v5447
      %v5462 = vmul.f32 %v5427, %v5447
      %v5463 = vmul.f32 %v5428, %v5447
      %v5464 = vmul.f32 %v5429, %v5447
      %v5465 = vmul.f32 %v5430, %v5447
      %v5466 = vmul.f32 %v5431, %v5447
      %v5467 = vmul.f32 %v5432, %v5447
      %v5468 = vmul.f32 %v5433, %v5447
      %v5469 = vmul.f32 %v5434, %v5447
      %v5470 = vmul.f32 %v5435, %v5447
      %v5471 = vmul.f32 %v5436, %v5447
      %v5472 = vmul.f32 %v5437, %v5447
      %v5473 = vmul.f32 %v5438, %v5447
      %v5474 = vmul.f32 %v5439, %v5447
      %v5475 = vmul.f32 %v5440, %v5447
      %v5476 = vmul.f32 %v5441, %v5447
      %v5477 = vmul.f32 %v5442, %v5447
      %v5478 = vmul.f32 %v5443, %v5447
      %v5479 = vmul.f32 %v5444, %v5447
      %v5480 = vmul.f32 %v5445, %v5447
      %v5482 = vperm.slane %v3678, 0
      %v5484 = vadd.f32 %v5449, %v5482
      %v5485 = vadd.f32 %v5450, %v5482
      %v5486 = vadd.f32 %v5451, %v5482
      %v5487 = vadd.f32 %v5452, %v5482
      %v5488 = vadd.f32 %v5453, %v5482
      %v5489 = vadd.f32 %v5454, %v5482
      %v5490 = vadd.f32 %v5455, %v5482
      %v5491 = vadd.f32 %v5456, %v5482
      %v5492 = vadd.f32 %v5457, %v5482
      %v5493 = vadd.f32 %v5458, %v5482
      %v5494 = vadd.f32 %v5459, %v5482
      %v5495 = vadd.f32 %v5460, %v5482
      %v5496 = vadd.f32 %v5461, %v5482
      %v5497 = vadd.f32 %v5462, %v5482
      %v5498 = vadd.f32 %v5463, %v5482
      %v5499 = vadd.f32 %v5464, %v5482
      %v5500 = vadd.f32 %v5465, %v5482
      %v5501 = vadd.f32 %v5466, %v5482
      %v5502 = vadd.f32 %v5467, %v5482
      %v5503 = vadd.f32 %v5468, %v5482
      %v5504 = vadd.f32 %v5469, %v5482
      %v5505 = vadd.f32 %v5470, %v5482
      %v5506 = vadd.f32 %v5471, %v5482
      %v5507 = vadd.f32 %v5472, %v5482
      %v5508 = vadd.f32 %v5473, %v5482
      %v5509 = vadd.f32 %v5474, %v5482
      %v5510 = vadd.f32 %v5475, %v5482
      %v5511 = vadd.f32 %v5476, %v5482
      %v5512 = vadd.f32 %v5477, %v5482
      %v5513 = vadd.f32 %v5478, %v5482
      %v5514 = vadd.f32 %v5479, %v5482
      %v5515 = vadd.f32 %v5480, %v5482
      %v5516 = vmax.f32 %v5484, 0.0
      %v5517 = vmax.f32 %v5485, 0.0
      %v5518 = vmax.f32 %v5486, 0.0
      %v5519 = vmax.f32 %v5487, 0.0
      %v5520 = vmax.f32 %v5488, 0.0
      %v5521 = vmax.f32 %v5489, 0.0
      %v5522 = vmax.f32 %v5490, 0.0
      %v5523 = vmax.f32 %v5491, 0.0
      %v5524 = vmax.f32 %v5492, 0.0
      %v5525 = vmax.f32 %v5493, 0.0
      %v5526 = vmax.f32 %v5494, 0.0
      %v5527 = vmax.f32 %v5495, 0.0
      %v5528 = vmax.f32 %v5496, 0.0
      %v5529 = vmax.f32 %v5497, 0.0
      %v5530 = vmax.f32 %v5498, 0.0
      %v5531 = vmax.f32 %v5499, 0.0
      %v5532 = vmax.f32 %v5500, 0.0
      %v5533 = vmax.f32 %v5501, 0.0
      %v5534 = vmax.f32 %v5502, 0.0
      %v5535 = vmax.f32 %v5503, 0.0
      %v5536 = vmax.f32 %v5504, 0.0
      %v5537 = vmax.f32 %v5505, 0.0
      %v5538 = vmax.f32 %v5506, 0.0
      %v5539 = vmax.f32 %v5507, 0.0
      %v5540 = vmax.f32 %v5508, 0.0
      %v5541 = vmax.f32 %v5509, 0.0
      %v5542 = vmax.f32 %v5510, 0.0
      %v5543 = vmax.f32 %v5511, 0.0
      %v5544 = vmax.f32 %v5512, 0.0
      %v5545 = vmax.f32 %v5513, 0.0
      %v5546 = vmax.f32 %v5514, 0.0
      %v5547 = vmax.f32 %v5515, 0.0
      %5548 = vxpose.xlu0.b32.start [1/16] %v5516, 128
      %5549 = vxpose.xlu0.b32.cont [2/16] %v5517, 128
      %5550 = vxpose.xlu0.b32.cont [3/16] %v5518, 128
      %5551 = vxpose.xlu0.b32.cont [4/16] %v5519, 128
      %5552 = vxpose.xlu0.b32.cont [5/16] %v5520, 128
      %5553 = vxpose.xlu0.b32.cont [6/16] %v5521, 128
      %5554 = vxpose.xlu0.b32.cont [7/16] %v5522, 128
      %5555 = vxpose.xlu0.b32.cont [8/16] %v5523, 128
      %5556 = vxpose.xlu0.b32.cont [9/16] %v5524, 128
      %5557 = vxpose.xlu0.b32.cont [10/16] %v5525, 128
      %5558 = vxpose.xlu0.b32.cont [11/16] %v5526, 128
      %5559 = vxpose.xlu0.b32.cont [12/16] %v5527, 128
      %5560 = vxpose.xlu0.b32.cont [13/16] %v5528, 128
      %5561 = vxpose.xlu0.b32.cont [14/16] %v5529, 128
      %5562 = vxpose.xlu0.b32.cont [15/16] %v5530, 128
      %5563 = vxpose.xlu0.b32.end [16/16] %v5531, 128
      %v5564 = vpop.trf.xlu0
      %v5565 = vpop.trf.xlu0
      %v5566 = vpop.trf.xlu0
      %v5567 = vpop.trf.xlu0
      %v5568 = vpop.trf.xlu0
      %v5569 = vpop.trf.xlu0
      %v5570 = vpop.trf.xlu0
      %v5571 = vpop.trf.xlu0
      %v5572 = vpop.trf.xlu0
      %v5573 = vpop.trf.xlu0
      %v5574 = vpop.trf.xlu0
      %v5575 = vpop.trf.xlu0
      %v5576 = vpop.trf.xlu0
      %v5577 = vpop.trf.xlu0
      %v5578 = vpop.trf.xlu0
      %v5579 = vpop.trf.xlu0
      %5580 = vxpose.xlu0.b32.start [1/16] %v5532, 128
      %5581 = vxpose.xlu0.b32.cont [2/16] %v5533, 128
      %5582 = vxpose.xlu0.b32.cont [3/16] %v5534, 128
      %5583 = vxpose.xlu0.b32.cont [4/16] %v5535, 128
      %5584 = vxpose.xlu0.b32.cont [5/16] %v5536, 128
      %5585 = vxpose.xlu0.b32.cont [6/16] %v5537, 128
      %5586 = vxpose.xlu0.b32.cont [7/16] %v5538, 128
      %5587 = vxpose.xlu0.b32.cont [8/16] %v5539, 128
      %5588 = vxpose.xlu0.b32.cont [9/16] %v5540, 128
      %5589 = vxpose.xlu0.b32.cont [10/16] %v5541, 128
      %5590 = vxpose.xlu0.b32.cont [11/16] %v5542, 128
      %5591 = vxpose.xlu0.b32.cont [12/16] %v5543, 128
      %5592 = vxpose.xlu0.b32.cont [13/16] %v5544, 128
      %5593 = vxpose.xlu0.b32.cont [14/16] %v5545, 128
      %5594 = vxpose.xlu0.b32.cont [15/16] %v5546, 128
      %5595 = vxpose.xlu0.b32.end [16/16] %v5547, 128
      %v5596 = vpop.trf.xlu0
      %v5597 = vpop.trf.xlu0
      %v5598 = vpop.trf.xlu0
      %v5599 = vpop.trf.xlu0
      %v5600 = vpop.trf.xlu0
      %v5601 = vpop.trf.xlu0
      %v5602 = vpop.trf.xlu0
      %v5603 = vpop.trf.xlu0
      %v5604 = vpop.trf.xlu0
      %v5605 = vpop.trf.xlu0
      %v5606 = vpop.trf.xlu0
      %v5607 = vpop.trf.xlu0
      %v5608 = vpop.trf.xlu0
      %v5609 = vpop.trf.xlu0
      %v5610 = vpop.trf.xlu0
      %v5611 = vpop.trf.xlu0
      %v5612 = vpack.c.bf16 %v5596, %v5564
      %v5613 = vpack.c.bf16 %v5597, %v5565
      %5614 = vst [vmem:[%s379] sm:$0xff] %v5612
      %5615 = vst [vmem:[%s379 + $0x8] sm:$0xff] %v5613
      %p5616 = scmp.lt.s32.totalorder %s21, 1
      %s5617 = scalar_select %p5616, %s21, 1
      %s5618 = smul.addr %s5617, 4
      %s5619 = smul.addr %s5618, 4
      %s5620 = scalar_lea.vmem %s10, %s5619
      // Predicated region
      $region61: #{_upsample_impl.1} parent=59 // pred_check
        %p5621 = pneg %p259
      $region62: #{_upsample_impl.1} parent=59 // pred_check_branch
        %5623 = sbr.rel (%p5621) target = $region64
      $region63: #{_upsample_impl.1} parent=59 // pred_region
        _
      $region64: #{_upsample_impl.1} parent=59 // pred_fallthru
        _
    $region60: #{_upsample_impl.1} parent=5 // pred_fallthru
      _
    %p5624 = scmp.le.s32.totalorder 2, %s16
    // Predicated region
    $region65: #{_upsample_impl.1} parent=5 // pred_check
      %p5625 = pneg %p5624
    $region66: #{_upsample_impl.1} parent=5 // pred_check_branch
      %5627 = sbr.rel (%p5625) target = $region68
    $region67: #{_upsample_impl.1} parent=5 // pred_region
      %s5628 = ssub.s32 %s16, 2
      // Predicated region
      $region69: #{_upsample_impl.1} parent=67 // pred_check
        %p5629 = pneg %p265
      $region70: #{_upsample_impl.1} parent=67 // pred_check_branch
        %5631 = sbr.rel (%p5629) target = $region72
      $region71: #{_upsample_impl.1} parent=67 // pred_region
        %p5632 = scmp.lt.s32.totalorder %s22, 1
        %s5633 = scalar_select %p5632, %s22, 1
        %s5634 = smul.addr %s5633, 4
        %s5635 = smul.addr %s5634, 4
        %s5636 = scalar_lea.vmem %s10, %s5635
      $region72: #{_upsample_impl.1} parent=67 // pred_fallthru
        _
    $region68: #{_upsample_impl.1} parent=5 // pred_fallthru
      _
  $region6: #{_upsample_impl.1} parent=0 // loop_footer
    %s20 = sadd.s32 1, %s16
  $region7: #{_upsample_impl.1} parent=0 // loop_footer_branch
    %15 = sbr.rel target = $region3
  $region8: #{_upsample_impl.1} parent=0 // loop_exit
    _

</llo_original>
